<compile_context>
chip_gen: v7x
topology: tpu7x:2x2x1
jax: 0.10.0
libtpu: 0.0.40
codegen_flags: <defaults>
</compile_context>

<pallas_src>
import math

import jax
import jax.numpy as jnp
from jax.experimental import pallas as pl
from jax.experimental.pallas import tpu as pltpu


def _round_up(x: int, m: int) -> int:
    return ((x + m - 1) // m) * m


def _fourier_features_kernel(x_ref, bt_ref, o_ref):
    # x_ref:  (tm, input_dim)          VMEM tile of points
    # bt_ref: (input_dim, n_features)  tiny projection matrix (2*pi pre-folded)
    # o_ref:  (tm, 2*n_features)       output tile: [sin | cos]
    input_dim, n_feat = bt_ref.shape
    x = x_ref[...].astype(jnp.float32)
    bt = bt_ref[...].astype(jnp.float32)

    if input_dim <= 8:
        # Tiny contraction dim: broadcast FMA on the VPU (lane-broadcast the
        # x column, sublane-broadcast the B row) avoids pushing a (tm, K<8)
        # operand through the MXU. VALU has plenty of slack here.
        x_proj = x[:, 0:1] * bt[0:1, :]
        for k in range(1, input_dim):
            x_proj = x_proj + x[:, k:k + 1] * bt[k:k + 1, :]
    else:
        x_proj = jnp.dot(x, bt, preferred_element_type=jnp.float32)

    # sin/cos on the EUP in f32, cast on store. Each half is a multiple of
    # 128 lanes for the module defaults -> unmasked lane-dense stores.
    o_ref[:, :n_feat] = jnp.sin(x_proj).astype(o_ref.dtype)
    o_ref[:, n_feat:] = jnp.cos(x_proj).astype(o_ref.dtype)


def fourier_features(x: jax.Array, B: jax.Array, *, tm: int | None = None,
                     out_dtype=None) -> jax.Array:
    """Pallas implementation of FourierFeatures.forward.

    x: (..., input_dim) float32
    B: (n_features, input_dim) float32 (the registered buffer)
    out_dtype: optional output dtype (e.g. jnp.bfloat16 to halve HBM writeback;
               default keeps float32 to match the reference).
    returns: (..., 2*n_features)
    """
    n_features, input_dim = B.shape
    lead_shape = x.shape[:-1]
    x2d = x.reshape(-1, input_dim)
    N = x2d.shape[0]
    out_dtype = jnp.dtype(out_dtype) if out_dtype is not None else x2d.dtype
    out_cols = 2 * n_features
    # NOTE: out_cols should be a multiple of 128 for unmasked lane-dense
    # stores; the module default n_features=256 gives 512, which is fine.

    if tm is None:
        # Big row tiles amortize per-step pipeline overhead (the kernel is
        # output-writeback bound). Budget ~8 MiB total for the double-buffered
        # output tile so it fits every generation's default scoped VMEM.
        bytes_per_row = out_cols * out_dtype.itemsize
        tm = min(2048, max(256, (8 * 1024 * 1024 // 2) // max(bytes_per_row, 1)))
        tm = max(8, (tm // 8) * 8)
        # Keep at least a few grid steps so the "parallel" axis can still be
        # sharded across both TensorCores on v7x for mid-sized N.
        while tm > 128 and pl.cdiv(N, tm) < 4:
            tm //= 2
        # Never pick a tile larger than (sublane-rounded) N.
        tm = max(8, min(tm, _round_up(N, 8)))

    grid = (pl.cdiv(N, tm),)

    # Fold the 2*pi into the tiny projection matrix once, outside the kernel.
    B_T = (2.0 * math.pi) * B.T.astype(jnp.float32)  # (input_dim, n_features)

    out = pl.pallas_call(
        _fourier_features_kernel,
        out_shape=jax.ShapeDtypeStruct((N, out_cols), out_dtype),
        grid_spec=pltpu.PrefetchScalarGridSpec(
            num_scalar_prefetch=0,
            grid=grid,
            in_specs=[
                # x tile: last dim equals the full array dim (input_dim).
                pl.BlockSpec((tm, input_dim), lambda i: (i, 0)),
                # B_T is tiny; keep the whole matrix resident every step.
                pl.BlockSpec((input_dim, n_features), lambda i: (0, 0)),
            ],
            # Ragged last tile is clipped by the pipeline -> no padded-output
            # copy in the wrapper.
            out_specs=pl.BlockSpec((tm, out_cols), lambda i: (i, 0)),
        ),
        compiler_params=pltpu.CompilerParams(
            dimension_semantics=("parallel",),
        ),
    )(x2d, B_T)

    return out.reshape(*lead_shape, out_cols)


def fourier_features_ref(x: jax.Array, B: jax.Array) -> jax.Array:
    """Pure-JAX reference matching the PyTorch forward exactly."""
    x_proj = 2.0 * math.pi * jnp.dot(x, B.T, precision=jax.lax.Precision.HIGHEST)
    return jnp.concatenate([jnp.sin(x_proj), jnp.cos(x_proj)], axis=-1)


if __name__ == "__main__":
    key = jax.random.PRNGKey(0)
    k_b, k_x, k_x2 = jax.random.split(key, 3)

    input_dim = 2
    n_features = 256
    gauss_scale = 10.0

    # Deterministic "buffer" B, same shape as the PyTorch module's randn buffer.
    B = gauss_scale * jax.random.normal(k_b, (n_features, input_dim),
                                        dtype=jnp.float32)

    # Small batch of 2-D points (e.g. ray-sample coordinates).
    x = jax.random.normal(k_x, (128, input_dim), dtype=jnp.float32)

    out = jax.block_until_ready(fourier_features(x, B))
    ref = fourier_features_ref(x, B)
    assert out.shape == (128, 2 * n_features), out.shape
    assert jnp.allclose(out, ref, atol=1e-3, rtol=1e-3), \
        float(jnp.max(jnp.abs(out - ref)))

    # Ragged-N path: grid = cdiv(N, tm), clipped last tile.
    x2 = jax.random.normal(k_x2, (200, input_dim), dtype=jnp.float32)
    out2 = jax.block_until_ready(fourier_features(x2, B))
    ref2 = fourier_features_ref(x2, B)
    assert out2.shape == (200, 2 * n_features), out2.shape
    assert jnp.allclose(out2, ref2, atol=1e-3, rtol=1e-3), \
        float(jnp.max(jnp.abs(out2 - ref2)))

    print("KERNEL_OK")
</pallas_src>

<mosaic_0001>
module attributes {stable_mosaic.version = 11 : i64} {
  func.func @_fourier_features_kernel(%arg0: i32, %arg1: memref<128x2xf32, #tpu.memory_space<vmem>>, %arg2: memref<2x256xf32, #tpu.memory_space<vmem>>, %arg3: memref<128x512xf32, #tpu.memory_space<vmem>>) attributes {dimension_semantics = [#tpu.dimension_semantics<parallel>], iteration_bounds = array<i64: 1>, scalar_prefetch = 0 : i64, scratch_operands = 0 : i64, tpu.core_type = #tpu.core_type<tc>, window_params = [{transform_indices = @transform_0, window_bounds = array<i64: 128, 2>}, {pipeline_mode = #tpu.pipeline_mode<synchronous>, transform_indices = @transform_1, window_bounds = array<i64: 2, 256>}, {transform_indices = @transform_2, window_bounds = array<i64: 128, 512>}]} {
    %c0 = arith.constant 0 : index
    %c0_0 = arith.constant 0 : index
    %0 = vector.load %arg1[%c0, %c0_0] : memref<128x2xf32, #tpu.memory_space<vmem>>, vector<128x2xf32>
    %c0_1 = arith.constant 0 : index
    %c0_2 = arith.constant 0 : index
    %1 = vector.load %arg2[%c0_1, %c0_2] : memref<2x256xf32, #tpu.memory_space<vmem>>, vector<2x256xf32>
    %2 = vector.extract_strided_slice %0 {offsets = [0, 0], sizes = [128, 1], strides = [1, 1]} : vector<128x2xf32> to vector<128x1xf32>
    %3 = vector.extract_strided_slice %1 {offsets = [0, 0], sizes = [1, 256], strides = [1, 1]} : vector<2x256xf32> to vector<1x256xf32>
    %4 = vector.broadcast %2 : vector<128x1xf32> to vector<128x256xf32>
    %5 = vector.broadcast %3 : vector<1x256xf32> to vector<128x256xf32>
    %6 = arith.mulf %4, %5 : vector<128x256xf32>
    %7 = vector.extract_strided_slice %0 {offsets = [0, 1], sizes = [128, 1], strides = [1, 1]} : vector<128x2xf32> to vector<128x1xf32>
    %8 = vector.extract_strided_slice %1 {offsets = [1, 0], sizes = [1, 256], strides = [1, 1]} : vector<2x256xf32> to vector<1x256xf32>
    %9 = vector.broadcast %7 : vector<128x1xf32> to vector<128x256xf32>
    %10 = vector.broadcast %8 : vector<1x256xf32> to vector<128x256xf32>
    %11 = arith.mulf %9, %10 : vector<128x256xf32>
    %12 = arith.addf %6, %11 : vector<128x256xf32>
    %13 = math.sin %12 : vector<128x256xf32>
    %c0_3 = arith.constant 0 : index
    %c0_4 = arith.constant 0 : index
    %14 = vector.load %arg3[%c0_3, %c0_4] : memref<128x512xf32, #tpu.memory_space<vmem>>, vector<128x256xf32>
    tpu.vector_store %arg3[%c0_3, %c0_4], %13 {strides = array<i32>} : memref<128x512xf32, #tpu.memory_space<vmem>>, vector<128x256xf32>,
    %15 = math.cos %12 : vector<128x256xf32>
    %c0_5 = arith.constant 0 : index
    %c256 = arith.constant 256 : index
    %16 = vector.load %arg3[%c0_5, %c256] : memref<128x512xf32, #tpu.memory_space<vmem>>, vector<128x256xf32>
    tpu.vector_store %arg3[%c0_5, %c256], %15 {strides = array<i32>} : memref<128x512xf32, #tpu.memory_space<vmem>>, vector<128x256xf32>,
    return
  }
  func.func @transform_0(%arg0: i32) -> (i32, i32) {
    %c0_i32 = arith.constant 0 : i32
    %c0_i32_0 = arith.constant 0 : i32
    return %arg0, %c0_i32 : i32, i32
  }
  func.func @transform_1(%arg0: i32) -> (i32, i32) {
    %c0_i32 = arith.constant 0 : i32
    %c0_i32_0 = arith.constant 0 : i32
    %c0_i32_1 = arith.constant 0 : i32
    return %c0_i32, %c0_i32_0 : i32, i32
  }
  func.func @transform_2(%arg0: i32) -> (i32, i32) {
    %c0_i32 = arith.constant 0 : i32
    %c0_i32_0 = arith.constant 0 : i32
    return %arg0, %c0_i32 : i32, i32
  }
}

</mosaic_0001>

<llo_original>
// kernel: tpu_custom_call.1
$region0: #{tpu_custom_call.1}
  #allocation0 [shape = 'u32[]', space=smem, size = 0x4, offset = 0x4, fixed_abs, tag = 'smem constant byte address 0x4 - core index']
  #allocation1 [shape = 'u32[144,128]{1,0:T(1,128)}', space=vmem, size = 0x12000, scoped, tag = 'internal scratch']
  %s0 = inlined_call_operand.vmem [shape: f32[128,2], index: 0, kind: input, shape index: {}]
  %s1 = inlined_call_operand.vmem [shape: f32[2,256], index: 1, kind: input, shape index: {}]
  %s2 = inlined_call_operand.hbm [shape: f32[128,512], index: 2, kind: output, shape index: {}]
  %s3 = sld [smem:[#allocation0]]
  $region18: #{tpu_custom_call.1} parent=0
    _
  %s5 = ssub.s32 1, %s3
  %s6 = scalar_select 0, %s5, %s3
  $region1: #{tpu_custom_call.1} parent=0
    #allocation2 [shape = 'u8[262144]{0}', space=vmem, size = 0x40000, scoped, tag = 'output window, operand 0, single buffered']
    #allocation3 [shape = 's32[1]{0}', space=sflag, size = 0x4, scoped, tag = 'scoped memory for tpu_custom_call.1']
    %7 = vsyncpa [#allocation3], 0
    // Predicated region
    $region2: #{tpu_custom_call.1} parent=1 // pred_check
      _
    $region3: #{tpu_custom_call.1} parent=1 // pred_check_branch
      %9 = sbr.rel (0) target = $region5
    $region4: #{tpu_custom_call.1} parent=1 // pred_region
      _
    $region5: #{tpu_custom_call.1} parent=1 // pred_fallthru
      _
    // Predicated region
    $region6: #{tpu_custom_call.1} parent=1 // pred_check
      _
    $region7: #{tpu_custom_call.1} parent=1 // pred_check_branch
      %11 = sbr.rel (0) target = $region9
    $region8: #{tpu_custom_call.1} parent=1 // pred_region
      _
    $region9: #{tpu_custom_call.1} parent=1 // pred_fallthru
      _
    %v12 = vld [vmem:[%s0] sm:$0xff]
    %v13 = vld [vmem:[%s0 + $0x8] sm:$0xff]
    %v14 = vld [vmem:[%s0 + $0x10] sm:$0xff]
    %v15 = vld [vmem:[%s0 + $0x18] sm:$0xff]
    %v16 = vld [vmem:[%s0 + $0x20] sm:$0xff]
    %v17 = vld [vmem:[%s0 + $0x28] sm:$0xff]
    %v18 = vld [vmem:[%s0 + $0x30] sm:$0xff]
    %v19 = vld [vmem:[%s0 + $0x38] sm:$0xff]
    %v20 = vld [vmem:[%s0 + $0x40] sm:$0xff]
    %v21 = vld [vmem:[%s0 + $0x48] sm:$0xff]
    %v22 = vld [vmem:[%s0 + $0x50] sm:$0xff]
    %v23 = vld [vmem:[%s0 + $0x58] sm:$0xff]
    %v24 = vld [vmem:[%s0 + $0x60] sm:$0xff]
    %v25 = vld [vmem:[%s0 + $0x68] sm:$0xff]
    %v26 = vld [vmem:[%s0 + $0x70] sm:$0xff]
    %v27 = vld [vmem:[%s0 + $0x78] sm:$0xff]
    %v28 = vld [vmem:[%s1] sm:$0xf]
    %30 = vset.pattern.permute.xlu0 0
    %31 = vperm.xlu0 %30, %v12
    %v32 = vpop.permute.xlu0 %31
    %35 = vset.pattern.permute.xlu0 0
    %36 = vperm.xlu0 %35, %v13
    %v37 = vpop.permute.xlu0 %36
    %40 = vset.pattern.permute.xlu0 0
    %41 = vperm.xlu0 %40, %v14
    %v42 = vpop.permute.xlu0 %41
    %45 = vset.pattern.permute.xlu0 0
    %46 = vperm.xlu0 %45, %v15
    %v47 = vpop.permute.xlu0 %46
    %50 = vset.pattern.permute.xlu0 0
    %51 = vperm.xlu0 %50, %v16
    %v52 = vpop.permute.xlu0 %51
    %55 = vset.pattern.permute.xlu0 0
    %56 = vperm.xlu0 %55, %v17
    %v57 = vpop.permute.xlu0 %56
    %60 = vset.pattern.permute.xlu0 0
    %61 = vperm.xlu0 %60, %v18
    %v62 = vpop.permute.xlu0 %61
    %65 = vset.pattern.permute.xlu0 0
    %66 = vperm.xlu0 %65, %v19
    %v67 = vpop.permute.xlu0 %66
    %70 = vset.pattern.permute.xlu0 0
    %71 = vperm.xlu0 %70, %v20
    %v72 = vpop.permute.xlu0 %71
    %75 = vset.pattern.permute.xlu0 0
    %76 = vperm.xlu0 %75, %v21
    %v77 = vpop.permute.xlu0 %76
    %80 = vset.pattern.permute.xlu0 0
    %81 = vperm.xlu0 %80, %v22
    %v82 = vpop.permute.xlu0 %81
    %85 = vset.pattern.permute.xlu0 0
    %86 = vperm.xlu0 %85, %v23
    %v87 = vpop.permute.xlu0 %86
    %90 = vset.pattern.permute.xlu0 0
    %91 = vperm.xlu0 %90, %v24
    %v92 = vpop.permute.xlu0 %91
    %95 = vset.pattern.permute.xlu0 0
    %96 = vperm.xlu0 %95, %v25
    %v97 = vpop.permute.xlu0 %96
    %100 = vset.pattern.permute.xlu0 0
    %101 = vperm.xlu0 %100, %v26
    %v102 = vpop.permute.xlu0 %101
    %105 = vset.pattern.permute.xlu0 0
    %106 = vperm.xlu0 %105, %v27
    %v107 = vpop.permute.xlu0 %106
    %v110 = vlaneseq
    %v111 = vshrl.u32 %v110, 7
    %v112 = vsub.s32 0, %v111
    %v113 = vrot.slane %v28, %v112
    %v114 = vlaneseq
    %v115 = vshrl.u32 %v114, 7
    %v116 = vsub.s32 2, %v115
    %v117 = vrot.slane %v28, %v116
    %v120 = vlaneseq
    %v121 = vshrl.u32 %v120, 7
    %v122 = vsub.s32 0, %v121
    %v123 = vrot.slane %v113, %v122
    %v124 = vlaneseq
    %v125 = vshrl.u32 %v124, 7
    %v126 = vsub.s32 0, %v125
    %v127 = vrot.slane %v117, %v126
    %v128 = vmul.f32 %v32, %v123
    %v129 = vmul.f32 %v32, %v127
    %v130 = vmul.f32 %v37, %v123
    %v131 = vmul.f32 %v37, %v127
    %v132 = vmul.f32 %v42, %v123
    %v133 = vmul.f32 %v42, %v127
    %v134 = vmul.f32 %v47, %v123
    %v135 = vmul.f32 %v47, %v127
    %v136 = vmul.f32 %v52, %v123
    %v137 = vmul.f32 %v52, %v127
    %v138 = vmul.f32 %v57, %v123
    %v139 = vmul.f32 %v57, %v127
    %v140 = vmul.f32 %v62, %v123
    %v141 = vmul.f32 %v62, %v127
    %v142 = vmul.f32 %v67, %v123
    %v143 = vmul.f32 %v67, %v127
    %v144 = vmul.f32 %v72, %v123
    %v145 = vmul.f32 %v72, %v127
    %v146 = vmul.f32 %v77, %v123
    %v147 = vmul.f32 %v77, %v127
    %v148 = vmul.f32 %v82, %v123
    %v149 = vmul.f32 %v82, %v127
    %v150 = vmul.f32 %v87, %v123
    %v151 = vmul.f32 %v87, %v127
    %v152 = vmul.f32 %v92, %v123
    %v153 = vmul.f32 %v92, %v127
    %v154 = vmul.f32 %v97, %v123
    %v155 = vmul.f32 %v97, %v127
    %v156 = vmul.f32 %v102, %v123
    %v157 = vmul.f32 %v102, %v127
    %v158 = vmul.f32 %v107, %v123
    %v159 = vmul.f32 %v107, %v127
    %160 = vset.pattern.permute.xlu0 1
    %161 = vperm.xlu0 %160, %v12
    %v162 = vpop.permute.xlu0 %161
    %164 = vset.pattern.permute.xlu0 1
    %165 = vperm.xlu0 %164, %v13
    %v166 = vpop.permute.xlu0 %165
    %168 = vset.pattern.permute.xlu0 1
    %169 = vperm.xlu0 %168, %v14
    %v170 = vpop.permute.xlu0 %169
    %172 = vset.pattern.permute.xlu0 1
    %173 = vperm.xlu0 %172, %v15
    %v174 = vpop.permute.xlu0 %173
    %176 = vset.pattern.permute.xlu0 1
    %177 = vperm.xlu0 %176, %v16
    %v178 = vpop.permute.xlu0 %177
    %180 = vset.pattern.permute.xlu0 1
    %181 = vperm.xlu0 %180, %v17
    %v182 = vpop.permute.xlu0 %181
    %184 = vset.pattern.permute.xlu0 1
    %185 = vperm.xlu0 %184, %v18
    %v186 = vpop.permute.xlu0 %185
    %188 = vset.pattern.permute.xlu0 1
    %189 = vperm.xlu0 %188, %v19
    %v190 = vpop.permute.xlu0 %189
    %192 = vset.pattern.permute.xlu0 1
    %193 = vperm.xlu0 %192, %v20
    %v194 = vpop.permute.xlu0 %193
    %196 = vset.pattern.permute.xlu0 1
    %197 = vperm.xlu0 %196, %v21
    %v198 = vpop.permute.xlu0 %197
    %200 = vset.pattern.permute.xlu0 1
    %201 = vperm.xlu0 %200, %v22
    %v202 = vpop.permute.xlu0 %201
    %204 = vset.pattern.permute.xlu0 1
    %205 = vperm.xlu0 %204, %v23
    %v206 = vpop.permute.xlu0 %205
    %208 = vset.pattern.permute.xlu0 1
    %209 = vperm.xlu0 %208, %v24
    %v210 = vpop.permute.xlu0 %209
    %212 = vset.pattern.permute.xlu0 1
    %213 = vperm.xlu0 %212, %v25
    %v214 = vpop.permute.xlu0 %213
    %216 = vset.pattern.permute.xlu0 1
    %217 = vperm.xlu0 %216, %v26
    %v218 = vpop.permute.xlu0 %217
    %220 = vset.pattern.permute.xlu0 1
    %221 = vperm.xlu0 %220, %v27
    %v222 = vpop.permute.xlu0 %221
    %v224 = vlaneseq
    %v225 = vshrl.u32 %v224, 7
    %v226 = vsub.s32 1, %v225
    %v227 = vrot.slane %v28, %v226
    %v228 = vlaneseq
    %v229 = vshrl.u32 %v228, 7
    %v230 = vsub.s32 3, %v229
    %v231 = vrot.slane %v28, %v230
    %v234 = vlaneseq
    %v235 = vshrl.u32 %v234, 7
    %v236 = vsub.s32 1, %v235
    %v237 = vrot.slane %v227, %v236
    %v238 = vlaneseq
    %v239 = vshrl.u32 %v238, 7
    %v240 = vsub.s32 1, %v239
    %v241 = vrot.slane %v231, %v240
    %v242 = vmul.f32 %v162, %v237
    %v243 = vmul.f32 %v162, %v241
    %v244 = vmul.f32 %v166, %v237
    %v245 = vmul.f32 %v166, %v241
    %v246 = vmul.f32 %v170, %v237
    %v247 = vmul.f32 %v170, %v241
    %v248 = vmul.f32 %v174, %v237
    %v249 = vmul.f32 %v174, %v241
    %v250 = vmul.f32 %v178, %v237
    %v251 = vmul.f32 %v178, %v241
    %v252 = vmul.f32 %v182, %v237
    %v253 = vmul.f32 %v182, %v241
    %v254 = vmul.f32 %v186, %v237
    %v255 = vmul.f32 %v186, %v241
    %v256 = vmul.f32 %v190, %v237
    %v257 = vmul.f32 %v190, %v241
    %v258 = vmul.f32 %v194, %v237
    %v259 = vmul.f32 %v194, %v241
    %v260 = vmul.f32 %v198, %v237
    %v261 = vmul.f32 %v198, %v241
    %v262 = vmul.f32 %v202, %v237
    %v263 = vmul.f32 %v202, %v241
    %v264 = vmul.f32 %v206, %v237
    %v265 = vmul.f32 %v206, %v241
    %v266 = vmul.f32 %v210, %v237
    %v267 = vmul.f32 %v210, %v241
    %v268 = vmul.f32 %v214, %v237
    %v269 = vmul.f32 %v214, %v241
    %v270 = vmul.f32 %v218, %v237
    %v271 = vmul.f32 %v218, %v241
    %v272 = vmul.f32 %v222, %v237
    %v273 = vmul.f32 %v222, %v241
    %v274 = vadd.f32 %v128, %v242
    %v275 = vadd.f32 %v129, %v243
    %v276 = vadd.f32 %v130, %v244
    %v277 = vadd.f32 %v131, %v245
    %v278 = vadd.f32 %v132, %v246
    %v279 = vadd.f32 %v133, %v247
    %v280 = vadd.f32 %v134, %v248
    %v281 = vadd.f32 %v135, %v249
    %v282 = vadd.f32 %v136, %v250
    %v283 = vadd.f32 %v137, %v251
    %v284 = vadd.f32 %v138, %v252
    %v285 = vadd.f32 %v139, %v253
    %v286 = vadd.f32 %v140, %v254
    %v287 = vadd.f32 %v141, %v255
    %v288 = vadd.f32 %v142, %v256
    %v289 = vadd.f32 %v143, %v257
    %v290 = vadd.f32 %v144, %v258
    %v291 = vadd.f32 %v145, %v259
    %v292 = vadd.f32 %v146, %v260
    %v293 = vadd.f32 %v147, %v261
    %v294 = vadd.f32 %v148, %v262
    %v295 = vadd.f32 %v149, %v263
    %v296 = vadd.f32 %v150, %v264
    %v297 = vadd.f32 %v151, %v265
    %v298 = vadd.f32 %v152, %v266
    %v299 = vadd.f32 %v153, %v267
    %v300 = vadd.f32 %v154, %v268
    %v301 = vadd.f32 %v155, %v269
    %v302 = vadd.f32 %v156, %v270
    %v303 = vadd.f32 %v157, %v271
    %v304 = vadd.f32 %v158, %v272
    %v305 = vadd.f32 %v159, %v273
    %v306 = vand.u32 2147483647, %v274
    %vm307 = vcmp.le.f32.partialorder %v306, 0.7853982
    %vm308 = vcmp.lt.s32.totalorder %v274, 0
    %v309 = vand.u32 %v274, 2139095040
    %v310 = vshrl.u32 %v309, 23
    %v311 = vsub.s32 %v310, 127
    %v312 = vand.u32 2147483647, %v274
    %v313 = vand.u32 %v312, 8388607
    %v314 = vor.u32 %v313, 8388608
    %v315 = vsub.s32 0, %v314
    %v316 = vadd.s32 %v311, 1
    %vm317 = vcmp.gt.s32.totalorder %v316, 0
    %v318 = vsel %vm317, %v316, 0
    %v319 = vshrl.u32 %v318, 5
    %v320 = vand.u32 %v318, 31
    %v321 = vsub.s32 32, %v320
    %v322 = vshrl.u32 683565275, %v321
    %v323 = vshll.u32 683565275, %v320
    %v324 = vshrl.u32 2475754826, %v321
    %v325 = vor.u32 %v323, %v324
    %v326 = vshll.u32 2475754826, %v320
    %v327 = vshrl.u32 2131351028, %v321
    %v328 = vor.u32 %v326, %v327
    %v329 = vshll.u32 2131351028, %v320
    %v330 = vshrl.u32 2102212464, %v321
    %v331 = vor.u32 %v329, %v330
    %v332 = vshll.u32 2102212464, %v320
    %v333 = vshrl.u32 920167782, %v321
    %v334 = vor.u32 %v332, %v333
    %v335 = vshll.u32 920167782, %v320
    %v336 = vshrl.u32 1326507024, %v321
    %v337 = vor.u32 %v335, %v336
    %vm338 = vcmp.lt.s32.totalorder %v319, 1
    %vm339 = vcmp.lt.s32.totalorder %v319, 2
    %vm340 = vcmp.lt.s32.totalorder %v319, 3
    %vm341 = vcmp.lt.s32.totalorder %v319, 4
    %v342 = vsel %vm338, %v322, %v325
    %v343 = vsel %vm341, %v331, 2102212464
    %v344 = vsel %vm340, %v328, %v343
    %v345 = vsel %vm339, %v342, %v344
    %v346 = vsel %vm338, %v325, %v328
    %v347 = vsel %vm341, %v334, 920167782
    %v348 = vsel %vm340, %v331, %v347
    %v349 = vsel %vm339, %v346, %v348
    %v350 = vsel %vm338, %v328, %v331
    %v351 = vsel %vm341, %v337, 1326507024
    %v352 = vsel %vm340, %v334, %v351
    %v353 = vsel %vm339, %v350, %v352
    %v354 = vshll.u32 %v314, 8
    %v355 = vmul.u32.u64.compose %v354, %v353
    %v356 = vextract.low.u32 %v355
    %v357 = vextract.high.u32 %v355
    %v358 = vmul.u32.u64.compose %v354, %v349
    %v359 = vextract.low.u32 %v358
    %v360 = vextract.high.u32 %v358
    %v361 = vmul.u32 %v354, %v345
    %v362 = vadd.s32 %v357, %v359
    %vm363 = vc.u32 %v357, %v359
    %v364 = vadd.s32 %v360, 1
    %v365 = vsel %vm363, %v364, %v360
    %v366 = vadd.s32 %v361, %v365
    %v367 = vadd.s32 %v366, 536870912
    %v368 = vshrl.u32 %v367, 30
    %v369 = vshll.u32 %v368, 30
    %v370 = vsub.s32 %v366, %v369
    %vm371 = vcmp.lt.s32.totalorder %v370, 0
    %v372 = vsub.s32 0, %v370
    %v373 = vsel %vm371, %v372, %v370
    %v374 = vclz %v373
    %v375 = vsub.s32 %v374, 2
    %vm376 = vcmp.gt.s32.totalorder 0, %v375
    %v377 = vsel %vm376, 0, %v375
    %v378 = vsub.s32 32, %v377
    %v379 = vshll.u32 %v370, %v377
    %v380 = vshrl.u32 %v362, %v378
    %v381 = vor.u32 %v379, %v380
    %v382 = vsub.s32 4294967266, %v377
    %v383 = vadd.s32 %v382, 127
    %v384 = vshll.u32 %v383, 23
    %v385 = vor.u32 4788187, %v384
    %v386 = vand.u32 2147483647, %v385
    %v388 = vcvt.s32.f32 %v381
    %v389 = vmul.f32 %v388, %v386
    %v390 = vxor.u32 %v389, 2147483648
    %v391 = vsel %vm308, %v390, %v389
    %v392 = vsub.s32 4, %v368
    %v393 = vsel %vm308, %v392, %v368
    %v394 = vsel %vm307, %v274, %v391
    %v395 = vsel %vm307, 0, %v393
    %v396 = vcosq.f32.pop %v394
    %v397 = vsinq.f32.pop %v394
    %vm398 = vweird.f32 %v274
    %v399 = vadd.s32 %v395, 3
    %v400 = vand.u32 %v399, 3
    %vm401 = vcmp.lt.s32.totalorder %v400, 2
    %vm402 = vcmp.eq.s32.totalorder %v400, 0
    %v403 = vxor.u32 %v397, 2147483648
    %v404 = vsel %vm402, %v396, %v403
    %vm405 = vcmp.eq.s32.totalorder %v400, 2
    %v406 = vxor.u32 %v396, 2147483648
    %v407 = vsel %vm405, %v406, %v397
    %v408 = vsel %vm401, %v404, %v407
    %v409 = vsel %vm398, nan, %v408
    %v410 = vand.u32 2147483647, %v275
    %vm411 = vcmp.le.f32.partialorder %v410, 0.7853982
    %vm412 = vcmp.lt.s32.totalorder %v275, 0
    %v413 = vand.u32 %v275, 2139095040
    %v414 = vshrl.u32 %v413, 23
    %v415 = vsub.s32 %v414, 127
    %v416 = vand.u32 2147483647, %v275
    %v417 = vand.u32 %v416, 8388607
    %v418 = vor.u32 %v417, 8388608
    %v419 = vsub.s32 0, %v418
    %v420 = vadd.s32 %v415, 1
    %vm421 = vcmp.gt.s32.totalorder %v420, 0
    %v422 = vsel %vm421, %v420, 0
    %v423 = vshrl.u32 %v422, 5
    %v424 = vand.u32 %v422, 31
    %v425 = vsub.s32 32, %v424
    %v426 = vshrl.u32 683565275, %v425
    %v427 = vshll.u32 683565275, %v424
    %v428 = vshrl.u32 2475754826, %v425
    %v429 = vor.u32 %v427, %v428
    %v430 = vshll.u32 2475754826, %v424
    %v431 = vshrl.u32 2131351028, %v425
    %v432 = vor.u32 %v430, %v431
    %v433 = vshll.u32 2131351028, %v424
    %v434 = vshrl.u32 2102212464, %v425
    %v435 = vor.u32 %v433, %v434
    %v436 = vshll.u32 2102212464, %v424
    %v437 = vshrl.u32 920167782, %v425
    %v438 = vor.u32 %v436, %v437
    %v439 = vshll.u32 920167782, %v424
    %v440 = vshrl.u32 1326507024, %v425
    %v441 = vor.u32 %v439, %v440
    %vm442 = vcmp.lt.s32.totalorder %v423, 1
    %vm443 = vcmp.lt.s32.totalorder %v423, 2
    %vm444 = vcmp.lt.s32.totalorder %v423, 3
    %vm445 = vcmp.lt.s32.totalorder %v423, 4
    %v446 = vsel %vm442, %v426, %v429
    %v447 = vsel %vm445, %v435, 2102212464
    %v448 = vsel %vm444, %v432, %v447
    %v449 = vsel %vm443, %v446, %v448
    %v450 = vsel %vm442, %v429, %v432
    %v451 = vsel %vm445, %v438, 920167782
    %v452 = vsel %vm444, %v435, %v451
    %v453 = vsel %vm443, %v450, %v452
    %v454 = vsel %vm442, %v432, %v435
    %v455 = vsel %vm445, %v441, 1326507024
    %v456 = vsel %vm444, %v438, %v455
    %v457 = vsel %vm443, %v454, %v456
    %v458 = vshll.u32 %v418, 8
    %v459 = vmul.u32.u64.compose %v458, %v457
    %v460 = vextract.low.u32 %v459
    %v461 = vextract.high.u32 %v459
    %v462 = vmul.u32.u64.compose %v458, %v453
    %v463 = vextract.low.u32 %v462
    %v464 = vextract.high.u32 %v462
    %v465 = vmul.u32 %v458, %v449
    %v466 = vadd.s32 %v461, %v463
    %vm467 = vc.u32 %v461, %v463
    %v468 = vadd.s32 %v464, 1
    %v469 = vsel %vm467, %v468, %v464
    %v470 = vadd.s32 %v465, %v469
    %v471 = vadd.s32 %v470, 536870912
    %v472 = vshrl.u32 %v471, 30
    %v473 = vshll.u32 %v472, 30
    %v474 = vsub.s32 %v470, %v473
    %vm475 = vcmp.lt.s32.totalorder %v474, 0
    %v476 = vsub.s32 0, %v474
    %v477 = vsel %vm475, %v476, %v474
    %v478 = vclz %v477
    %v479 = vsub.s32 %v478, 2
    %vm480 = vcmp.gt.s32.totalorder 0, %v479
    %v481 = vsel %vm480, 0, %v479
    %v482 = vsub.s32 32, %v481
    %v483 = vshll.u32 %v474, %v481
    %v484 = vshrl.u32 %v466, %v482
    %v485 = vor.u32 %v483, %v484
    %v486 = vsub.s32 4294967266, %v481
    %v487 = vadd.s32 %v486, 127
    %v488 = vshll.u32 %v487, 23
    %v489 = vor.u32 4788187, %v488
    %v490 = vand.u32 2147483647, %v489
    %v492 = vcvt.s32.f32 %v485
    %v493 = vmul.f32 %v492, %v490
    %v494 = vxor.u32 %v493, 2147483648
    %v495 = vsel %vm412, %v494, %v493
    %v496 = vsub.s32 4, %v472
    %v497 = vsel %vm412, %v496, %v472
    %v498 = vsel %vm411, %v275, %v495
    %v499 = vsel %vm411, 0, %v497
    %v500 = vcosq.f32.pop %v498
    %v501 = vsinq.f32.pop %v498
    %vm502 = vweird.f32 %v275
    %v503 = vadd.s32 %v499, 3
    %v504 = vand.u32 %v503, 3
    %vm505 = vcmp.lt.s32.totalorder %v504, 2
    %vm506 = vcmp.eq.s32.totalorder %v504, 0
    %v507 = vxor.u32 %v501, 2147483648
    %v508 = vsel %vm506, %v500, %v507
    %vm509 = vcmp.eq.s32.totalorder %v504, 2
    %v510 = vxor.u32 %v500, 2147483648
    %v511 = vsel %vm509, %v510, %v501
    %v512 = vsel %vm505, %v508, %v511
    %v513 = vsel %vm502, nan, %v512
    %v514 = vand.u32 2147483647, %v276
    %vm515 = vcmp.le.f32.partialorder %v514, 0.7853982
    %vm516 = vcmp.lt.s32.totalorder %v276, 0
    %v517 = vand.u32 %v276, 2139095040
    %v518 = vshrl.u32 %v517, 23
    %v519 = vsub.s32 %v518, 127
    %v520 = vand.u32 2147483647, %v276
    %v521 = vand.u32 %v520, 8388607
    %v522 = vor.u32 %v521, 8388608
    %v523 = vsub.s32 0, %v522
    %v524 = vadd.s32 %v519, 1
    %vm525 = vcmp.gt.s32.totalorder %v524, 0
    %v526 = vsel %vm525, %v524, 0
    %v527 = vshrl.u32 %v526, 5
    %v528 = vand.u32 %v526, 31
    %v529 = vsub.s32 32, %v528
    %v530 = vshrl.u32 683565275, %v529
    %v531 = vshll.u32 683565275, %v528
    %v532 = vshrl.u32 2475754826, %v529
    %v533 = vor.u32 %v531, %v532
    %v534 = vshll.u32 2475754826, %v528
    %v535 = vshrl.u32 2131351028, %v529
    %v536 = vor.u32 %v534, %v535
    %v537 = vshll.u32 2131351028, %v528
    %v538 = vshrl.u32 2102212464, %v529
    %v539 = vor.u32 %v537, %v538
    %v540 = vshll.u32 2102212464, %v528
    %v541 = vshrl.u32 920167782, %v529
    %v542 = vor.u32 %v540, %v541
    %v543 = vshll.u32 920167782, %v528
    %v544 = vshrl.u32 1326507024, %v529
    %v545 = vor.u32 %v543, %v544
    %vm546 = vcmp.lt.s32.totalorder %v527, 1
    %vm547 = vcmp.lt.s32.totalorder %v527, 2
    %vm548 = vcmp.lt.s32.totalorder %v527, 3
    %vm549 = vcmp.lt.s32.totalorder %v527, 4
    %v550 = vsel %vm546, %v530, %v533
    %v551 = vsel %vm549, %v539, 2102212464
    %v552 = vsel %vm548, %v536, %v551
    %v553 = vsel %vm547, %v550, %v552
    %v554 = vsel %vm546, %v533, %v536
    %v555 = vsel %vm549, %v542, 920167782
    %v556 = vsel %vm548, %v539, %v555
    %v557 = vsel %vm547, %v554, %v556
    %v558 = vsel %vm546, %v536, %v539
    %v559 = vsel %vm549, %v545, 1326507024
    %v560 = vsel %vm548, %v542, %v559
    %v561 = vsel %vm547, %v558, %v560
    %v562 = vshll.u32 %v522, 8
    %v563 = vmul.u32.u64.compose %v562, %v561
    %v564 = vextract.low.u32 %v563
    %v565 = vextract.high.u32 %v563
    %v566 = vmul.u32.u64.compose %v562, %v557
    %v567 = vextract.low.u32 %v566
    %v568 = vextract.high.u32 %v566
    %v569 = vmul.u32 %v562, %v553
    %v570 = vadd.s32 %v565, %v567
    %vm571 = vc.u32 %v565, %v567
    %v572 = vadd.s32 %v568, 1
    %v573 = vsel %vm571, %v572, %v568
    %v574 = vadd.s32 %v569, %v573
    %v575 = vadd.s32 %v574, 536870912
    %v576 = vshrl.u32 %v575, 30
    %v577 = vshll.u32 %v576, 30
    %v578 = vsub.s32 %v574, %v577
    %vm579 = vcmp.lt.s32.totalorder %v578, 0
    %v580 = vsub.s32 0, %v578
    %v581 = vsel %vm579, %v580, %v578
    %v582 = vclz %v581
    %v583 = vsub.s32 %v582, 2
    %vm584 = vcmp.gt.s32.totalorder 0, %v583
    %v585 = vsel %vm584, 0, %v583
    %v586 = vsub.s32 32, %v585
    %v587 = vshll.u32 %v578, %v585
    %v588 = vshrl.u32 %v570, %v586
    %v589 = vor.u32 %v587, %v588
    %v590 = vsub.s32 4294967266, %v585
    %v591 = vadd.s32 %v590, 127
    %v592 = vshll.u32 %v591, 23
    %v593 = vor.u32 4788187, %v592
    %v594 = vand.u32 2147483647, %v593
    %v596 = vcvt.s32.f32 %v589
    %v597 = vmul.f32 %v596, %v594
    %v598 = vxor.u32 %v597, 2147483648
    %v599 = vsel %vm516, %v598, %v597
    %v600 = vsub.s32 4, %v576
    %v601 = vsel %vm516, %v600, %v576
    %v602 = vsel %vm515, %v276, %v599
    %v603 = vsel %vm515, 0, %v601
    %v604 = vcosq.f32.pop %v602
    %v605 = vsinq.f32.pop %v602
    %vm606 = vweird.f32 %v276
    %v607 = vadd.s32 %v603, 3
    %v608 = vand.u32 %v607, 3
    %vm609 = vcmp.lt.s32.totalorder %v608, 2
    %vm610 = vcmp.eq.s32.totalorder %v608, 0
    %v611 = vxor.u32 %v605, 2147483648
    %v612 = vsel %vm610, %v604, %v611
    %vm613 = vcmp.eq.s32.totalorder %v608, 2
    %v614 = vxor.u32 %v604, 2147483648
    %v615 = vsel %vm613, %v614, %v605
    %v616 = vsel %vm609, %v612, %v615
    %v617 = vsel %vm606, nan, %v616
    %v618 = vand.u32 2147483647, %v277
    %vm619 = vcmp.le.f32.partialorder %v618, 0.7853982
    %vm620 = vcmp.lt.s32.totalorder %v277, 0
    %v621 = vand.u32 %v277, 2139095040
    %v622 = vshrl.u32 %v621, 23
    %v623 = vsub.s32 %v622, 127
    %v624 = vand.u32 2147483647, %v277
    %v625 = vand.u32 %v624, 8388607
    %v626 = vor.u32 %v625, 8388608
    %v627 = vsub.s32 0, %v626
    %v628 = vadd.s32 %v623, 1
    %vm629 = vcmp.gt.s32.totalorder %v628, 0
    %v630 = vsel %vm629, %v628, 0
    %v631 = vshrl.u32 %v630, 5
    %v632 = vand.u32 %v630, 31
    %v633 = vsub.s32 32, %v632
    %v634 = vshrl.u32 683565275, %v633
    %v635 = vshll.u32 683565275, %v632
    %v636 = vshrl.u32 2475754826, %v633
    %v637 = vor.u32 %v635, %v636
    %v638 = vshll.u32 2475754826, %v632
    %v639 = vshrl.u32 2131351028, %v633
    %v640 = vor.u32 %v638, %v639
    %v641 = vshll.u32 2131351028, %v632
    %v642 = vshrl.u32 2102212464, %v633
    %v643 = vor.u32 %v641, %v642
    %v644 = vshll.u32 2102212464, %v632
    %v645 = vshrl.u32 920167782, %v633
    %v646 = vor.u32 %v644, %v645
    %v647 = vshll.u32 920167782, %v632
    %v648 = vshrl.u32 1326507024, %v633
    %v649 = vor.u32 %v647, %v648
    %vm650 = vcmp.lt.s32.totalorder %v631, 1
    %vm651 = vcmp.lt.s32.totalorder %v631, 2
    %vm652 = vcmp.lt.s32.totalorder %v631, 3
    %vm653 = vcmp.lt.s32.totalorder %v631, 4
    %v654 = vsel %vm650, %v634, %v637
    %v655 = vsel %vm653, %v643, 2102212464
    %v656 = vsel %vm652, %v640, %v655
    %v657 = vsel %vm651, %v654, %v656
    %v658 = vsel %vm650, %v637, %v640
    %v659 = vsel %vm653, %v646, 920167782
    %v660 = vsel %vm652, %v643, %v659
    %v661 = vsel %vm651, %v658, %v660
    %v662 = vsel %vm650, %v640, %v643
    %v663 = vsel %vm653, %v649, 1326507024
    %v664 = vsel %vm652, %v646, %v663
    %v665 = vsel %vm651, %v662, %v664
    %v666 = vshll.u32 %v626, 8
    %v667 = vmul.u32.u64.compose %v666, %v665
    %v668 = vextract.low.u32 %v667
    %v669 = vextract.high.u32 %v667
    %v670 = vmul.u32.u64.compose %v666, %v661
    %v671 = vextract.low.u32 %v670
    %v672 = vextract.high.u32 %v670
    %v673 = vmul.u32 %v666, %v657
    %v674 = vadd.s32 %v669, %v671
    %vm675 = vc.u32 %v669, %v671
    %v676 = vadd.s32 %v672, 1
    %v677 = vsel %vm675, %v676, %v672
    %v678 = vadd.s32 %v673, %v677
    %v679 = vadd.s32 %v678, 536870912
    %v680 = vshrl.u32 %v679, 30
    %v681 = vshll.u32 %v680, 30
    %v682 = vsub.s32 %v678, %v681
    %vm683 = vcmp.lt.s32.totalorder %v682, 0
    %v684 = vsub.s32 0, %v682
    %v685 = vsel %vm683, %v684, %v682
    %v686 = vclz %v685
    %v687 = vsub.s32 %v686, 2
    %vm688 = vcmp.gt.s32.totalorder 0, %v687
    %v689 = vsel %vm688, 0, %v687
    %v690 = vsub.s32 32, %v689
    %v691 = vshll.u32 %v682, %v689
    %v692 = vshrl.u32 %v674, %v690
    %v693 = vor.u32 %v691, %v692
    %v694 = vsub.s32 4294967266, %v689
    %v695 = vadd.s32 %v694, 127
    %v696 = vshll.u32 %v695, 23
    %v697 = vor.u32 4788187, %v696
    %v698 = vand.u32 2147483647, %v697
    %v700 = vcvt.s32.f32 %v693
    %v701 = vmul.f32 %v700, %v698
    %v702 = vxor.u32 %v701, 2147483648
    %v703 = vsel %vm620, %v702, %v701
    %v704 = vsub.s32 4, %v680
    %v705 = vsel %vm620, %v704, %v680
    %v706 = vsel %vm619, %v277, %v703
    %v707 = vsel %vm619, 0, %v705
    %v708 = vcosq.f32.pop %v706
    %v709 = vsinq.f32.pop %v706
    %vm710 = vweird.f32 %v277
    %v711 = vadd.s32 %v707, 3
    %v712 = vand.u32 %v711, 3
    %vm713 = vcmp.lt.s32.totalorder %v712, 2
    %vm714 = vcmp.eq.s32.totalorder %v712, 0
    %v715 = vxor.u32 %v709, 2147483648
    %v716 = vsel %vm714, %v708, %v715
    %vm717 = vcmp.eq.s32.totalorder %v712, 2
    %v718 = vxor.u32 %v708, 2147483648
    %v719 = vsel %vm717, %v718, %v709
    %v720 = vsel %vm713, %v716, %v719
    %v721 = vsel %vm710, nan, %v720
    %v722 = vand.u32 2147483647, %v278
    %vm723 = vcmp.le.f32.partialorder %v722, 0.7853982
    %vm724 = vcmp.lt.s32.totalorder %v278, 0
    %v725 = vand.u32 %v278, 2139095040
    %v726 = vshrl.u32 %v725, 23
    %v727 = vsub.s32 %v726, 127
    %v728 = vand.u32 2147483647, %v278
    %v729 = vand.u32 %v728, 8388607
    %v730 = vor.u32 %v729, 8388608
    %v731 = vsub.s32 0, %v730
    %v732 = vadd.s32 %v727, 1
    %vm733 = vcmp.gt.s32.totalorder %v732, 0
    %v734 = vsel %vm733, %v732, 0
    %v735 = vshrl.u32 %v734, 5
    %v736 = vand.u32 %v734, 31
    %v737 = vsub.s32 32, %v736
    %v738 = vshrl.u32 683565275, %v737
    %v739 = vshll.u32 683565275, %v736
    %v740 = vshrl.u32 2475754826, %v737
    %v741 = vor.u32 %v739, %v740
    %v742 = vshll.u32 2475754826, %v736
    %v743 = vshrl.u32 2131351028, %v737
    %v744 = vor.u32 %v742, %v743
    %v745 = vshll.u32 2131351028, %v736
    %v746 = vshrl.u32 2102212464, %v737
    %v747 = vor.u32 %v745, %v746
    %v748 = vshll.u32 2102212464, %v736
    %v749 = vshrl.u32 920167782, %v737
    %v750 = vor.u32 %v748, %v749
    %v751 = vshll.u32 920167782, %v736
    %v752 = vshrl.u32 1326507024, %v737
    %v753 = vor.u32 %v751, %v752
    %vm754 = vcmp.lt.s32.totalorder %v735, 1
    %vm755 = vcmp.lt.s32.totalorder %v735, 2
    %vm756 = vcmp.lt.s32.totalorder %v735, 3
    %vm757 = vcmp.lt.s32.totalorder %v735, 4
    %v758 = vsel %vm754, %v738, %v741
    %v759 = vsel %vm757, %v747, 2102212464
    %v760 = vsel %vm756, %v744, %v759
    %v761 = vsel %vm755, %v758, %v760
    %v762 = vsel %vm754, %v741, %v744
    %v763 = vsel %vm757, %v750, 920167782
    %v764 = vsel %vm756, %v747, %v763
    %v765 = vsel %vm755, %v762, %v764
    %v766 = vsel %vm754, %v744, %v747
    %v767 = vsel %vm757, %v753, 1326507024
    %v768 = vsel %vm756, %v750, %v767
    %v769 = vsel %vm755, %v766, %v768
    %v770 = vshll.u32 %v730, 8
    %v771 = vmul.u32.u64.compose %v770, %v769
    %v772 = vextract.low.u32 %v771
    %v773 = vextract.high.u32 %v771
    %v774 = vmul.u32.u64.compose %v770, %v765
    %v775 = vextract.low.u32 %v774
    %v776 = vextract.high.u32 %v774
    %v777 = vmul.u32 %v770, %v761
    %v778 = vadd.s32 %v773, %v775
    %vm779 = vc.u32 %v773, %v775
    %v780 = vadd.s32 %v776, 1
    %v781 = vsel %vm779, %v780, %v776
    %v782 = vadd.s32 %v777, %v781
    %v783 = vadd.s32 %v782, 536870912
    %v784 = vshrl.u32 %v783, 30
    %v785 = vshll.u32 %v784, 30
    %v786 = vsub.s32 %v782, %v785
    %vm787 = vcmp.lt.s32.totalorder %v786, 0
    %v788 = vsub.s32 0, %v786
    %v789 = vsel %vm787, %v788, %v786
    %v790 = vclz %v789
    %v791 = vsub.s32 %v790, 2
    %vm792 = vcmp.gt.s32.totalorder 0, %v791
    %v793 = vsel %vm792, 0, %v791
    %v794 = vsub.s32 32, %v793
    %v795 = vshll.u32 %v786, %v793
    %v796 = vshrl.u32 %v778, %v794
    %v797 = vor.u32 %v795, %v796
    %v798 = vsub.s32 4294967266, %v793
    %v799 = vadd.s32 %v798, 127
    %v800 = vshll.u32 %v799, 23
    %v801 = vor.u32 4788187, %v800
    %v802 = vand.u32 2147483647, %v801
    %v804 = vcvt.s32.f32 %v797
    %v805 = vmul.f32 %v804, %v802
    %v806 = vxor.u32 %v805, 2147483648
    %v807 = vsel %vm724, %v806, %v805
    %v808 = vsub.s32 4, %v784
    %v809 = vsel %vm724, %v808, %v784
    %v810 = vsel %vm723, %v278, %v807
    %v811 = vsel %vm723, 0, %v809
    %v812 = vcosq.f32.pop %v810
    %v813 = vsinq.f32.pop %v810
    %vm814 = vweird.f32 %v278
    %v815 = vadd.s32 %v811, 3
    %v816 = vand.u32 %v815, 3
    %vm817 = vcmp.lt.s32.totalorder %v816, 2
    %vm818 = vcmp.eq.s32.totalorder %v816, 0
    %v819 = vxor.u32 %v813, 2147483648
    %v820 = vsel %vm818, %v812, %v819
    %vm821 = vcmp.eq.s32.totalorder %v816, 2
    %v822 = vxor.u32 %v812, 2147483648
    %v823 = vsel %vm821, %v822, %v813
    %v824 = vsel %vm817, %v820, %v823
    %v825 = vsel %vm814, nan, %v824
    %v826 = vand.u32 2147483647, %v279
    %vm827 = vcmp.le.f32.partialorder %v826, 0.7853982
    %vm828 = vcmp.lt.s32.totalorder %v279, 0
    %v829 = vand.u32 %v279, 2139095040
    %v830 = vshrl.u32 %v829, 23
    %v831 = vsub.s32 %v830, 127
    %v832 = vand.u32 2147483647, %v279
    %v833 = vand.u32 %v832, 8388607
    %v834 = vor.u32 %v833, 8388608
    %v835 = vsub.s32 0, %v834
    %v836 = vadd.s32 %v831, 1
    %vm837 = vcmp.gt.s32.totalorder %v836, 0
    %v838 = vsel %vm837, %v836, 0
    %v839 = vshrl.u32 %v838, 5
    %v840 = vand.u32 %v838, 31
    %v841 = vsub.s32 32, %v840
    %v842 = vshrl.u32 683565275, %v841
    %v843 = vshll.u32 683565275, %v840
    %v844 = vshrl.u32 2475754826, %v841
    %v845 = vor.u32 %v843, %v844
    %v846 = vshll.u32 2475754826, %v840
    %v847 = vshrl.u32 2131351028, %v841
    %v848 = vor.u32 %v846, %v847
    %v849 = vshll.u32 2131351028, %v840
    %v850 = vshrl.u32 2102212464, %v841
    %v851 = vor.u32 %v849, %v850
    %v852 = vshll.u32 2102212464, %v840
    %v853 = vshrl.u32 920167782, %v841
    %v854 = vor.u32 %v852, %v853
    %v855 = vshll.u32 920167782, %v840
    %v856 = vshrl.u32 1326507024, %v841
    %v857 = vor.u32 %v855, %v856
    %vm858 = vcmp.lt.s32.totalorder %v839, 1
    %vm859 = vcmp.lt.s32.totalorder %v839, 2
    %vm860 = vcmp.lt.s32.totalorder %v839, 3
    %vm861 = vcmp.lt.s32.totalorder %v839, 4
    %v862 = vsel %vm858, %v842, %v845
    %v863 = vsel %vm861, %v851, 2102212464
    %v864 = vsel %vm860, %v848, %v863
    %v865 = vsel %vm859, %v862, %v864
    %v866 = vsel %vm858, %v845, %v848
    %v867 = vsel %vm861, %v854, 920167782
    %v868 = vsel %vm860, %v851, %v867
    %v869 = vsel %vm859, %v866, %v868
    %v870 = vsel %vm858, %v848, %v851
    %v871 = vsel %vm861, %v857, 1326507024
    %v872 = vsel %vm860, %v854, %v871
    %v873 = vsel %vm859, %v870, %v872
    %v874 = vshll.u32 %v834, 8
    %v875 = vmul.u32.u64.compose %v874, %v873
    %v876 = vextract.low.u32 %v875
    %v877 = vextract.high.u32 %v875
    %v878 = vmul.u32.u64.compose %v874, %v869
    %v879 = vextract.low.u32 %v878
    %v880 = vextract.high.u32 %v878
    %v881 = vmul.u32 %v874, %v865
    %v882 = vadd.s32 %v877, %v879
    %vm883 = vc.u32 %v877, %v879
    %v884 = vadd.s32 %v880, 1
    %v885 = vsel %vm883, %v884, %v880
    %v886 = vadd.s32 %v881, %v885
    %v887 = vadd.s32 %v886, 536870912
    %v888 = vshrl.u32 %v887, 30
    %v889 = vshll.u32 %v888, 30
    %v890 = vsub.s32 %v886, %v889
    %vm891 = vcmp.lt.s32.totalorder %v890, 0
    %v892 = vsub.s32 0, %v890
    %v893 = vsel %vm891, %v892, %v890
    %v894 = vclz %v893
    %v895 = vsub.s32 %v894, 2
    %vm896 = vcmp.gt.s32.totalorder 0, %v895
    %v897 = vsel %vm896, 0, %v895
    %v898 = vsub.s32 32, %v897
    %v899 = vshll.u32 %v890, %v897
    %v900 = vshrl.u32 %v882, %v898
    %v901 = vor.u32 %v899, %v900
    %v902 = vsub.s32 4294967266, %v897
    %v903 = vadd.s32 %v902, 127
    %v904 = vshll.u32 %v903, 23
    %v905 = vor.u32 4788187, %v904
    %v906 = vand.u32 2147483647, %v905
    %v908 = vcvt.s32.f32 %v901
    %v909 = vmul.f32 %v908, %v906
    %v910 = vxor.u32 %v909, 2147483648
    %v911 = vsel %vm828, %v910, %v909
    %v912 = vsub.s32 4, %v888
    %v913 = vsel %vm828, %v912, %v888
    %v914 = vsel %vm827, %v279, %v911
    %v915 = vsel %vm827, 0, %v913
    %v916 = vcosq.f32.pop %v914
    %v917 = vsinq.f32.pop %v914
    %vm918 = vweird.f32 %v279
    %v919 = vadd.s32 %v915, 3
    %v920 = vand.u32 %v919, 3
    %vm921 = vcmp.lt.s32.totalorder %v920, 2
    %vm922 = vcmp.eq.s32.totalorder %v920, 0
    %v923 = vxor.u32 %v917, 2147483648
    %v924 = vsel %vm922, %v916, %v923
    %vm925 = vcmp.eq.s32.totalorder %v920, 2
    %v926 = vxor.u32 %v916, 2147483648
    %v927 = vsel %vm925, %v926, %v917
    %v928 = vsel %vm921, %v924, %v927
    %v929 = vsel %vm918, nan, %v928
    %v930 = vand.u32 2147483647, %v280
    %vm931 = vcmp.le.f32.partialorder %v930, 0.7853982
    %vm932 = vcmp.lt.s32.totalorder %v280, 0
    %v933 = vand.u32 %v280, 2139095040
    %v934 = vshrl.u32 %v933, 23
    %v935 = vsub.s32 %v934, 127
    %v936 = vand.u32 2147483647, %v280
    %v937 = vand.u32 %v936, 8388607
    %v938 = vor.u32 %v937, 8388608
    %v939 = vsub.s32 0, %v938
    %v940 = vadd.s32 %v935, 1
    %vm941 = vcmp.gt.s32.totalorder %v940, 0
    %v942 = vsel %vm941, %v940, 0
    %v943 = vshrl.u32 %v942, 5
    %v944 = vand.u32 %v942, 31
    %v945 = vsub.s32 32, %v944
    %v946 = vshrl.u32 683565275, %v945
    %v947 = vshll.u32 683565275, %v944
    %v948 = vshrl.u32 2475754826, %v945
    %v949 = vor.u32 %v947, %v948
    %v950 = vshll.u32 2475754826, %v944
    %v951 = vshrl.u32 2131351028, %v945
    %v952 = vor.u32 %v950, %v951
    %v953 = vshll.u32 2131351028, %v944
    %v954 = vshrl.u32 2102212464, %v945
    %v955 = vor.u32 %v953, %v954
    %v956 = vshll.u32 2102212464, %v944
    %v957 = vshrl.u32 920167782, %v945
    %v958 = vor.u32 %v956, %v957
    %v959 = vshll.u32 920167782, %v944
    %v960 = vshrl.u32 1326507024, %v945
    %v961 = vor.u32 %v959, %v960
    %vm962 = vcmp.lt.s32.totalorder %v943, 1
    %vm963 = vcmp.lt.s32.totalorder %v943, 2
    %vm964 = vcmp.lt.s32.totalorder %v943, 3
    %vm965 = vcmp.lt.s32.totalorder %v943, 4
    %v966 = vsel %vm962, %v946, %v949
    %v967 = vsel %vm965, %v955, 2102212464
    %v968 = vsel %vm964, %v952, %v967
    %v969 = vsel %vm963, %v966, %v968
    %v970 = vsel %vm962, %v949, %v952
    %v971 = vsel %vm965, %v958, 920167782
    %v972 = vsel %vm964, %v955, %v971
    %v973 = vsel %vm963, %v970, %v972
    %v974 = vsel %vm962, %v952, %v955
    %v975 = vsel %vm965, %v961, 1326507024
    %v976 = vsel %vm964, %v958, %v975
    %v977 = vsel %vm963, %v974, %v976
    %v978 = vshll.u32 %v938, 8
    %v979 = vmul.u32.u64.compose %v978, %v977
    %v980 = vextract.low.u32 %v979
    %v981 = vextract.high.u32 %v979
    %v982 = vmul.u32.u64.compose %v978, %v973
    %v983 = vextract.low.u32 %v982
    %v984 = vextract.high.u32 %v982
    %v985 = vmul.u32 %v978, %v969
    %v986 = vadd.s32 %v981, %v983
    %vm987 = vc.u32 %v981, %v983
    %v988 = vadd.s32 %v984, 1
    %v989 = vsel %vm987, %v988, %v984
    %v990 = vadd.s32 %v985, %v989
    %v991 = vadd.s32 %v990, 536870912
    %v992 = vshrl.u32 %v991, 30
    %v993 = vshll.u32 %v992, 30
    %v994 = vsub.s32 %v990, %v993
    %vm995 = vcmp.lt.s32.totalorder %v994, 0
    %v996 = vsub.s32 0, %v994
    %v997 = vsel %vm995, %v996, %v994
    %v998 = vclz %v997
    %v999 = vsub.s32 %v998, 2
    %vm1000 = vcmp.gt.s32.totalorder 0, %v999
    %v1001 = vsel %vm1000, 0, %v999
    %v1002 = vsub.s32 32, %v1001
    %v1003 = vshll.u32 %v994, %v1001
    %v1004 = vshrl.u32 %v986, %v1002
    %v1005 = vor.u32 %v1003, %v1004
    %v1006 = vsub.s32 4294967266, %v1001
    %v1007 = vadd.s32 %v1006, 127
    %v1008 = vshll.u32 %v1007, 23
    %v1009 = vor.u32 4788187, %v1008
    %v1010 = vand.u32 2147483647, %v1009
    %v1012 = vcvt.s32.f32 %v1005
    %v1013 = vmul.f32 %v1012, %v1010
    %v1014 = vxor.u32 %v1013, 2147483648
    %v1015 = vsel %vm932, %v1014, %v1013
    %v1016 = vsub.s32 4, %v992
    %v1017 = vsel %vm932, %v1016, %v992
    %v1018 = vsel %vm931, %v280, %v1015
    %v1019 = vsel %vm931, 0, %v1017
    %v1020 = vcosq.f32.pop %v1018
    %v1021 = vsinq.f32.pop %v1018
    %vm1022 = vweird.f32 %v280
    %v1023 = vadd.s32 %v1019, 3
    %v1024 = vand.u32 %v1023, 3
    %vm1025 = vcmp.lt.s32.totalorder %v1024, 2
    %vm1026 = vcmp.eq.s32.totalorder %v1024, 0
    %v1027 = vxor.u32 %v1021, 2147483648
    %v1028 = vsel %vm1026, %v1020, %v1027
    %vm1029 = vcmp.eq.s32.totalorder %v1024, 2
    %v1030 = vxor.u32 %v1020, 2147483648
    %v1031 = vsel %vm1029, %v1030, %v1021
    %v1032 = vsel %vm1025, %v1028, %v1031
    %v1033 = vsel %vm1022, nan, %v1032
    %v1034 = vand.u32 2147483647, %v281
    %vm1035 = vcmp.le.f32.partialorder %v1034, 0.7853982
    %vm1036 = vcmp.lt.s32.totalorder %v281, 0
    %v1037 = vand.u32 %v281, 2139095040
    %v1038 = vshrl.u32 %v1037, 23
    %v1039 = vsub.s32 %v1038, 127
    %v1040 = vand.u32 2147483647, %v281
    %v1041 = vand.u32 %v1040, 8388607
    %v1042 = vor.u32 %v1041, 8388608
    %v1043 = vsub.s32 0, %v1042
    %v1044 = vadd.s32 %v1039, 1
    %vm1045 = vcmp.gt.s32.totalorder %v1044, 0
    %v1046 = vsel %vm1045, %v1044, 0
    %v1047 = vshrl.u32 %v1046, 5
    %v1048 = vand.u32 %v1046, 31
    %v1049 = vsub.s32 32, %v1048
    %v1050 = vshrl.u32 683565275, %v1049
    %v1051 = vshll.u32 683565275, %v1048
    %v1052 = vshrl.u32 2475754826, %v1049
    %v1053 = vor.u32 %v1051, %v1052
    %v1054 = vshll.u32 2475754826, %v1048
    %v1055 = vshrl.u32 2131351028, %v1049
    %v1056 = vor.u32 %v1054, %v1055
    %v1057 = vshll.u32 2131351028, %v1048
    %v1058 = vshrl.u32 2102212464, %v1049
    %v1059 = vor.u32 %v1057, %v1058
    %v1060 = vshll.u32 2102212464, %v1048
    %v1061 = vshrl.u32 920167782, %v1049
    %v1062 = vor.u32 %v1060, %v1061
    %v1063 = vshll.u32 920167782, %v1048
    %v1064 = vshrl.u32 1326507024, %v1049
    %v1065 = vor.u32 %v1063, %v1064
    %vm1066 = vcmp.lt.s32.totalorder %v1047, 1
    %vm1067 = vcmp.lt.s32.totalorder %v1047, 2
    %vm1068 = vcmp.lt.s32.totalorder %v1047, 3
    %vm1069 = vcmp.lt.s32.totalorder %v1047, 4
    %v1070 = vsel %vm1066, %v1050, %v1053
    %v1071 = vsel %vm1069, %v1059, 2102212464
    %v1072 = vsel %vm1068, %v1056, %v1071
    %v1073 = vsel %vm1067, %v1070, %v1072
    %v1074 = vsel %vm1066, %v1053, %v1056
    %v1075 = vsel %vm1069, %v1062, 920167782
    %v1076 = vsel %vm1068, %v1059, %v1075
    %v1077 = vsel %vm1067, %v1074, %v1076
    %v1078 = vsel %vm1066, %v1056, %v1059
    %v1079 = vsel %vm1069, %v1065, 1326507024
    %v1080 = vsel %vm1068, %v1062, %v1079
    %v1081 = vsel %vm1067, %v1078, %v1080
    %v1082 = vshll.u32 %v1042, 8
    %v1083 = vmul.u32.u64.compose %v1082, %v1081
    %v1084 = vextract.low.u32 %v1083
    %v1085 = vextract.high.u32 %v1083
    %v1086 = vmul.u32.u64.compose %v1082, %v1077
    %v1087 = vextract.low.u32 %v1086
    %v1088 = vextract.high.u32 %v1086
    %v1089 = vmul.u32 %v1082, %v1073
    %v1090 = vadd.s32 %v1085, %v1087
    %vm1091 = vc.u32 %v1085, %v1087
    %v1092 = vadd.s32 %v1088, 1
    %v1093 = vsel %vm1091, %v1092, %v1088
    %v1094 = vadd.s32 %v1089, %v1093
    %v1095 = vadd.s32 %v1094, 536870912
    %v1096 = vshrl.u32 %v1095, 30
    %v1097 = vshll.u32 %v1096, 30
    %v1098 = vsub.s32 %v1094, %v1097
    %vm1099 = vcmp.lt.s32.totalorder %v1098, 0
    %v1100 = vsub.s32 0, %v1098
    %v1101 = vsel %vm1099, %v1100, %v1098
    %v1102 = vclz %v1101
    %v1103 = vsub.s32 %v1102, 2
    %vm1104 = vcmp.gt.s32.totalorder 0, %v1103
    %v1105 = vsel %vm1104, 0, %v1103
    %v1106 = vsub.s32 32, %v1105
    %v1107 = vshll.u32 %v1098, %v1105
    %v1108 = vshrl.u32 %v1090, %v1106
    %v1109 = vor.u32 %v1107, %v1108
    %v1110 = vsub.s32 4294967266, %v1105
    %v1111 = vadd.s32 %v1110, 127
    %v1112 = vshll.u32 %v1111, 23
    %v1113 = vor.u32 4788187, %v1112
    %v1114 = vand.u32 2147483647, %v1113
    %v1116 = vcvt.s32.f32 %v1109
    %v1117 = vmul.f32 %v1116, %v1114
    %v1118 = vxor.u32 %v1117, 2147483648
    %v1119 = vsel %vm1036, %v1118, %v1117
    %v1120 = vsub.s32 4, %v1096
    %v1121 = vsel %vm1036, %v1120, %v1096
    %v1122 = vsel %vm1035, %v281, %v1119
    %v1123 = vsel %vm1035, 0, %v1121
    %v1124 = vcosq.f32.pop %v1122
    %v1125 = vsinq.f32.pop %v1122
    %vm1126 = vweird.f32 %v281
    %v1127 = vadd.s32 %v1123, 3
    %v1128 = vand.u32 %v1127, 3
    %vm1129 = vcmp.lt.s32.totalorder %v1128, 2
    %vm1130 = vcmp.eq.s32.totalorder %v1128, 0
    %v1131 = vxor.u32 %v1125, 2147483648
    %v1132 = vsel %vm1130, %v1124, %v1131
    %vm1133 = vcmp.eq.s32.totalorder %v1128, 2
    %v1134 = vxor.u32 %v1124, 2147483648
    %v1135 = vsel %vm1133, %v1134, %v1125
    %v1136 = vsel %vm1129, %v1132, %v1135
    %v1137 = vsel %vm1126, nan, %v1136
    %v1138 = vand.u32 2147483647, %v282
    %vm1139 = vcmp.le.f32.partialorder %v1138, 0.7853982
    %vm1140 = vcmp.lt.s32.totalorder %v282, 0
    %v1141 = vand.u32 %v282, 2139095040
    %v1142 = vshrl.u32 %v1141, 23
    %v1143 = vsub.s32 %v1142, 127
    %v1144 = vand.u32 2147483647, %v282
    %v1145 = vand.u32 %v1144, 8388607
    %v1146 = vor.u32 %v1145, 8388608
    %v1147 = vsub.s32 0, %v1146
    %v1148 = vadd.s32 %v1143, 1
    %vm1149 = vcmp.gt.s32.totalorder %v1148, 0
    %v1150 = vsel %vm1149, %v1148, 0
    %v1151 = vshrl.u32 %v1150, 5
    %v1152 = vand.u32 %v1150, 31
    %v1153 = vsub.s32 32, %v1152
    %v1154 = vshrl.u32 683565275, %v1153
    %v1155 = vshll.u32 683565275, %v1152
    %v1156 = vshrl.u32 2475754826, %v1153
    %v1157 = vor.u32 %v1155, %v1156
    %v1158 = vshll.u32 2475754826, %v1152
    %v1159 = vshrl.u32 2131351028, %v1153
    %v1160 = vor.u32 %v1158, %v1159
    %v1161 = vshll.u32 2131351028, %v1152
    %v1162 = vshrl.u32 2102212464, %v1153
    %v1163 = vor.u32 %v1161, %v1162
    %v1164 = vshll.u32 2102212464, %v1152
    %v1165 = vshrl.u32 920167782, %v1153
    %v1166 = vor.u32 %v1164, %v1165
    %v1167 = vshll.u32 920167782, %v1152
    %v1168 = vshrl.u32 1326507024, %v1153
    %v1169 = vor.u32 %v1167, %v1168
    %vm1170 = vcmp.lt.s32.totalorder %v1151, 1
    %vm1171 = vcmp.lt.s32.totalorder %v1151, 2
    %vm1172 = vcmp.lt.s32.totalorder %v1151, 3
    %vm1173 = vcmp.lt.s32.totalorder %v1151, 4
    %v1174 = vsel %vm1170, %v1154, %v1157
    %v1175 = vsel %vm1173, %v1163, 2102212464
    %v1176 = vsel %vm1172, %v1160, %v1175
    %v1177 = vsel %vm1171, %v1174, %v1176
    %v1178 = vsel %vm1170, %v1157, %v1160
    %v1179 = vsel %vm1173, %v1166, 920167782
    %v1180 = vsel %vm1172, %v1163, %v1179
    %v1181 = vsel %vm1171, %v1178, %v1180
    %v1182 = vsel %vm1170, %v1160, %v1163
    %v1183 = vsel %vm1173, %v1169, 1326507024
    %v1184 = vsel %vm1172, %v1166, %v1183
    %v1185 = vsel %vm1171, %v1182, %v1184
    %v1186 = vshll.u32 %v1146, 8
    %v1187 = vmul.u32.u64.compose %v1186, %v1185
    %v1188 = vextract.low.u32 %v1187
    %v1189 = vextract.high.u32 %v1187
    %v1190 = vmul.u32.u64.compose %v1186, %v1181
    %v1191 = vextract.low.u32 %v1190
    %v1192 = vextract.high.u32 %v1190
    %v1193 = vmul.u32 %v1186, %v1177
    %v1194 = vadd.s32 %v1189, %v1191
    %vm1195 = vc.u32 %v1189, %v1191
    %v1196 = vadd.s32 %v1192, 1
    %v1197 = vsel %vm1195, %v1196, %v1192
    %v1198 = vadd.s32 %v1193, %v1197
    %v1199 = vadd.s32 %v1198, 536870912
    %v1200 = vshrl.u32 %v1199, 30
    %v1201 = vshll.u32 %v1200, 30
    %v1202 = vsub.s32 %v1198, %v1201
    %vm1203 = vcmp.lt.s32.totalorder %v1202, 0
    %v1204 = vsub.s32 0, %v1202
    %v1205 = vsel %vm1203, %v1204, %v1202
    %v1206 = vclz %v1205
    %v1207 = vsub.s32 %v1206, 2
    %vm1208 = vcmp.gt.s32.totalorder 0, %v1207
    %v1209 = vsel %vm1208, 0, %v1207
    %v1210 = vsub.s32 32, %v1209
    %v1211 = vshll.u32 %v1202, %v1209
    %v1212 = vshrl.u32 %v1194, %v1210
    %v1213 = vor.u32 %v1211, %v1212
    %v1214 = vsub.s32 4294967266, %v1209
    %v1215 = vadd.s32 %v1214, 127
    %v1216 = vshll.u32 %v1215, 23
    %v1217 = vor.u32 4788187, %v1216
    %v1218 = vand.u32 2147483647, %v1217
    %v1220 = vcvt.s32.f32 %v1213
    %v1221 = vmul.f32 %v1220, %v1218
    %v1222 = vxor.u32 %v1221, 2147483648
    %v1223 = vsel %vm1140, %v1222, %v1221
    %v1224 = vsub.s32 4, %v1200
    %v1225 = vsel %vm1140, %v1224, %v1200
    %v1226 = vsel %vm1139, %v282, %v1223
    %v1227 = vsel %vm1139, 0, %v1225
    %v1228 = vcosq.f32.pop %v1226
    %v1229 = vsinq.f32.pop %v1226
    %vm1230 = vweird.f32 %v282
    %v1231 = vadd.s32 %v1227, 3
    %v1232 = vand.u32 %v1231, 3
    %vm1233 = vcmp.lt.s32.totalorder %v1232, 2
    %vm1234 = vcmp.eq.s32.totalorder %v1232, 0
    %v1235 = vxor.u32 %v1229, 2147483648
    %v1236 = vsel %vm1234, %v1228, %v1235
    %vm1237 = vcmp.eq.s32.totalorder %v1232, 2
    %v1238 = vxor.u32 %v1228, 2147483648
    %v1239 = vsel %vm1237, %v1238, %v1229
    %v1240 = vsel %vm1233, %v1236, %v1239
    %v1241 = vsel %vm1230, nan, %v1240
    %v1242 = vand.u32 2147483647, %v283
    %vm1243 = vcmp.le.f32.partialorder %v1242, 0.7853982
    %vm1244 = vcmp.lt.s32.totalorder %v283, 0
    %v1245 = vand.u32 %v283, 2139095040
    %v1246 = vshrl.u32 %v1245, 23
    %v1247 = vsub.s32 %v1246, 127
    %v1248 = vand.u32 2147483647, %v283
    %v1249 = vand.u32 %v1248, 8388607
    %v1250 = vor.u32 %v1249, 8388608
    %v1251 = vsub.s32 0, %v1250
    %v1252 = vadd.s32 %v1247, 1
    %vm1253 = vcmp.gt.s32.totalorder %v1252, 0
    %v1254 = vsel %vm1253, %v1252, 0
    %v1255 = vshrl.u32 %v1254, 5
    %v1256 = vand.u32 %v1254, 31
    %v1257 = vsub.s32 32, %v1256
    %v1258 = vshrl.u32 683565275, %v1257
    %v1259 = vshll.u32 683565275, %v1256
    %v1260 = vshrl.u32 2475754826, %v1257
    %v1261 = vor.u32 %v1259, %v1260
    %v1262 = vshll.u32 2475754826, %v1256
    %v1263 = vshrl.u32 2131351028, %v1257
    %v1264 = vor.u32 %v1262, %v1263
    %v1265 = vshll.u32 2131351028, %v1256
    %v1266 = vshrl.u32 2102212464, %v1257
    %v1267 = vor.u32 %v1265, %v1266
    %v1268 = vshll.u32 2102212464, %v1256
    %v1269 = vshrl.u32 920167782, %v1257
    %v1270 = vor.u32 %v1268, %v1269
    %v1271 = vshll.u32 920167782, %v1256
    %v1272 = vshrl.u32 1326507024, %v1257
    %v1273 = vor.u32 %v1271, %v1272
    %vm1274 = vcmp.lt.s32.totalorder %v1255, 1
    %vm1275 = vcmp.lt.s32.totalorder %v1255, 2
    %vm1276 = vcmp.lt.s32.totalorder %v1255, 3
    %vm1277 = vcmp.lt.s32.totalorder %v1255, 4
    %v1278 = vsel %vm1274, %v1258, %v1261
    %v1279 = vsel %vm1277, %v1267, 2102212464
    %v1280 = vsel %vm1276, %v1264, %v1279
    %v1281 = vsel %vm1275, %v1278, %v1280
    %v1282 = vsel %vm1274, %v1261, %v1264
    %v1283 = vsel %vm1277, %v1270, 920167782
    %v1284 = vsel %vm1276, %v1267, %v1283
    %v1285 = vsel %vm1275, %v1282, %v1284
    %v1286 = vsel %vm1274, %v1264, %v1267
    %v1287 = vsel %vm1277, %v1273, 1326507024
    %v1288 = vsel %vm1276, %v1270, %v1287
    %v1289 = vsel %vm1275, %v1286, %v1288
    %v1290 = vshll.u32 %v1250, 8
    %v1291 = vmul.u32.u64.compose %v1290, %v1289
    %v1292 = vextract.low.u32 %v1291
    %v1293 = vextract.high.u32 %v1291
    %v1294 = vmul.u32.u64.compose %v1290, %v1285
    %v1295 = vextract.low.u32 %v1294
    %v1296 = vextract.high.u32 %v1294
    %v1297 = vmul.u32 %v1290, %v1281
    %v1298 = vadd.s32 %v1293, %v1295
    %vm1299 = vc.u32 %v1293, %v1295
    %v1300 = vadd.s32 %v1296, 1
    %v1301 = vsel %vm1299, %v1300, %v1296
    %v1302 = vadd.s32 %v1297, %v1301
    %v1303 = vadd.s32 %v1302, 536870912
    %v1304 = vshrl.u32 %v1303, 30
    %v1305 = vshll.u32 %v1304, 30
    %v1306 = vsub.s32 %v1302, %v1305
    %vm1307 = vcmp.lt.s32.totalorder %v1306, 0
    %v1308 = vsub.s32 0, %v1306
    %v1309 = vsel %vm1307, %v1308, %v1306
    %v1310 = vclz %v1309
    %v1311 = vsub.s32 %v1310, 2
    %vm1312 = vcmp.gt.s32.totalorder 0, %v1311
    %v1313 = vsel %vm1312, 0, %v1311
    %v1314 = vsub.s32 32, %v1313
    %v1315 = vshll.u32 %v1306, %v1313
    %v1316 = vshrl.u32 %v1298, %v1314
    %v1317 = vor.u32 %v1315, %v1316
    %v1318 = vsub.s32 4294967266, %v1313
    %v1319 = vadd.s32 %v1318, 127
    %v1320 = vshll.u32 %v1319, 23
    %v1321 = vor.u32 4788187, %v1320
    %v1322 = vand.u32 2147483647, %v1321
    %v1324 = vcvt.s32.f32 %v1317
    %v1325 = vmul.f32 %v1324, %v1322
    %v1326 = vxor.u32 %v1325, 2147483648
    %v1327 = vsel %vm1244, %v1326, %v1325
    %v1328 = vsub.s32 4, %v1304
    %v1329 = vsel %vm1244, %v1328, %v1304
    %v1330 = vsel %vm1243, %v283, %v1327
    %v1331 = vsel %vm1243, 0, %v1329
    %v1332 = vcosq.f32.pop %v1330
    %v1333 = vsinq.f32.pop %v1330
    %vm1334 = vweird.f32 %v283
    %v1335 = vadd.s32 %v1331, 3
    %v1336 = vand.u32 %v1335, 3
    %vm1337 = vcmp.lt.s32.totalorder %v1336, 2
    %vm1338 = vcmp.eq.s32.totalorder %v1336, 0
    %v1339 = vxor.u32 %v1333, 2147483648
    %v1340 = vsel %vm1338, %v1332, %v1339
    %vm1341 = vcmp.eq.s32.totalorder %v1336, 2
    %v1342 = vxor.u32 %v1332, 2147483648
    %v1343 = vsel %vm1341, %v1342, %v1333
    %v1344 = vsel %vm1337, %v1340, %v1343
    %v1345 = vsel %vm1334, nan, %v1344
    %v1346 = vand.u32 2147483647, %v284
    %vm1347 = vcmp.le.f32.partialorder %v1346, 0.7853982
    %vm1348 = vcmp.lt.s32.totalorder %v284, 0
    %v1349 = vand.u32 %v284, 2139095040
    %v1350 = vshrl.u32 %v1349, 23
    %v1351 = vsub.s32 %v1350, 127
    %v1352 = vand.u32 2147483647, %v284
    %v1353 = vand.u32 %v1352, 8388607
    %v1354 = vor.u32 %v1353, 8388608
    %v1355 = vsub.s32 0, %v1354
    %v1356 = vadd.s32 %v1351, 1
    %vm1357 = vcmp.gt.s32.totalorder %v1356, 0
    %v1358 = vsel %vm1357, %v1356, 0
    %v1359 = vshrl.u32 %v1358, 5
    %v1360 = vand.u32 %v1358, 31
    %v1361 = vsub.s32 32, %v1360
    %v1362 = vshrl.u32 683565275, %v1361
    %v1363 = vshll.u32 683565275, %v1360
    %v1364 = vshrl.u32 2475754826, %v1361
    %v1365 = vor.u32 %v1363, %v1364
    %v1366 = vshll.u32 2475754826, %v1360
    %v1367 = vshrl.u32 2131351028, %v1361
    %v1368 = vor.u32 %v1366, %v1367
    %v1369 = vshll.u32 2131351028, %v1360
    %v1370 = vshrl.u32 2102212464, %v1361
    %v1371 = vor.u32 %v1369, %v1370
    %v1372 = vshll.u32 2102212464, %v1360
    %v1373 = vshrl.u32 920167782, %v1361
    %v1374 = vor.u32 %v1372, %v1373
    %v1375 = vshll.u32 920167782, %v1360
    %v1376 = vshrl.u32 1326507024, %v1361
    %v1377 = vor.u32 %v1375, %v1376
    %vm1378 = vcmp.lt.s32.totalorder %v1359, 1
    %vm1379 = vcmp.lt.s32.totalorder %v1359, 2
    %vm1380 = vcmp.lt.s32.totalorder %v1359, 3
    %vm1381 = vcmp.lt.s32.totalorder %v1359, 4
    %v1382 = vsel %vm1378, %v1362, %v1365
    %v1383 = vsel %vm1381, %v1371, 2102212464
    %v1384 = vsel %vm1380, %v1368, %v1383
    %v1385 = vsel %vm1379, %v1382, %v1384
    %v1386 = vsel %vm1378, %v1365, %v1368
    %v1387 = vsel %vm1381, %v1374, 920167782
    %v1388 = vsel %vm1380, %v1371, %v1387
    %v1389 = vsel %vm1379, %v1386, %v1388
    %v1390 = vsel %vm1378, %v1368, %v1371
    %v1391 = vsel %vm1381, %v1377, 1326507024
    %v1392 = vsel %vm1380, %v1374, %v1391
    %v1393 = vsel %vm1379, %v1390, %v1392
    %v1394 = vshll.u32 %v1354, 8
    %v1395 = vmul.u32.u64.compose %v1394, %v1393
    %v1396 = vextract.low.u32 %v1395
    %v1397 = vextract.high.u32 %v1395
    %v1398 = vmul.u32.u64.compose %v1394, %v1389
    %v1399 = vextract.low.u32 %v1398
    %v1400 = vextract.high.u32 %v1398
    %v1401 = vmul.u32 %v1394, %v1385
    %v1402 = vadd.s32 %v1397, %v1399
    %vm1403 = vc.u32 %v1397, %v1399
    %v1404 = vadd.s32 %v1400, 1
    %v1405 = vsel %vm1403, %v1404, %v1400
    %v1406 = vadd.s32 %v1401, %v1405
    %v1407 = vadd.s32 %v1406, 536870912
    %v1408 = vshrl.u32 %v1407, 30
    %v1409 = vshll.u32 %v1408, 30
    %v1410 = vsub.s32 %v1406, %v1409
    %vm1411 = vcmp.lt.s32.totalorder %v1410, 0
    %v1412 = vsub.s32 0, %v1410
    %v1413 = vsel %vm1411, %v1412, %v1410
    %v1414 = vclz %v1413
    %v1415 = vsub.s32 %v1414, 2
    %vm1416 = vcmp.gt.s32.totalorder 0, %v1415
    %v1417 = vsel %vm1416, 0, %v1415
    %v1418 = vsub.s32 32, %v1417
    %v1419 = vshll.u32 %v1410, %v1417
    %v1420 = vshrl.u32 %v1402, %v1418
    %v1421 = vor.u32 %v1419, %v1420
    %v1422 = vsub.s32 4294967266, %v1417
    %v1423 = vadd.s32 %v1422, 127
    %v1424 = vshll.u32 %v1423, 23
    %v1425 = vor.u32 4788187, %v1424
    %v1426 = vand.u32 2147483647, %v1425
    %v1428 = vcvt.s32.f32 %v1421
    %v1429 = vmul.f32 %v1428, %v1426
    %v1430 = vxor.u32 %v1429, 2147483648
    %v1431 = vsel %vm1348, %v1430, %v1429
    %v1432 = vsub.s32 4, %v1408
    %v1433 = vsel %vm1348, %v1432, %v1408
    %v1434 = vsel %vm1347, %v284, %v1431
    %v1435 = vsel %vm1347, 0, %v1433
    %v1436 = vcosq.f32.pop %v1434
    %v1437 = vsinq.f32.pop %v1434
    %vm1438 = vweird.f32 %v284
    %v1439 = vadd.s32 %v1435, 3
    %v1440 = vand.u32 %v1439, 3
    %vm1441 = vcmp.lt.s32.totalorder %v1440, 2
    %vm1442 = vcmp.eq.s32.totalorder %v1440, 0
    %v1443 = vxor.u32 %v1437, 2147483648
    %v1444 = vsel %vm1442, %v1436, %v1443
    %vm1445 = vcmp.eq.s32.totalorder %v1440, 2
    %v1446 = vxor.u32 %v1436, 2147483648
    %v1447 = vsel %vm1445, %v1446, %v1437
    %v1448 = vsel %vm1441, %v1444, %v1447
    %v1449 = vsel %vm1438, nan, %v1448
    %v1450 = vand.u32 2147483647, %v285
    %vm1451 = vcmp.le.f32.partialorder %v1450, 0.7853982
    %vm1452 = vcmp.lt.s32.totalorder %v285, 0
    %v1453 = vand.u32 %v285, 2139095040
    %v1454 = vshrl.u32 %v1453, 23
    %v1455 = vsub.s32 %v1454, 127
    %v1456 = vand.u32 2147483647, %v285
    %v1457 = vand.u32 %v1456, 8388607
    %v1458 = vor.u32 %v1457, 8388608
    %v1459 = vsub.s32 0, %v1458
    %v1460 = vadd.s32 %v1455, 1
    %vm1461 = vcmp.gt.s32.totalorder %v1460, 0
    %v1462 = vsel %vm1461, %v1460, 0
    %v1463 = vshrl.u32 %v1462, 5
    %v1464 = vand.u32 %v1462, 31
    %v1465 = vsub.s32 32, %v1464
    %v1466 = vshrl.u32 683565275, %v1465
    %v1467 = vshll.u32 683565275, %v1464
    %v1468 = vshrl.u32 2475754826, %v1465
    %v1469 = vor.u32 %v1467, %v1468
    %v1470 = vshll.u32 2475754826, %v1464
    %v1471 = vshrl.u32 2131351028, %v1465
    %v1472 = vor.u32 %v1470, %v1471
    %v1473 = vshll.u32 2131351028, %v1464
    %v1474 = vshrl.u32 2102212464, %v1465
    %v1475 = vor.u32 %v1473, %v1474
    %v1476 = vshll.u32 2102212464, %v1464
    %v1477 = vshrl.u32 920167782, %v1465
    %v1478 = vor.u32 %v1476, %v1477
    %v1479 = vshll.u32 920167782, %v1464
    %v1480 = vshrl.u32 1326507024, %v1465
    %v1481 = vor.u32 %v1479, %v1480
    %vm1482 = vcmp.lt.s32.totalorder %v1463, 1
    %vm1483 = vcmp.lt.s32.totalorder %v1463, 2
    %vm1484 = vcmp.lt.s32.totalorder %v1463, 3
    %vm1485 = vcmp.lt.s32.totalorder %v1463, 4
    %v1486 = vsel %vm1482, %v1466, %v1469
    %v1487 = vsel %vm1485, %v1475, 2102212464
    %v1488 = vsel %vm1484, %v1472, %v1487
    %v1489 = vsel %vm1483, %v1486, %v1488
    %v1490 = vsel %vm1482, %v1469, %v1472
    %v1491 = vsel %vm1485, %v1478, 920167782
    %v1492 = vsel %vm1484, %v1475, %v1491
    %v1493 = vsel %vm1483, %v1490, %v1492
    %v1494 = vsel %vm1482, %v1472, %v1475
    %v1495 = vsel %vm1485, %v1481, 1326507024
    %v1496 = vsel %vm1484, %v1478, %v1495
    %v1497 = vsel %vm1483, %v1494, %v1496
    %v1498 = vshll.u32 %v1458, 8
    %v1499 = vmul.u32.u64.compose %v1498, %v1497
    %v1500 = vextract.low.u32 %v1499
    %v1501 = vextract.high.u32 %v1499
    %v1502 = vmul.u32.u64.compose %v1498, %v1493
    %v1503 = vextract.low.u32 %v1502
    %v1504 = vextract.high.u32 %v1502
    %v1505 = vmul.u32 %v1498, %v1489
    %v1506 = vadd.s32 %v1501, %v1503
    %vm1507 = vc.u32 %v1501, %v1503
    %v1508 = vadd.s32 %v1504, 1
    %v1509 = vsel %vm1507, %v1508, %v1504
    %v1510 = vadd.s32 %v1505, %v1509
    %v1511 = vadd.s32 %v1510, 536870912
    %v1512 = vshrl.u32 %v1511, 30
    %v1513 = vshll.u32 %v1512, 30
    %v1514 = vsub.s32 %v1510, %v1513
    %vm1515 = vcmp.lt.s32.totalorder %v1514, 0
    %v1516 = vsub.s32 0, %v1514
    %v1517 = vsel %vm1515, %v1516, %v1514
    %v1518 = vclz %v1517
    %v1519 = vsub.s32 %v1518, 2
    %vm1520 = vcmp.gt.s32.totalorder 0, %v1519
    %v1521 = vsel %vm1520, 0, %v1519
    %v1522 = vsub.s32 32, %v1521
    %v1523 = vshll.u32 %v1514, %v1521
    %v1524 = vshrl.u32 %v1506, %v1522
    %v1525 = vor.u32 %v1523, %v1524
    %v1526 = vsub.s32 4294967266, %v1521
    %v1527 = vadd.s32 %v1526, 127
    %v1528 = vshll.u32 %v1527, 23
    %v1529 = vor.u32 4788187, %v1528
    %v1530 = vand.u32 2147483647, %v1529
    %v1532 = vcvt.s32.f32 %v1525
    %v1533 = vmul.f32 %v1532, %v1530
    %v1534 = vxor.u32 %v1533, 2147483648
    %v1535 = vsel %vm1452, %v1534, %v1533
    %v1536 = vsub.s32 4, %v1512
    %v1537 = vsel %vm1452, %v1536, %v1512
    %v1538 = vsel %vm1451, %v285, %v1535
    %v1539 = vsel %vm1451, 0, %v1537
    %v1540 = vcosq.f32.pop %v1538
    %v1541 = vsinq.f32.pop %v1538
    %vm1542 = vweird.f32 %v285
    %v1543 = vadd.s32 %v1539, 3
    %v1544 = vand.u32 %v1543, 3
    %vm1545 = vcmp.lt.s32.totalorder %v1544, 2
    %vm1546 = vcmp.eq.s32.totalorder %v1544, 0
    %v1547 = vxor.u32 %v1541, 2147483648
    %v1548 = vsel %vm1546, %v1540, %v1547
    %vm1549 = vcmp.eq.s32.totalorder %v1544, 2
    %v1550 = vxor.u32 %v1540, 2147483648
    %v1551 = vsel %vm1549, %v1550, %v1541
    %v1552 = vsel %vm1545, %v1548, %v1551
    %v1553 = vsel %vm1542, nan, %v1552
    %v1554 = vand.u32 2147483647, %v286
    %vm1555 = vcmp.le.f32.partialorder %v1554, 0.7853982
    %vm1556 = vcmp.lt.s32.totalorder %v286, 0
    %v1557 = vand.u32 %v286, 2139095040
    %v1558 = vshrl.u32 %v1557, 23
    %v1559 = vsub.s32 %v1558, 127
    %v1560 = vand.u32 2147483647, %v286
    %v1561 = vand.u32 %v1560, 8388607
    %v1562 = vor.u32 %v1561, 8388608
    %v1563 = vsub.s32 0, %v1562
    %v1564 = vadd.s32 %v1559, 1
    %vm1565 = vcmp.gt.s32.totalorder %v1564, 0
    %v1566 = vsel %vm1565, %v1564, 0
    %v1567 = vshrl.u32 %v1566, 5
    %v1568 = vand.u32 %v1566, 31
    %v1569 = vsub.s32 32, %v1568
    %v1570 = vshrl.u32 683565275, %v1569
    %v1571 = vshll.u32 683565275, %v1568
    %v1572 = vshrl.u32 2475754826, %v1569
    %v1573 = vor.u32 %v1571, %v1572
    %v1574 = vshll.u32 2475754826, %v1568
    %v1575 = vshrl.u32 2131351028, %v1569
    %v1576 = vor.u32 %v1574, %v1575
    %v1577 = vshll.u32 2131351028, %v1568
    %v1578 = vshrl.u32 2102212464, %v1569
    %v1579 = vor.u32 %v1577, %v1578
    %v1580 = vshll.u32 2102212464, %v1568
    %v1581 = vshrl.u32 920167782, %v1569
    %v1582 = vor.u32 %v1580, %v1581
    %v1583 = vshll.u32 920167782, %v1568
    %v1584 = vshrl.u32 1326507024, %v1569
    %v1585 = vor.u32 %v1583, %v1584
    %vm1586 = vcmp.lt.s32.totalorder %v1567, 1
    %vm1587 = vcmp.lt.s32.totalorder %v1567, 2
    %vm1588 = vcmp.lt.s32.totalorder %v1567, 3
    %vm1589 = vcmp.lt.s32.totalorder %v1567, 4
    %v1590 = vsel %vm1586, %v1570, %v1573
    %v1591 = vsel %vm1589, %v1579, 2102212464
    %v1592 = vsel %vm1588, %v1576, %v1591
    %v1593 = vsel %vm1587, %v1590, %v1592
    %v1594 = vsel %vm1586, %v1573, %v1576
    %v1595 = vsel %vm1589, %v1582, 920167782
    %v1596 = vsel %vm1588, %v1579, %v1595
    %v1597 = vsel %vm1587, %v1594, %v1596
    %v1598 = vsel %vm1586, %v1576, %v1579
    %v1599 = vsel %vm1589, %v1585, 1326507024
    %v1600 = vsel %vm1588, %v1582, %v1599
    %v1601 = vsel %vm1587, %v1598, %v1600
    %v1602 = vshll.u32 %v1562, 8
    %v1603 = vmul.u32.u64.compose %v1602, %v1601
    %v1604 = vextract.low.u32 %v1603
    %v1605 = vextract.high.u32 %v1603
    %v1606 = vmul.u32.u64.compose %v1602, %v1597
    %v1607 = vextract.low.u32 %v1606
    %v1608 = vextract.high.u32 %v1606
    %v1609 = vmul.u32 %v1602, %v1593
    %v1610 = vadd.s32 %v1605, %v1607
    %vm1611 = vc.u32 %v1605, %v1607
    %v1612 = vadd.s32 %v1608, 1
    %v1613 = vsel %vm1611, %v1612, %v1608
    %v1614 = vadd.s32 %v1609, %v1613
    %v1615 = vadd.s32 %v1614, 536870912
    %v1616 = vshrl.u32 %v1615, 30
    %v1617 = vshll.u32 %v1616, 30
    %v1618 = vsub.s32 %v1614, %v1617
    %vm1619 = vcmp.lt.s32.totalorder %v1618, 0
    %v1620 = vsub.s32 0, %v1618
    %v1621 = vsel %vm1619, %v1620, %v1618
    %v1622 = vclz %v1621
    %v1623 = vsub.s32 %v1622, 2
    %vm1624 = vcmp.gt.s32.totalorder 0, %v1623
    %v1625 = vsel %vm1624, 0, %v1623
    %v1626 = vsub.s32 32, %v1625
    %v1627 = vshll.u32 %v1618, %v1625
    %v1628 = vshrl.u32 %v1610, %v1626
    %v1629 = vor.u32 %v1627, %v1628
    %v1630 = vsub.s32 4294967266, %v1625
    %v1631 = vadd.s32 %v1630, 127
    %v1632 = vshll.u32 %v1631, 23
    %v1633 = vor.u32 4788187, %v1632
    %v1634 = vand.u32 2147483647, %v1633
    %v1636 = vcvt.s32.f32 %v1629
    %v1637 = vmul.f32 %v1636, %v1634
    %v1638 = vxor.u32 %v1637, 2147483648
    %v1639 = vsel %vm1556, %v1638, %v1637
    %v1640 = vsub.s32 4, %v1616
    %v1641 = vsel %vm1556, %v1640, %v1616
    %v1642 = vsel %vm1555, %v286, %v1639
    %v1643 = vsel %vm1555, 0, %v1641
    %v1644 = vcosq.f32.pop %v1642
    %v1645 = vsinq.f32.pop %v1642
    %vm1646 = vweird.f32 %v286
    %v1647 = vadd.s32 %v1643, 3
    %v1648 = vand.u32 %v1647, 3
    %vm1649 = vcmp.lt.s32.totalorder %v1648, 2
    %vm1650 = vcmp.eq.s32.totalorder %v1648, 0
    %v1651 = vxor.u32 %v1645, 2147483648
    %v1652 = vsel %vm1650, %v1644, %v1651
    %vm1653 = vcmp.eq.s32.totalorder %v1648, 2
    %v1654 = vxor.u32 %v1644, 2147483648
    %v1655 = vsel %vm1653, %v1654, %v1645
    %v1656 = vsel %vm1649, %v1652, %v1655
    %v1657 = vsel %vm1646, nan, %v1656
    %v1658 = vand.u32 2147483647, %v287
    %vm1659 = vcmp.le.f32.partialorder %v1658, 0.7853982
    %vm1660 = vcmp.lt.s32.totalorder %v287, 0
    %v1661 = vand.u32 %v287, 2139095040
    %v1662 = vshrl.u32 %v1661, 23
    %v1663 = vsub.s32 %v1662, 127
    %v1664 = vand.u32 2147483647, %v287
    %v1665 = vand.u32 %v1664, 8388607
    %v1666 = vor.u32 %v1665, 8388608
    %v1667 = vsub.s32 0, %v1666
    %v1668 = vadd.s32 %v1663, 1
    %vm1669 = vcmp.gt.s32.totalorder %v1668, 0
    %v1670 = vsel %vm1669, %v1668, 0
    %v1671 = vshrl.u32 %v1670, 5
    %v1672 = vand.u32 %v1670, 31
    %v1673 = vsub.s32 32, %v1672
    %v1674 = vshrl.u32 683565275, %v1673
    %v1675 = vshll.u32 683565275, %v1672
    %v1676 = vshrl.u32 2475754826, %v1673
    %v1677 = vor.u32 %v1675, %v1676
    %v1678 = vshll.u32 2475754826, %v1672
    %v1679 = vshrl.u32 2131351028, %v1673
    %v1680 = vor.u32 %v1678, %v1679
    %v1681 = vshll.u32 2131351028, %v1672
    %v1682 = vshrl.u32 2102212464, %v1673
    %v1683 = vor.u32 %v1681, %v1682
    %v1684 = vshll.u32 2102212464, %v1672
    %v1685 = vshrl.u32 920167782, %v1673
    %v1686 = vor.u32 %v1684, %v1685
    %v1687 = vshll.u32 920167782, %v1672
    %v1688 = vshrl.u32 1326507024, %v1673
    %v1689 = vor.u32 %v1687, %v1688
    %vm1690 = vcmp.lt.s32.totalorder %v1671, 1
    %vm1691 = vcmp.lt.s32.totalorder %v1671, 2
    %vm1692 = vcmp.lt.s32.totalorder %v1671, 3
    %vm1693 = vcmp.lt.s32.totalorder %v1671, 4
    %v1694 = vsel %vm1690, %v1674, %v1677
    %v1695 = vsel %vm1693, %v1683, 2102212464
    %v1696 = vsel %vm1692, %v1680, %v1695
    %v1697 = vsel %vm1691, %v1694, %v1696
    %v1698 = vsel %vm1690, %v1677, %v1680
    %v1699 = vsel %vm1693, %v1686, 920167782
    %v1700 = vsel %vm1692, %v1683, %v1699
    %v1701 = vsel %vm1691, %v1698, %v1700
    %v1702 = vsel %vm1690, %v1680, %v1683
    %v1703 = vsel %vm1693, %v1689, 1326507024
    %v1704 = vsel %vm1692, %v1686, %v1703
    %v1705 = vsel %vm1691, %v1702, %v1704
    %v1706 = vshll.u32 %v1666, 8
    %v1707 = vmul.u32.u64.compose %v1706, %v1705
    %v1708 = vextract.low.u32 %v1707
    %v1709 = vextract.high.u32 %v1707
    %v1710 = vmul.u32.u64.compose %v1706, %v1701
    %v1711 = vextract.low.u32 %v1710
    %v1712 = vextract.high.u32 %v1710
    %v1713 = vmul.u32 %v1706, %v1697
    %v1714 = vadd.s32 %v1709, %v1711
    %vm1715 = vc.u32 %v1709, %v1711
    %v1716 = vadd.s32 %v1712, 1
    %v1717 = vsel %vm1715, %v1716, %v1712
    %v1718 = vadd.s32 %v1713, %v1717
    %v1719 = vadd.s32 %v1718, 536870912
    %v1720 = vshrl.u32 %v1719, 30
    %v1721 = vshll.u32 %v1720, 30
    %v1722 = vsub.s32 %v1718, %v1721
    %vm1723 = vcmp.lt.s32.totalorder %v1722, 0
    %v1724 = vsub.s32 0, %v1722
    %v1725 = vsel %vm1723, %v1724, %v1722
    %v1726 = vclz %v1725
    %v1727 = vsub.s32 %v1726, 2
    %vm1728 = vcmp.gt.s32.totalorder 0, %v1727
    %v1729 = vsel %vm1728, 0, %v1727
    %v1730 = vsub.s32 32, %v1729
    %v1731 = vshll.u32 %v1722, %v1729
    %v1732 = vshrl.u32 %v1714, %v1730
    %v1733 = vor.u32 %v1731, %v1732
    %v1734 = vsub.s32 4294967266, %v1729
    %v1735 = vadd.s32 %v1734, 127
    %v1736 = vshll.u32 %v1735, 23
    %v1737 = vor.u32 4788187, %v1736
    %v1738 = vand.u32 2147483647, %v1737
    %v1740 = vcvt.s32.f32 %v1733
    %v1741 = vmul.f32 %v1740, %v1738
    %v1742 = vxor.u32 %v1741, 2147483648
    %v1743 = vsel %vm1660, %v1742, %v1741
    %v1744 = vsub.s32 4, %v1720
    %v1745 = vsel %vm1660, %v1744, %v1720
    %v1746 = vsel %vm1659, %v287, %v1743
    %v1747 = vsel %vm1659, 0, %v1745
    %v1748 = vcosq.f32.pop %v1746
    %v1749 = vsinq.f32.pop %v1746
    %vm1750 = vweird.f32 %v287
    %v1751 = vadd.s32 %v1747, 3
    %v1752 = vand.u32 %v1751, 3
    %vm1753 = vcmp.lt.s32.totalorder %v1752, 2
    %vm1754 = vcmp.eq.s32.totalorder %v1752, 0
    %v1755 = vxor.u32 %v1749, 2147483648
    %v1756 = vsel %vm1754, %v1748, %v1755
    %vm1757 = vcmp.eq.s32.totalorder %v1752, 2
    %v1758 = vxor.u32 %v1748, 2147483648
    %v1759 = vsel %vm1757, %v1758, %v1749
    %v1760 = vsel %vm1753, %v1756, %v1759
    %v1761 = vsel %vm1750, nan, %v1760
    %v1762 = vand.u32 2147483647, %v288
    %vm1763 = vcmp.le.f32.partialorder %v1762, 0.7853982
    %vm1764 = vcmp.lt.s32.totalorder %v288, 0
    %v1765 = vand.u32 %v288, 2139095040
    %v1766 = vshrl.u32 %v1765, 23
    %v1767 = vsub.s32 %v1766, 127
    %v1768 = vand.u32 2147483647, %v288
    %v1769 = vand.u32 %v1768, 8388607
    %v1770 = vor.u32 %v1769, 8388608
    %v1771 = vsub.s32 0, %v1770
    %v1772 = vadd.s32 %v1767, 1
    %vm1773 = vcmp.gt.s32.totalorder %v1772, 0
    %v1774 = vsel %vm1773, %v1772, 0
    %v1775 = vshrl.u32 %v1774, 5
    %v1776 = vand.u32 %v1774, 31
    %v1777 = vsub.s32 32, %v1776
    %v1778 = vshrl.u32 683565275, %v1777
    %v1779 = vshll.u32 683565275, %v1776
    %v1780 = vshrl.u32 2475754826, %v1777
    %v1781 = vor.u32 %v1779, %v1780
    %v1782 = vshll.u32 2475754826, %v1776
    %v1783 = vshrl.u32 2131351028, %v1777
    %v1784 = vor.u32 %v1782, %v1783
    %v1785 = vshll.u32 2131351028, %v1776
    %v1786 = vshrl.u32 2102212464, %v1777
    %v1787 = vor.u32 %v1785, %v1786
    %v1788 = vshll.u32 2102212464, %v1776
    %v1789 = vshrl.u32 920167782, %v1777
    %v1790 = vor.u32 %v1788, %v1789
    %v1791 = vshll.u32 920167782, %v1776
    %v1792 = vshrl.u32 1326507024, %v1777
    %v1793 = vor.u32 %v1791, %v1792
    %vm1794 = vcmp.lt.s32.totalorder %v1775, 1
    %vm1795 = vcmp.lt.s32.totalorder %v1775, 2
    %vm1796 = vcmp.lt.s32.totalorder %v1775, 3
    %vm1797 = vcmp.lt.s32.totalorder %v1775, 4
    %v1798 = vsel %vm1794, %v1778, %v1781
    %v1799 = vsel %vm1797, %v1787, 2102212464
    %v1800 = vsel %vm1796, %v1784, %v1799
    %v1801 = vsel %vm1795, %v1798, %v1800
    %v1802 = vsel %vm1794, %v1781, %v1784
    %v1803 = vsel %vm1797, %v1790, 920167782
    %v1804 = vsel %vm1796, %v1787, %v1803
    %v1805 = vsel %vm1795, %v1802, %v1804
    %v1806 = vsel %vm1794, %v1784, %v1787
    %v1807 = vsel %vm1797, %v1793, 1326507024
    %v1808 = vsel %vm1796, %v1790, %v1807
    %v1809 = vsel %vm1795, %v1806, %v1808
    %v1810 = vshll.u32 %v1770, 8
    %v1811 = vmul.u32.u64.compose %v1810, %v1809
    %v1812 = vextract.low.u32 %v1811
    %v1813 = vextract.high.u32 %v1811
    %v1814 = vmul.u32.u64.compose %v1810, %v1805
    %v1815 = vextract.low.u32 %v1814
    %v1816 = vextract.high.u32 %v1814
    %v1817 = vmul.u32 %v1810, %v1801
    %v1818 = vadd.s32 %v1813, %v1815
    %vm1819 = vc.u32 %v1813, %v1815
    %v1820 = vadd.s32 %v1816, 1
    %v1821 = vsel %vm1819, %v1820, %v1816
    %v1822 = vadd.s32 %v1817, %v1821
    %v1823 = vadd.s32 %v1822, 536870912
    %v1824 = vshrl.u32 %v1823, 30
    %v1825 = vshll.u32 %v1824, 30
    %v1826 = vsub.s32 %v1822, %v1825
    %vm1827 = vcmp.lt.s32.totalorder %v1826, 0
    %v1828 = vsub.s32 0, %v1826
    %v1829 = vsel %vm1827, %v1828, %v1826
    %v1830 = vclz %v1829
    %v1831 = vsub.s32 %v1830, 2
    %vm1832 = vcmp.gt.s32.totalorder 0, %v1831
    %v1833 = vsel %vm1832, 0, %v1831
    %v1834 = vsub.s32 32, %v1833
    %v1835 = vshll.u32 %v1826, %v1833
    %v1836 = vshrl.u32 %v1818, %v1834
    %v1837 = vor.u32 %v1835, %v1836
    %v1838 = vsub.s32 4294967266, %v1833
    %v1839 = vadd.s32 %v1838, 127
    %v1840 = vshll.u32 %v1839, 23
    %v1841 = vor.u32 4788187, %v1840
    %v1842 = vand.u32 2147483647, %v1841
    %v1844 = vcvt.s32.f32 %v1837
    %v1845 = vmul.f32 %v1844, %v1842
    %v1846 = vxor.u32 %v1845, 2147483648
    %v1847 = vsel %vm1764, %v1846, %v1845
    %v1848 = vsub.s32 4, %v1824
    %v1849 = vsel %vm1764, %v1848, %v1824
    %v1850 = vsel %vm1763, %v288, %v1847
    %v1851 = vsel %vm1763, 0, %v1849
    %v1852 = vcosq.f32.pop %v1850
    %v1853 = vsinq.f32.pop %v1850
    %vm1854 = vweird.f32 %v288
    %v1855 = vadd.s32 %v1851, 3
    %v1856 = vand.u32 %v1855, 3
    %vm1857 = vcmp.lt.s32.totalorder %v1856, 2
    %vm1858 = vcmp.eq.s32.totalorder %v1856, 0
    %v1859 = vxor.u32 %v1853, 2147483648
    %v1860 = vsel %vm1858, %v1852, %v1859
    %vm1861 = vcmp.eq.s32.totalorder %v1856, 2
    %v1862 = vxor.u32 %v1852, 2147483648
    %v1863 = vsel %vm1861, %v1862, %v1853
    %v1864 = vsel %vm1857, %v1860, %v1863
    %v1865 = vsel %vm1854, nan, %v1864
    %v1866 = vand.u32 2147483647, %v289
    %vm1867 = vcmp.le.f32.partialorder %v1866, 0.7853982
    %vm1868 = vcmp.lt.s32.totalorder %v289, 0
    %v1869 = vand.u32 %v289, 2139095040
    %v1870 = vshrl.u32 %v1869, 23
    %v1871 = vsub.s32 %v1870, 127
    %v1872 = vand.u32 2147483647, %v289
    %v1873 = vand.u32 %v1872, 8388607
    %v1874 = vor.u32 %v1873, 8388608
    %v1875 = vsub.s32 0, %v1874
    %v1876 = vadd.s32 %v1871, 1
    %vm1877 = vcmp.gt.s32.totalorder %v1876, 0
    %v1878 = vsel %vm1877, %v1876, 0
    %v1879 = vshrl.u32 %v1878, 5
    %v1880 = vand.u32 %v1878, 31
    %v1881 = vsub.s32 32, %v1880
    %v1882 = vshrl.u32 683565275, %v1881
    %v1883 = vshll.u32 683565275, %v1880
    %v1884 = vshrl.u32 2475754826, %v1881
    %v1885 = vor.u32 %v1883, %v1884
    %v1886 = vshll.u32 2475754826, %v1880
    %v1887 = vshrl.u32 2131351028, %v1881
    %v1888 = vor.u32 %v1886, %v1887
    %v1889 = vshll.u32 2131351028, %v1880
    %v1890 = vshrl.u32 2102212464, %v1881
    %v1891 = vor.u32 %v1889, %v1890
    %v1892 = vshll.u32 2102212464, %v1880
    %v1893 = vshrl.u32 920167782, %v1881
    %v1894 = vor.u32 %v1892, %v1893
    %v1895 = vshll.u32 920167782, %v1880
    %v1896 = vshrl.u32 1326507024, %v1881
    %v1897 = vor.u32 %v1895, %v1896
    %vm1898 = vcmp.lt.s32.totalorder %v1879, 1
    %vm1899 = vcmp.lt.s32.totalorder %v1879, 2
    %vm1900 = vcmp.lt.s32.totalorder %v1879, 3
    %vm1901 = vcmp.lt.s32.totalorder %v1879, 4
    %v1902 = vsel %vm1898, %v1882, %v1885
    %v1903 = vsel %vm1901, %v1891, 2102212464
    %v1904 = vsel %vm1900, %v1888, %v1903
    %v1905 = vsel %vm1899, %v1902, %v1904
    %v1906 = vsel %vm1898, %v1885, %v1888
    %v1907 = vsel %vm1901, %v1894, 920167782
    %v1908 = vsel %vm1900, %v1891, %v1907
    %v1909 = vsel %vm1899, %v1906, %v1908
    %v1910 = vsel %vm1898, %v1888, %v1891
    %v1911 = vsel %vm1901, %v1897, 1326507024
    %v1912 = vsel %vm1900, %v1894, %v1911
    %v1913 = vsel %vm1899, %v1910, %v1912
    %v1914 = vshll.u32 %v1874, 8
    %v1915 = vmul.u32.u64.compose %v1914, %v1913
    %v1916 = vextract.low.u32 %v1915
    %v1917 = vextract.high.u32 %v1915
    %v1918 = vmul.u32.u64.compose %v1914, %v1909
    %v1919 = vextract.low.u32 %v1918
    %v1920 = vextract.high.u32 %v1918
    %v1921 = vmul.u32 %v1914, %v1905
    %v1922 = vadd.s32 %v1917, %v1919
    %vm1923 = vc.u32 %v1917, %v1919
    %v1924 = vadd.s32 %v1920, 1
    %v1925 = vsel %vm1923, %v1924, %v1920
    %v1926 = vadd.s32 %v1921, %v1925
    %v1927 = vadd.s32 %v1926, 536870912
    %v1928 = vshrl.u32 %v1927, 30
    %v1929 = vshll.u32 %v1928, 30
    %v1930 = vsub.s32 %v1926, %v1929
    %vm1931 = vcmp.lt.s32.totalorder %v1930, 0
    %v1932 = vsub.s32 0, %v1930
    %v1933 = vsel %vm1931, %v1932, %v1930
    %v1934 = vclz %v1933
    %v1935 = vsub.s32 %v1934, 2
    %vm1936 = vcmp.gt.s32.totalorder 0, %v1935
    %v1937 = vsel %vm1936, 0, %v1935
    %v1938 = vsub.s32 32, %v1937
    %v1939 = vshll.u32 %v1930, %v1937
    %v1940 = vshrl.u32 %v1922, %v1938
    %v1941 = vor.u32 %v1939, %v1940
    %v1942 = vsub.s32 4294967266, %v1937
    %v1943 = vadd.s32 %v1942, 127
    %v1944 = vshll.u32 %v1943, 23
    %v1945 = vor.u32 4788187, %v1944
    %v1946 = vand.u32 2147483647, %v1945
    %v1948 = vcvt.s32.f32 %v1941
    %v1949 = vmul.f32 %v1948, %v1946
    %v1950 = vxor.u32 %v1949, 2147483648
    %v1951 = vsel %vm1868, %v1950, %v1949
    %v1952 = vsub.s32 4, %v1928
    %v1953 = vsel %vm1868, %v1952, %v1928
    %v1954 = vsel %vm1867, %v289, %v1951
    %v1955 = vsel %vm1867, 0, %v1953
    %v1956 = vcosq.f32.pop %v1954
    %v1957 = vsinq.f32.pop %v1954
    %vm1958 = vweird.f32 %v289
    %v1959 = vadd.s32 %v1955, 3
    %v1960 = vand.u32 %v1959, 3
    %vm1961 = vcmp.lt.s32.totalorder %v1960, 2
    %vm1962 = vcmp.eq.s32.totalorder %v1960, 0
    %v1963 = vxor.u32 %v1957, 2147483648
    %v1964 = vsel %vm1962, %v1956, %v1963
    %vm1965 = vcmp.eq.s32.totalorder %v1960, 2
    %v1966 = vxor.u32 %v1956, 2147483648
    %v1967 = vsel %vm1965, %v1966, %v1957
    %v1968 = vsel %vm1961, %v1964, %v1967
    %v1969 = vsel %vm1958, nan, %v1968
    %v1970 = vand.u32 2147483647, %v290
    %vm1971 = vcmp.le.f32.partialorder %v1970, 0.7853982
    %vm1972 = vcmp.lt.s32.totalorder %v290, 0
    %v1973 = vand.u32 %v290, 2139095040
    %v1974 = vshrl.u32 %v1973, 23
    %v1975 = vsub.s32 %v1974, 127
    %v1976 = vand.u32 2147483647, %v290
    %v1977 = vand.u32 %v1976, 8388607
    %v1978 = vor.u32 %v1977, 8388608
    %v1979 = vsub.s32 0, %v1978
    %v1980 = vadd.s32 %v1975, 1
    %vm1981 = vcmp.gt.s32.totalorder %v1980, 0
    %v1982 = vsel %vm1981, %v1980, 0
    %v1983 = vshrl.u32 %v1982, 5
    %v1984 = vand.u32 %v1982, 31
    %v1985 = vsub.s32 32, %v1984
    %v1986 = vshrl.u32 683565275, %v1985
    %v1987 = vshll.u32 683565275, %v1984
    %v1988 = vshrl.u32 2475754826, %v1985
    %v1989 = vor.u32 %v1987, %v1988
    %v1990 = vshll.u32 2475754826, %v1984
    %v1991 = vshrl.u32 2131351028, %v1985
    %v1992 = vor.u32 %v1990, %v1991
    %v1993 = vshll.u32 2131351028, %v1984
    %v1994 = vshrl.u32 2102212464, %v1985
    %v1995 = vor.u32 %v1993, %v1994
    %v1996 = vshll.u32 2102212464, %v1984
    %v1997 = vshrl.u32 920167782, %v1985
    %v1998 = vor.u32 %v1996, %v1997
    %v1999 = vshll.u32 920167782, %v1984
    %v2000 = vshrl.u32 1326507024, %v1985
    %v2001 = vor.u32 %v1999, %v2000
    %vm2002 = vcmp.lt.s32.totalorder %v1983, 1
    %vm2003 = vcmp.lt.s32.totalorder %v1983, 2
    %vm2004 = vcmp.lt.s32.totalorder %v1983, 3
    %vm2005 = vcmp.lt.s32.totalorder %v1983, 4
    %v2006 = vsel %vm2002, %v1986, %v1989
    %v2007 = vsel %vm2005, %v1995, 2102212464
    %v2008 = vsel %vm2004, %v1992, %v2007
    %v2009 = vsel %vm2003, %v2006, %v2008
    %v2010 = vsel %vm2002, %v1989, %v1992
    %v2011 = vsel %vm2005, %v1998, 920167782
    %v2012 = vsel %vm2004, %v1995, %v2011
    %v2013 = vsel %vm2003, %v2010, %v2012
    %v2014 = vsel %vm2002, %v1992, %v1995
    %v2015 = vsel %vm2005, %v2001, 1326507024
    %v2016 = vsel %vm2004, %v1998, %v2015
    %v2017 = vsel %vm2003, %v2014, %v2016
    %v2018 = vshll.u32 %v1978, 8
    %v2019 = vmul.u32.u64.compose %v2018, %v2017
    %v2020 = vextract.low.u32 %v2019
    %v2021 = vextract.high.u32 %v2019
    %v2022 = vmul.u32.u64.compose %v2018, %v2013
    %v2023 = vextract.low.u32 %v2022
    %v2024 = vextract.high.u32 %v2022
    %v2025 = vmul.u32 %v2018, %v2009
    %v2026 = vadd.s32 %v2021, %v2023
    %vm2027 = vc.u32 %v2021, %v2023
    %v2028 = vadd.s32 %v2024, 1
    %v2029 = vsel %vm2027, %v2028, %v2024
    %v2030 = vadd.s32 %v2025, %v2029
    %v2031 = vadd.s32 %v2030, 536870912
    %v2032 = vshrl.u32 %v2031, 30
    %v2033 = vshll.u32 %v2032, 30
    %v2034 = vsub.s32 %v2030, %v2033
    %vm2035 = vcmp.lt.s32.totalorder %v2034, 0
    %v2036 = vsub.s32 0, %v2034
    %v2037 = vsel %vm2035, %v2036, %v2034
    %v2038 = vclz %v2037
    %v2039 = vsub.s32 %v2038, 2
    %vm2040 = vcmp.gt.s32.totalorder 0, %v2039
    %v2041 = vsel %vm2040, 0, %v2039
    %v2042 = vsub.s32 32, %v2041
    %v2043 = vshll.u32 %v2034, %v2041
    %v2044 = vshrl.u32 %v2026, %v2042
    %v2045 = vor.u32 %v2043, %v2044
    %v2046 = vsub.s32 4294967266, %v2041
    %v2047 = vadd.s32 %v2046, 127
    %v2048 = vshll.u32 %v2047, 23
    %v2049 = vor.u32 4788187, %v2048
    %v2050 = vand.u32 2147483647, %v2049
    %v2052 = vcvt.s32.f32 %v2045
    %v2053 = vmul.f32 %v2052, %v2050
    %v2054 = vxor.u32 %v2053, 2147483648
    %v2055 = vsel %vm1972, %v2054, %v2053
    %v2056 = vsub.s32 4, %v2032
    %v2057 = vsel %vm1972, %v2056, %v2032
    %v2058 = vsel %vm1971, %v290, %v2055
    %v2059 = vsel %vm1971, 0, %v2057
    %v2060 = vcosq.f32.pop %v2058
    %v2061 = vsinq.f32.pop %v2058
    %vm2062 = vweird.f32 %v290
    %v2063 = vadd.s32 %v2059, 3
    %v2064 = vand.u32 %v2063, 3
    %vm2065 = vcmp.lt.s32.totalorder %v2064, 2
    %vm2066 = vcmp.eq.s32.totalorder %v2064, 0
    %v2067 = vxor.u32 %v2061, 2147483648
    %v2068 = vsel %vm2066, %v2060, %v2067
    %vm2069 = vcmp.eq.s32.totalorder %v2064, 2
    %v2070 = vxor.u32 %v2060, 2147483648
    %v2071 = vsel %vm2069, %v2070, %v2061
    %v2072 = vsel %vm2065, %v2068, %v2071
    %v2073 = vsel %vm2062, nan, %v2072
    %v2074 = vand.u32 2147483647, %v291
    %vm2075 = vcmp.le.f32.partialorder %v2074, 0.7853982
    %vm2076 = vcmp.lt.s32.totalorder %v291, 0
    %v2077 = vand.u32 %v291, 2139095040
    %v2078 = vshrl.u32 %v2077, 23
    %v2079 = vsub.s32 %v2078, 127
    %v2080 = vand.u32 2147483647, %v291
    %v2081 = vand.u32 %v2080, 8388607
    %v2082 = vor.u32 %v2081, 8388608
    %v2083 = vsub.s32 0, %v2082
    %v2084 = vadd.s32 %v2079, 1
    %vm2085 = vcmp.gt.s32.totalorder %v2084, 0
    %v2086 = vsel %vm2085, %v2084, 0
    %v2087 = vshrl.u32 %v2086, 5
    %v2088 = vand.u32 %v2086, 31
    %v2089 = vsub.s32 32, %v2088
    %v2090 = vshrl.u32 683565275, %v2089
    %v2091 = vshll.u32 683565275, %v2088
    %v2092 = vshrl.u32 2475754826, %v2089
    %v2093 = vor.u32 %v2091, %v2092
    %v2094 = vshll.u32 2475754826, %v2088
    %v2095 = vshrl.u32 2131351028, %v2089
    %v2096 = vor.u32 %v2094, %v2095
    %v2097 = vshll.u32 2131351028, %v2088
    %v2098 = vshrl.u32 2102212464, %v2089
    %v2099 = vor.u32 %v2097, %v2098
    %v2100 = vshll.u32 2102212464, %v2088
    %v2101 = vshrl.u32 920167782, %v2089
    %v2102 = vor.u32 %v2100, %v2101
    %v2103 = vshll.u32 920167782, %v2088
    %v2104 = vshrl.u32 1326507024, %v2089
    %v2105 = vor.u32 %v2103, %v2104
    %vm2106 = vcmp.lt.s32.totalorder %v2087, 1
    %vm2107 = vcmp.lt.s32.totalorder %v2087, 2
    %vm2108 = vcmp.lt.s32.totalorder %v2087, 3
    %vm2109 = vcmp.lt.s32.totalorder %v2087, 4
    %v2110 = vsel %vm2106, %v2090, %v2093
    %v2111 = vsel %vm2109, %v2099, 2102212464
    %v2112 = vsel %vm2108, %v2096, %v2111
    %v2113 = vsel %vm2107, %v2110, %v2112
    %v2114 = vsel %vm2106, %v2093, %v2096
    %v2115 = vsel %vm2109, %v2102, 920167782
    %v2116 = vsel %vm2108, %v2099, %v2115
    %v2117 = vsel %vm2107, %v2114, %v2116
    %v2118 = vsel %vm2106, %v2096, %v2099
    %v2119 = vsel %vm2109, %v2105, 1326507024
    %v2120 = vsel %vm2108, %v2102, %v2119
    %v2121 = vsel %vm2107, %v2118, %v2120
    %v2122 = vshll.u32 %v2082, 8
    %v2123 = vmul.u32.u64.compose %v2122, %v2121
    %v2124 = vextract.low.u32 %v2123
    %v2125 = vextract.high.u32 %v2123
    %v2126 = vmul.u32.u64.compose %v2122, %v2117
    %v2127 = vextract.low.u32 %v2126
    %v2128 = vextract.high.u32 %v2126
    %v2129 = vmul.u32 %v2122, %v2113
    %v2130 = vadd.s32 %v2125, %v2127
    %vm2131 = vc.u32 %v2125, %v2127
    %v2132 = vadd.s32 %v2128, 1
    %v2133 = vsel %vm2131, %v2132, %v2128
    %v2134 = vadd.s32 %v2129, %v2133
    %v2135 = vadd.s32 %v2134, 536870912
    %v2136 = vshrl.u32 %v2135, 30
    %v2137 = vshll.u32 %v2136, 30
    %v2138 = vsub.s32 %v2134, %v2137
    %vm2139 = vcmp.lt.s32.totalorder %v2138, 0
    %v2140 = vsub.s32 0, %v2138
    %v2141 = vsel %vm2139, %v2140, %v2138
    %v2142 = vclz %v2141
    %v2143 = vsub.s32 %v2142, 2
    %vm2144 = vcmp.gt.s32.totalorder 0, %v2143
    %v2145 = vsel %vm2144, 0, %v2143
    %v2146 = vsub.s32 32, %v2145
    %v2147 = vshll.u32 %v2138, %v2145
    %v2148 = vshrl.u32 %v2130, %v2146
    %v2149 = vor.u32 %v2147, %v2148
    %v2150 = vsub.s32 4294967266, %v2145
    %v2151 = vadd.s32 %v2150, 127
    %v2152 = vshll.u32 %v2151, 23
    %v2153 = vor.u32 4788187, %v2152
    %v2154 = vand.u32 2147483647, %v2153
    %v2156 = vcvt.s32.f32 %v2149
    %v2157 = vmul.f32 %v2156, %v2154
    %v2158 = vxor.u32 %v2157, 2147483648
    %v2159 = vsel %vm2076, %v2158, %v2157
    %v2160 = vsub.s32 4, %v2136
    %v2161 = vsel %vm2076, %v2160, %v2136
    %v2162 = vsel %vm2075, %v291, %v2159
    %v2163 = vsel %vm2075, 0, %v2161
    %v2164 = vcosq.f32.pop %v2162
    %v2165 = vsinq.f32.pop %v2162
    %vm2166 = vweird.f32 %v291
    %v2167 = vadd.s32 %v2163, 3
    %v2168 = vand.u32 %v2167, 3
    %vm2169 = vcmp.lt.s32.totalorder %v2168, 2
    %vm2170 = vcmp.eq.s32.totalorder %v2168, 0
    %v2171 = vxor.u32 %v2165, 2147483648
    %v2172 = vsel %vm2170, %v2164, %v2171
    %vm2173 = vcmp.eq.s32.totalorder %v2168, 2
    %v2174 = vxor.u32 %v2164, 2147483648
    %v2175 = vsel %vm2173, %v2174, %v2165
    %v2176 = vsel %vm2169, %v2172, %v2175
    %v2177 = vsel %vm2166, nan, %v2176
    %v2178 = vand.u32 2147483647, %v292
    %vm2179 = vcmp.le.f32.partialorder %v2178, 0.7853982
    %vm2180 = vcmp.lt.s32.totalorder %v292, 0
    %v2181 = vand.u32 %v292, 2139095040
    %v2182 = vshrl.u32 %v2181, 23
    %v2183 = vsub.s32 %v2182, 127
    %v2184 = vand.u32 2147483647, %v292
    %v2185 = vand.u32 %v2184, 8388607
    %v2186 = vor.u32 %v2185, 8388608
    %v2187 = vsub.s32 0, %v2186
    %v2188 = vadd.s32 %v2183, 1
    %vm2189 = vcmp.gt.s32.totalorder %v2188, 0
    %v2190 = vsel %vm2189, %v2188, 0
    %v2191 = vshrl.u32 %v2190, 5
    %v2192 = vand.u32 %v2190, 31
    %v2193 = vsub.s32 32, %v2192
    %v2194 = vshrl.u32 683565275, %v2193
    %v2195 = vshll.u32 683565275, %v2192
    %v2196 = vshrl.u32 2475754826, %v2193
    %v2197 = vor.u32 %v2195, %v2196
    %v2198 = vshll.u32 2475754826, %v2192
    %v2199 = vshrl.u32 2131351028, %v2193
    %v2200 = vor.u32 %v2198, %v2199
    %v2201 = vshll.u32 2131351028, %v2192
    %v2202 = vshrl.u32 2102212464, %v2193
    %v2203 = vor.u32 %v2201, %v2202
    %v2204 = vshll.u32 2102212464, %v2192
    %v2205 = vshrl.u32 920167782, %v2193
    %v2206 = vor.u32 %v2204, %v2205
    %v2207 = vshll.u32 920167782, %v2192
    %v2208 = vshrl.u32 1326507024, %v2193
    %v2209 = vor.u32 %v2207, %v2208
    %vm2210 = vcmp.lt.s32.totalorder %v2191, 1
    %vm2211 = vcmp.lt.s32.totalorder %v2191, 2
    %vm2212 = vcmp.lt.s32.totalorder %v2191, 3
    %vm2213 = vcmp.lt.s32.totalorder %v2191, 4
    %v2214 = vsel %vm2210, %v2194, %v2197
    %v2215 = vsel %vm2213, %v2203, 2102212464
    %v2216 = vsel %vm2212, %v2200, %v2215
    %v2217 = vsel %vm2211, %v2214, %v2216
    %v2218 = vsel %vm2210, %v2197, %v2200
    %v2219 = vsel %vm2213, %v2206, 920167782
    %v2220 = vsel %vm2212, %v2203, %v2219
    %v2221 = vsel %vm2211, %v2218, %v2220
    %v2222 = vsel %vm2210, %v2200, %v2203
    %v2223 = vsel %vm2213, %v2209, 1326507024
    %v2224 = vsel %vm2212, %v2206, %v2223
    %v2225 = vsel %vm2211, %v2222, %v2224
    %v2226 = vshll.u32 %v2186, 8
    %v2227 = vmul.u32.u64.compose %v2226, %v2225
    %v2228 = vextract.low.u32 %v2227
    %v2229 = vextract.high.u32 %v2227
    %v2230 = vmul.u32.u64.compose %v2226, %v2221
    %v2231 = vextract.low.u32 %v2230
    %v2232 = vextract.high.u32 %v2230
    %v2233 = vmul.u32 %v2226, %v2217
    %v2234 = vadd.s32 %v2229, %v2231
    %vm2235 = vc.u32 %v2229, %v2231
    %v2236 = vadd.s32 %v2232, 1
    %v2237 = vsel %vm2235, %v2236, %v2232
    %v2238 = vadd.s32 %v2233, %v2237
    %v2239 = vadd.s32 %v2238, 536870912
    %v2240 = vshrl.u32 %v2239, 30
    %v2241 = vshll.u32 %v2240, 30
    %v2242 = vsub.s32 %v2238, %v2241
    %vm2243 = vcmp.lt.s32.totalorder %v2242, 0
    %v2244 = vsub.s32 0, %v2242
    %v2245 = vsel %vm2243, %v2244, %v2242
    %v2246 = vclz %v2245
    %v2247 = vsub.s32 %v2246, 2
    %vm2248 = vcmp.gt.s32.totalorder 0, %v2247
    %v2249 = vsel %vm2248, 0, %v2247
    %v2250 = vsub.s32 32, %v2249
    %v2251 = vshll.u32 %v2242, %v2249
    %v2252 = vshrl.u32 %v2234, %v2250
    %v2253 = vor.u32 %v2251, %v2252
    %v2254 = vsub.s32 4294967266, %v2249
    %v2255 = vadd.s32 %v2254, 127
    %v2256 = vshll.u32 %v2255, 23
    %v2257 = vor.u32 4788187, %v2256
    %v2258 = vand.u32 2147483647, %v2257
    %v2260 = vcvt.s32.f32 %v2253
    %v2261 = vmul.f32 %v2260, %v2258
    %v2262 = vxor.u32 %v2261, 2147483648
    %v2263 = vsel %vm2180, %v2262, %v2261
    %v2264 = vsub.s32 4, %v2240
    %v2265 = vsel %vm2180, %v2264, %v2240
    %v2266 = vsel %vm2179, %v292, %v2263
    %v2267 = vsel %vm2179, 0, %v2265
    %v2268 = vcosq.f32.pop %v2266
    %v2269 = vsinq.f32.pop %v2266
    %vm2270 = vweird.f32 %v292
    %v2271 = vadd.s32 %v2267, 3
    %v2272 = vand.u32 %v2271, 3
    %vm2273 = vcmp.lt.s32.totalorder %v2272, 2
    %vm2274 = vcmp.eq.s32.totalorder %v2272, 0
    %v2275 = vxor.u32 %v2269, 2147483648
    %v2276 = vsel %vm2274, %v2268, %v2275
    %vm2277 = vcmp.eq.s32.totalorder %v2272, 2
    %v2278 = vxor.u32 %v2268, 2147483648
    %v2279 = vsel %vm2277, %v2278, %v2269
    %v2280 = vsel %vm2273, %v2276, %v2279
    %v2281 = vsel %vm2270, nan, %v2280
    %v2282 = vand.u32 2147483647, %v293
    %vm2283 = vcmp.le.f32.partialorder %v2282, 0.7853982
    %vm2284 = vcmp.lt.s32.totalorder %v293, 0
    %v2285 = vand.u32 %v293, 2139095040
    %v2286 = vshrl.u32 %v2285, 23
    %v2287 = vsub.s32 %v2286, 127
    %v2288 = vand.u32 2147483647, %v293
    %v2289 = vand.u32 %v2288, 8388607
    %v2290 = vor.u32 %v2289, 8388608
    %v2291 = vsub.s32 0, %v2290
    %v2292 = vadd.s32 %v2287, 1
    %vm2293 = vcmp.gt.s32.totalorder %v2292, 0
    %v2294 = vsel %vm2293, %v2292, 0
    %v2295 = vshrl.u32 %v2294, 5
    %v2296 = vand.u32 %v2294, 31
    %v2297 = vsub.s32 32, %v2296
    %v2298 = vshrl.u32 683565275, %v2297
    %v2299 = vshll.u32 683565275, %v2296
    %v2300 = vshrl.u32 2475754826, %v2297
    %v2301 = vor.u32 %v2299, %v2300
    %v2302 = vshll.u32 2475754826, %v2296
    %v2303 = vshrl.u32 2131351028, %v2297
    %v2304 = vor.u32 %v2302, %v2303
    %v2305 = vshll.u32 2131351028, %v2296
    %v2306 = vshrl.u32 2102212464, %v2297
    %v2307 = vor.u32 %v2305, %v2306
    %v2308 = vshll.u32 2102212464, %v2296
    %v2309 = vshrl.u32 920167782, %v2297
    %v2310 = vor.u32 %v2308, %v2309
    %v2311 = vshll.u32 920167782, %v2296
    %v2312 = vshrl.u32 1326507024, %v2297
    %v2313 = vor.u32 %v2311, %v2312
    %vm2314 = vcmp.lt.s32.totalorder %v2295, 1
    %vm2315 = vcmp.lt.s32.totalorder %v2295, 2
    %vm2316 = vcmp.lt.s32.totalorder %v2295, 3
    %vm2317 = vcmp.lt.s32.totalorder %v2295, 4
    %v2318 = vsel %vm2314, %v2298, %v2301
    %v2319 = vsel %vm2317, %v2307, 2102212464
    %v2320 = vsel %vm2316, %v2304, %v2319
    %v2321 = vsel %vm2315, %v2318, %v2320
    %v2322 = vsel %vm2314, %v2301, %v2304
    %v2323 = vsel %vm2317, %v2310, 920167782
    %v2324 = vsel %vm2316, %v2307, %v2323
    %v2325 = vsel %vm2315, %v2322, %v2324
    %v2326 = vsel %vm2314, %v2304, %v2307
    %v2327 = vsel %vm2317, %v2313, 1326507024
    %v2328 = vsel %vm2316, %v2310, %v2327
    %v2329 = vsel %vm2315, %v2326, %v2328
    %v2330 = vshll.u32 %v2290, 8
    %v2331 = vmul.u32.u64.compose %v2330, %v2329
    %v2332 = vextract.low.u32 %v2331
    %v2333 = vextract.high.u32 %v2331
    %v2334 = vmul.u32.u64.compose %v2330, %v2325
    %v2335 = vextract.low.u32 %v2334
    %v2336 = vextract.high.u32 %v2334
    %v2337 = vmul.u32 %v2330, %v2321
    %v2338 = vadd.s32 %v2333, %v2335
    %vm2339 = vc.u32 %v2333, %v2335
    %v2340 = vadd.s32 %v2336, 1
    %v2341 = vsel %vm2339, %v2340, %v2336
    %v2342 = vadd.s32 %v2337, %v2341
    %v2343 = vadd.s32 %v2342, 536870912
    %v2344 = vshrl.u32 %v2343, 30
    %v2345 = vshll.u32 %v2344, 30
    %v2346 = vsub.s32 %v2342, %v2345
    %vm2347 = vcmp.lt.s32.totalorder %v2346, 0
    %v2348 = vsub.s32 0, %v2346
    %v2349 = vsel %vm2347, %v2348, %v2346
    %v2350 = vclz %v2349
    %v2351 = vsub.s32 %v2350, 2
    %vm2352 = vcmp.gt.s32.totalorder 0, %v2351
    %v2353 = vsel %vm2352, 0, %v2351
    %v2354 = vsub.s32 32, %v2353
    %v2355 = vshll.u32 %v2346, %v2353
    %v2356 = vshrl.u32 %v2338, %v2354
    %v2357 = vor.u32 %v2355, %v2356
    %v2358 = vsub.s32 4294967266, %v2353
    %v2359 = vadd.s32 %v2358, 127
    %v2360 = vshll.u32 %v2359, 23
    %v2361 = vor.u32 4788187, %v2360
    %v2362 = vand.u32 2147483647, %v2361
    %v2364 = vcvt.s32.f32 %v2357
    %v2365 = vmul.f32 %v2364, %v2362
    %v2366 = vxor.u32 %v2365, 2147483648
    %v2367 = vsel %vm2284, %v2366, %v2365
    %v2368 = vsub.s32 4, %v2344
    %v2369 = vsel %vm2284, %v2368, %v2344
    %v2370 = vsel %vm2283, %v293, %v2367
    %v2371 = vsel %vm2283, 0, %v2369
    %v2372 = vcosq.f32.pop %v2370
    %v2373 = vsinq.f32.pop %v2370
    %vm2374 = vweird.f32 %v293
    %v2375 = vadd.s32 %v2371, 3
    %v2376 = vand.u32 %v2375, 3
    %vm2377 = vcmp.lt.s32.totalorder %v2376, 2
    %vm2378 = vcmp.eq.s32.totalorder %v2376, 0
    %v2379 = vxor.u32 %v2373, 2147483648
    %v2380 = vsel %vm2378, %v2372, %v2379
    %vm2381 = vcmp.eq.s32.totalorder %v2376, 2
    %v2382 = vxor.u32 %v2372, 2147483648
    %v2383 = vsel %vm2381, %v2382, %v2373
    %v2384 = vsel %vm2377, %v2380, %v2383
    %v2385 = vsel %vm2374, nan, %v2384
    %v2386 = vand.u32 2147483647, %v294
    %vm2387 = vcmp.le.f32.partialorder %v2386, 0.7853982
    %vm2388 = vcmp.lt.s32.totalorder %v294, 0
    %v2389 = vand.u32 %v294, 2139095040
    %v2390 = vshrl.u32 %v2389, 23
    %v2391 = vsub.s32 %v2390, 127
    %v2392 = vand.u32 2147483647, %v294
    %v2393 = vand.u32 %v2392, 8388607
    %v2394 = vor.u32 %v2393, 8388608
    %v2395 = vsub.s32 0, %v2394
    %v2396 = vadd.s32 %v2391, 1
    %vm2397 = vcmp.gt.s32.totalorder %v2396, 0
    %v2398 = vsel %vm2397, %v2396, 0
    %v2399 = vshrl.u32 %v2398, 5
    %v2400 = vand.u32 %v2398, 31
    %v2401 = vsub.s32 32, %v2400
    %v2402 = vshrl.u32 683565275, %v2401
    %v2403 = vshll.u32 683565275, %v2400
    %v2404 = vshrl.u32 2475754826, %v2401
    %v2405 = vor.u32 %v2403, %v2404
    %v2406 = vshll.u32 2475754826, %v2400
    %v2407 = vshrl.u32 2131351028, %v2401
    %v2408 = vor.u32 %v2406, %v2407
    %v2409 = vshll.u32 2131351028, %v2400
    %v2410 = vshrl.u32 2102212464, %v2401
    %v2411 = vor.u32 %v2409, %v2410
    %v2412 = vshll.u32 2102212464, %v2400
    %v2413 = vshrl.u32 920167782, %v2401
    %v2414 = vor.u32 %v2412, %v2413
    %v2415 = vshll.u32 920167782, %v2400
    %v2416 = vshrl.u32 1326507024, %v2401
    %v2417 = vor.u32 %v2415, %v2416
    %vm2418 = vcmp.lt.s32.totalorder %v2399, 1
    %vm2419 = vcmp.lt.s32.totalorder %v2399, 2
    %vm2420 = vcmp.lt.s32.totalorder %v2399, 3
    %vm2421 = vcmp.lt.s32.totalorder %v2399, 4
    %v2422 = vsel %vm2418, %v2402, %v2405
    %v2423 = vsel %vm2421, %v2411, 2102212464
    %v2424 = vsel %vm2420, %v2408, %v2423
    %v2425 = vsel %vm2419, %v2422, %v2424
    %v2426 = vsel %vm2418, %v2405, %v2408
    %v2427 = vsel %vm2421, %v2414, 920167782
    %v2428 = vsel %vm2420, %v2411, %v2427
    %v2429 = vsel %vm2419, %v2426, %v2428
    %v2430 = vsel %vm2418, %v2408, %v2411
    %v2431 = vsel %vm2421, %v2417, 1326507024
    %v2432 = vsel %vm2420, %v2414, %v2431
    %v2433 = vsel %vm2419, %v2430, %v2432
    %v2434 = vshll.u32 %v2394, 8
    %v2435 = vmul.u32.u64.compose %v2434, %v2433
    %v2436 = vextract.low.u32 %v2435
    %v2437 = vextract.high.u32 %v2435
    %v2438 = vmul.u32.u64.compose %v2434, %v2429
    %v2439 = vextract.low.u32 %v2438
    %v2440 = vextract.high.u32 %v2438
    %v2441 = vmul.u32 %v2434, %v2425
    %v2442 = vadd.s32 %v2437, %v2439
    %vm2443 = vc.u32 %v2437, %v2439
    %v2444 = vadd.s32 %v2440, 1
    %v2445 = vsel %vm2443, %v2444, %v2440
    %v2446 = vadd.s32 %v2441, %v2445
    %v2447 = vadd.s32 %v2446, 536870912
    %v2448 = vshrl.u32 %v2447, 30
    %v2449 = vshll.u32 %v2448, 30
    %v2450 = vsub.s32 %v2446, %v2449
    %vm2451 = vcmp.lt.s32.totalorder %v2450, 0
    %v2452 = vsub.s32 0, %v2450
    %v2453 = vsel %vm2451, %v2452, %v2450
    %v2454 = vclz %v2453
    %v2455 = vsub.s32 %v2454, 2
    %vm2456 = vcmp.gt.s32.totalorder 0, %v2455
    %v2457 = vsel %vm2456, 0, %v2455
    %v2458 = vsub.s32 32, %v2457
    %v2459 = vshll.u32 %v2450, %v2457
    %v2460 = vshrl.u32 %v2442, %v2458
    %v2461 = vor.u32 %v2459, %v2460
    %v2462 = vsub.s32 4294967266, %v2457
    %v2463 = vadd.s32 %v2462, 127
    %v2464 = vshll.u32 %v2463, 23
    %v2465 = vor.u32 4788187, %v2464
    %v2466 = vand.u32 2147483647, %v2465
    %v2468 = vcvt.s32.f32 %v2461
    %v2469 = vmul.f32 %v2468, %v2466
    %v2470 = vxor.u32 %v2469, 2147483648
    %v2471 = vsel %vm2388, %v2470, %v2469
    %v2472 = vsub.s32 4, %v2448
    %v2473 = vsel %vm2388, %v2472, %v2448
    %v2474 = vsel %vm2387, %v294, %v2471
    %v2475 = vsel %vm2387, 0, %v2473
    %v2476 = vcosq.f32.pop %v2474
    %v2477 = vsinq.f32.pop %v2474
    %vm2478 = vweird.f32 %v294
    %v2479 = vadd.s32 %v2475, 3
    %v2480 = vand.u32 %v2479, 3
    %vm2481 = vcmp.lt.s32.totalorder %v2480, 2
    %vm2482 = vcmp.eq.s32.totalorder %v2480, 0
    %v2483 = vxor.u32 %v2477, 2147483648
    %v2484 = vsel %vm2482, %v2476, %v2483
    %vm2485 = vcmp.eq.s32.totalorder %v2480, 2
    %v2486 = vxor.u32 %v2476, 2147483648
    %v2487 = vsel %vm2485, %v2486, %v2477
    %v2488 = vsel %vm2481, %v2484, %v2487
    %v2489 = vsel %vm2478, nan, %v2488
    %v2490 = vand.u32 2147483647, %v295
    %vm2491 = vcmp.le.f32.partialorder %v2490, 0.7853982
    %vm2492 = vcmp.lt.s32.totalorder %v295, 0
    %v2493 = vand.u32 %v295, 2139095040
    %v2494 = vshrl.u32 %v2493, 23
    %v2495 = vsub.s32 %v2494, 127
    %v2496 = vand.u32 2147483647, %v295
    %v2497 = vand.u32 %v2496, 8388607
    %v2498 = vor.u32 %v2497, 8388608
    %v2499 = vsub.s32 0, %v2498
    %v2500 = vadd.s32 %v2495, 1
    %vm2501 = vcmp.gt.s32.totalorder %v2500, 0
    %v2502 = vsel %vm2501, %v2500, 0
    %v2503 = vshrl.u32 %v2502, 5
    %v2504 = vand.u32 %v2502, 31
    %v2505 = vsub.s32 32, %v2504
    %v2506 = vshrl.u32 683565275, %v2505
    %v2507 = vshll.u32 683565275, %v2504
    %v2508 = vshrl.u32 2475754826, %v2505
    %v2509 = vor.u32 %v2507, %v2508
    %v2510 = vshll.u32 2475754826, %v2504
    %v2511 = vshrl.u32 2131351028, %v2505
    %v2512 = vor.u32 %v2510, %v2511
    %v2513 = vshll.u32 2131351028, %v2504
    %v2514 = vshrl.u32 2102212464, %v2505
    %v2515 = vor.u32 %v2513, %v2514
    %v2516 = vshll.u32 2102212464, %v2504
    %v2517 = vshrl.u32 920167782, %v2505
    %v2518 = vor.u32 %v2516, %v2517
    %v2519 = vshll.u32 920167782, %v2504
    %v2520 = vshrl.u32 1326507024, %v2505
    %v2521 = vor.u32 %v2519, %v2520
    %vm2522 = vcmp.lt.s32.totalorder %v2503, 1
    %vm2523 = vcmp.lt.s32.totalorder %v2503, 2
    %vm2524 = vcmp.lt.s32.totalorder %v2503, 3
    %vm2525 = vcmp.lt.s32.totalorder %v2503, 4
    %v2526 = vsel %vm2522, %v2506, %v2509
    %v2527 = vsel %vm2525, %v2515, 2102212464
    %v2528 = vsel %vm2524, %v2512, %v2527
    %v2529 = vsel %vm2523, %v2526, %v2528
    %v2530 = vsel %vm2522, %v2509, %v2512
    %v2531 = vsel %vm2525, %v2518, 920167782
    %v2532 = vsel %vm2524, %v2515, %v2531
    %v2533 = vsel %vm2523, %v2530, %v2532
    %v2534 = vsel %vm2522, %v2512, %v2515
    %v2535 = vsel %vm2525, %v2521, 1326507024
    %v2536 = vsel %vm2524, %v2518, %v2535
    %v2537 = vsel %vm2523, %v2534, %v2536
    %v2538 = vshll.u32 %v2498, 8
    %v2539 = vmul.u32.u64.compose %v2538, %v2537
    %v2540 = vextract.low.u32 %v2539
    %v2541 = vextract.high.u32 %v2539
    %v2542 = vmul.u32.u64.compose %v2538, %v2533
    %v2543 = vextract.low.u32 %v2542
    %v2544 = vextract.high.u32 %v2542
    %v2545 = vmul.u32 %v2538, %v2529
    %v2546 = vadd.s32 %v2541, %v2543
    %vm2547 = vc.u32 %v2541, %v2543
    %v2548 = vadd.s32 %v2544, 1
    %v2549 = vsel %vm2547, %v2548, %v2544
    %v2550 = vadd.s32 %v2545, %v2549
    %v2551 = vadd.s32 %v2550, 536870912
    %v2552 = vshrl.u32 %v2551, 30
    %v2553 = vshll.u32 %v2552, 30
    %v2554 = vsub.s32 %v2550, %v2553
    %vm2555 = vcmp.lt.s32.totalorder %v2554, 0
    %v2556 = vsub.s32 0, %v2554
    %v2557 = vsel %vm2555, %v2556, %v2554
    %v2558 = vclz %v2557
    %v2559 = vsub.s32 %v2558, 2
    %vm2560 = vcmp.gt.s32.totalorder 0, %v2559
    %v2561 = vsel %vm2560, 0, %v2559
    %v2562 = vsub.s32 32, %v2561
    %v2563 = vshll.u32 %v2554, %v2561
    %v2564 = vshrl.u32 %v2546, %v2562
    %v2565 = vor.u32 %v2563, %v2564
    %v2566 = vsub.s32 4294967266, %v2561
    %v2567 = vadd.s32 %v2566, 127
    %v2568 = vshll.u32 %v2567, 23
    %v2569 = vor.u32 4788187, %v2568
    %v2570 = vand.u32 2147483647, %v2569
    %v2572 = vcvt.s32.f32 %v2565
    %v2573 = vmul.f32 %v2572, %v2570
    %v2574 = vxor.u32 %v2573, 2147483648
    %v2575 = vsel %vm2492, %v2574, %v2573
    %v2576 = vsub.s32 4, %v2552
    %v2577 = vsel %vm2492, %v2576, %v2552
    %v2578 = vsel %vm2491, %v295, %v2575
    %v2579 = vsel %vm2491, 0, %v2577
    %v2580 = vcosq.f32.pop %v2578
    %v2581 = vsinq.f32.pop %v2578
    %vm2582 = vweird.f32 %v295
    %v2583 = vadd.s32 %v2579, 3
    %v2584 = vand.u32 %v2583, 3
    %vm2585 = vcmp.lt.s32.totalorder %v2584, 2
    %vm2586 = vcmp.eq.s32.totalorder %v2584, 0
    %v2587 = vxor.u32 %v2581, 2147483648
    %v2588 = vsel %vm2586, %v2580, %v2587
    %vm2589 = vcmp.eq.s32.totalorder %v2584, 2
    %v2590 = vxor.u32 %v2580, 2147483648
    %v2591 = vsel %vm2589, %v2590, %v2581
    %v2592 = vsel %vm2585, %v2588, %v2591
    %v2593 = vsel %vm2582, nan, %v2592
    %v2594 = vand.u32 2147483647, %v296
    %vm2595 = vcmp.le.f32.partialorder %v2594, 0.7853982
    %vm2596 = vcmp.lt.s32.totalorder %v296, 0
    %v2597 = vand.u32 %v296, 2139095040
    %v2598 = vshrl.u32 %v2597, 23
    %v2599 = vsub.s32 %v2598, 127
    %v2600 = vand.u32 2147483647, %v296
    %v2601 = vand.u32 %v2600, 8388607
    %v2602 = vor.u32 %v2601, 8388608
    %v2603 = vsub.s32 0, %v2602
    %v2604 = vadd.s32 %v2599, 1
    %vm2605 = vcmp.gt.s32.totalorder %v2604, 0
    %v2606 = vsel %vm2605, %v2604, 0
    %v2607 = vshrl.u32 %v2606, 5
    %v2608 = vand.u32 %v2606, 31
    %v2609 = vsub.s32 32, %v2608
    %v2610 = vshrl.u32 683565275, %v2609
    %v2611 = vshll.u32 683565275, %v2608
    %v2612 = vshrl.u32 2475754826, %v2609
    %v2613 = vor.u32 %v2611, %v2612
    %v2614 = vshll.u32 2475754826, %v2608
    %v2615 = vshrl.u32 2131351028, %v2609
    %v2616 = vor.u32 %v2614, %v2615
    %v2617 = vshll.u32 2131351028, %v2608
    %v2618 = vshrl.u32 2102212464, %v2609
    %v2619 = vor.u32 %v2617, %v2618
    %v2620 = vshll.u32 2102212464, %v2608
    %v2621 = vshrl.u32 920167782, %v2609
    %v2622 = vor.u32 %v2620, %v2621
    %v2623 = vshll.u32 920167782, %v2608
    %v2624 = vshrl.u32 1326507024, %v2609
    %v2625 = vor.u32 %v2623, %v2624
    %vm2626 = vcmp.lt.s32.totalorder %v2607, 1
    %vm2627 = vcmp.lt.s32.totalorder %v2607, 2
    %vm2628 = vcmp.lt.s32.totalorder %v2607, 3
    %vm2629 = vcmp.lt.s32.totalorder %v2607, 4
    %v2630 = vsel %vm2626, %v2610, %v2613
    %v2631 = vsel %vm2629, %v2619, 2102212464
    %v2632 = vsel %vm2628, %v2616, %v2631
    %v2633 = vsel %vm2627, %v2630, %v2632
    %v2634 = vsel %vm2626, %v2613, %v2616
    %v2635 = vsel %vm2629, %v2622, 920167782
    %v2636 = vsel %vm2628, %v2619, %v2635
    %v2637 = vsel %vm2627, %v2634, %v2636
    %v2638 = vsel %vm2626, %v2616, %v2619
    %v2639 = vsel %vm2629, %v2625, 1326507024
    %v2640 = vsel %vm2628, %v2622, %v2639
    %v2641 = vsel %vm2627, %v2638, %v2640
    %v2642 = vshll.u32 %v2602, 8
    %v2643 = vmul.u32.u64.compose %v2642, %v2641
    %v2644 = vextract.low.u32 %v2643
    %v2645 = vextract.high.u32 %v2643
    %v2646 = vmul.u32.u64.compose %v2642, %v2637
    %v2647 = vextract.low.u32 %v2646
    %v2648 = vextract.high.u32 %v2646
    %v2649 = vmul.u32 %v2642, %v2633
    %v2650 = vadd.s32 %v2645, %v2647
    %vm2651 = vc.u32 %v2645, %v2647
    %v2652 = vadd.s32 %v2648, 1
    %v2653 = vsel %vm2651, %v2652, %v2648
    %v2654 = vadd.s32 %v2649, %v2653
    %v2655 = vadd.s32 %v2654, 536870912
    %v2656 = vshrl.u32 %v2655, 30
    %v2657 = vshll.u32 %v2656, 30
    %v2658 = vsub.s32 %v2654, %v2657
    %vm2659 = vcmp.lt.s32.totalorder %v2658, 0
    %v2660 = vsub.s32 0, %v2658
    %v2661 = vsel %vm2659, %v2660, %v2658
    %v2662 = vclz %v2661
    %v2663 = vsub.s32 %v2662, 2
    %vm2664 = vcmp.gt.s32.totalorder 0, %v2663
    %v2665 = vsel %vm2664, 0, %v2663
    %v2666 = vsub.s32 32, %v2665
    %v2667 = vshll.u32 %v2658, %v2665
    %v2668 = vshrl.u32 %v2650, %v2666
    %v2669 = vor.u32 %v2667, %v2668
    %v2670 = vsub.s32 4294967266, %v2665
    %v2671 = vadd.s32 %v2670, 127
    %v2672 = vshll.u32 %v2671, 23
    %v2673 = vor.u32 4788187, %v2672
    %v2674 = vand.u32 2147483647, %v2673
    %v2676 = vcvt.s32.f32 %v2669
    %v2677 = vmul.f32 %v2676, %v2674
    %v2678 = vxor.u32 %v2677, 2147483648
    %v2679 = vsel %vm2596, %v2678, %v2677
    %v2680 = vsub.s32 4, %v2656
    %v2681 = vsel %vm2596, %v2680, %v2656
    %v2682 = vsel %vm2595, %v296, %v2679
    %v2683 = vsel %vm2595, 0, %v2681
    %v2684 = vcosq.f32.pop %v2682
    %v2685 = vsinq.f32.pop %v2682
    %vm2686 = vweird.f32 %v296
    %v2687 = vadd.s32 %v2683, 3
    %v2688 = vand.u32 %v2687, 3
    %vm2689 = vcmp.lt.s32.totalorder %v2688, 2
    %vm2690 = vcmp.eq.s32.totalorder %v2688, 0
    %v2691 = vxor.u32 %v2685, 2147483648
    %v2692 = vsel %vm2690, %v2684, %v2691
    %vm2693 = vcmp.eq.s32.totalorder %v2688, 2
    %v2694 = vxor.u32 %v2684, 2147483648
    %v2695 = vsel %vm2693, %v2694, %v2685
    %v2696 = vsel %vm2689, %v2692, %v2695
    %v2697 = vsel %vm2686, nan, %v2696
    %v2698 = vand.u32 2147483647, %v297
    %vm2699 = vcmp.le.f32.partialorder %v2698, 0.7853982
    %vm2700 = vcmp.lt.s32.totalorder %v297, 0
    %v2701 = vand.u32 %v297, 2139095040
    %v2702 = vshrl.u32 %v2701, 23
    %v2703 = vsub.s32 %v2702, 127
    %v2704 = vand.u32 2147483647, %v297
    %v2705 = vand.u32 %v2704, 8388607
    %v2706 = vor.u32 %v2705, 8388608
    %v2707 = vsub.s32 0, %v2706
    %v2708 = vadd.s32 %v2703, 1
    %vm2709 = vcmp.gt.s32.totalorder %v2708, 0
    %v2710 = vsel %vm2709, %v2708, 0
    %v2711 = vshrl.u32 %v2710, 5
    %v2712 = vand.u32 %v2710, 31
    %v2713 = vsub.s32 32, %v2712
    %v2714 = vshrl.u32 683565275, %v2713
    %v2715 = vshll.u32 683565275, %v2712
    %v2716 = vshrl.u32 2475754826, %v2713
    %v2717 = vor.u32 %v2715, %v2716
    %v2718 = vshll.u32 2475754826, %v2712
    %v2719 = vshrl.u32 2131351028, %v2713
    %v2720 = vor.u32 %v2718, %v2719
    %v2721 = vshll.u32 2131351028, %v2712
    %v2722 = vshrl.u32 2102212464, %v2713
    %v2723 = vor.u32 %v2721, %v2722
    %v2724 = vshll.u32 2102212464, %v2712
    %v2725 = vshrl.u32 920167782, %v2713
    %v2726 = vor.u32 %v2724, %v2725
    %v2727 = vshll.u32 920167782, %v2712
    %v2728 = vshrl.u32 1326507024, %v2713
    %v2729 = vor.u32 %v2727, %v2728
    %vm2730 = vcmp.lt.s32.totalorder %v2711, 1
    %vm2731 = vcmp.lt.s32.totalorder %v2711, 2
    %vm2732 = vcmp.lt.s32.totalorder %v2711, 3
    %vm2733 = vcmp.lt.s32.totalorder %v2711, 4
    %v2734 = vsel %vm2730, %v2714, %v2717
    %v2735 = vsel %vm2733, %v2723, 2102212464
    %v2736 = vsel %vm2732, %v2720, %v2735
    %v2737 = vsel %vm2731, %v2734, %v2736
    %v2738 = vsel %vm2730, %v2717, %v2720
    %v2739 = vsel %vm2733, %v2726, 920167782
    %v2740 = vsel %vm2732, %v2723, %v2739
    %v2741 = vsel %vm2731, %v2738, %v2740
    %v2742 = vsel %vm2730, %v2720, %v2723
    %v2743 = vsel %vm2733, %v2729, 1326507024
    %v2744 = vsel %vm2732, %v2726, %v2743
    %v2745 = vsel %vm2731, %v2742, %v2744
    %v2746 = vshll.u32 %v2706, 8
    %v2747 = vmul.u32.u64.compose %v2746, %v2745
    %v2748 = vextract.low.u32 %v2747
    %v2749 = vextract.high.u32 %v2747
    %v2750 = vmul.u32.u64.compose %v2746, %v2741
    %v2751 = vextract.low.u32 %v2750
    %v2752 = vextract.high.u32 %v2750
    %v2753 = vmul.u32 %v2746, %v2737
    %v2754 = vadd.s32 %v2749, %v2751
    %vm2755 = vc.u32 %v2749, %v2751
    %v2756 = vadd.s32 %v2752, 1
    %v2757 = vsel %vm2755, %v2756, %v2752
    %v2758 = vadd.s32 %v2753, %v2757
    %v2759 = vadd.s32 %v2758, 536870912
    %v2760 = vshrl.u32 %v2759, 30
    %v2761 = vshll.u32 %v2760, 30
    %v2762 = vsub.s32 %v2758, %v2761
    %vm2763 = vcmp.lt.s32.totalorder %v2762, 0
    %v2764 = vsub.s32 0, %v2762
    %v2765 = vsel %vm2763, %v2764, %v2762
    %v2766 = vclz %v2765
    %v2767 = vsub.s32 %v2766, 2
    %vm2768 = vcmp.gt.s32.totalorder 0, %v2767
    %v2769 = vsel %vm2768, 0, %v2767
    %v2770 = vsub.s32 32, %v2769
    %v2771 = vshll.u32 %v2762, %v2769
    %v2772 = vshrl.u32 %v2754, %v2770
    %v2773 = vor.u32 %v2771, %v2772
    %v2774 = vsub.s32 4294967266, %v2769
    %v2775 = vadd.s32 %v2774, 127
    %v2776 = vshll.u32 %v2775, 23
    %v2777 = vor.u32 4788187, %v2776
    %v2778 = vand.u32 2147483647, %v2777
    %v2780 = vcvt.s32.f32 %v2773
    %v2781 = vmul.f32 %v2780, %v2778
    %v2782 = vxor.u32 %v2781, 2147483648
    %v2783 = vsel %vm2700, %v2782, %v2781
    %v2784 = vsub.s32 4, %v2760
    %v2785 = vsel %vm2700, %v2784, %v2760
    %v2786 = vsel %vm2699, %v297, %v2783
    %v2787 = vsel %vm2699, 0, %v2785
    %v2788 = vcosq.f32.pop %v2786
    %v2789 = vsinq.f32.pop %v2786
    %vm2790 = vweird.f32 %v297
    %v2791 = vadd.s32 %v2787, 3
    %v2792 = vand.u32 %v2791, 3
    %vm2793 = vcmp.lt.s32.totalorder %v2792, 2
    %vm2794 = vcmp.eq.s32.totalorder %v2792, 0
    %v2795 = vxor.u32 %v2789, 2147483648
    %v2796 = vsel %vm2794, %v2788, %v2795
    %vm2797 = vcmp.eq.s32.totalorder %v2792, 2
    %v2798 = vxor.u32 %v2788, 2147483648
    %v2799 = vsel %vm2797, %v2798, %v2789
    %v2800 = vsel %vm2793, %v2796, %v2799
    %v2801 = vsel %vm2790, nan, %v2800
    %v2802 = vand.u32 2147483647, %v298
    %vm2803 = vcmp.le.f32.partialorder %v2802, 0.7853982
    %vm2804 = vcmp.lt.s32.totalorder %v298, 0
    %v2805 = vand.u32 %v298, 2139095040
    %v2806 = vshrl.u32 %v2805, 23
    %v2807 = vsub.s32 %v2806, 127
    %v2808 = vand.u32 2147483647, %v298
    %v2809 = vand.u32 %v2808, 8388607
    %v2810 = vor.u32 %v2809, 8388608
    %v2811 = vsub.s32 0, %v2810
    %v2812 = vadd.s32 %v2807, 1
    %vm2813 = vcmp.gt.s32.totalorder %v2812, 0
    %v2814 = vsel %vm2813, %v2812, 0
    %v2815 = vshrl.u32 %v2814, 5
    %v2816 = vand.u32 %v2814, 31
    %v2817 = vsub.s32 32, %v2816
    %v2818 = vshrl.u32 683565275, %v2817
    %v2819 = vshll.u32 683565275, %v2816
    %v2820 = vshrl.u32 2475754826, %v2817
    %v2821 = vor.u32 %v2819, %v2820
    %v2822 = vshll.u32 2475754826, %v2816
    %v2823 = vshrl.u32 2131351028, %v2817
    %v2824 = vor.u32 %v2822, %v2823
    %v2825 = vshll.u32 2131351028, %v2816
    %v2826 = vshrl.u32 2102212464, %v2817
    %v2827 = vor.u32 %v2825, %v2826
    %v2828 = vshll.u32 2102212464, %v2816
    %v2829 = vshrl.u32 920167782, %v2817
    %v2830 = vor.u32 %v2828, %v2829
    %v2831 = vshll.u32 920167782, %v2816
    %v2832 = vshrl.u32 1326507024, %v2817
    %v2833 = vor.u32 %v2831, %v2832
    %vm2834 = vcmp.lt.s32.totalorder %v2815, 1
    %vm2835 = vcmp.lt.s32.totalorder %v2815, 2
    %vm2836 = vcmp.lt.s32.totalorder %v2815, 3
    %vm2837 = vcmp.lt.s32.totalorder %v2815, 4
    %v2838 = vsel %vm2834, %v2818, %v2821
    %v2839 = vsel %vm2837, %v2827, 2102212464
    %v2840 = vsel %vm2836, %v2824, %v2839
    %v2841 = vsel %vm2835, %v2838, %v2840
    %v2842 = vsel %vm2834, %v2821, %v2824
    %v2843 = vsel %vm2837, %v2830, 920167782
    %v2844 = vsel %vm2836, %v2827, %v2843
    %v2845 = vsel %vm2835, %v2842, %v2844
    %v2846 = vsel %vm2834, %v2824, %v2827
    %v2847 = vsel %vm2837, %v2833, 1326507024
    %v2848 = vsel %vm2836, %v2830, %v2847
    %v2849 = vsel %vm2835, %v2846, %v2848
    %v2850 = vshll.u32 %v2810, 8
    %v2851 = vmul.u32.u64.compose %v2850, %v2849
    %v2852 = vextract.low.u32 %v2851
    %v2853 = vextract.high.u32 %v2851
    %v2854 = vmul.u32.u64.compose %v2850, %v2845
    %v2855 = vextract.low.u32 %v2854
    %v2856 = vextract.high.u32 %v2854
    %v2857 = vmul.u32 %v2850, %v2841
    %v2858 = vadd.s32 %v2853, %v2855
    %vm2859 = vc.u32 %v2853, %v2855
    %v2860 = vadd.s32 %v2856, 1
    %v2861 = vsel %vm2859, %v2860, %v2856
    %v2862 = vadd.s32 %v2857, %v2861
    %v2863 = vadd.s32 %v2862, 536870912
    %v2864 = vshrl.u32 %v2863, 30
    %v2865 = vshll.u32 %v2864, 30
    %v2866 = vsub.s32 %v2862, %v2865
    %vm2867 = vcmp.lt.s32.totalorder %v2866, 0
    %v2868 = vsub.s32 0, %v2866
    %v2869 = vsel %vm2867, %v2868, %v2866
    %v2870 = vclz %v2869
    %v2871 = vsub.s32 %v2870, 2
    %vm2872 = vcmp.gt.s32.totalorder 0, %v2871
    %v2873 = vsel %vm2872, 0, %v2871
    %v2874 = vsub.s32 32, %v2873
    %v2875 = vshll.u32 %v2866, %v2873
    %v2876 = vshrl.u32 %v2858, %v2874
    %v2877 = vor.u32 %v2875, %v2876
    %v2878 = vsub.s32 4294967266, %v2873
    %v2879 = vadd.s32 %v2878, 127
    %v2880 = vshll.u32 %v2879, 23
    %v2881 = vor.u32 4788187, %v2880
    %v2882 = vand.u32 2147483647, %v2881
    %v2884 = vcvt.s32.f32 %v2877
    %v2885 = vmul.f32 %v2884, %v2882
    %v2886 = vxor.u32 %v2885, 2147483648
    %v2887 = vsel %vm2804, %v2886, %v2885
    %v2888 = vsub.s32 4, %v2864
    %v2889 = vsel %vm2804, %v2888, %v2864
    %v2890 = vsel %vm2803, %v298, %v2887
    %v2891 = vsel %vm2803, 0, %v2889
    %v2892 = vcosq.f32.pop %v2890
    %v2893 = vsinq.f32.pop %v2890
    %vm2894 = vweird.f32 %v298
    %v2895 = vadd.s32 %v2891, 3
    %v2896 = vand.u32 %v2895, 3
    %vm2897 = vcmp.lt.s32.totalorder %v2896, 2
    %vm2898 = vcmp.eq.s32.totalorder %v2896, 0
    %v2899 = vxor.u32 %v2893, 2147483648
    %v2900 = vsel %vm2898, %v2892, %v2899
    %vm2901 = vcmp.eq.s32.totalorder %v2896, 2
    %v2902 = vxor.u32 %v2892, 2147483648
    %v2903 = vsel %vm2901, %v2902, %v2893
    %v2904 = vsel %vm2897, %v2900, %v2903
    %v2905 = vsel %vm2894, nan, %v2904
    %v2906 = vand.u32 2147483647, %v299
    %vm2907 = vcmp.le.f32.partialorder %v2906, 0.7853982
    %vm2908 = vcmp.lt.s32.totalorder %v299, 0
    %v2909 = vand.u32 %v299, 2139095040
    %v2910 = vshrl.u32 %v2909, 23
    %v2911 = vsub.s32 %v2910, 127
    %v2912 = vand.u32 2147483647, %v299
    %v2913 = vand.u32 %v2912, 8388607
    %v2914 = vor.u32 %v2913, 8388608
    %v2915 = vsub.s32 0, %v2914
    %v2916 = vadd.s32 %v2911, 1
    %vm2917 = vcmp.gt.s32.totalorder %v2916, 0
    %v2918 = vsel %vm2917, %v2916, 0
    %v2919 = vshrl.u32 %v2918, 5
    %v2920 = vand.u32 %v2918, 31
    %v2921 = vsub.s32 32, %v2920
    %v2922 = vshrl.u32 683565275, %v2921
    %v2923 = vshll.u32 683565275, %v2920
    %v2924 = vshrl.u32 2475754826, %v2921
    %v2925 = vor.u32 %v2923, %v2924
    %v2926 = vshll.u32 2475754826, %v2920
    %v2927 = vshrl.u32 2131351028, %v2921
    %v2928 = vor.u32 %v2926, %v2927
    %v2929 = vshll.u32 2131351028, %v2920
    %v2930 = vshrl.u32 2102212464, %v2921
    %v2931 = vor.u32 %v2929, %v2930
    %v2932 = vshll.u32 2102212464, %v2920
    %v2933 = vshrl.u32 920167782, %v2921
    %v2934 = vor.u32 %v2932, %v2933
    %v2935 = vshll.u32 920167782, %v2920
    %v2936 = vshrl.u32 1326507024, %v2921
    %v2937 = vor.u32 %v2935, %v2936
    %vm2938 = vcmp.lt.s32.totalorder %v2919, 1
    %vm2939 = vcmp.lt.s32.totalorder %v2919, 2
    %vm2940 = vcmp.lt.s32.totalorder %v2919, 3
    %vm2941 = vcmp.lt.s32.totalorder %v2919, 4
    %v2942 = vsel %vm2938, %v2922, %v2925
    %v2943 = vsel %vm2941, %v2931, 2102212464
    %v2944 = vsel %vm2940, %v2928, %v2943
    %v2945 = vsel %vm2939, %v2942, %v2944
    %v2946 = vsel %vm2938, %v2925, %v2928
    %v2947 = vsel %vm2941, %v2934, 920167782
    %v2948 = vsel %vm2940, %v2931, %v2947
    %v2949 = vsel %vm2939, %v2946, %v2948
    %v2950 = vsel %vm2938, %v2928, %v2931
    %v2951 = vsel %vm2941, %v2937, 1326507024
    %v2952 = vsel %vm2940, %v2934, %v2951
    %v2953 = vsel %vm2939, %v2950, %v2952
    %v2954 = vshll.u32 %v2914, 8
    %v2955 = vmul.u32.u64.compose %v2954, %v2953
    %v2956 = vextract.low.u32 %v2955
    %v2957 = vextract.high.u32 %v2955
    %v2958 = vmul.u32.u64.compose %v2954, %v2949
    %v2959 = vextract.low.u32 %v2958
    %v2960 = vextract.high.u32 %v2958
    %v2961 = vmul.u32 %v2954, %v2945
    %v2962 = vadd.s32 %v2957, %v2959
    %vm2963 = vc.u32 %v2957, %v2959
    %v2964 = vadd.s32 %v2960, 1
    %v2965 = vsel %vm2963, %v2964, %v2960
    %v2966 = vadd.s32 %v2961, %v2965
    %v2967 = vadd.s32 %v2966, 536870912
    %v2968 = vshrl.u32 %v2967, 30
    %v2969 = vshll.u32 %v2968, 30
    %v2970 = vsub.s32 %v2966, %v2969
    %vm2971 = vcmp.lt.s32.totalorder %v2970, 0
    %v2972 = vsub.s32 0, %v2970
    %v2973 = vsel %vm2971, %v2972, %v2970
    %v2974 = vclz %v2973
    %v2975 = vsub.s32 %v2974, 2
    %vm2976 = vcmp.gt.s32.totalorder 0, %v2975
    %v2977 = vsel %vm2976, 0, %v2975
    %v2978 = vsub.s32 32, %v2977
    %v2979 = vshll.u32 %v2970, %v2977
    %v2980 = vshrl.u32 %v2962, %v2978
    %v2981 = vor.u32 %v2979, %v2980
    %v2982 = vsub.s32 4294967266, %v2977
    %v2983 = vadd.s32 %v2982, 127
    %v2984 = vshll.u32 %v2983, 23
    %v2985 = vor.u32 4788187, %v2984
    %v2986 = vand.u32 2147483647, %v2985
    %v2988 = vcvt.s32.f32 %v2981
    %v2989 = vmul.f32 %v2988, %v2986
    %v2990 = vxor.u32 %v2989, 2147483648
    %v2991 = vsel %vm2908, %v2990, %v2989
    %v2992 = vsub.s32 4, %v2968
    %v2993 = vsel %vm2908, %v2992, %v2968
    %v2994 = vsel %vm2907, %v299, %v2991
    %v2995 = vsel %vm2907, 0, %v2993
    %v2996 = vcosq.f32.pop %v2994
    %v2997 = vsinq.f32.pop %v2994
    %vm2998 = vweird.f32 %v299
    %v2999 = vadd.s32 %v2995, 3
    %v3000 = vand.u32 %v2999, 3
    %vm3001 = vcmp.lt.s32.totalorder %v3000, 2
    %vm3002 = vcmp.eq.s32.totalorder %v3000, 0
    %v3003 = vxor.u32 %v2997, 2147483648
    %v3004 = vsel %vm3002, %v2996, %v3003
    %vm3005 = vcmp.eq.s32.totalorder %v3000, 2
    %v3006 = vxor.u32 %v2996, 2147483648
    %v3007 = vsel %vm3005, %v3006, %v2997
    %v3008 = vsel %vm3001, %v3004, %v3007
    %v3009 = vsel %vm2998, nan, %v3008
    %v3010 = vand.u32 2147483647, %v300
    %vm3011 = vcmp.le.f32.partialorder %v3010, 0.7853982
    %vm3012 = vcmp.lt.s32.totalorder %v300, 0
    %v3013 = vand.u32 %v300, 2139095040
    %v3014 = vshrl.u32 %v3013, 23
    %v3015 = vsub.s32 %v3014, 127
    %v3016 = vand.u32 2147483647, %v300
    %v3017 = vand.u32 %v3016, 8388607
    %v3018 = vor.u32 %v3017, 8388608
    %v3019 = vsub.s32 0, %v3018
    %v3020 = vadd.s32 %v3015, 1
    %vm3021 = vcmp.gt.s32.totalorder %v3020, 0
    %v3022 = vsel %vm3021, %v3020, 0
    %v3023 = vshrl.u32 %v3022, 5
    %v3024 = vand.u32 %v3022, 31
    %v3025 = vsub.s32 32, %v3024
    %v3026 = vshrl.u32 683565275, %v3025
    %v3027 = vshll.u32 683565275, %v3024
    %v3028 = vshrl.u32 2475754826, %v3025
    %v3029 = vor.u32 %v3027, %v3028
    %v3030 = vshll.u32 2475754826, %v3024
    %v3031 = vshrl.u32 2131351028, %v3025
    %v3032 = vor.u32 %v3030, %v3031
    %v3033 = vshll.u32 2131351028, %v3024
    %v3034 = vshrl.u32 2102212464, %v3025
    %v3035 = vor.u32 %v3033, %v3034
    %v3036 = vshll.u32 2102212464, %v3024
    %v3037 = vshrl.u32 920167782, %v3025
    %v3038 = vor.u32 %v3036, %v3037
    %v3039 = vshll.u32 920167782, %v3024
    %v3040 = vshrl.u32 1326507024, %v3025
    %v3041 = vor.u32 %v3039, %v3040
    %vm3042 = vcmp.lt.s32.totalorder %v3023, 1
    %vm3043 = vcmp.lt.s32.totalorder %v3023, 2
    %vm3044 = vcmp.lt.s32.totalorder %v3023, 3
    %vm3045 = vcmp.lt.s32.totalorder %v3023, 4
    %v3046 = vsel %vm3042, %v3026, %v3029
    %v3047 = vsel %vm3045, %v3035, 2102212464
    %v3048 = vsel %vm3044, %v3032, %v3047
    %v3049 = vsel %vm3043, %v3046, %v3048
    %v3050 = vsel %vm3042, %v3029, %v3032
    %v3051 = vsel %vm3045, %v3038, 920167782
    %v3052 = vsel %vm3044, %v3035, %v3051
    %v3053 = vsel %vm3043, %v3050, %v3052
    %v3054 = vsel %vm3042, %v3032, %v3035
    %v3055 = vsel %vm3045, %v3041, 1326507024
    %v3056 = vsel %vm3044, %v3038, %v3055
    %v3057 = vsel %vm3043, %v3054, %v3056
    %v3058 = vshll.u32 %v3018, 8
    %v3059 = vmul.u32.u64.compose %v3058, %v3057
    %v3060 = vextract.low.u32 %v3059
    %v3061 = vextract.high.u32 %v3059
    %v3062 = vmul.u32.u64.compose %v3058, %v3053
    %v3063 = vextract.low.u32 %v3062
    %v3064 = vextract.high.u32 %v3062
    %v3065 = vmul.u32 %v3058, %v3049
    %v3066 = vadd.s32 %v3061, %v3063
    %vm3067 = vc.u32 %v3061, %v3063
    %v3068 = vadd.s32 %v3064, 1
    %v3069 = vsel %vm3067, %v3068, %v3064
    %v3070 = vadd.s32 %v3065, %v3069
    %v3071 = vadd.s32 %v3070, 536870912
    %v3072 = vshrl.u32 %v3071, 30
    %v3073 = vshll.u32 %v3072, 30
    %v3074 = vsub.s32 %v3070, %v3073
    %vm3075 = vcmp.lt.s32.totalorder %v3074, 0
    %v3076 = vsub.s32 0, %v3074
    %v3077 = vsel %vm3075, %v3076, %v3074
    %v3078 = vclz %v3077
    %v3079 = vsub.s32 %v3078, 2
    %vm3080 = vcmp.gt.s32.totalorder 0, %v3079
    %v3081 = vsel %vm3080, 0, %v3079
    %v3082 = vsub.s32 32, %v3081
    %v3083 = vshll.u32 %v3074, %v3081
    %v3084 = vshrl.u32 %v3066, %v3082
    %v3085 = vor.u32 %v3083, %v3084
    %v3086 = vsub.s32 4294967266, %v3081
    %v3087 = vadd.s32 %v3086, 127
    %v3088 = vshll.u32 %v3087, 23
    %v3089 = vor.u32 4788187, %v3088
    %v3090 = vand.u32 2147483647, %v3089
    %v3092 = vcvt.s32.f32 %v3085
    %v3093 = vmul.f32 %v3092, %v3090
    %v3094 = vxor.u32 %v3093, 2147483648
    %v3095 = vsel %vm3012, %v3094, %v3093
    %v3096 = vsub.s32 4, %v3072
    %v3097 = vsel %vm3012, %v3096, %v3072
    %v3098 = vsel %vm3011, %v300, %v3095
    %v3099 = vsel %vm3011, 0, %v3097
    %v3100 = vcosq.f32.pop %v3098
    %v3101 = vsinq.f32.pop %v3098
    %vm3102 = vweird.f32 %v300
    %v3103 = vadd.s32 %v3099, 3
    %v3104 = vand.u32 %v3103, 3
    %vm3105 = vcmp.lt.s32.totalorder %v3104, 2
    %vm3106 = vcmp.eq.s32.totalorder %v3104, 0
    %v3107 = vxor.u32 %v3101, 2147483648
    %v3108 = vsel %vm3106, %v3100, %v3107
    %vm3109 = vcmp.eq.s32.totalorder %v3104, 2
    %v3110 = vxor.u32 %v3100, 2147483648
    %v3111 = vsel %vm3109, %v3110, %v3101
    %v3112 = vsel %vm3105, %v3108, %v3111
    %v3113 = vsel %vm3102, nan, %v3112
    %v3114 = vand.u32 2147483647, %v301
    %vm3115 = vcmp.le.f32.partialorder %v3114, 0.7853982
    %vm3116 = vcmp.lt.s32.totalorder %v301, 0
    %v3117 = vand.u32 %v301, 2139095040
    %v3118 = vshrl.u32 %v3117, 23
    %v3119 = vsub.s32 %v3118, 127
    %v3120 = vand.u32 2147483647, %v301
    %v3121 = vand.u32 %v3120, 8388607
    %v3122 = vor.u32 %v3121, 8388608
    %v3123 = vsub.s32 0, %v3122
    %v3124 = vadd.s32 %v3119, 1
    %vm3125 = vcmp.gt.s32.totalorder %v3124, 0
    %v3126 = vsel %vm3125, %v3124, 0
    %v3127 = vshrl.u32 %v3126, 5
    %v3128 = vand.u32 %v3126, 31
    %v3129 = vsub.s32 32, %v3128
    %v3130 = vshrl.u32 683565275, %v3129
    %v3131 = vshll.u32 683565275, %v3128
    %v3132 = vshrl.u32 2475754826, %v3129
    %v3133 = vor.u32 %v3131, %v3132
    %v3134 = vshll.u32 2475754826, %v3128
    %v3135 = vshrl.u32 2131351028, %v3129
    %v3136 = vor.u32 %v3134, %v3135
    %v3137 = vshll.u32 2131351028, %v3128
    %v3138 = vshrl.u32 2102212464, %v3129
    %v3139 = vor.u32 %v3137, %v3138
    %v3140 = vshll.u32 2102212464, %v3128
    %v3141 = vshrl.u32 920167782, %v3129
    %v3142 = vor.u32 %v3140, %v3141
    %v3143 = vshll.u32 920167782, %v3128
    %v3144 = vshrl.u32 1326507024, %v3129
    %v3145 = vor.u32 %v3143, %v3144
    %vm3146 = vcmp.lt.s32.totalorder %v3127, 1
    %vm3147 = vcmp.lt.s32.totalorder %v3127, 2
    %vm3148 = vcmp.lt.s32.totalorder %v3127, 3
    %vm3149 = vcmp.lt.s32.totalorder %v3127, 4
    %v3150 = vsel %vm3146, %v3130, %v3133
    %v3151 = vsel %vm3149, %v3139, 2102212464
    %v3152 = vsel %vm3148, %v3136, %v3151
    %v3153 = vsel %vm3147, %v3150, %v3152
    %v3154 = vsel %vm3146, %v3133, %v3136
    %v3155 = vsel %vm3149, %v3142, 920167782
    %v3156 = vsel %vm3148, %v3139, %v3155
    %v3157 = vsel %vm3147, %v3154, %v3156
    %v3158 = vsel %vm3146, %v3136, %v3139
    %v3159 = vsel %vm3149, %v3145, 1326507024
    %v3160 = vsel %vm3148, %v3142, %v3159
    %v3161 = vsel %vm3147, %v3158, %v3160
    %v3162 = vshll.u32 %v3122, 8
    %v3163 = vmul.u32.u64.compose %v3162, %v3161
    %v3164 = vextract.low.u32 %v3163
    %v3165 = vextract.high.u32 %v3163
    %v3166 = vmul.u32.u64.compose %v3162, %v3157
    %v3167 = vextract.low.u32 %v3166
    %v3168 = vextract.high.u32 %v3166
    %v3169 = vmul.u32 %v3162, %v3153
    %v3170 = vadd.s32 %v3165, %v3167
    %vm3171 = vc.u32 %v3165, %v3167
    %v3172 = vadd.s32 %v3168, 1
    %v3173 = vsel %vm3171, %v3172, %v3168
    %v3174 = vadd.s32 %v3169, %v3173
    %v3175 = vadd.s32 %v3174, 536870912
    %v3176 = vshrl.u32 %v3175, 30
    %v3177 = vshll.u32 %v3176, 30
    %v3178 = vsub.s32 %v3174, %v3177
    %vm3179 = vcmp.lt.s32.totalorder %v3178, 0
    %v3180 = vsub.s32 0, %v3178
    %v3181 = vsel %vm3179, %v3180, %v3178
    %v3182 = vclz %v3181
    %v3183 = vsub.s32 %v3182, 2
    %vm3184 = vcmp.gt.s32.totalorder 0, %v3183
    %v3185 = vsel %vm3184, 0, %v3183
    %v3186 = vsub.s32 32, %v3185
    %v3187 = vshll.u32 %v3178, %v3185
    %v3188 = vshrl.u32 %v3170, %v3186
    %v3189 = vor.u32 %v3187, %v3188
    %v3190 = vsub.s32 4294967266, %v3185
    %v3191 = vadd.s32 %v3190, 127
    %v3192 = vshll.u32 %v3191, 23
    %v3193 = vor.u32 4788187, %v3192
    %v3194 = vand.u32 2147483647, %v3193
    %v3196 = vcvt.s32.f32 %v3189
    %v3197 = vmul.f32 %v3196, %v3194
    %v3198 = vxor.u32 %v3197, 2147483648
    %v3199 = vsel %vm3116, %v3198, %v3197
    %v3200 = vsub.s32 4, %v3176
    %v3201 = vsel %vm3116, %v3200, %v3176
    %v3202 = vsel %vm3115, %v301, %v3199
    %v3203 = vsel %vm3115, 0, %v3201
    %v3204 = vcosq.f32.pop %v3202
    %v3205 = vsinq.f32.pop %v3202
    %vm3206 = vweird.f32 %v301
    %v3207 = vadd.s32 %v3203, 3
    %v3208 = vand.u32 %v3207, 3
    %vm3209 = vcmp.lt.s32.totalorder %v3208, 2
    %vm3210 = vcmp.eq.s32.totalorder %v3208, 0
    %v3211 = vxor.u32 %v3205, 2147483648
    %v3212 = vsel %vm3210, %v3204, %v3211
    %vm3213 = vcmp.eq.s32.totalorder %v3208, 2
    %v3214 = vxor.u32 %v3204, 2147483648
    %v3215 = vsel %vm3213, %v3214, %v3205
    %v3216 = vsel %vm3209, %v3212, %v3215
    %v3217 = vsel %vm3206, nan, %v3216
    %v3218 = vand.u32 2147483647, %v302
    %vm3219 = vcmp.le.f32.partialorder %v3218, 0.7853982
    %vm3220 = vcmp.lt.s32.totalorder %v302, 0
    %v3221 = vand.u32 %v302, 2139095040
    %v3222 = vshrl.u32 %v3221, 23
    %v3223 = vsub.s32 %v3222, 127
    %v3224 = vand.u32 2147483647, %v302
    %v3225 = vand.u32 %v3224, 8388607
    %v3226 = vor.u32 %v3225, 8388608
    %v3227 = vsub.s32 0, %v3226
    %v3228 = vadd.s32 %v3223, 1
    %vm3229 = vcmp.gt.s32.totalorder %v3228, 0
    %v3230 = vsel %vm3229, %v3228, 0
    %v3231 = vshrl.u32 %v3230, 5
    %v3232 = vand.u32 %v3230, 31
    %v3233 = vsub.s32 32, %v3232
    %v3234 = vshrl.u32 683565275, %v3233
    %v3235 = vshll.u32 683565275, %v3232
    %v3236 = vshrl.u32 2475754826, %v3233
    %v3237 = vor.u32 %v3235, %v3236
    %v3238 = vshll.u32 2475754826, %v3232
    %v3239 = vshrl.u32 2131351028, %v3233
    %v3240 = vor.u32 %v3238, %v3239
    %v3241 = vshll.u32 2131351028, %v3232
    %v3242 = vshrl.u32 2102212464, %v3233
    %v3243 = vor.u32 %v3241, %v3242
    %v3244 = vshll.u32 2102212464, %v3232
    %v3245 = vshrl.u32 920167782, %v3233
    %v3246 = vor.u32 %v3244, %v3245
    %v3247 = vshll.u32 920167782, %v3232
    %v3248 = vshrl.u32 1326507024, %v3233
    %v3249 = vor.u32 %v3247, %v3248
    %vm3250 = vcmp.lt.s32.totalorder %v3231, 1
    %vm3251 = vcmp.lt.s32.totalorder %v3231, 2
    %vm3252 = vcmp.lt.s32.totalorder %v3231, 3
    %vm3253 = vcmp.lt.s32.totalorder %v3231, 4
    %v3254 = vsel %vm3250, %v3234, %v3237
    %v3255 = vsel %vm3253, %v3243, 2102212464
    %v3256 = vsel %vm3252, %v3240, %v3255
    %v3257 = vsel %vm3251, %v3254, %v3256
    %v3258 = vsel %vm3250, %v3237, %v3240
    %v3259 = vsel %vm3253, %v3246, 920167782
    %v3260 = vsel %vm3252, %v3243, %v3259
    %v3261 = vsel %vm3251, %v3258, %v3260
    %v3262 = vsel %vm3250, %v3240, %v3243
    %v3263 = vsel %vm3253, %v3249, 1326507024
    %v3264 = vsel %vm3252, %v3246, %v3263
    %v3265 = vsel %vm3251, %v3262, %v3264
    %v3266 = vshll.u32 %v3226, 8
    %v3267 = vmul.u32.u64.compose %v3266, %v3265
    %v3268 = vextract.low.u32 %v3267
    %v3269 = vextract.high.u32 %v3267
    %v3270 = vmul.u32.u64.compose %v3266, %v3261
    %v3271 = vextract.low.u32 %v3270
    %v3272 = vextract.high.u32 %v3270
    %v3273 = vmul.u32 %v3266, %v3257
    %v3274 = vadd.s32 %v3269, %v3271
    %vm3275 = vc.u32 %v3269, %v3271
    %v3276 = vadd.s32 %v3272, 1
    %v3277 = vsel %vm3275, %v3276, %v3272
    %v3278 = vadd.s32 %v3273, %v3277
    %v3279 = vadd.s32 %v3278, 536870912
    %v3280 = vshrl.u32 %v3279, 30
    %v3281 = vshll.u32 %v3280, 30
    %v3282 = vsub.s32 %v3278, %v3281
    %vm3283 = vcmp.lt.s32.totalorder %v3282, 0
    %v3284 = vsub.s32 0, %v3282
    %v3285 = vsel %vm3283, %v3284, %v3282
    %v3286 = vclz %v3285
    %v3287 = vsub.s32 %v3286, 2
    %vm3288 = vcmp.gt.s32.totalorder 0, %v3287
    %v3289 = vsel %vm3288, 0, %v3287
    %v3290 = vsub.s32 32, %v3289
    %v3291 = vshll.u32 %v3282, %v3289
    %v3292 = vshrl.u32 %v3274, %v3290
    %v3293 = vor.u32 %v3291, %v3292
    %v3294 = vsub.s32 4294967266, %v3289
    %v3295 = vadd.s32 %v3294, 127
    %v3296 = vshll.u32 %v3295, 23
    %v3297 = vor.u32 4788187, %v3296
    %v3298 = vand.u32 2147483647, %v3297
    %v3300 = vcvt.s32.f32 %v3293
    %v3301 = vmul.f32 %v3300, %v3298
    %v3302 = vxor.u32 %v3301, 2147483648
    %v3303 = vsel %vm3220, %v3302, %v3301
    %v3304 = vsub.s32 4, %v3280
    %v3305 = vsel %vm3220, %v3304, %v3280
    %v3306 = vsel %vm3219, %v302, %v3303
    %v3307 = vsel %vm3219, 0, %v3305
    %v3308 = vcosq.f32.pop %v3306
    %v3309 = vsinq.f32.pop %v3306
    %vm3310 = vweird.f32 %v302
    %v3311 = vadd.s32 %v3307, 3
    %v3312 = vand.u32 %v3311, 3
    %vm3313 = vcmp.lt.s32.totalorder %v3312, 2
    %vm3314 = vcmp.eq.s32.totalorder %v3312, 0
    %v3315 = vxor.u32 %v3309, 2147483648
    %v3316 = vsel %vm3314, %v3308, %v3315
    %vm3317 = vcmp.eq.s32.totalorder %v3312, 2
    %v3318 = vxor.u32 %v3308, 2147483648
    %v3319 = vsel %vm3317, %v3318, %v3309
    %v3320 = vsel %vm3313, %v3316, %v3319
    %v3321 = vsel %vm3310, nan, %v3320
    %v3322 = vand.u32 2147483647, %v303
    %vm3323 = vcmp.le.f32.partialorder %v3322, 0.7853982
    %vm3324 = vcmp.lt.s32.totalorder %v303, 0
    %v3325 = vand.u32 %v303, 2139095040
    %v3326 = vshrl.u32 %v3325, 23
    %v3327 = vsub.s32 %v3326, 127
    %v3328 = vand.u32 2147483647, %v303
    %v3329 = vand.u32 %v3328, 8388607
    %v3330 = vor.u32 %v3329, 8388608
    %v3331 = vsub.s32 0, %v3330
    %v3332 = vadd.s32 %v3327, 1
    %vm3333 = vcmp.gt.s32.totalorder %v3332, 0
    %v3334 = vsel %vm3333, %v3332, 0
    %v3335 = vshrl.u32 %v3334, 5
    %v3336 = vand.u32 %v3334, 31
    %v3337 = vsub.s32 32, %v3336
    %v3338 = vshrl.u32 683565275, %v3337
    %v3339 = vshll.u32 683565275, %v3336
    %v3340 = vshrl.u32 2475754826, %v3337
    %v3341 = vor.u32 %v3339, %v3340
    %v3342 = vshll.u32 2475754826, %v3336
    %v3343 = vshrl.u32 2131351028, %v3337
    %v3344 = vor.u32 %v3342, %v3343
    %v3345 = vshll.u32 2131351028, %v3336
    %v3346 = vshrl.u32 2102212464, %v3337
    %v3347 = vor.u32 %v3345, %v3346
    %v3348 = vshll.u32 2102212464, %v3336
    %v3349 = vshrl.u32 920167782, %v3337
    %v3350 = vor.u32 %v3348, %v3349
    %v3351 = vshll.u32 920167782, %v3336
    %v3352 = vshrl.u32 1326507024, %v3337
    %v3353 = vor.u32 %v3351, %v3352
    %vm3354 = vcmp.lt.s32.totalorder %v3335, 1
    %vm3355 = vcmp.lt.s32.totalorder %v3335, 2
    %vm3356 = vcmp.lt.s32.totalorder %v3335, 3
    %vm3357 = vcmp.lt.s32.totalorder %v3335, 4
    %v3358 = vsel %vm3354, %v3338, %v3341
    %v3359 = vsel %vm3357, %v3347, 2102212464
    %v3360 = vsel %vm3356, %v3344, %v3359
    %v3361 = vsel %vm3355, %v3358, %v3360
    %v3362 = vsel %vm3354, %v3341, %v3344
    %v3363 = vsel %vm3357, %v3350, 920167782
    %v3364 = vsel %vm3356, %v3347, %v3363
    %v3365 = vsel %vm3355, %v3362, %v3364
    %v3366 = vsel %vm3354, %v3344, %v3347
    %v3367 = vsel %vm3357, %v3353, 1326507024
    %v3368 = vsel %vm3356, %v3350, %v3367
    %v3369 = vsel %vm3355, %v3366, %v3368
    %v3370 = vshll.u32 %v3330, 8
    %v3371 = vmul.u32.u64.compose %v3370, %v3369
    %v3372 = vextract.low.u32 %v3371
    %v3373 = vextract.high.u32 %v3371
    %v3374 = vmul.u32.u64.compose %v3370, %v3365
    %v3375 = vextract.low.u32 %v3374
    %v3376 = vextract.high.u32 %v3374
    %v3377 = vmul.u32 %v3370, %v3361
    %v3378 = vadd.s32 %v3373, %v3375
    %vm3379 = vc.u32 %v3373, %v3375
    %v3380 = vadd.s32 %v3376, 1
    %v3381 = vsel %vm3379, %v3380, %v3376
    %v3382 = vadd.s32 %v3377, %v3381
    %v3383 = vadd.s32 %v3382, 536870912
    %v3384 = vshrl.u32 %v3383, 30
    %v3385 = vshll.u32 %v3384, 30
    %v3386 = vsub.s32 %v3382, %v3385
    %vm3387 = vcmp.lt.s32.totalorder %v3386, 0
    %v3388 = vsub.s32 0, %v3386
    %v3389 = vsel %vm3387, %v3388, %v3386
    %v3390 = vclz %v3389
    %v3391 = vsub.s32 %v3390, 2
    %vm3392 = vcmp.gt.s32.totalorder 0, %v3391
    %v3393 = vsel %vm3392, 0, %v3391
    %v3394 = vsub.s32 32, %v3393
    %v3395 = vshll.u32 %v3386, %v3393
    %v3396 = vshrl.u32 %v3378, %v3394
    %v3397 = vor.u32 %v3395, %v3396
    %v3398 = vsub.s32 4294967266, %v3393
    %v3399 = vadd.s32 %v3398, 127
    %v3400 = vshll.u32 %v3399, 23
    %v3401 = vor.u32 4788187, %v3400
    %v3402 = vand.u32 2147483647, %v3401
    %v3404 = vcvt.s32.f32 %v3397
    %v3405 = vmul.f32 %v3404, %v3402
    %v3406 = vxor.u32 %v3405, 2147483648
    %v3407 = vsel %vm3324, %v3406, %v3405
    %v3408 = vsub.s32 4, %v3384
    %v3409 = vsel %vm3324, %v3408, %v3384
    %v3410 = vsel %vm3323, %v303, %v3407
    %v3411 = vsel %vm3323, 0, %v3409
    %v3412 = vcosq.f32.pop %v3410
    %v3413 = vsinq.f32.pop %v3410
    %vm3414 = vweird.f32 %v303
    %v3415 = vadd.s32 %v3411, 3
    %v3416 = vand.u32 %v3415, 3
    %vm3417 = vcmp.lt.s32.totalorder %v3416, 2
    %vm3418 = vcmp.eq.s32.totalorder %v3416, 0
    %v3419 = vxor.u32 %v3413, 2147483648
    %v3420 = vsel %vm3418, %v3412, %v3419
    %vm3421 = vcmp.eq.s32.totalorder %v3416, 2
    %v3422 = vxor.u32 %v3412, 2147483648
    %v3423 = vsel %vm3421, %v3422, %v3413
    %v3424 = vsel %vm3417, %v3420, %v3423
    %v3425 = vsel %vm3414, nan, %v3424
    %v3426 = vand.u32 2147483647, %v304
    %vm3427 = vcmp.le.f32.partialorder %v3426, 0.7853982
    %vm3428 = vcmp.lt.s32.totalorder %v304, 0
    %v3429 = vand.u32 %v304, 2139095040
    %v3430 = vshrl.u32 %v3429, 23
    %v3431 = vsub.s32 %v3430, 127
    %v3432 = vand.u32 2147483647, %v304
    %v3433 = vand.u32 %v3432, 8388607
    %v3434 = vor.u32 %v3433, 8388608
    %v3435 = vsub.s32 0, %v3434
    %v3436 = vadd.s32 %v3431, 1
    %vm3437 = vcmp.gt.s32.totalorder %v3436, 0
    %v3438 = vsel %vm3437, %v3436, 0
    %v3439 = vshrl.u32 %v3438, 5
    %v3440 = vand.u32 %v3438, 31
    %v3441 = vsub.s32 32, %v3440
    %v3442 = vshrl.u32 683565275, %v3441
    %v3443 = vshll.u32 683565275, %v3440
    %v3444 = vshrl.u32 2475754826, %v3441
    %v3445 = vor.u32 %v3443, %v3444
    %v3446 = vshll.u32 2475754826, %v3440
    %v3447 = vshrl.u32 2131351028, %v3441
    %v3448 = vor.u32 %v3446, %v3447
    %v3449 = vshll.u32 2131351028, %v3440
    %v3450 = vshrl.u32 2102212464, %v3441
    %v3451 = vor.u32 %v3449, %v3450
    %v3452 = vshll.u32 2102212464, %v3440
    %v3453 = vshrl.u32 920167782, %v3441
    %v3454 = vor.u32 %v3452, %v3453
    %v3455 = vshll.u32 920167782, %v3440
    %v3456 = vshrl.u32 1326507024, %v3441
    %v3457 = vor.u32 %v3455, %v3456
    %vm3458 = vcmp.lt.s32.totalorder %v3439, 1
    %vm3459 = vcmp.lt.s32.totalorder %v3439, 2
    %vm3460 = vcmp.lt.s32.totalorder %v3439, 3
    %vm3461 = vcmp.lt.s32.totalorder %v3439, 4
    %v3462 = vsel %vm3458, %v3442, %v3445
    %v3463 = vsel %vm3461, %v3451, 2102212464
    %v3464 = vsel %vm3460, %v3448, %v3463
    %v3465 = vsel %vm3459, %v3462, %v3464
    %v3466 = vsel %vm3458, %v3445, %v3448
    %v3467 = vsel %vm3461, %v3454, 920167782
    %v3468 = vsel %vm3460, %v3451, %v3467
    %v3469 = vsel %vm3459, %v3466, %v3468
    %v3470 = vsel %vm3458, %v3448, %v3451
    %v3471 = vsel %vm3461, %v3457, 1326507024
    %v3472 = vsel %vm3460, %v3454, %v3471
    %v3473 = vsel %vm3459, %v3470, %v3472
    %v3474 = vshll.u32 %v3434, 8
    %v3475 = vmul.u32.u64.compose %v3474, %v3473
    %v3476 = vextract.low.u32 %v3475
    %v3477 = vextract.high.u32 %v3475
    %v3478 = vmul.u32.u64.compose %v3474, %v3469
    %v3479 = vextract.low.u32 %v3478
    %v3480 = vextract.high.u32 %v3478
    %v3481 = vmul.u32 %v3474, %v3465
    %v3482 = vadd.s32 %v3477, %v3479
    %vm3483 = vc.u32 %v3477, %v3479
    %v3484 = vadd.s32 %v3480, 1
    %v3485 = vsel %vm3483, %v3484, %v3480
    %v3486 = vadd.s32 %v3481, %v3485
    %v3487 = vadd.s32 %v3486, 536870912
    %v3488 = vshrl.u32 %v3487, 30
    %v3489 = vshll.u32 %v3488, 30
    %v3490 = vsub.s32 %v3486, %v3489
    %vm3491 = vcmp.lt.s32.totalorder %v3490, 0
    %v3492 = vsub.s32 0, %v3490
    %v3493 = vsel %vm3491, %v3492, %v3490
    %v3494 = vclz %v3493
    %v3495 = vsub.s32 %v3494, 2
    %vm3496 = vcmp.gt.s32.totalorder 0, %v3495
    %v3497 = vsel %vm3496, 0, %v3495
    %v3498 = vsub.s32 32, %v3497
    %v3499 = vshll.u32 %v3490, %v3497
    %v3500 = vshrl.u32 %v3482, %v3498
    %v3501 = vor.u32 %v3499, %v3500
    %v3502 = vsub.s32 4294967266, %v3497
    %v3503 = vadd.s32 %v3502, 127
    %v3504 = vshll.u32 %v3503, 23
    %v3505 = vor.u32 4788187, %v3504
    %v3506 = vand.u32 2147483647, %v3505
    %v3508 = vcvt.s32.f32 %v3501
    %v3509 = vmul.f32 %v3508, %v3506
    %v3510 = vxor.u32 %v3509, 2147483648
    %v3511 = vsel %vm3428, %v3510, %v3509
    %v3512 = vsub.s32 4, %v3488
    %v3513 = vsel %vm3428, %v3512, %v3488
    %v3514 = vsel %vm3427, %v304, %v3511
    %v3515 = vsel %vm3427, 0, %v3513
    %v3516 = vcosq.f32.pop %v3514
    %v3517 = vsinq.f32.pop %v3514
    %vm3518 = vweird.f32 %v304
    %v3519 = vadd.s32 %v3515, 3
    %v3520 = vand.u32 %v3519, 3
    %vm3521 = vcmp.lt.s32.totalorder %v3520, 2
    %vm3522 = vcmp.eq.s32.totalorder %v3520, 0
    %v3523 = vxor.u32 %v3517, 2147483648
    %v3524 = vsel %vm3522, %v3516, %v3523
    %vm3525 = vcmp.eq.s32.totalorder %v3520, 2
    %v3526 = vxor.u32 %v3516, 2147483648
    %v3527 = vsel %vm3525, %v3526, %v3517
    %v3528 = vsel %vm3521, %v3524, %v3527
    %v3529 = vsel %vm3518, nan, %v3528
    %v3530 = vand.u32 2147483647, %v305
    %vm3531 = vcmp.le.f32.partialorder %v3530, 0.7853982
    %vm3532 = vcmp.lt.s32.totalorder %v305, 0
    %v3533 = vand.u32 %v305, 2139095040
    %v3534 = vshrl.u32 %v3533, 23
    %v3535 = vsub.s32 %v3534, 127
    %v3536 = vand.u32 2147483647, %v305
    %v3537 = vand.u32 %v3536, 8388607
    %v3538 = vor.u32 %v3537, 8388608
    %v3539 = vsub.s32 0, %v3538
    %v3540 = vadd.s32 %v3535, 1
    %vm3541 = vcmp.gt.s32.totalorder %v3540, 0
    %v3542 = vsel %vm3541, %v3540, 0
    %v3543 = vshrl.u32 %v3542, 5
    %v3544 = vand.u32 %v3542, 31
    %v3545 = vsub.s32 32, %v3544
    %v3546 = vshrl.u32 683565275, %v3545
    %v3547 = vshll.u32 683565275, %v3544
    %v3548 = vshrl.u32 2475754826, %v3545
    %v3549 = vor.u32 %v3547, %v3548
    %v3550 = vshll.u32 2475754826, %v3544
    %v3551 = vshrl.u32 2131351028, %v3545
    %v3552 = vor.u32 %v3550, %v3551
    %v3553 = vshll.u32 2131351028, %v3544
    %v3554 = vshrl.u32 2102212464, %v3545
    %v3555 = vor.u32 %v3553, %v3554
    %v3556 = vshll.u32 2102212464, %v3544
    %v3557 = vshrl.u32 920167782, %v3545
    %v3558 = vor.u32 %v3556, %v3557
    %v3559 = vshll.u32 920167782, %v3544
    %v3560 = vshrl.u32 1326507024, %v3545
    %v3561 = vor.u32 %v3559, %v3560
    %vm3562 = vcmp.lt.s32.totalorder %v3543, 1
    %vm3563 = vcmp.lt.s32.totalorder %v3543, 2
    %vm3564 = vcmp.lt.s32.totalorder %v3543, 3
    %vm3565 = vcmp.lt.s32.totalorder %v3543, 4
    %v3566 = vsel %vm3562, %v3546, %v3549
    %v3567 = vsel %vm3565, %v3555, 2102212464
    %v3568 = vsel %vm3564, %v3552, %v3567
    %v3569 = vsel %vm3563, %v3566, %v3568
    %v3570 = vsel %vm3562, %v3549, %v3552
    %v3571 = vsel %vm3565, %v3558, 920167782
    %v3572 = vsel %vm3564, %v3555, %v3571
    %v3573 = vsel %vm3563, %v3570, %v3572
    %v3574 = vsel %vm3562, %v3552, %v3555
    %v3575 = vsel %vm3565, %v3561, 1326507024
    %v3576 = vsel %vm3564, %v3558, %v3575
    %v3577 = vsel %vm3563, %v3574, %v3576
    %v3578 = vshll.u32 %v3538, 8
    %v3579 = vmul.u32.u64.compose %v3578, %v3577
    %v3580 = vextract.low.u32 %v3579
    %v3581 = vextract.high.u32 %v3579
    %v3582 = vmul.u32.u64.compose %v3578, %v3573
    %v3583 = vextract.low.u32 %v3582
    %v3584 = vextract.high.u32 %v3582
    %v3585 = vmul.u32 %v3578, %v3569
    %v3586 = vadd.s32 %v3581, %v3583
    %vm3587 = vc.u32 %v3581, %v3583
    %v3588 = vadd.s32 %v3584, 1
    %v3589 = vsel %vm3587, %v3588, %v3584
    %v3590 = vadd.s32 %v3585, %v3589
    %v3591 = vadd.s32 %v3590, 536870912
    %v3592 = vshrl.u32 %v3591, 30
    %v3593 = vshll.u32 %v3592, 30
    %v3594 = vsub.s32 %v3590, %v3593
    %vm3595 = vcmp.lt.s32.totalorder %v3594, 0
    %v3596 = vsub.s32 0, %v3594
    %v3597 = vsel %vm3595, %v3596, %v3594
    %v3598 = vclz %v3597
    %v3599 = vsub.s32 %v3598, 2
    %vm3600 = vcmp.gt.s32.totalorder 0, %v3599
    %v3601 = vsel %vm3600, 0, %v3599
    %v3602 = vsub.s32 32, %v3601
    %v3603 = vshll.u32 %v3594, %v3601
    %v3604 = vshrl.u32 %v3586, %v3602
    %v3605 = vor.u32 %v3603, %v3604
    %v3606 = vsub.s32 4294967266, %v3601
    %v3607 = vadd.s32 %v3606, 127
    %v3608 = vshll.u32 %v3607, 23
    %v3609 = vor.u32 4788187, %v3608
    %v3610 = vand.u32 2147483647, %v3609
    %v3612 = vcvt.s32.f32 %v3605
    %v3613 = vmul.f32 %v3612, %v3610
    %v3614 = vxor.u32 %v3613, 2147483648
    %v3615 = vsel %vm3532, %v3614, %v3613
    %v3616 = vsub.s32 4, %v3592
    %v3617 = vsel %vm3532, %v3616, %v3592
    %v3618 = vsel %vm3531, %v305, %v3615
    %v3619 = vsel %vm3531, 0, %v3617
    %v3620 = vcosq.f32.pop %v3618
    %v3621 = vsinq.f32.pop %v3618
    %vm3622 = vweird.f32 %v305
    %v3623 = vadd.s32 %v3619, 3
    %v3624 = vand.u32 %v3623, 3
    %vm3625 = vcmp.lt.s32.totalorder %v3624, 2
    %vm3626 = vcmp.eq.s32.totalorder %v3624, 0
    %v3627 = vxor.u32 %v3621, 2147483648
    %v3628 = vsel %vm3626, %v3620, %v3627
    %vm3629 = vcmp.eq.s32.totalorder %v3624, 2
    %v3630 = vxor.u32 %v3620, 2147483648
    %v3631 = vsel %vm3629, %v3630, %v3621
    %v3632 = vsel %vm3625, %v3628, %v3631
    %v3633 = vsel %vm3622, nan, %v3632
    %3634 = vst [vmem:[#allocation2] sm:$0xff] %v409
    %3635 = vst [vmem:[#allocation2 + $0x8] sm:$0xff] %v513
    %3636 = vst [vmem:[#allocation2 + $0x20] sm:$0xff] %v617
    %3637 = vst [vmem:[#allocation2 + $0x28] sm:$0xff] %v721
    %3638 = vst [vmem:[#allocation2 + $0x40] sm:$0xff] %v825
    %3639 = vst [vmem:[#allocation2 + $0x48] sm:$0xff] %v929
    %3640 = vst [vmem:[#allocation2 + $0x60] sm:$0xff] %v1033
    %3641 = vst [vmem:[#allocation2 + $0x68] sm:$0xff] %v1137
    %3642 = vst [vmem:[#allocation2 + $0x80] sm:$0xff] %v1241
    %3643 = vst [vmem:[#allocation2 + $0x88] sm:$0xff] %v1345
    %3644 = vst [vmem:[#allocation2 + $0xa0] sm:$0xff] %v1449
    %3645 = vst [vmem:[#allocation2 + $0xa8] sm:$0xff] %v1553
    %3646 = vst [vmem:[#allocation2 + $0xc0] sm:$0xff] %v1657
    %3647 = vst [vmem:[#allocation2 + $0xc8] sm:$0xff] %v1761
    %3648 = vst [vmem:[#allocation2 + $0xe0] sm:$0xff] %v1865
    %3649 = vst [vmem:[#allocation2 + $0xe8] sm:$0xff] %v1969
    %3650 = vst [vmem:[#allocation2 + $0x100] sm:$0xff] %v2073
    %3651 = vst [vmem:[#allocation2 + $0x108] sm:$0xff] %v2177
    %3652 = vst [vmem:[#allocation2 + $0x120] sm:$0xff] %v2281
    %3653 = vst [vmem:[#allocation2 + $0x128] sm:$0xff] %v2385
    %3654 = vst [vmem:[#allocation2 + $0x140] sm:$0xff] %v2489
    %3655 = vst [vmem:[#allocation2 + $0x148] sm:$0xff] %v2593
    %3656 = vst [vmem:[#allocation2 + $0x160] sm:$0xff] %v2697
    %3657 = vst [vmem:[#allocation2 + $0x168] sm:$0xff] %v2801
    %3658 = vst [vmem:[#allocation2 + $0x180] sm:$0xff] %v2905
    %3659 = vst [vmem:[#allocation2 + $0x188] sm:$0xff] %v3009
    %3660 = vst [vmem:[#allocation2 + $0x1a0] sm:$0xff] %v3113
    %3661 = vst [vmem:[#allocation2 + $0x1a8] sm:$0xff] %v3217
    %3662 = vst [vmem:[#allocation2 + $0x1c0] sm:$0xff] %v3321
    %3663 = vst [vmem:[#allocation2 + $0x1c8] sm:$0xff] %v3425
    %3664 = vst [vmem:[#allocation2 + $0x1e0] sm:$0xff] %v3529
    %3665 = vst [vmem:[#allocation2 + $0x1e8] sm:$0xff] %v3633
    %v3666 = vand.u32 2147483647, %v274
    %vm3667 = vcmp.le.f32.partialorder %v3666, 0.7853982
    %vm3668 = vcmp.lt.s32.totalorder %v274, 0
    %v3669 = vand.u32 %v274, 2139095040
    %v3670 = vshrl.u32 %v3669, 23
    %v3671 = vsub.s32 %v3670, 127
    %v3672 = vand.u32 2147483647, %v274
    %v3673 = vand.u32 %v3672, 8388607
    %v3674 = vor.u32 %v3673, 8388608
    %v3675 = vsub.s32 0, %v3674
    %v3676 = vadd.s32 %v3671, 1
    %vm3677 = vcmp.gt.s32.totalorder %v3676, 0
    %v3678 = vsel %vm3677, %v3676, 0
    %v3679 = vshrl.u32 %v3678, 5
    %v3680 = vand.u32 %v3678, 31
    %v3681 = vsub.s32 32, %v3680
    %v3682 = vshrl.u32 683565275, %v3681
    %v3683 = vshll.u32 683565275, %v3680
    %v3684 = vshrl.u32 2475754826, %v3681
    %v3685 = vor.u32 %v3683, %v3684
    %v3686 = vshll.u32 2475754826, %v3680
    %v3687 = vshrl.u32 2131351028, %v3681
    %v3688 = vor.u32 %v3686, %v3687
    %v3689 = vshll.u32 2131351028, %v3680
    %v3690 = vshrl.u32 2102212464, %v3681
    %v3691 = vor.u32 %v3689, %v3690
    %v3692 = vshll.u32 2102212464, %v3680
    %v3693 = vshrl.u32 920167782, %v3681
    %v3694 = vor.u32 %v3692, %v3693
    %v3695 = vshll.u32 920167782, %v3680
    %v3696 = vshrl.u32 1326507024, %v3681
    %v3697 = vor.u32 %v3695, %v3696
    %vm3698 = vcmp.lt.s32.totalorder %v3679, 1
    %vm3699 = vcmp.lt.s32.totalorder %v3679, 2
    %vm3700 = vcmp.lt.s32.totalorder %v3679, 3
    %vm3701 = vcmp.lt.s32.totalorder %v3679, 4
    %v3702 = vsel %vm3698, %v3682, %v3685
    %v3703 = vsel %vm3701, %v3691, 2102212464
    %v3704 = vsel %vm3700, %v3688, %v3703
    %v3705 = vsel %vm3699, %v3702, %v3704
    %v3706 = vsel %vm3698, %v3685, %v3688
    %v3707 = vsel %vm3701, %v3694, 920167782
    %v3708 = vsel %vm3700, %v3691, %v3707
    %v3709 = vsel %vm3699, %v3706, %v3708
    %v3710 = vsel %vm3698, %v3688, %v3691
    %v3711 = vsel %vm3701, %v3697, 1326507024
    %v3712 = vsel %vm3700, %v3694, %v3711
    %v3713 = vsel %vm3699, %v3710, %v3712
    %v3714 = vshll.u32 %v3674, 8
    %v3715 = vmul.u32.u64.compose %v3714, %v3713
    %v3716 = vextract.low.u32 %v3715
    %v3717 = vextract.high.u32 %v3715
    %v3718 = vmul.u32.u64.compose %v3714, %v3709
    %v3719 = vextract.low.u32 %v3718
    %v3720 = vextract.high.u32 %v3718
    %v3721 = vmul.u32 %v3714, %v3705
    %v3722 = vadd.s32 %v3717, %v3719
    %vm3723 = vc.u32 %v3717, %v3719
    %v3724 = vadd.s32 %v3720, 1
    %v3725 = vsel %vm3723, %v3724, %v3720
    %v3726 = vadd.s32 %v3721, %v3725
    %v3727 = vadd.s32 %v3726, 536870912
    %v3728 = vshrl.u32 %v3727, 30
    %v3729 = vshll.u32 %v3728, 30
    %v3730 = vsub.s32 %v3726, %v3729
    %vm3731 = vcmp.lt.s32.totalorder %v3730, 0
    %v3732 = vsub.s32 0, %v3730
    %v3733 = vsel %vm3731, %v3732, %v3730
    %v3734 = vclz %v3733
    %v3735 = vsub.s32 %v3734, 2
    %vm3736 = vcmp.gt.s32.totalorder 0, %v3735
    %v3737 = vsel %vm3736, 0, %v3735
    %v3738 = vsub.s32 32, %v3737
    %v3739 = vshll.u32 %v3730, %v3737
    %v3740 = vshrl.u32 %v3722, %v3738
    %v3741 = vor.u32 %v3739, %v3740
    %v3742 = vsub.s32 4294967266, %v3737
    %v3743 = vadd.s32 %v3742, 127
    %v3744 = vshll.u32 %v3743, 23
    %v3745 = vor.u32 4788187, %v3744
    %v3746 = vand.u32 2147483647, %v3745
    %v3748 = vcvt.s32.f32 %v3741
    %v3749 = vmul.f32 %v3748, %v3746
    %v3750 = vxor.u32 %v3749, 2147483648
    %v3751 = vsel %vm3668, %v3750, %v3749
    %v3752 = vsub.s32 4, %v3728
    %v3753 = vsel %vm3668, %v3752, %v3728
    %v3754 = vsel %vm3667, %v274, %v3751
    %v3755 = vsel %vm3667, 0, %v3753
    %v3756 = vcosq.f32.pop %v3754
    %v3757 = vsinq.f32.pop %v3754
    %vm3758 = vweird.f32 %v274
    %v3759 = vand.u32 %v3755, 3
    %vm3760 = vcmp.lt.s32.totalorder %v3759, 2
    %vm3761 = vcmp.eq.s32.totalorder %v3759, 0
    %v3762 = vxor.u32 %v3757, 2147483648
    %v3763 = vsel %vm3761, %v3756, %v3762
    %vm3764 = vcmp.eq.s32.totalorder %v3759, 2
    %v3765 = vxor.u32 %v3756, 2147483648
    %v3766 = vsel %vm3764, %v3765, %v3757
    %v3767 = vsel %vm3760, %v3763, %v3766
    %v3768 = vsel %vm3758, nan, %v3767
    %v3769 = vand.u32 2147483647, %v275
    %vm3770 = vcmp.le.f32.partialorder %v3769, 0.7853982
    %vm3771 = vcmp.lt.s32.totalorder %v275, 0
    %v3772 = vand.u32 %v275, 2139095040
    %v3773 = vshrl.u32 %v3772, 23
    %v3774 = vsub.s32 %v3773, 127
    %v3775 = vand.u32 2147483647, %v275
    %v3776 = vand.u32 %v3775, 8388607
    %v3777 = vor.u32 %v3776, 8388608
    %v3778 = vsub.s32 0, %v3777
    %v3779 = vadd.s32 %v3774, 1
    %vm3780 = vcmp.gt.s32.totalorder %v3779, 0
    %v3781 = vsel %vm3780, %v3779, 0
    %v3782 = vshrl.u32 %v3781, 5
    %v3783 = vand.u32 %v3781, 31
    %v3784 = vsub.s32 32, %v3783
    %v3785 = vshrl.u32 683565275, %v3784
    %v3786 = vshll.u32 683565275, %v3783
    %v3787 = vshrl.u32 2475754826, %v3784
    %v3788 = vor.u32 %v3786, %v3787
    %v3789 = vshll.u32 2475754826, %v3783
    %v3790 = vshrl.u32 2131351028, %v3784
    %v3791 = vor.u32 %v3789, %v3790
    %v3792 = vshll.u32 2131351028, %v3783
    %v3793 = vshrl.u32 2102212464, %v3784
    %v3794 = vor.u32 %v3792, %v3793
    %v3795 = vshll.u32 2102212464, %v3783
    %v3796 = vshrl.u32 920167782, %v3784
    %v3797 = vor.u32 %v3795, %v3796
    %v3798 = vshll.u32 920167782, %v3783
    %v3799 = vshrl.u32 1326507024, %v3784
    %v3800 = vor.u32 %v3798, %v3799
    %vm3801 = vcmp.lt.s32.totalorder %v3782, 1
    %vm3802 = vcmp.lt.s32.totalorder %v3782, 2
    %vm3803 = vcmp.lt.s32.totalorder %v3782, 3
    %vm3804 = vcmp.lt.s32.totalorder %v3782, 4
    %v3805 = vsel %vm3801, %v3785, %v3788
    %v3806 = vsel %vm3804, %v3794, 2102212464
    %v3807 = vsel %vm3803, %v3791, %v3806
    %v3808 = vsel %vm3802, %v3805, %v3807
    %v3809 = vsel %vm3801, %v3788, %v3791
    %v3810 = vsel %vm3804, %v3797, 920167782
    %v3811 = vsel %vm3803, %v3794, %v3810
    %v3812 = vsel %vm3802, %v3809, %v3811
    %v3813 = vsel %vm3801, %v3791, %v3794
    %v3814 = vsel %vm3804, %v3800, 1326507024
    %v3815 = vsel %vm3803, %v3797, %v3814
    %v3816 = vsel %vm3802, %v3813, %v3815
    %v3817 = vshll.u32 %v3777, 8
    %v3818 = vmul.u32.u64.compose %v3817, %v3816
    %v3819 = vextract.low.u32 %v3818
    %v3820 = vextract.high.u32 %v3818
    %v3821 = vmul.u32.u64.compose %v3817, %v3812
    %v3822 = vextract.low.u32 %v3821
    %v3823 = vextract.high.u32 %v3821
    %v3824 = vmul.u32 %v3817, %v3808
    %v3825 = vadd.s32 %v3820, %v3822
    %vm3826 = vc.u32 %v3820, %v3822
    %v3827 = vadd.s32 %v3823, 1
    %v3828 = vsel %vm3826, %v3827, %v3823
    %v3829 = vadd.s32 %v3824, %v3828
    %v3830 = vadd.s32 %v3829, 536870912
    %v3831 = vshrl.u32 %v3830, 30
    %v3832 = vshll.u32 %v3831, 30
    %v3833 = vsub.s32 %v3829, %v3832
    %vm3834 = vcmp.lt.s32.totalorder %v3833, 0
    %v3835 = vsub.s32 0, %v3833
    %v3836 = vsel %vm3834, %v3835, %v3833
    %v3837 = vclz %v3836
    %v3838 = vsub.s32 %v3837, 2
    %vm3839 = vcmp.gt.s32.totalorder 0, %v3838
    %v3840 = vsel %vm3839, 0, %v3838
    %v3841 = vsub.s32 32, %v3840
    %v3842 = vshll.u32 %v3833, %v3840
    %v3843 = vshrl.u32 %v3825, %v3841
    %v3844 = vor.u32 %v3842, %v3843
    %v3845 = vsub.s32 4294967266, %v3840
    %v3846 = vadd.s32 %v3845, 127
    %v3847 = vshll.u32 %v3846, 23
    %v3848 = vor.u32 4788187, %v3847
    %v3849 = vand.u32 2147483647, %v3848
    %v3851 = vcvt.s32.f32 %v3844
    %v3852 = vmul.f32 %v3851, %v3849
    %v3853 = vxor.u32 %v3852, 2147483648
    %v3854 = vsel %vm3771, %v3853, %v3852
    %v3855 = vsub.s32 4, %v3831
    %v3856 = vsel %vm3771, %v3855, %v3831
    %v3857 = vsel %vm3770, %v275, %v3854
    %v3858 = vsel %vm3770, 0, %v3856
    %v3859 = vcosq.f32.pop %v3857
    %v3860 = vsinq.f32.pop %v3857
    %vm3861 = vweird.f32 %v275
    %v3862 = vand.u32 %v3858, 3
    %vm3863 = vcmp.lt.s32.totalorder %v3862, 2
    %vm3864 = vcmp.eq.s32.totalorder %v3862, 0
    %v3865 = vxor.u32 %v3860, 2147483648
    %v3866 = vsel %vm3864, %v3859, %v3865
    %vm3867 = vcmp.eq.s32.totalorder %v3862, 2
    %v3868 = vxor.u32 %v3859, 2147483648
    %v3869 = vsel %vm3867, %v3868, %v3860
    %v3870 = vsel %vm3863, %v3866, %v3869
    %v3871 = vsel %vm3861, nan, %v3870
    %v3872 = vand.u32 2147483647, %v276
    %vm3873 = vcmp.le.f32.partialorder %v3872, 0.7853982
    %vm3874 = vcmp.lt.s32.totalorder %v276, 0
    %v3875 = vand.u32 %v276, 2139095040
    %v3876 = vshrl.u32 %v3875, 23
    %v3877 = vsub.s32 %v3876, 127
    %v3878 = vand.u32 2147483647, %v276
    %v3879 = vand.u32 %v3878, 8388607
    %v3880 = vor.u32 %v3879, 8388608
    %v3881 = vsub.s32 0, %v3880
    %v3882 = vadd.s32 %v3877, 1
    %vm3883 = vcmp.gt.s32.totalorder %v3882, 0
    %v3884 = vsel %vm3883, %v3882, 0
    %v3885 = vshrl.u32 %v3884, 5
    %v3886 = vand.u32 %v3884, 31
    %v3887 = vsub.s32 32, %v3886
    %v3888 = vshrl.u32 683565275, %v3887
    %v3889 = vshll.u32 683565275, %v3886
    %v3890 = vshrl.u32 2475754826, %v3887
    %v3891 = vor.u32 %v3889, %v3890
    %v3892 = vshll.u32 2475754826, %v3886
    %v3893 = vshrl.u32 2131351028, %v3887
    %v3894 = vor.u32 %v3892, %v3893
    %v3895 = vshll.u32 2131351028, %v3886
    %v3896 = vshrl.u32 2102212464, %v3887
    %v3897 = vor.u32 %v3895, %v3896
    %v3898 = vshll.u32 2102212464, %v3886
    %v3899 = vshrl.u32 920167782, %v3887
    %v3900 = vor.u32 %v3898, %v3899
    %v3901 = vshll.u32 920167782, %v3886
    %v3902 = vshrl.u32 1326507024, %v3887
    %v3903 = vor.u32 %v3901, %v3902
    %vm3904 = vcmp.lt.s32.totalorder %v3885, 1
    %vm3905 = vcmp.lt.s32.totalorder %v3885, 2
    %vm3906 = vcmp.lt.s32.totalorder %v3885, 3
    %vm3907 = vcmp.lt.s32.totalorder %v3885, 4
    %v3908 = vsel %vm3904, %v3888, %v3891
    %v3909 = vsel %vm3907, %v3897, 2102212464
    %v3910 = vsel %vm3906, %v3894, %v3909
    %v3911 = vsel %vm3905, %v3908, %v3910
    %v3912 = vsel %vm3904, %v3891, %v3894
    %v3913 = vsel %vm3907, %v3900, 920167782
    %v3914 = vsel %vm3906, %v3897, %v3913
    %v3915 = vsel %vm3905, %v3912, %v3914
    %v3916 = vsel %vm3904, %v3894, %v3897
    %v3917 = vsel %vm3907, %v3903, 1326507024
    %v3918 = vsel %vm3906, %v3900, %v3917
    %v3919 = vsel %vm3905, %v3916, %v3918
    %v3920 = vshll.u32 %v3880, 8
    %v3921 = vmul.u32.u64.compose %v3920, %v3919
    %v3922 = vextract.low.u32 %v3921
    %v3923 = vextract.high.u32 %v3921
    %v3924 = vmul.u32.u64.compose %v3920, %v3915
    %v3925 = vextract.low.u32 %v3924
    %v3926 = vextract.high.u32 %v3924
    %v3927 = vmul.u32 %v3920, %v3911
    %v3928 = vadd.s32 %v3923, %v3925
    %vm3929 = vc.u32 %v3923, %v3925
    %v3930 = vadd.s32 %v3926, 1
    %v3931 = vsel %vm3929, %v3930, %v3926
    %v3932 = vadd.s32 %v3927, %v3931
    %v3933 = vadd.s32 %v3932, 536870912
    %v3934 = vshrl.u32 %v3933, 30
    %v3935 = vshll.u32 %v3934, 30
    %v3936 = vsub.s32 %v3932, %v3935
    %vm3937 = vcmp.lt.s32.totalorder %v3936, 0
    %v3938 = vsub.s32 0, %v3936
    %v3939 = vsel %vm3937, %v3938, %v3936
    %v3940 = vclz %v3939
    %v3941 = vsub.s32 %v3940, 2
    %vm3942 = vcmp.gt.s32.totalorder 0, %v3941
    %v3943 = vsel %vm3942, 0, %v3941
    %v3944 = vsub.s32 32, %v3943
    %v3945 = vshll.u32 %v3936, %v3943
    %v3946 = vshrl.u32 %v3928, %v3944
    %v3947 = vor.u32 %v3945, %v3946
    %v3948 = vsub.s32 4294967266, %v3943
    %v3949 = vadd.s32 %v3948, 127
    %v3950 = vshll.u32 %v3949, 23
    %v3951 = vor.u32 4788187, %v3950
    %v3952 = vand.u32 2147483647, %v3951
    %v3954 = vcvt.s32.f32 %v3947
    %v3955 = vmul.f32 %v3954, %v3952
    %v3956 = vxor.u32 %v3955, 2147483648
    %v3957 = vsel %vm3874, %v3956, %v3955
    %v3958 = vsub.s32 4, %v3934
    %v3959 = vsel %vm3874, %v3958, %v3934
    %v3960 = vsel %vm3873, %v276, %v3957
    %v3961 = vsel %vm3873, 0, %v3959
    %v3962 = vcosq.f32.pop %v3960
    %v3963 = vsinq.f32.pop %v3960
    %vm3964 = vweird.f32 %v276
    %v3965 = vand.u32 %v3961, 3
    %vm3966 = vcmp.lt.s32.totalorder %v3965, 2
    %vm3967 = vcmp.eq.s32.totalorder %v3965, 0
    %v3968 = vxor.u32 %v3963, 2147483648
    %v3969 = vsel %vm3967, %v3962, %v3968
    %vm3970 = vcmp.eq.s32.totalorder %v3965, 2
    %v3971 = vxor.u32 %v3962, 2147483648
    %v3972 = vsel %vm3970, %v3971, %v3963
    %v3973 = vsel %vm3966, %v3969, %v3972
    %v3974 = vsel %vm3964, nan, %v3973
    %v3975 = vand.u32 2147483647, %v277
    %vm3976 = vcmp.le.f32.partialorder %v3975, 0.7853982
    %vm3977 = vcmp.lt.s32.totalorder %v277, 0
    %v3978 = vand.u32 %v277, 2139095040
    %v3979 = vshrl.u32 %v3978, 23
    %v3980 = vsub.s32 %v3979, 127
    %v3981 = vand.u32 2147483647, %v277
    %v3982 = vand.u32 %v3981, 8388607
    %v3983 = vor.u32 %v3982, 8388608
    %v3984 = vsub.s32 0, %v3983
    %v3985 = vadd.s32 %v3980, 1
    %vm3986 = vcmp.gt.s32.totalorder %v3985, 0
    %v3987 = vsel %vm3986, %v3985, 0
    %v3988 = vshrl.u32 %v3987, 5
    %v3989 = vand.u32 %v3987, 31
    %v3990 = vsub.s32 32, %v3989
    %v3991 = vshrl.u32 683565275, %v3990
    %v3992 = vshll.u32 683565275, %v3989
    %v3993 = vshrl.u32 2475754826, %v3990
    %v3994 = vor.u32 %v3992, %v3993
    %v3995 = vshll.u32 2475754826, %v3989
    %v3996 = vshrl.u32 2131351028, %v3990
    %v3997 = vor.u32 %v3995, %v3996
    %v3998 = vshll.u32 2131351028, %v3989
    %v3999 = vshrl.u32 2102212464, %v3990
    %v4000 = vor.u32 %v3998, %v3999
    %v4001 = vshll.u32 2102212464, %v3989
    %v4002 = vshrl.u32 920167782, %v3990
    %v4003 = vor.u32 %v4001, %v4002
    %v4004 = vshll.u32 920167782, %v3989
    %v4005 = vshrl.u32 1326507024, %v3990
    %v4006 = vor.u32 %v4004, %v4005
    %vm4007 = vcmp.lt.s32.totalorder %v3988, 1
    %vm4008 = vcmp.lt.s32.totalorder %v3988, 2
    %vm4009 = vcmp.lt.s32.totalorder %v3988, 3
    %vm4010 = vcmp.lt.s32.totalorder %v3988, 4
    %v4011 = vsel %vm4007, %v3991, %v3994
    %v4012 = vsel %vm4010, %v4000, 2102212464
    %v4013 = vsel %vm4009, %v3997, %v4012
    %v4014 = vsel %vm4008, %v4011, %v4013
    %v4015 = vsel %vm4007, %v3994, %v3997
    %v4016 = vsel %vm4010, %v4003, 920167782
    %v4017 = vsel %vm4009, %v4000, %v4016
    %v4018 = vsel %vm4008, %v4015, %v4017
    %v4019 = vsel %vm4007, %v3997, %v4000
    %v4020 = vsel %vm4010, %v4006, 1326507024
    %v4021 = vsel %vm4009, %v4003, %v4020
    %v4022 = vsel %vm4008, %v4019, %v4021
    %v4023 = vshll.u32 %v3983, 8
    %v4024 = vmul.u32.u64.compose %v4023, %v4022
    %v4025 = vextract.low.u32 %v4024
    %v4026 = vextract.high.u32 %v4024
    %v4027 = vmul.u32.u64.compose %v4023, %v4018
    %v4028 = vextract.low.u32 %v4027
    %v4029 = vextract.high.u32 %v4027
    %v4030 = vmul.u32 %v4023, %v4014
    %v4031 = vadd.s32 %v4026, %v4028
    %vm4032 = vc.u32 %v4026, %v4028
    %v4033 = vadd.s32 %v4029, 1
    %v4034 = vsel %vm4032, %v4033, %v4029
    %v4035 = vadd.s32 %v4030, %v4034
    %v4036 = vadd.s32 %v4035, 536870912
    %v4037 = vshrl.u32 %v4036, 30
    %v4038 = vshll.u32 %v4037, 30
    %v4039 = vsub.s32 %v4035, %v4038
    %vm4040 = vcmp.lt.s32.totalorder %v4039, 0
    %v4041 = vsub.s32 0, %v4039
    %v4042 = vsel %vm4040, %v4041, %v4039
    %v4043 = vclz %v4042
    %v4044 = vsub.s32 %v4043, 2
    %vm4045 = vcmp.gt.s32.totalorder 0, %v4044
    %v4046 = vsel %vm4045, 0, %v4044
    %v4047 = vsub.s32 32, %v4046
    %v4048 = vshll.u32 %v4039, %v4046
    %v4049 = vshrl.u32 %v4031, %v4047
    %v4050 = vor.u32 %v4048, %v4049
    %v4051 = vsub.s32 4294967266, %v4046
    %v4052 = vadd.s32 %v4051, 127
    %v4053 = vshll.u32 %v4052, 23
    %v4054 = vor.u32 4788187, %v4053
    %v4055 = vand.u32 2147483647, %v4054
    %v4057 = vcvt.s32.f32 %v4050
    %v4058 = vmul.f32 %v4057, %v4055
    %v4059 = vxor.u32 %v4058, 2147483648
    %v4060 = vsel %vm3977, %v4059, %v4058
    %v4061 = vsub.s32 4, %v4037
    %v4062 = vsel %vm3977, %v4061, %v4037
    %v4063 = vsel %vm3976, %v277, %v4060
    %v4064 = vsel %vm3976, 0, %v4062
    %v4065 = vcosq.f32.pop %v4063
    %v4066 = vsinq.f32.pop %v4063
    %vm4067 = vweird.f32 %v277
    %v4068 = vand.u32 %v4064, 3
    %vm4069 = vcmp.lt.s32.totalorder %v4068, 2
    %vm4070 = vcmp.eq.s32.totalorder %v4068, 0
    %v4071 = vxor.u32 %v4066, 2147483648
    %v4072 = vsel %vm4070, %v4065, %v4071
    %vm4073 = vcmp.eq.s32.totalorder %v4068, 2
    %v4074 = vxor.u32 %v4065, 2147483648
    %v4075 = vsel %vm4073, %v4074, %v4066
    %v4076 = vsel %vm4069, %v4072, %v4075
    %v4077 = vsel %vm4067, nan, %v4076
    %v4078 = vand.u32 2147483647, %v278
    %vm4079 = vcmp.le.f32.partialorder %v4078, 0.7853982
    %vm4080 = vcmp.lt.s32.totalorder %v278, 0
    %v4081 = vand.u32 %v278, 2139095040
    %v4082 = vshrl.u32 %v4081, 23
    %v4083 = vsub.s32 %v4082, 127
    %v4084 = vand.u32 2147483647, %v278
    %v4085 = vand.u32 %v4084, 8388607
    %v4086 = vor.u32 %v4085, 8388608
    %v4087 = vsub.s32 0, %v4086
    %v4088 = vadd.s32 %v4083, 1
    %vm4089 = vcmp.gt.s32.totalorder %v4088, 0
    %v4090 = vsel %vm4089, %v4088, 0
    %v4091 = vshrl.u32 %v4090, 5
    %v4092 = vand.u32 %v4090, 31
    %v4093 = vsub.s32 32, %v4092
    %v4094 = vshrl.u32 683565275, %v4093
    %v4095 = vshll.u32 683565275, %v4092
    %v4096 = vshrl.u32 2475754826, %v4093
    %v4097 = vor.u32 %v4095, %v4096
    %v4098 = vshll.u32 2475754826, %v4092
    %v4099 = vshrl.u32 2131351028, %v4093
    %v4100 = vor.u32 %v4098, %v4099
    %v4101 = vshll.u32 2131351028, %v4092
    %v4102 = vshrl.u32 2102212464, %v4093
    %v4103 = vor.u32 %v4101, %v4102
    %v4104 = vshll.u32 2102212464, %v4092
    %v4105 = vshrl.u32 920167782, %v4093
    %v4106 = vor.u32 %v4104, %v4105
    %v4107 = vshll.u32 920167782, %v4092
    %v4108 = vshrl.u32 1326507024, %v4093
    %v4109 = vor.u32 %v4107, %v4108
    %vm4110 = vcmp.lt.s32.totalorder %v4091, 1
    %vm4111 = vcmp.lt.s32.totalorder %v4091, 2
    %vm4112 = vcmp.lt.s32.totalorder %v4091, 3
    %vm4113 = vcmp.lt.s32.totalorder %v4091, 4
    %v4114 = vsel %vm4110, %v4094, %v4097
    %v4115 = vsel %vm4113, %v4103, 2102212464
    %v4116 = vsel %vm4112, %v4100, %v4115
    %v4117 = vsel %vm4111, %v4114, %v4116
    %v4118 = vsel %vm4110, %v4097, %v4100
    %v4119 = vsel %vm4113, %v4106, 920167782
    %v4120 = vsel %vm4112, %v4103, %v4119
    %v4121 = vsel %vm4111, %v4118, %v4120
    %v4122 = vsel %vm4110, %v4100, %v4103
    %v4123 = vsel %vm4113, %v4109, 1326507024
    %v4124 = vsel %vm4112, %v4106, %v4123
    %v4125 = vsel %vm4111, %v4122, %v4124
    %v4126 = vshll.u32 %v4086, 8
    %v4127 = vmul.u32.u64.compose %v4126, %v4125
    %v4128 = vextract.low.u32 %v4127
    %v4129 = vextract.high.u32 %v4127
    %v4130 = vmul.u32.u64.compose %v4126, %v4121
    %v4131 = vextract.low.u32 %v4130
    %v4132 = vextract.high.u32 %v4130
    %v4133 = vmul.u32 %v4126, %v4117
    %v4134 = vadd.s32 %v4129, %v4131
    %vm4135 = vc.u32 %v4129, %v4131
    %v4136 = vadd.s32 %v4132, 1
    %v4137 = vsel %vm4135, %v4136, %v4132
    %v4138 = vadd.s32 %v4133, %v4137
    %v4139 = vadd.s32 %v4138, 536870912
    %v4140 = vshrl.u32 %v4139, 30
    %v4141 = vshll.u32 %v4140, 30
    %v4142 = vsub.s32 %v4138, %v4141
    %vm4143 = vcmp.lt.s32.totalorder %v4142, 0
    %v4144 = vsub.s32 0, %v4142
    %v4145 = vsel %vm4143, %v4144, %v4142
    %v4146 = vclz %v4145
    %v4147 = vsub.s32 %v4146, 2
    %vm4148 = vcmp.gt.s32.totalorder 0, %v4147
    %v4149 = vsel %vm4148, 0, %v4147
    %v4150 = vsub.s32 32, %v4149
    %v4151 = vshll.u32 %v4142, %v4149
    %v4152 = vshrl.u32 %v4134, %v4150
    %v4153 = vor.u32 %v4151, %v4152
    %v4154 = vsub.s32 4294967266, %v4149
    %v4155 = vadd.s32 %v4154, 127
    %v4156 = vshll.u32 %v4155, 23
    %v4157 = vor.u32 4788187, %v4156
    %v4158 = vand.u32 2147483647, %v4157
    %v4160 = vcvt.s32.f32 %v4153
    %v4161 = vmul.f32 %v4160, %v4158
    %v4162 = vxor.u32 %v4161, 2147483648
    %v4163 = vsel %vm4080, %v4162, %v4161
    %v4164 = vsub.s32 4, %v4140
    %v4165 = vsel %vm4080, %v4164, %v4140
    %v4166 = vsel %vm4079, %v278, %v4163
    %v4167 = vsel %vm4079, 0, %v4165
    %v4168 = vcosq.f32.pop %v4166
    %v4169 = vsinq.f32.pop %v4166
    %vm4170 = vweird.f32 %v278
    %v4171 = vand.u32 %v4167, 3
    %vm4172 = vcmp.lt.s32.totalorder %v4171, 2
    %vm4173 = vcmp.eq.s32.totalorder %v4171, 0
    %v4174 = vxor.u32 %v4169, 2147483648
    %v4175 = vsel %vm4173, %v4168, %v4174
    %vm4176 = vcmp.eq.s32.totalorder %v4171, 2
    %v4177 = vxor.u32 %v4168, 2147483648
    %v4178 = vsel %vm4176, %v4177, %v4169
    %v4179 = vsel %vm4172, %v4175, %v4178
    %v4180 = vsel %vm4170, nan, %v4179
    %v4181 = vand.u32 2147483647, %v279
    %vm4182 = vcmp.le.f32.partialorder %v4181, 0.7853982
    %vm4183 = vcmp.lt.s32.totalorder %v279, 0
    %v4184 = vand.u32 %v279, 2139095040
    %v4185 = vshrl.u32 %v4184, 23
    %v4186 = vsub.s32 %v4185, 127
    %v4187 = vand.u32 2147483647, %v279
    %v4188 = vand.u32 %v4187, 8388607
    %v4189 = vor.u32 %v4188, 8388608
    %v4190 = vsub.s32 0, %v4189
    %v4191 = vadd.s32 %v4186, 1
    %vm4192 = vcmp.gt.s32.totalorder %v4191, 0
    %v4193 = vsel %vm4192, %v4191, 0
    %v4194 = vshrl.u32 %v4193, 5
    %v4195 = vand.u32 %v4193, 31
    %v4196 = vsub.s32 32, %v4195
    %v4197 = vshrl.u32 683565275, %v4196
    %v4198 = vshll.u32 683565275, %v4195
    %v4199 = vshrl.u32 2475754826, %v4196
    %v4200 = vor.u32 %v4198, %v4199
    %v4201 = vshll.u32 2475754826, %v4195
    %v4202 = vshrl.u32 2131351028, %v4196
    %v4203 = vor.u32 %v4201, %v4202
    %v4204 = vshll.u32 2131351028, %v4195
    %v4205 = vshrl.u32 2102212464, %v4196
    %v4206 = vor.u32 %v4204, %v4205
    %v4207 = vshll.u32 2102212464, %v4195
    %v4208 = vshrl.u32 920167782, %v4196
    %v4209 = vor.u32 %v4207, %v4208
    %v4210 = vshll.u32 920167782, %v4195
    %v4211 = vshrl.u32 1326507024, %v4196
    %v4212 = vor.u32 %v4210, %v4211
    %vm4213 = vcmp.lt.s32.totalorder %v4194, 1
    %vm4214 = vcmp.lt.s32.totalorder %v4194, 2
    %vm4215 = vcmp.lt.s32.totalorder %v4194, 3
    %vm4216 = vcmp.lt.s32.totalorder %v4194, 4
    %v4217 = vsel %vm4213, %v4197, %v4200
    %v4218 = vsel %vm4216, %v4206, 2102212464
    %v4219 = vsel %vm4215, %v4203, %v4218
    %v4220 = vsel %vm4214, %v4217, %v4219
    %v4221 = vsel %vm4213, %v4200, %v4203
    %v4222 = vsel %vm4216, %v4209, 920167782
    %v4223 = vsel %vm4215, %v4206, %v4222
    %v4224 = vsel %vm4214, %v4221, %v4223
    %v4225 = vsel %vm4213, %v4203, %v4206
    %v4226 = vsel %vm4216, %v4212, 1326507024
    %v4227 = vsel %vm4215, %v4209, %v4226
    %v4228 = vsel %vm4214, %v4225, %v4227
    %v4229 = vshll.u32 %v4189, 8
    %v4230 = vmul.u32.u64.compose %v4229, %v4228
    %v4231 = vextract.low.u32 %v4230
    %v4232 = vextract.high.u32 %v4230
    %v4233 = vmul.u32.u64.compose %v4229, %v4224
    %v4234 = vextract.low.u32 %v4233
    %v4235 = vextract.high.u32 %v4233
    %v4236 = vmul.u32 %v4229, %v4220
    %v4237 = vadd.s32 %v4232, %v4234
    %vm4238 = vc.u32 %v4232, %v4234
    %v4239 = vadd.s32 %v4235, 1
    %v4240 = vsel %vm4238, %v4239, %v4235
    %v4241 = vadd.s32 %v4236, %v4240
    %v4242 = vadd.s32 %v4241, 536870912
    %v4243 = vshrl.u32 %v4242, 30
    %v4244 = vshll.u32 %v4243, 30
    %v4245 = vsub.s32 %v4241, %v4244
    %vm4246 = vcmp.lt.s32.totalorder %v4245, 0
    %v4247 = vsub.s32 0, %v4245
    %v4248 = vsel %vm4246, %v4247, %v4245
    %v4249 = vclz %v4248
    %v4250 = vsub.s32 %v4249, 2
    %vm4251 = vcmp.gt.s32.totalorder 0, %v4250
    %v4252 = vsel %vm4251, 0, %v4250
    %v4253 = vsub.s32 32, %v4252
    %v4254 = vshll.u32 %v4245, %v4252
    %v4255 = vshrl.u32 %v4237, %v4253
    %v4256 = vor.u32 %v4254, %v4255
    %v4257 = vsub.s32 4294967266, %v4252
    %v4258 = vadd.s32 %v4257, 127
    %v4259 = vshll.u32 %v4258, 23
    %v4260 = vor.u32 4788187, %v4259
    %v4261 = vand.u32 2147483647, %v4260
    %v4263 = vcvt.s32.f32 %v4256
    %v4264 = vmul.f32 %v4263, %v4261
    %v4265 = vxor.u32 %v4264, 2147483648
    %v4266 = vsel %vm4183, %v4265, %v4264
    %v4267 = vsub.s32 4, %v4243
    %v4268 = vsel %vm4183, %v4267, %v4243
    %v4269 = vsel %vm4182, %v279, %v4266
    %v4270 = vsel %vm4182, 0, %v4268
    %v4271 = vcosq.f32.pop %v4269
    %v4272 = vsinq.f32.pop %v4269
    %vm4273 = vweird.f32 %v279
    %v4274 = vand.u32 %v4270, 3
    %vm4275 = vcmp.lt.s32.totalorder %v4274, 2
    %vm4276 = vcmp.eq.s32.totalorder %v4274, 0
    %v4277 = vxor.u32 %v4272, 2147483648
    %v4278 = vsel %vm4276, %v4271, %v4277
    %vm4279 = vcmp.eq.s32.totalorder %v4274, 2
    %v4280 = vxor.u32 %v4271, 2147483648
    %v4281 = vsel %vm4279, %v4280, %v4272
    %v4282 = vsel %vm4275, %v4278, %v4281
    %v4283 = vsel %vm4273, nan, %v4282
    %v4284 = vand.u32 2147483647, %v280
    %vm4285 = vcmp.le.f32.partialorder %v4284, 0.7853982
    %vm4286 = vcmp.lt.s32.totalorder %v280, 0
    %v4287 = vand.u32 %v280, 2139095040
    %v4288 = vshrl.u32 %v4287, 23
    %v4289 = vsub.s32 %v4288, 127
    %v4290 = vand.u32 2147483647, %v280
    %v4291 = vand.u32 %v4290, 8388607
    %v4292 = vor.u32 %v4291, 8388608
    %v4293 = vsub.s32 0, %v4292
    %v4294 = vadd.s32 %v4289, 1
    %vm4295 = vcmp.gt.s32.totalorder %v4294, 0
    %v4296 = vsel %vm4295, %v4294, 0
    %v4297 = vshrl.u32 %v4296, 5
    %v4298 = vand.u32 %v4296, 31
    %v4299 = vsub.s32 32, %v4298
    %v4300 = vshrl.u32 683565275, %v4299
    %v4301 = vshll.u32 683565275, %v4298
    %v4302 = vshrl.u32 2475754826, %v4299
    %v4303 = vor.u32 %v4301, %v4302
    %v4304 = vshll.u32 2475754826, %v4298
    %v4305 = vshrl.u32 2131351028, %v4299
    %v4306 = vor.u32 %v4304, %v4305
    %v4307 = vshll.u32 2131351028, %v4298
    %v4308 = vshrl.u32 2102212464, %v4299
    %v4309 = vor.u32 %v4307, %v4308
    %v4310 = vshll.u32 2102212464, %v4298
    %v4311 = vshrl.u32 920167782, %v4299
    %v4312 = vor.u32 %v4310, %v4311
    %v4313 = vshll.u32 920167782, %v4298
    %v4314 = vshrl.u32 1326507024, %v4299
    %v4315 = vor.u32 %v4313, %v4314
    %vm4316 = vcmp.lt.s32.totalorder %v4297, 1
    %vm4317 = vcmp.lt.s32.totalorder %v4297, 2
    %vm4318 = vcmp.lt.s32.totalorder %v4297, 3
    %vm4319 = vcmp.lt.s32.totalorder %v4297, 4
    %v4320 = vsel %vm4316, %v4300, %v4303
    %v4321 = vsel %vm4319, %v4309, 2102212464
    %v4322 = vsel %vm4318, %v4306, %v4321
    %v4323 = vsel %vm4317, %v4320, %v4322
    %v4324 = vsel %vm4316, %v4303, %v4306
    %v4325 = vsel %vm4319, %v4312, 920167782
    %v4326 = vsel %vm4318, %v4309, %v4325
    %v4327 = vsel %vm4317, %v4324, %v4326
    %v4328 = vsel %vm4316, %v4306, %v4309
    %v4329 = vsel %vm4319, %v4315, 1326507024
    %v4330 = vsel %vm4318, %v4312, %v4329
    %v4331 = vsel %vm4317, %v4328, %v4330
    %v4332 = vshll.u32 %v4292, 8
    %v4333 = vmul.u32.u64.compose %v4332, %v4331
    %v4334 = vextract.low.u32 %v4333
    %v4335 = vextract.high.u32 %v4333
    %v4336 = vmul.u32.u64.compose %v4332, %v4327
    %v4337 = vextract.low.u32 %v4336
    %v4338 = vextract.high.u32 %v4336
    %v4339 = vmul.u32 %v4332, %v4323
    %v4340 = vadd.s32 %v4335, %v4337
    %vm4341 = vc.u32 %v4335, %v4337
    %v4342 = vadd.s32 %v4338, 1
    %v4343 = vsel %vm4341, %v4342, %v4338
    %v4344 = vadd.s32 %v4339, %v4343
    %v4345 = vadd.s32 %v4344, 536870912
    %v4346 = vshrl.u32 %v4345, 30
    %v4347 = vshll.u32 %v4346, 30
    %v4348 = vsub.s32 %v4344, %v4347
    %vm4349 = vcmp.lt.s32.totalorder %v4348, 0
    %v4350 = vsub.s32 0, %v4348
    %v4351 = vsel %vm4349, %v4350, %v4348
    %v4352 = vclz %v4351
    %v4353 = vsub.s32 %v4352, 2
    %vm4354 = vcmp.gt.s32.totalorder 0, %v4353
    %v4355 = vsel %vm4354, 0, %v4353
    %v4356 = vsub.s32 32, %v4355
    %v4357 = vshll.u32 %v4348, %v4355
    %v4358 = vshrl.u32 %v4340, %v4356
    %v4359 = vor.u32 %v4357, %v4358
    %v4360 = vsub.s32 4294967266, %v4355
    %v4361 = vadd.s32 %v4360, 127
    %v4362 = vshll.u32 %v4361, 23
    %v4363 = vor.u32 4788187, %v4362
    %v4364 = vand.u32 2147483647, %v4363
    %v4366 = vcvt.s32.f32 %v4359
    %v4367 = vmul.f32 %v4366, %v4364
    %v4368 = vxor.u32 %v4367, 2147483648
    %v4369 = vsel %vm4286, %v4368, %v4367
    %v4370 = vsub.s32 4, %v4346
    %v4371 = vsel %vm4286, %v4370, %v4346
    %v4372 = vsel %vm4285, %v280, %v4369
    %v4373 = vsel %vm4285, 0, %v4371
    %v4374 = vcosq.f32.pop %v4372
    %v4375 = vsinq.f32.pop %v4372
    %vm4376 = vweird.f32 %v280
    %v4377 = vand.u32 %v4373, 3
    %vm4378 = vcmp.lt.s32.totalorder %v4377, 2
    %vm4379 = vcmp.eq.s32.totalorder %v4377, 0
    %v4380 = vxor.u32 %v4375, 2147483648
    %v4381 = vsel %vm4379, %v4374, %v4380
    %vm4382 = vcmp.eq.s32.totalorder %v4377, 2
    %v4383 = vxor.u32 %v4374, 2147483648
    %v4384 = vsel %vm4382, %v4383, %v4375
    %v4385 = vsel %vm4378, %v4381, %v4384
    %v4386 = vsel %vm4376, nan, %v4385
    %v4387 = vand.u32 2147483647, %v281
    %vm4388 = vcmp.le.f32.partialorder %v4387, 0.7853982
    %vm4389 = vcmp.lt.s32.totalorder %v281, 0
    %v4390 = vand.u32 %v281, 2139095040
    %v4391 = vshrl.u32 %v4390, 23
    %v4392 = vsub.s32 %v4391, 127
    %v4393 = vand.u32 2147483647, %v281
    %v4394 = vand.u32 %v4393, 8388607
    %v4395 = vor.u32 %v4394, 8388608
    %v4396 = vsub.s32 0, %v4395
    %v4397 = vadd.s32 %v4392, 1
    %vm4398 = vcmp.gt.s32.totalorder %v4397, 0
    %v4399 = vsel %vm4398, %v4397, 0
    %v4400 = vshrl.u32 %v4399, 5
    %v4401 = vand.u32 %v4399, 31
    %v4402 = vsub.s32 32, %v4401
    %v4403 = vshrl.u32 683565275, %v4402
    %v4404 = vshll.u32 683565275, %v4401
    %v4405 = vshrl.u32 2475754826, %v4402
    %v4406 = vor.u32 %v4404, %v4405
    %v4407 = vshll.u32 2475754826, %v4401
    %v4408 = vshrl.u32 2131351028, %v4402
    %v4409 = vor.u32 %v4407, %v4408
    %v4410 = vshll.u32 2131351028, %v4401
    %v4411 = vshrl.u32 2102212464, %v4402
    %v4412 = vor.u32 %v4410, %v4411
    %v4413 = vshll.u32 2102212464, %v4401
    %v4414 = vshrl.u32 920167782, %v4402
    %v4415 = vor.u32 %v4413, %v4414
    %v4416 = vshll.u32 920167782, %v4401
    %v4417 = vshrl.u32 1326507024, %v4402
    %v4418 = vor.u32 %v4416, %v4417
    %vm4419 = vcmp.lt.s32.totalorder %v4400, 1
    %vm4420 = vcmp.lt.s32.totalorder %v4400, 2
    %vm4421 = vcmp.lt.s32.totalorder %v4400, 3
    %vm4422 = vcmp.lt.s32.totalorder %v4400, 4
    %v4423 = vsel %vm4419, %v4403, %v4406
    %v4424 = vsel %vm4422, %v4412, 2102212464
    %v4425 = vsel %vm4421, %v4409, %v4424
    %v4426 = vsel %vm4420, %v4423, %v4425
    %v4427 = vsel %vm4419, %v4406, %v4409
    %v4428 = vsel %vm4422, %v4415, 920167782
    %v4429 = vsel %vm4421, %v4412, %v4428
    %v4430 = vsel %vm4420, %v4427, %v4429
    %v4431 = vsel %vm4419, %v4409, %v4412
    %v4432 = vsel %vm4422, %v4418, 1326507024
    %v4433 = vsel %vm4421, %v4415, %v4432
    %v4434 = vsel %vm4420, %v4431, %v4433
    %v4435 = vshll.u32 %v4395, 8
    %v4436 = vmul.u32.u64.compose %v4435, %v4434
    %v4437 = vextract.low.u32 %v4436
    %v4438 = vextract.high.u32 %v4436
    %v4439 = vmul.u32.u64.compose %v4435, %v4430
    %v4440 = vextract.low.u32 %v4439
    %v4441 = vextract.high.u32 %v4439
    %v4442 = vmul.u32 %v4435, %v4426
    %v4443 = vadd.s32 %v4438, %v4440
    %vm4444 = vc.u32 %v4438, %v4440
    %v4445 = vadd.s32 %v4441, 1
    %v4446 = vsel %vm4444, %v4445, %v4441
    %v4447 = vadd.s32 %v4442, %v4446
    %v4448 = vadd.s32 %v4447, 536870912
    %v4449 = vshrl.u32 %v4448, 30
    %v4450 = vshll.u32 %v4449, 30
    %v4451 = vsub.s32 %v4447, %v4450
    %vm4452 = vcmp.lt.s32.totalorder %v4451, 0
    %v4453 = vsub.s32 0, %v4451
    %v4454 = vsel %vm4452, %v4453, %v4451
    %v4455 = vclz %v4454
    %v4456 = vsub.s32 %v4455, 2
    %vm4457 = vcmp.gt.s32.totalorder 0, %v4456
    %v4458 = vsel %vm4457, 0, %v4456
    %v4459 = vsub.s32 32, %v4458
    %v4460 = vshll.u32 %v4451, %v4458
    %v4461 = vshrl.u32 %v4443, %v4459
    %v4462 = vor.u32 %v4460, %v4461
    %v4463 = vsub.s32 4294967266, %v4458
    %v4464 = vadd.s32 %v4463, 127
    %v4465 = vshll.u32 %v4464, 23
    %v4466 = vor.u32 4788187, %v4465
    %v4467 = vand.u32 2147483647, %v4466
    %v4469 = vcvt.s32.f32 %v4462
    %v4470 = vmul.f32 %v4469, %v4467
    %v4471 = vxor.u32 %v4470, 2147483648
    %v4472 = vsel %vm4389, %v4471, %v4470
    %v4473 = vsub.s32 4, %v4449
    %v4474 = vsel %vm4389, %v4473, %v4449
    %v4475 = vsel %vm4388, %v281, %v4472
    %v4476 = vsel %vm4388, 0, %v4474
    %v4477 = vcosq.f32.pop %v4475
    %v4478 = vsinq.f32.pop %v4475
    %vm4479 = vweird.f32 %v281
    %v4480 = vand.u32 %v4476, 3
    %vm4481 = vcmp.lt.s32.totalorder %v4480, 2
    %vm4482 = vcmp.eq.s32.totalorder %v4480, 0
    %v4483 = vxor.u32 %v4478, 2147483648
    %v4484 = vsel %vm4482, %v4477, %v4483
    %vm4485 = vcmp.eq.s32.totalorder %v4480, 2
    %v4486 = vxor.u32 %v4477, 2147483648
    %v4487 = vsel %vm4485, %v4486, %v4478
    %v4488 = vsel %vm4481, %v4484, %v4487
    %v4489 = vsel %vm4479, nan, %v4488
    %v4490 = vand.u32 2147483647, %v282
    %vm4491 = vcmp.le.f32.partialorder %v4490, 0.7853982
    %vm4492 = vcmp.lt.s32.totalorder %v282, 0
    %v4493 = vand.u32 %v282, 2139095040
    %v4494 = vshrl.u32 %v4493, 23
    %v4495 = vsub.s32 %v4494, 127
    %v4496 = vand.u32 2147483647, %v282
    %v4497 = vand.u32 %v4496, 8388607
    %v4498 = vor.u32 %v4497, 8388608
    %v4499 = vsub.s32 0, %v4498
    %v4500 = vadd.s32 %v4495, 1
    %vm4501 = vcmp.gt.s32.totalorder %v4500, 0
    %v4502 = vsel %vm4501, %v4500, 0
    %v4503 = vshrl.u32 %v4502, 5
    %v4504 = vand.u32 %v4502, 31
    %v4505 = vsub.s32 32, %v4504
    %v4506 = vshrl.u32 683565275, %v4505
    %v4507 = vshll.u32 683565275, %v4504
    %v4508 = vshrl.u32 2475754826, %v4505
    %v4509 = vor.u32 %v4507, %v4508
    %v4510 = vshll.u32 2475754826, %v4504
    %v4511 = vshrl.u32 2131351028, %v4505
    %v4512 = vor.u32 %v4510, %v4511
    %v4513 = vshll.u32 2131351028, %v4504
    %v4514 = vshrl.u32 2102212464, %v4505
    %v4515 = vor.u32 %v4513, %v4514
    %v4516 = vshll.u32 2102212464, %v4504
    %v4517 = vshrl.u32 920167782, %v4505
    %v4518 = vor.u32 %v4516, %v4517
    %v4519 = vshll.u32 920167782, %v4504
    %v4520 = vshrl.u32 1326507024, %v4505
    %v4521 = vor.u32 %v4519, %v4520
    %vm4522 = vcmp.lt.s32.totalorder %v4503, 1
    %vm4523 = vcmp.lt.s32.totalorder %v4503, 2
    %vm4524 = vcmp.lt.s32.totalorder %v4503, 3
    %vm4525 = vcmp.lt.s32.totalorder %v4503, 4
    %v4526 = vsel %vm4522, %v4506, %v4509
    %v4527 = vsel %vm4525, %v4515, 2102212464
    %v4528 = vsel %vm4524, %v4512, %v4527
    %v4529 = vsel %vm4523, %v4526, %v4528
    %v4530 = vsel %vm4522, %v4509, %v4512
    %v4531 = vsel %vm4525, %v4518, 920167782
    %v4532 = vsel %vm4524, %v4515, %v4531
    %v4533 = vsel %vm4523, %v4530, %v4532
    %v4534 = vsel %vm4522, %v4512, %v4515
    %v4535 = vsel %vm4525, %v4521, 1326507024
    %v4536 = vsel %vm4524, %v4518, %v4535
    %v4537 = vsel %vm4523, %v4534, %v4536
    %v4538 = vshll.u32 %v4498, 8
    %v4539 = vmul.u32.u64.compose %v4538, %v4537
    %v4540 = vextract.low.u32 %v4539
    %v4541 = vextract.high.u32 %v4539
    %v4542 = vmul.u32.u64.compose %v4538, %v4533
    %v4543 = vextract.low.u32 %v4542
    %v4544 = vextract.high.u32 %v4542
    %v4545 = vmul.u32 %v4538, %v4529
    %v4546 = vadd.s32 %v4541, %v4543
    %vm4547 = vc.u32 %v4541, %v4543
    %v4548 = vadd.s32 %v4544, 1
    %v4549 = vsel %vm4547, %v4548, %v4544
    %v4550 = vadd.s32 %v4545, %v4549
    %v4551 = vadd.s32 %v4550, 536870912
    %v4552 = vshrl.u32 %v4551, 30
    %v4553 = vshll.u32 %v4552, 30
    %v4554 = vsub.s32 %v4550, %v4553
    %vm4555 = vcmp.lt.s32.totalorder %v4554, 0
    %v4556 = vsub.s32 0, %v4554
    %v4557 = vsel %vm4555, %v4556, %v4554
    %v4558 = vclz %v4557
    %v4559 = vsub.s32 %v4558, 2
    %vm4560 = vcmp.gt.s32.totalorder 0, %v4559
    %v4561 = vsel %vm4560, 0, %v4559
    %v4562 = vsub.s32 32, %v4561
    %v4563 = vshll.u32 %v4554, %v4561
    %v4564 = vshrl.u32 %v4546, %v4562
    %v4565 = vor.u32 %v4563, %v4564
    %v4566 = vsub.s32 4294967266, %v4561
    %v4567 = vadd.s32 %v4566, 127
    %v4568 = vshll.u32 %v4567, 23
    %v4569 = vor.u32 4788187, %v4568
    %v4570 = vand.u32 2147483647, %v4569
    %v4572 = vcvt.s32.f32 %v4565
    %v4573 = vmul.f32 %v4572, %v4570
    %v4574 = vxor.u32 %v4573, 2147483648
    %v4575 = vsel %vm4492, %v4574, %v4573
    %v4576 = vsub.s32 4, %v4552
    %v4577 = vsel %vm4492, %v4576, %v4552
    %v4578 = vsel %vm4491, %v282, %v4575
    %v4579 = vsel %vm4491, 0, %v4577
    %v4580 = vcosq.f32.pop %v4578
    %v4581 = vsinq.f32.pop %v4578
    %vm4582 = vweird.f32 %v282
    %v4583 = vand.u32 %v4579, 3
    %vm4584 = vcmp.lt.s32.totalorder %v4583, 2
    %vm4585 = vcmp.eq.s32.totalorder %v4583, 0
    %v4586 = vxor.u32 %v4581, 2147483648
    %v4587 = vsel %vm4585, %v4580, %v4586
    %vm4588 = vcmp.eq.s32.totalorder %v4583, 2
    %v4589 = vxor.u32 %v4580, 2147483648
    %v4590 = vsel %vm4588, %v4589, %v4581
    %v4591 = vsel %vm4584, %v4587, %v4590
    %v4592 = vsel %vm4582, nan, %v4591
    %v4593 = vand.u32 2147483647, %v283
    %vm4594 = vcmp.le.f32.partialorder %v4593, 0.7853982
    %vm4595 = vcmp.lt.s32.totalorder %v283, 0
    %v4596 = vand.u32 %v283, 2139095040
    %v4597 = vshrl.u32 %v4596, 23
    %v4598 = vsub.s32 %v4597, 127
    %v4599 = vand.u32 2147483647, %v283
    %v4600 = vand.u32 %v4599, 8388607
    %v4601 = vor.u32 %v4600, 8388608
    %v4602 = vsub.s32 0, %v4601
    %v4603 = vadd.s32 %v4598, 1
    %vm4604 = vcmp.gt.s32.totalorder %v4603, 0
    %v4605 = vsel %vm4604, %v4603, 0
    %v4606 = vshrl.u32 %v4605, 5
    %v4607 = vand.u32 %v4605, 31
    %v4608 = vsub.s32 32, %v4607
    %v4609 = vshrl.u32 683565275, %v4608
    %v4610 = vshll.u32 683565275, %v4607
    %v4611 = vshrl.u32 2475754826, %v4608
    %v4612 = vor.u32 %v4610, %v4611
    %v4613 = vshll.u32 2475754826, %v4607
    %v4614 = vshrl.u32 2131351028, %v4608
    %v4615 = vor.u32 %v4613, %v4614
    %v4616 = vshll.u32 2131351028, %v4607
    %v4617 = vshrl.u32 2102212464, %v4608
    %v4618 = vor.u32 %v4616, %v4617
    %v4619 = vshll.u32 2102212464, %v4607
    %v4620 = vshrl.u32 920167782, %v4608
    %v4621 = vor.u32 %v4619, %v4620
    %v4622 = vshll.u32 920167782, %v4607
    %v4623 = vshrl.u32 1326507024, %v4608
    %v4624 = vor.u32 %v4622, %v4623
    %vm4625 = vcmp.lt.s32.totalorder %v4606, 1
    %vm4626 = vcmp.lt.s32.totalorder %v4606, 2
    %vm4627 = vcmp.lt.s32.totalorder %v4606, 3
    %vm4628 = vcmp.lt.s32.totalorder %v4606, 4
    %v4629 = vsel %vm4625, %v4609, %v4612
    %v4630 = vsel %vm4628, %v4618, 2102212464
    %v4631 = vsel %vm4627, %v4615, %v4630
    %v4632 = vsel %vm4626, %v4629, %v4631
    %v4633 = vsel %vm4625, %v4612, %v4615
    %v4634 = vsel %vm4628, %v4621, 920167782
    %v4635 = vsel %vm4627, %v4618, %v4634
    %v4636 = vsel %vm4626, %v4633, %v4635
    %v4637 = vsel %vm4625, %v4615, %v4618
    %v4638 = vsel %vm4628, %v4624, 1326507024
    %v4639 = vsel %vm4627, %v4621, %v4638
    %v4640 = vsel %vm4626, %v4637, %v4639
    %v4641 = vshll.u32 %v4601, 8
    %v4642 = vmul.u32.u64.compose %v4641, %v4640
    %v4643 = vextract.low.u32 %v4642
    %v4644 = vextract.high.u32 %v4642
    %v4645 = vmul.u32.u64.compose %v4641, %v4636
    %v4646 = vextract.low.u32 %v4645
    %v4647 = vextract.high.u32 %v4645
    %v4648 = vmul.u32 %v4641, %v4632
    %v4649 = vadd.s32 %v4644, %v4646
    %vm4650 = vc.u32 %v4644, %v4646
    %v4651 = vadd.s32 %v4647, 1
    %v4652 = vsel %vm4650, %v4651, %v4647
    %v4653 = vadd.s32 %v4648, %v4652
    %v4654 = vadd.s32 %v4653, 536870912
    %v4655 = vshrl.u32 %v4654, 30
    %v4656 = vshll.u32 %v4655, 30
    %v4657 = vsub.s32 %v4653, %v4656
    %vm4658 = vcmp.lt.s32.totalorder %v4657, 0
    %v4659 = vsub.s32 0, %v4657
    %v4660 = vsel %vm4658, %v4659, %v4657
    %v4661 = vclz %v4660
    %v4662 = vsub.s32 %v4661, 2
    %vm4663 = vcmp.gt.s32.totalorder 0, %v4662
    %v4664 = vsel %vm4663, 0, %v4662
    %v4665 = vsub.s32 32, %v4664
    %v4666 = vshll.u32 %v4657, %v4664
    %v4667 = vshrl.u32 %v4649, %v4665
    %v4668 = vor.u32 %v4666, %v4667
    %v4669 = vsub.s32 4294967266, %v4664
    %v4670 = vadd.s32 %v4669, 127
    %v4671 = vshll.u32 %v4670, 23
    %v4672 = vor.u32 4788187, %v4671
    %v4673 = vand.u32 2147483647, %v4672
    %v4675 = vcvt.s32.f32 %v4668
    %v4676 = vmul.f32 %v4675, %v4673
    %v4677 = vxor.u32 %v4676, 2147483648
    %v4678 = vsel %vm4595, %v4677, %v4676
    %v4679 = vsub.s32 4, %v4655
    %v4680 = vsel %vm4595, %v4679, %v4655
    %v4681 = vsel %vm4594, %v283, %v4678
    %v4682 = vsel %vm4594, 0, %v4680
    %v4683 = vcosq.f32.pop %v4681
    %v4684 = vsinq.f32.pop %v4681
    %vm4685 = vweird.f32 %v283
    %v4686 = vand.u32 %v4682, 3
    %vm4687 = vcmp.lt.s32.totalorder %v4686, 2
    %vm4688 = vcmp.eq.s32.totalorder %v4686, 0
    %v4689 = vxor.u32 %v4684, 2147483648
    %v4690 = vsel %vm4688, %v4683, %v4689
    %vm4691 = vcmp.eq.s32.totalorder %v4686, 2
    %v4692 = vxor.u32 %v4683, 2147483648
    %v4693 = vsel %vm4691, %v4692, %v4684
    %v4694 = vsel %vm4687, %v4690, %v4693
    %v4695 = vsel %vm4685, nan, %v4694
    %v4696 = vand.u32 2147483647, %v284
    %vm4697 = vcmp.le.f32.partialorder %v4696, 0.7853982
    %vm4698 = vcmp.lt.s32.totalorder %v284, 0
    %v4699 = vand.u32 %v284, 2139095040
    %v4700 = vshrl.u32 %v4699, 23
    %v4701 = vsub.s32 %v4700, 127
    %v4702 = vand.u32 2147483647, %v284
    %v4703 = vand.u32 %v4702, 8388607
    %v4704 = vor.u32 %v4703, 8388608
    %v4705 = vsub.s32 0, %v4704
    %v4706 = vadd.s32 %v4701, 1
    %vm4707 = vcmp.gt.s32.totalorder %v4706, 0
    %v4708 = vsel %vm4707, %v4706, 0
    %v4709 = vshrl.u32 %v4708, 5
    %v4710 = vand.u32 %v4708, 31
    %v4711 = vsub.s32 32, %v4710
    %v4712 = vshrl.u32 683565275, %v4711
    %v4713 = vshll.u32 683565275, %v4710
    %v4714 = vshrl.u32 2475754826, %v4711
    %v4715 = vor.u32 %v4713, %v4714
    %v4716 = vshll.u32 2475754826, %v4710
    %v4717 = vshrl.u32 2131351028, %v4711
    %v4718 = vor.u32 %v4716, %v4717
    %v4719 = vshll.u32 2131351028, %v4710
    %v4720 = vshrl.u32 2102212464, %v4711
    %v4721 = vor.u32 %v4719, %v4720
    %v4722 = vshll.u32 2102212464, %v4710
    %v4723 = vshrl.u32 920167782, %v4711
    %v4724 = vor.u32 %v4722, %v4723
    %v4725 = vshll.u32 920167782, %v4710
    %v4726 = vshrl.u32 1326507024, %v4711
    %v4727 = vor.u32 %v4725, %v4726
    %vm4728 = vcmp.lt.s32.totalorder %v4709, 1
    %vm4729 = vcmp.lt.s32.totalorder %v4709, 2
    %vm4730 = vcmp.lt.s32.totalorder %v4709, 3
    %vm4731 = vcmp.lt.s32.totalorder %v4709, 4
    %v4732 = vsel %vm4728, %v4712, %v4715
    %v4733 = vsel %vm4731, %v4721, 2102212464
    %v4734 = vsel %vm4730, %v4718, %v4733
    %v4735 = vsel %vm4729, %v4732, %v4734
    %v4736 = vsel %vm4728, %v4715, %v4718
    %v4737 = vsel %vm4731, %v4724, 920167782
    %v4738 = vsel %vm4730, %v4721, %v4737
    %v4739 = vsel %vm4729, %v4736, %v4738
    %v4740 = vsel %vm4728, %v4718, %v4721
    %v4741 = vsel %vm4731, %v4727, 1326507024
    %v4742 = vsel %vm4730, %v4724, %v4741
    %v4743 = vsel %vm4729, %v4740, %v4742
    %v4744 = vshll.u32 %v4704, 8
    %v4745 = vmul.u32.u64.compose %v4744, %v4743
    %v4746 = vextract.low.u32 %v4745
    %v4747 = vextract.high.u32 %v4745
    %v4748 = vmul.u32.u64.compose %v4744, %v4739
    %v4749 = vextract.low.u32 %v4748
    %v4750 = vextract.high.u32 %v4748
    %v4751 = vmul.u32 %v4744, %v4735
    %v4752 = vadd.s32 %v4747, %v4749
    %vm4753 = vc.u32 %v4747, %v4749
    %v4754 = vadd.s32 %v4750, 1
    %v4755 = vsel %vm4753, %v4754, %v4750
    %v4756 = vadd.s32 %v4751, %v4755
    %v4757 = vadd.s32 %v4756, 536870912
    %v4758 = vshrl.u32 %v4757, 30
    %v4759 = vshll.u32 %v4758, 30
    %v4760 = vsub.s32 %v4756, %v4759
    %vm4761 = vcmp.lt.s32.totalorder %v4760, 0
    %v4762 = vsub.s32 0, %v4760
    %v4763 = vsel %vm4761, %v4762, %v4760
    %v4764 = vclz %v4763
    %v4765 = vsub.s32 %v4764, 2
    %vm4766 = vcmp.gt.s32.totalorder 0, %v4765
    %v4767 = vsel %vm4766, 0, %v4765
    %v4768 = vsub.s32 32, %v4767
    %v4769 = vshll.u32 %v4760, %v4767
    %v4770 = vshrl.u32 %v4752, %v4768
    %v4771 = vor.u32 %v4769, %v4770
    %v4772 = vsub.s32 4294967266, %v4767
    %v4773 = vadd.s32 %v4772, 127
    %v4774 = vshll.u32 %v4773, 23
    %v4775 = vor.u32 4788187, %v4774
    %v4776 = vand.u32 2147483647, %v4775
    %v4778 = vcvt.s32.f32 %v4771
    %v4779 = vmul.f32 %v4778, %v4776
    %v4780 = vxor.u32 %v4779, 2147483648
    %v4781 = vsel %vm4698, %v4780, %v4779
    %v4782 = vsub.s32 4, %v4758
    %v4783 = vsel %vm4698, %v4782, %v4758
    %v4784 = vsel %vm4697, %v284, %v4781
    %v4785 = vsel %vm4697, 0, %v4783
    %v4786 = vcosq.f32.pop %v4784
    %v4787 = vsinq.f32.pop %v4784
    %vm4788 = vweird.f32 %v284
    %v4789 = vand.u32 %v4785, 3
    %vm4790 = vcmp.lt.s32.totalorder %v4789, 2
    %vm4791 = vcmp.eq.s32.totalorder %v4789, 0
    %v4792 = vxor.u32 %v4787, 2147483648
    %v4793 = vsel %vm4791, %v4786, %v4792
    %vm4794 = vcmp.eq.s32.totalorder %v4789, 2
    %v4795 = vxor.u32 %v4786, 2147483648
    %v4796 = vsel %vm4794, %v4795, %v4787
    %v4797 = vsel %vm4790, %v4793, %v4796
    %v4798 = vsel %vm4788, nan, %v4797
    %v4799 = vand.u32 2147483647, %v285
    %vm4800 = vcmp.le.f32.partialorder %v4799, 0.7853982
    %vm4801 = vcmp.lt.s32.totalorder %v285, 0
    %v4802 = vand.u32 %v285, 2139095040
    %v4803 = vshrl.u32 %v4802, 23
    %v4804 = vsub.s32 %v4803, 127
    %v4805 = vand.u32 2147483647, %v285
    %v4806 = vand.u32 %v4805, 8388607
    %v4807 = vor.u32 %v4806, 8388608
    %v4808 = vsub.s32 0, %v4807
    %v4809 = vadd.s32 %v4804, 1
    %vm4810 = vcmp.gt.s32.totalorder %v4809, 0
    %v4811 = vsel %vm4810, %v4809, 0
    %v4812 = vshrl.u32 %v4811, 5
    %v4813 = vand.u32 %v4811, 31
    %v4814 = vsub.s32 32, %v4813
    %v4815 = vshrl.u32 683565275, %v4814
    %v4816 = vshll.u32 683565275, %v4813
    %v4817 = vshrl.u32 2475754826, %v4814
    %v4818 = vor.u32 %v4816, %v4817
    %v4819 = vshll.u32 2475754826, %v4813
    %v4820 = vshrl.u32 2131351028, %v4814
    %v4821 = vor.u32 %v4819, %v4820
    %v4822 = vshll.u32 2131351028, %v4813
    %v4823 = vshrl.u32 2102212464, %v4814
    %v4824 = vor.u32 %v4822, %v4823
    %v4825 = vshll.u32 2102212464, %v4813
    %v4826 = vshrl.u32 920167782, %v4814
    %v4827 = vor.u32 %v4825, %v4826
    %v4828 = vshll.u32 920167782, %v4813
    %v4829 = vshrl.u32 1326507024, %v4814
    %v4830 = vor.u32 %v4828, %v4829
    %vm4831 = vcmp.lt.s32.totalorder %v4812, 1
    %vm4832 = vcmp.lt.s32.totalorder %v4812, 2
    %vm4833 = vcmp.lt.s32.totalorder %v4812, 3
    %vm4834 = vcmp.lt.s32.totalorder %v4812, 4
    %v4835 = vsel %vm4831, %v4815, %v4818
    %v4836 = vsel %vm4834, %v4824, 2102212464
    %v4837 = vsel %vm4833, %v4821, %v4836
    %v4838 = vsel %vm4832, %v4835, %v4837
    %v4839 = vsel %vm4831, %v4818, %v4821
    %v4840 = vsel %vm4834, %v4827, 920167782
    %v4841 = vsel %vm4833, %v4824, %v4840
    %v4842 = vsel %vm4832, %v4839, %v4841
    %v4843 = vsel %vm4831, %v4821, %v4824
    %v4844 = vsel %vm4834, %v4830, 1326507024
    %v4845 = vsel %vm4833, %v4827, %v4844
    %v4846 = vsel %vm4832, %v4843, %v4845
    %v4847 = vshll.u32 %v4807, 8
    %v4848 = vmul.u32.u64.compose %v4847, %v4846
    %v4849 = vextract.low.u32 %v4848
    %v4850 = vextract.high.u32 %v4848
    %v4851 = vmul.u32.u64.compose %v4847, %v4842
    %v4852 = vextract.low.u32 %v4851
    %v4853 = vextract.high.u32 %v4851
    %v4854 = vmul.u32 %v4847, %v4838
    %v4855 = vadd.s32 %v4850, %v4852
    %vm4856 = vc.u32 %v4850, %v4852
    %v4857 = vadd.s32 %v4853, 1
    %v4858 = vsel %vm4856, %v4857, %v4853
    %v4859 = vadd.s32 %v4854, %v4858
    %v4860 = vadd.s32 %v4859, 536870912
    %v4861 = vshrl.u32 %v4860, 30
    %v4862 = vshll.u32 %v4861, 30
    %v4863 = vsub.s32 %v4859, %v4862
    %vm4864 = vcmp.lt.s32.totalorder %v4863, 0
    %v4865 = vsub.s32 0, %v4863
    %v4866 = vsel %vm4864, %v4865, %v4863
    %v4867 = vclz %v4866
    %v4868 = vsub.s32 %v4867, 2
    %vm4869 = vcmp.gt.s32.totalorder 0, %v4868
    %v4870 = vsel %vm4869, 0, %v4868
    %v4871 = vsub.s32 32, %v4870
    %v4872 = vshll.u32 %v4863, %v4870
    %v4873 = vshrl.u32 %v4855, %v4871
    %v4874 = vor.u32 %v4872, %v4873
    %v4875 = vsub.s32 4294967266, %v4870
    %v4876 = vadd.s32 %v4875, 127
    %v4877 = vshll.u32 %v4876, 23
    %v4878 = vor.u32 4788187, %v4877
    %v4879 = vand.u32 2147483647, %v4878
    %v4881 = vcvt.s32.f32 %v4874
    %v4882 = vmul.f32 %v4881, %v4879
    %v4883 = vxor.u32 %v4882, 2147483648
    %v4884 = vsel %vm4801, %v4883, %v4882
    %v4885 = vsub.s32 4, %v4861
    %v4886 = vsel %vm4801, %v4885, %v4861
    %v4887 = vsel %vm4800, %v285, %v4884
    %v4888 = vsel %vm4800, 0, %v4886
    %v4889 = vcosq.f32.pop %v4887
    %v4890 = vsinq.f32.pop %v4887
    %vm4891 = vweird.f32 %v285
    %v4892 = vand.u32 %v4888, 3
    %vm4893 = vcmp.lt.s32.totalorder %v4892, 2
    %vm4894 = vcmp.eq.s32.totalorder %v4892, 0
    %v4895 = vxor.u32 %v4890, 2147483648
    %v4896 = vsel %vm4894, %v4889, %v4895
    %vm4897 = vcmp.eq.s32.totalorder %v4892, 2
    %v4898 = vxor.u32 %v4889, 2147483648
    %v4899 = vsel %vm4897, %v4898, %v4890
    %v4900 = vsel %vm4893, %v4896, %v4899
    %v4901 = vsel %vm4891, nan, %v4900
    %v4902 = vand.u32 2147483647, %v286
    %vm4903 = vcmp.le.f32.partialorder %v4902, 0.7853982
    %vm4904 = vcmp.lt.s32.totalorder %v286, 0
    %v4905 = vand.u32 %v286, 2139095040
    %v4906 = vshrl.u32 %v4905, 23
    %v4907 = vsub.s32 %v4906, 127
    %v4908 = vand.u32 2147483647, %v286
    %v4909 = vand.u32 %v4908, 8388607
    %v4910 = vor.u32 %v4909, 8388608
    %v4911 = vsub.s32 0, %v4910
    %v4912 = vadd.s32 %v4907, 1
    %vm4913 = vcmp.gt.s32.totalorder %v4912, 0
    %v4914 = vsel %vm4913, %v4912, 0
    %v4915 = vshrl.u32 %v4914, 5
    %v4916 = vand.u32 %v4914, 31
    %v4917 = vsub.s32 32, %v4916
    %v4918 = vshrl.u32 683565275, %v4917
    %v4919 = vshll.u32 683565275, %v4916
    %v4920 = vshrl.u32 2475754826, %v4917
    %v4921 = vor.u32 %v4919, %v4920
    %v4922 = vshll.u32 2475754826, %v4916
    %v4923 = vshrl.u32 2131351028, %v4917
    %v4924 = vor.u32 %v4922, %v4923
    %v4925 = vshll.u32 2131351028, %v4916
    %v4926 = vshrl.u32 2102212464, %v4917
    %v4927 = vor.u32 %v4925, %v4926
    %v4928 = vshll.u32 2102212464, %v4916
    %v4929 = vshrl.u32 920167782, %v4917
    %v4930 = vor.u32 %v4928, %v4929
    %v4931 = vshll.u32 920167782, %v4916
    %v4932 = vshrl.u32 1326507024, %v4917
    %v4933 = vor.u32 %v4931, %v4932
    %vm4934 = vcmp.lt.s32.totalorder %v4915, 1
    %vm4935 = vcmp.lt.s32.totalorder %v4915, 2
    %vm4936 = vcmp.lt.s32.totalorder %v4915, 3
    %vm4937 = vcmp.lt.s32.totalorder %v4915, 4
    %v4938 = vsel %vm4934, %v4918, %v4921
    %v4939 = vsel %vm4937, %v4927, 2102212464
    %v4940 = vsel %vm4936, %v4924, %v4939
    %v4941 = vsel %vm4935, %v4938, %v4940
    %v4942 = vsel %vm4934, %v4921, %v4924
    %v4943 = vsel %vm4937, %v4930, 920167782
    %v4944 = vsel %vm4936, %v4927, %v4943
    %v4945 = vsel %vm4935, %v4942, %v4944
    %v4946 = vsel %vm4934, %v4924, %v4927
    %v4947 = vsel %vm4937, %v4933, 1326507024
    %v4948 = vsel %vm4936, %v4930, %v4947
    %v4949 = vsel %vm4935, %v4946, %v4948
    %v4950 = vshll.u32 %v4910, 8
    %v4951 = vmul.u32.u64.compose %v4950, %v4949
    %v4952 = vextract.low.u32 %v4951
    %v4953 = vextract.high.u32 %v4951
    %v4954 = vmul.u32.u64.compose %v4950, %v4945
    %v4955 = vextract.low.u32 %v4954
    %v4956 = vextract.high.u32 %v4954
    %v4957 = vmul.u32 %v4950, %v4941
    %v4958 = vadd.s32 %v4953, %v4955
    %vm4959 = vc.u32 %v4953, %v4955
    %v4960 = vadd.s32 %v4956, 1
    %v4961 = vsel %vm4959, %v4960, %v4956
    %v4962 = vadd.s32 %v4957, %v4961
    %v4963 = vadd.s32 %v4962, 536870912
    %v4964 = vshrl.u32 %v4963, 30
    %v4965 = vshll.u32 %v4964, 30
    %v4966 = vsub.s32 %v4962, %v4965
    %vm4967 = vcmp.lt.s32.totalorder %v4966, 0
    %v4968 = vsub.s32 0, %v4966
    %v4969 = vsel %vm4967, %v4968, %v4966
    %v4970 = vclz %v4969
    %v4971 = vsub.s32 %v4970, 2
    %vm4972 = vcmp.gt.s32.totalorder 0, %v4971
    %v4973 = vsel %vm4972, 0, %v4971
    %v4974 = vsub.s32 32, %v4973
    %v4975 = vshll.u32 %v4966, %v4973
    %v4976 = vshrl.u32 %v4958, %v4974
    %v4977 = vor.u32 %v4975, %v4976
    %v4978 = vsub.s32 4294967266, %v4973
    %v4979 = vadd.s32 %v4978, 127
    %v4980 = vshll.u32 %v4979, 23
    %v4981 = vor.u32 4788187, %v4980
    %v4982 = vand.u32 2147483647, %v4981
    %v4984 = vcvt.s32.f32 %v4977
    %v4985 = vmul.f32 %v4984, %v4982
    %v4986 = vxor.u32 %v4985, 2147483648
    %v4987 = vsel %vm4904, %v4986, %v4985
    %v4988 = vsub.s32 4, %v4964
    %v4989 = vsel %vm4904, %v4988, %v4964
    %v4990 = vsel %vm4903, %v286, %v4987
    %v4991 = vsel %vm4903, 0, %v4989
    %v4992 = vcosq.f32.pop %v4990
    %v4993 = vsinq.f32.pop %v4990
    %vm4994 = vweird.f32 %v286
    %v4995 = vand.u32 %v4991, 3
    %vm4996 = vcmp.lt.s32.totalorder %v4995, 2
    %vm4997 = vcmp.eq.s32.totalorder %v4995, 0
    %v4998 = vxor.u32 %v4993, 2147483648
    %v4999 = vsel %vm4997, %v4992, %v4998
    %vm5000 = vcmp.eq.s32.totalorder %v4995, 2
    %v5001 = vxor.u32 %v4992, 2147483648
    %v5002 = vsel %vm5000, %v5001, %v4993
    %v5003 = vsel %vm4996, %v4999, %v5002
    %v5004 = vsel %vm4994, nan, %v5003
    %v5005 = vand.u32 2147483647, %v287
    %vm5006 = vcmp.le.f32.partialorder %v5005, 0.7853982
    %vm5007 = vcmp.lt.s32.totalorder %v287, 0
    %v5008 = vand.u32 %v287, 2139095040
    %v5009 = vshrl.u32 %v5008, 23
    %v5010 = vsub.s32 %v5009, 127
    %v5011 = vand.u32 2147483647, %v287
    %v5012 = vand.u32 %v5011, 8388607
    %v5013 = vor.u32 %v5012, 8388608
    %v5014 = vsub.s32 0, %v5013
    %v5015 = vadd.s32 %v5010, 1
    %vm5016 = vcmp.gt.s32.totalorder %v5015, 0
    %v5017 = vsel %vm5016, %v5015, 0
    %v5018 = vshrl.u32 %v5017, 5
    %v5019 = vand.u32 %v5017, 31
    %v5020 = vsub.s32 32, %v5019
    %v5021 = vshrl.u32 683565275, %v5020
    %v5022 = vshll.u32 683565275, %v5019
    %v5023 = vshrl.u32 2475754826, %v5020
    %v5024 = vor.u32 %v5022, %v5023
    %v5025 = vshll.u32 2475754826, %v5019
    %v5026 = vshrl.u32 2131351028, %v5020
    %v5027 = vor.u32 %v5025, %v5026
    %v5028 = vshll.u32 2131351028, %v5019
    %v5029 = vshrl.u32 2102212464, %v5020
    %v5030 = vor.u32 %v5028, %v5029
    %v5031 = vshll.u32 2102212464, %v5019
    %v5032 = vshrl.u32 920167782, %v5020
    %v5033 = vor.u32 %v5031, %v5032
    %v5034 = vshll.u32 920167782, %v5019
    %v5035 = vshrl.u32 1326507024, %v5020
    %v5036 = vor.u32 %v5034, %v5035
    %vm5037 = vcmp.lt.s32.totalorder %v5018, 1
    %vm5038 = vcmp.lt.s32.totalorder %v5018, 2
    %vm5039 = vcmp.lt.s32.totalorder %v5018, 3
    %vm5040 = vcmp.lt.s32.totalorder %v5018, 4
    %v5041 = vsel %vm5037, %v5021, %v5024
    %v5042 = vsel %vm5040, %v5030, 2102212464
    %v5043 = vsel %vm5039, %v5027, %v5042
    %v5044 = vsel %vm5038, %v5041, %v5043
    %v5045 = vsel %vm5037, %v5024, %v5027
    %v5046 = vsel %vm5040, %v5033, 920167782
    %v5047 = vsel %vm5039, %v5030, %v5046
    %v5048 = vsel %vm5038, %v5045, %v5047
    %v5049 = vsel %vm5037, %v5027, %v5030
    %v5050 = vsel %vm5040, %v5036, 1326507024
    %v5051 = vsel %vm5039, %v5033, %v5050
    %v5052 = vsel %vm5038, %v5049, %v5051
    %v5053 = vshll.u32 %v5013, 8
    %v5054 = vmul.u32.u64.compose %v5053, %v5052
    %v5055 = vextract.low.u32 %v5054
    %v5056 = vextract.high.u32 %v5054
    %v5057 = vmul.u32.u64.compose %v5053, %v5048
    %v5058 = vextract.low.u32 %v5057
    %v5059 = vextract.high.u32 %v5057
    %v5060 = vmul.u32 %v5053, %v5044
    %v5061 = vadd.s32 %v5056, %v5058
    %vm5062 = vc.u32 %v5056, %v5058
    %v5063 = vadd.s32 %v5059, 1
    %v5064 = vsel %vm5062, %v5063, %v5059
    %v5065 = vadd.s32 %v5060, %v5064
    %v5066 = vadd.s32 %v5065, 536870912
    %v5067 = vshrl.u32 %v5066, 30
    %v5068 = vshll.u32 %v5067, 30
    %v5069 = vsub.s32 %v5065, %v5068
    %vm5070 = vcmp.lt.s32.totalorder %v5069, 0
    %v5071 = vsub.s32 0, %v5069
    %v5072 = vsel %vm5070, %v5071, %v5069
    %v5073 = vclz %v5072
    %v5074 = vsub.s32 %v5073, 2
    %vm5075 = vcmp.gt.s32.totalorder 0, %v5074
    %v5076 = vsel %vm5075, 0, %v5074
    %v5077 = vsub.s32 32, %v5076
    %v5078 = vshll.u32 %v5069, %v5076
    %v5079 = vshrl.u32 %v5061, %v5077
    %v5080 = vor.u32 %v5078, %v5079
    %v5081 = vsub.s32 4294967266, %v5076
    %v5082 = vadd.s32 %v5081, 127
    %v5083 = vshll.u32 %v5082, 23
    %v5084 = vor.u32 4788187, %v5083
    %v5085 = vand.u32 2147483647, %v5084
    %v5087 = vcvt.s32.f32 %v5080
    %v5088 = vmul.f32 %v5087, %v5085
    %v5089 = vxor.u32 %v5088, 2147483648
    %v5090 = vsel %vm5007, %v5089, %v5088
    %v5091 = vsub.s32 4, %v5067
    %v5092 = vsel %vm5007, %v5091, %v5067
    %v5093 = vsel %vm5006, %v287, %v5090
    %v5094 = vsel %vm5006, 0, %v5092
    %v5095 = vcosq.f32.pop %v5093
    %v5096 = vsinq.f32.pop %v5093
    %vm5097 = vweird.f32 %v287
    %v5098 = vand.u32 %v5094, 3
    %vm5099 = vcmp.lt.s32.totalorder %v5098, 2
    %vm5100 = vcmp.eq.s32.totalorder %v5098, 0
    %v5101 = vxor.u32 %v5096, 2147483648
    %v5102 = vsel %vm5100, %v5095, %v5101
    %vm5103 = vcmp.eq.s32.totalorder %v5098, 2
    %v5104 = vxor.u32 %v5095, 2147483648
    %v5105 = vsel %vm5103, %v5104, %v5096
    %v5106 = vsel %vm5099, %v5102, %v5105
    %v5107 = vsel %vm5097, nan, %v5106
    %v5108 = vand.u32 2147483647, %v288
    %vm5109 = vcmp.le.f32.partialorder %v5108, 0.7853982
    %vm5110 = vcmp.lt.s32.totalorder %v288, 0
    %v5111 = vand.u32 %v288, 2139095040
    %v5112 = vshrl.u32 %v5111, 23
    %v5113 = vsub.s32 %v5112, 127
    %v5114 = vand.u32 2147483647, %v288
    %v5115 = vand.u32 %v5114, 8388607
    %v5116 = vor.u32 %v5115, 8388608
    %v5117 = vsub.s32 0, %v5116
    %v5118 = vadd.s32 %v5113, 1
    %vm5119 = vcmp.gt.s32.totalorder %v5118, 0
    %v5120 = vsel %vm5119, %v5118, 0
    %v5121 = vshrl.u32 %v5120, 5
    %v5122 = vand.u32 %v5120, 31
    %v5123 = vsub.s32 32, %v5122
    %v5124 = vshrl.u32 683565275, %v5123
    %v5125 = vshll.u32 683565275, %v5122
    %v5126 = vshrl.u32 2475754826, %v5123
    %v5127 = vor.u32 %v5125, %v5126
    %v5128 = vshll.u32 2475754826, %v5122
    %v5129 = vshrl.u32 2131351028, %v5123
    %v5130 = vor.u32 %v5128, %v5129
    %v5131 = vshll.u32 2131351028, %v5122
    %v5132 = vshrl.u32 2102212464, %v5123
    %v5133 = vor.u32 %v5131, %v5132
    %v5134 = vshll.u32 2102212464, %v5122
    %v5135 = vshrl.u32 920167782, %v5123
    %v5136 = vor.u32 %v5134, %v5135
    %v5137 = vshll.u32 920167782, %v5122
    %v5138 = vshrl.u32 1326507024, %v5123
    %v5139 = vor.u32 %v5137, %v5138
    %vm5140 = vcmp.lt.s32.totalorder %v5121, 1
    %vm5141 = vcmp.lt.s32.totalorder %v5121, 2
    %vm5142 = vcmp.lt.s32.totalorder %v5121, 3
    %vm5143 = vcmp.lt.s32.totalorder %v5121, 4
    %v5144 = vsel %vm5140, %v5124, %v5127
    %v5145 = vsel %vm5143, %v5133, 2102212464
    %v5146 = vsel %vm5142, %v5130, %v5145
    %v5147 = vsel %vm5141, %v5144, %v5146
    %v5148 = vsel %vm5140, %v5127, %v5130
    %v5149 = vsel %vm5143, %v5136, 920167782
    %v5150 = vsel %vm5142, %v5133, %v5149
    %v5151 = vsel %vm5141, %v5148, %v5150
    %v5152 = vsel %vm5140, %v5130, %v5133
    %v5153 = vsel %vm5143, %v5139, 1326507024
    %v5154 = vsel %vm5142, %v5136, %v5153
    %v5155 = vsel %vm5141, %v5152, %v5154
    %v5156 = vshll.u32 %v5116, 8
    %v5157 = vmul.u32.u64.compose %v5156, %v5155
    %v5158 = vextract.low.u32 %v5157
    %v5159 = vextract.high.u32 %v5157
    %v5160 = vmul.u32.u64.compose %v5156, %v5151
    %v5161 = vextract.low.u32 %v5160
    %v5162 = vextract.high.u32 %v5160
    %v5163 = vmul.u32 %v5156, %v5147
    %v5164 = vadd.s32 %v5159, %v5161
    %vm5165 = vc.u32 %v5159, %v5161
    %v5166 = vadd.s32 %v5162, 1
    %v5167 = vsel %vm5165, %v5166, %v5162
    %v5168 = vadd.s32 %v5163, %v5167
    %v5169 = vadd.s32 %v5168, 536870912
    %v5170 = vshrl.u32 %v5169, 30
    %v5171 = vshll.u32 %v5170, 30
    %v5172 = vsub.s32 %v5168, %v5171
    %vm5173 = vcmp.lt.s32.totalorder %v5172, 0
    %v5174 = vsub.s32 0, %v5172
    %v5175 = vsel %vm5173, %v5174, %v5172
    %v5176 = vclz %v5175
    %v5177 = vsub.s32 %v5176, 2
    %vm5178 = vcmp.gt.s32.totalorder 0, %v5177
    %v5179 = vsel %vm5178, 0, %v5177
    %v5180 = vsub.s32 32, %v5179
    %v5181 = vshll.u32 %v5172, %v5179
    %v5182 = vshrl.u32 %v5164, %v5180
    %v5183 = vor.u32 %v5181, %v5182
    %v5184 = vsub.s32 4294967266, %v5179
    %v5185 = vadd.s32 %v5184, 127
    %v5186 = vshll.u32 %v5185, 23
    %v5187 = vor.u32 4788187, %v5186
    %v5188 = vand.u32 2147483647, %v5187
    %v5190 = vcvt.s32.f32 %v5183
    %v5191 = vmul.f32 %v5190, %v5188
    %v5192 = vxor.u32 %v5191, 2147483648
    %v5193 = vsel %vm5110, %v5192, %v5191
    %v5194 = vsub.s32 4, %v5170
    %v5195 = vsel %vm5110, %v5194, %v5170
    %v5196 = vsel %vm5109, %v288, %v5193
    %v5197 = vsel %vm5109, 0, %v5195
    %v5198 = vcosq.f32.pop %v5196
    %v5199 = vsinq.f32.pop %v5196
    %vm5200 = vweird.f32 %v288
    %v5201 = vand.u32 %v5197, 3
    %vm5202 = vcmp.lt.s32.totalorder %v5201, 2
    %vm5203 = vcmp.eq.s32.totalorder %v5201, 0
    %v5204 = vxor.u32 %v5199, 2147483648
    %v5205 = vsel %vm5203, %v5198, %v5204
    %vm5206 = vcmp.eq.s32.totalorder %v5201, 2
    %v5207 = vxor.u32 %v5198, 2147483648
    %v5208 = vsel %vm5206, %v5207, %v5199
    %v5209 = vsel %vm5202, %v5205, %v5208
    %v5210 = vsel %vm5200, nan, %v5209
    %v5211 = vand.u32 2147483647, %v289
    %vm5212 = vcmp.le.f32.partialorder %v5211, 0.7853982
    %vm5213 = vcmp.lt.s32.totalorder %v289, 0
    %v5214 = vand.u32 %v289, 2139095040
    %v5215 = vshrl.u32 %v5214, 23
    %v5216 = vsub.s32 %v5215, 127
    %v5217 = vand.u32 2147483647, %v289
    %v5218 = vand.u32 %v5217, 8388607
    %v5219 = vor.u32 %v5218, 8388608
    %v5220 = vsub.s32 0, %v5219
    %v5221 = vadd.s32 %v5216, 1
    %vm5222 = vcmp.gt.s32.totalorder %v5221, 0
    %v5223 = vsel %vm5222, %v5221, 0
    %v5224 = vshrl.u32 %v5223, 5
    %v5225 = vand.u32 %v5223, 31
    %v5226 = vsub.s32 32, %v5225
    %v5227 = vshrl.u32 683565275, %v5226
    %v5228 = vshll.u32 683565275, %v5225
    %v5229 = vshrl.u32 2475754826, %v5226
    %v5230 = vor.u32 %v5228, %v5229
    %v5231 = vshll.u32 2475754826, %v5225
    %v5232 = vshrl.u32 2131351028, %v5226
    %v5233 = vor.u32 %v5231, %v5232
    %v5234 = vshll.u32 2131351028, %v5225
    %v5235 = vshrl.u32 2102212464, %v5226
    %v5236 = vor.u32 %v5234, %v5235
    %v5237 = vshll.u32 2102212464, %v5225
    %v5238 = vshrl.u32 920167782, %v5226
    %v5239 = vor.u32 %v5237, %v5238
    %v5240 = vshll.u32 920167782, %v5225
    %v5241 = vshrl.u32 1326507024, %v5226
    %v5242 = vor.u32 %v5240, %v5241
    %vm5243 = vcmp.lt.s32.totalorder %v5224, 1
    %vm5244 = vcmp.lt.s32.totalorder %v5224, 2
    %vm5245 = vcmp.lt.s32.totalorder %v5224, 3
    %vm5246 = vcmp.lt.s32.totalorder %v5224, 4
    %v5247 = vsel %vm5243, %v5227, %v5230
    %v5248 = vsel %vm5246, %v5236, 2102212464
    %v5249 = vsel %vm5245, %v5233, %v5248
    %v5250 = vsel %vm5244, %v5247, %v5249
    %v5251 = vsel %vm5243, %v5230, %v5233
    %v5252 = vsel %vm5246, %v5239, 920167782
    %v5253 = vsel %vm5245, %v5236, %v5252
    %v5254 = vsel %vm5244, %v5251, %v5253
    %v5255 = vsel %vm5243, %v5233, %v5236
    %v5256 = vsel %vm5246, %v5242, 1326507024
    %v5257 = vsel %vm5245, %v5239, %v5256
    %v5258 = vsel %vm5244, %v5255, %v5257
    %v5259 = vshll.u32 %v5219, 8
    %v5260 = vmul.u32.u64.compose %v5259, %v5258
    %v5261 = vextract.low.u32 %v5260
    %v5262 = vextract.high.u32 %v5260
    %v5263 = vmul.u32.u64.compose %v5259, %v5254
    %v5264 = vextract.low.u32 %v5263
    %v5265 = vextract.high.u32 %v5263
    %v5266 = vmul.u32 %v5259, %v5250
    %v5267 = vadd.s32 %v5262, %v5264
    %vm5268 = vc.u32 %v5262, %v5264
    %v5269 = vadd.s32 %v5265, 1
    %v5270 = vsel %vm5268, %v5269, %v5265
    %v5271 = vadd.s32 %v5266, %v5270
    %v5272 = vadd.s32 %v5271, 536870912
    %v5273 = vshrl.u32 %v5272, 30
    %v5274 = vshll.u32 %v5273, 30
    %v5275 = vsub.s32 %v5271, %v5274
    %vm5276 = vcmp.lt.s32.totalorder %v5275, 0
    %v5277 = vsub.s32 0, %v5275
    %v5278 = vsel %vm5276, %v5277, %v5275
    %v5279 = vclz %v5278
    %v5280 = vsub.s32 %v5279, 2
    %vm5281 = vcmp.gt.s32.totalorder 0, %v5280
    %v5282 = vsel %vm5281, 0, %v5280
    %v5283 = vsub.s32 32, %v5282
    %v5284 = vshll.u32 %v5275, %v5282
    %v5285 = vshrl.u32 %v5267, %v5283
    %v5286 = vor.u32 %v5284, %v5285
    %v5287 = vsub.s32 4294967266, %v5282
    %v5288 = vadd.s32 %v5287, 127
    %v5289 = vshll.u32 %v5288, 23
    %v5290 = vor.u32 4788187, %v5289
    %v5291 = vand.u32 2147483647, %v5290
    %v5293 = vcvt.s32.f32 %v5286
    %v5294 = vmul.f32 %v5293, %v5291
    %v5295 = vxor.u32 %v5294, 2147483648
    %v5296 = vsel %vm5213, %v5295, %v5294
    %v5297 = vsub.s32 4, %v5273
    %v5298 = vsel %vm5213, %v5297, %v5273
    %v5299 = vsel %vm5212, %v289, %v5296
    %v5300 = vsel %vm5212, 0, %v5298
    %v5301 = vcosq.f32.pop %v5299
    %v5302 = vsinq.f32.pop %v5299
    %vm5303 = vweird.f32 %v289
    %v5304 = vand.u32 %v5300, 3
    %vm5305 = vcmp.lt.s32.totalorder %v5304, 2
    %vm5306 = vcmp.eq.s32.totalorder %v5304, 0
    %v5307 = vxor.u32 %v5302, 2147483648
    %v5308 = vsel %vm5306, %v5301, %v5307
    %vm5309 = vcmp.eq.s32.totalorder %v5304, 2
    %v5310 = vxor.u32 %v5301, 2147483648
    %v5311 = vsel %vm5309, %v5310, %v5302
    %v5312 = vsel %vm5305, %v5308, %v5311
    %v5313 = vsel %vm5303, nan, %v5312
    %v5314 = vand.u32 2147483647, %v290
    %vm5315 = vcmp.le.f32.partialorder %v5314, 0.7853982
    %vm5316 = vcmp.lt.s32.totalorder %v290, 0
    %v5317 = vand.u32 %v290, 2139095040
    %v5318 = vshrl.u32 %v5317, 23
    %v5319 = vsub.s32 %v5318, 127
    %v5320 = vand.u32 2147483647, %v290
    %v5321 = vand.u32 %v5320, 8388607
    %v5322 = vor.u32 %v5321, 8388608
    %v5323 = vsub.s32 0, %v5322
    %v5324 = vadd.s32 %v5319, 1
    %vm5325 = vcmp.gt.s32.totalorder %v5324, 0
    %v5326 = vsel %vm5325, %v5324, 0
    %v5327 = vshrl.u32 %v5326, 5
    %v5328 = vand.u32 %v5326, 31
    %v5329 = vsub.s32 32, %v5328
    %v5330 = vshrl.u32 683565275, %v5329
    %v5331 = vshll.u32 683565275, %v5328
    %v5332 = vshrl.u32 2475754826, %v5329
    %v5333 = vor.u32 %v5331, %v5332
    %v5334 = vshll.u32 2475754826, %v5328
    %v5335 = vshrl.u32 2131351028, %v5329
    %v5336 = vor.u32 %v5334, %v5335
    %v5337 = vshll.u32 2131351028, %v5328
    %v5338 = vshrl.u32 2102212464, %v5329
    %v5339 = vor.u32 %v5337, %v5338
    %v5340 = vshll.u32 2102212464, %v5328
    %v5341 = vshrl.u32 920167782, %v5329
    %v5342 = vor.u32 %v5340, %v5341
    %v5343 = vshll.u32 920167782, %v5328
    %v5344 = vshrl.u32 1326507024, %v5329
    %v5345 = vor.u32 %v5343, %v5344
    %vm5346 = vcmp.lt.s32.totalorder %v5327, 1
    %vm5347 = vcmp.lt.s32.totalorder %v5327, 2
    %vm5348 = vcmp.lt.s32.totalorder %v5327, 3
    %vm5349 = vcmp.lt.s32.totalorder %v5327, 4
    %v5350 = vsel %vm5346, %v5330, %v5333
    %v5351 = vsel %vm5349, %v5339, 2102212464
    %v5352 = vsel %vm5348, %v5336, %v5351
    %v5353 = vsel %vm5347, %v5350, %v5352
    %v5354 = vsel %vm5346, %v5333, %v5336
    %v5355 = vsel %vm5349, %v5342, 920167782
    %v5356 = vsel %vm5348, %v5339, %v5355
    %v5357 = vsel %vm5347, %v5354, %v5356
    %v5358 = vsel %vm5346, %v5336, %v5339
    %v5359 = vsel %vm5349, %v5345, 1326507024
    %v5360 = vsel %vm5348, %v5342, %v5359
    %v5361 = vsel %vm5347, %v5358, %v5360
    %v5362 = vshll.u32 %v5322, 8
    %v5363 = vmul.u32.u64.compose %v5362, %v5361
    %v5364 = vextract.low.u32 %v5363
    %v5365 = vextract.high.u32 %v5363
    %v5366 = vmul.u32.u64.compose %v5362, %v5357
    %v5367 = vextract.low.u32 %v5366
    %v5368 = vextract.high.u32 %v5366
    %v5369 = vmul.u32 %v5362, %v5353
    %v5370 = vadd.s32 %v5365, %v5367
    %vm5371 = vc.u32 %v5365, %v5367
    %v5372 = vadd.s32 %v5368, 1
    %v5373 = vsel %vm5371, %v5372, %v5368
    %v5374 = vadd.s32 %v5369, %v5373
    %v5375 = vadd.s32 %v5374, 536870912
    %v5376 = vshrl.u32 %v5375, 30
    %v5377 = vshll.u32 %v5376, 30
    %v5378 = vsub.s32 %v5374, %v5377
    %vm5379 = vcmp.lt.s32.totalorder %v5378, 0
    %v5380 = vsub.s32 0, %v5378
    %v5381 = vsel %vm5379, %v5380, %v5378
    %v5382 = vclz %v5381
    %v5383 = vsub.s32 %v5382, 2
    %vm5384 = vcmp.gt.s32.totalorder 0, %v5383
    %v5385 = vsel %vm5384, 0, %v5383
    %v5386 = vsub.s32 32, %v5385
    %v5387 = vshll.u32 %v5378, %v5385
    %v5388 = vshrl.u32 %v5370, %v5386
    %v5389 = vor.u32 %v5387, %v5388
    %v5390 = vsub.s32 4294967266, %v5385
    %v5391 = vadd.s32 %v5390, 127
    %v5392 = vshll.u32 %v5391, 23
    %v5393 = vor.u32 4788187, %v5392
    %v5394 = vand.u32 2147483647, %v5393
    %v5396 = vcvt.s32.f32 %v5389
    %v5397 = vmul.f32 %v5396, %v5394
    %v5398 = vxor.u32 %v5397, 2147483648
    %v5399 = vsel %vm5316, %v5398, %v5397
    %v5400 = vsub.s32 4, %v5376
    %v5401 = vsel %vm5316, %v5400, %v5376
    %v5402 = vsel %vm5315, %v290, %v5399
    %v5403 = vsel %vm5315, 0, %v5401
    %v5404 = vcosq.f32.pop %v5402
    %v5405 = vsinq.f32.pop %v5402
    %vm5406 = vweird.f32 %v290
    %v5407 = vand.u32 %v5403, 3
    %vm5408 = vcmp.lt.s32.totalorder %v5407, 2
    %vm5409 = vcmp.eq.s32.totalorder %v5407, 0
    %v5410 = vxor.u32 %v5405, 2147483648
    %v5411 = vsel %vm5409, %v5404, %v5410
    %vm5412 = vcmp.eq.s32.totalorder %v5407, 2
    %v5413 = vxor.u32 %v5404, 2147483648
    %v5414 = vsel %vm5412, %v5413, %v5405
    %v5415 = vsel %vm5408, %v5411, %v5414
    %v5416 = vsel %vm5406, nan, %v5415
    %v5417 = vand.u32 2147483647, %v291
    %vm5418 = vcmp.le.f32.partialorder %v5417, 0.7853982
    %vm5419 = vcmp.lt.s32.totalorder %v291, 0
    %v5420 = vand.u32 %v291, 2139095040
    %v5421 = vshrl.u32 %v5420, 23
    %v5422 = vsub.s32 %v5421, 127
    %v5423 = vand.u32 2147483647, %v291
    %v5424 = vand.u32 %v5423, 8388607
    %v5425 = vor.u32 %v5424, 8388608
    %v5426 = vsub.s32 0, %v5425
    %v5427 = vadd.s32 %v5422, 1
    %vm5428 = vcmp.gt.s32.totalorder %v5427, 0
    %v5429 = vsel %vm5428, %v5427, 0
    %v5430 = vshrl.u32 %v5429, 5
    %v5431 = vand.u32 %v5429, 31
    %v5432 = vsub.s32 32, %v5431
    %v5433 = vshrl.u32 683565275, %v5432
    %v5434 = vshll.u32 683565275, %v5431
    %v5435 = vshrl.u32 2475754826, %v5432
    %v5436 = vor.u32 %v5434, %v5435
    %v5437 = vshll.u32 2475754826, %v5431
    %v5438 = vshrl.u32 2131351028, %v5432
    %v5439 = vor.u32 %v5437, %v5438
    %v5440 = vshll.u32 2131351028, %v5431
    %v5441 = vshrl.u32 2102212464, %v5432
    %v5442 = vor.u32 %v5440, %v5441
    %v5443 = vshll.u32 2102212464, %v5431
    %v5444 = vshrl.u32 920167782, %v5432
    %v5445 = vor.u32 %v5443, %v5444
    %v5446 = vshll.u32 920167782, %v5431
    %v5447 = vshrl.u32 1326507024, %v5432
    %v5448 = vor.u32 %v5446, %v5447
    %vm5449 = vcmp.lt.s32.totalorder %v5430, 1
    %vm5450 = vcmp.lt.s32.totalorder %v5430, 2
    %vm5451 = vcmp.lt.s32.totalorder %v5430, 3
    %vm5452 = vcmp.lt.s32.totalorder %v5430, 4
    %v5453 = vsel %vm5449, %v5433, %v5436
    %v5454 = vsel %vm5452, %v5442, 2102212464
    %v5455 = vsel %vm5451, %v5439, %v5454
    %v5456 = vsel %vm5450, %v5453, %v5455
    %v5457 = vsel %vm5449, %v5436, %v5439
    %v5458 = vsel %vm5452, %v5445, 920167782
    %v5459 = vsel %vm5451, %v5442, %v5458
    %v5460 = vsel %vm5450, %v5457, %v5459
    %v5461 = vsel %vm5449, %v5439, %v5442
    %v5462 = vsel %vm5452, %v5448, 1326507024
    %v5463 = vsel %vm5451, %v5445, %v5462
    %v5464 = vsel %vm5450, %v5461, %v5463
    %v5465 = vshll.u32 %v5425, 8
    %v5466 = vmul.u32.u64.compose %v5465, %v5464
    %v5467 = vextract.low.u32 %v5466
    %v5468 = vextract.high.u32 %v5466
    %v5469 = vmul.u32.u64.compose %v5465, %v5460
    %v5470 = vextract.low.u32 %v5469
    %v5471 = vextract.high.u32 %v5469
    %v5472 = vmul.u32 %v5465, %v5456
    %v5473 = vadd.s32 %v5468, %v5470
    %vm5474 = vc.u32 %v5468, %v5470
    %v5475 = vadd.s32 %v5471, 1
    %v5476 = vsel %vm5474, %v5475, %v5471
    %v5477 = vadd.s32 %v5472, %v5476
    %v5478 = vadd.s32 %v5477, 536870912
    %v5479 = vshrl.u32 %v5478, 30
    %v5480 = vshll.u32 %v5479, 30
    %v5481 = vsub.s32 %v5477, %v5480
    %vm5482 = vcmp.lt.s32.totalorder %v5481, 0
    %v5483 = vsub.s32 0, %v5481
    %v5484 = vsel %vm5482, %v5483, %v5481
    %v5485 = vclz %v5484
    %v5486 = vsub.s32 %v5485, 2
    %vm5487 = vcmp.gt.s32.totalorder 0, %v5486
    %v5488 = vsel %vm5487, 0, %v5486
    %v5489 = vsub.s32 32, %v5488
    %v5490 = vshll.u32 %v5481, %v5488
    %v5491 = vshrl.u32 %v5473, %v5489
    %v5492 = vor.u32 %v5490, %v5491
    %v5493 = vsub.s32 4294967266, %v5488
    %v5494 = vadd.s32 %v5493, 127
    %v5495 = vshll.u32 %v5494, 23
    %v5496 = vor.u32 4788187, %v5495
    %v5497 = vand.u32 2147483647, %v5496
    %v5499 = vcvt.s32.f32 %v5492
    %v5500 = vmul.f32 %v5499, %v5497
    %v5501 = vxor.u32 %v5500, 2147483648
    %v5502 = vsel %vm5419, %v5501, %v5500
    %v5503 = vsub.s32 4, %v5479
    %v5504 = vsel %vm5419, %v5503, %v5479
    %v5505 = vsel %vm5418, %v291, %v5502
    %v5506 = vsel %vm5418, 0, %v5504
    %v5507 = vcosq.f32.pop %v5505
    %v5508 = vsinq.f32.pop %v5505
    %vm5509 = vweird.f32 %v291
    %v5510 = vand.u32 %v5506, 3
    %vm5511 = vcmp.lt.s32.totalorder %v5510, 2
    %vm5512 = vcmp.eq.s32.totalorder %v5510, 0
    %v5513 = vxor.u32 %v5508, 2147483648
    %v5514 = vsel %vm5512, %v5507, %v5513
    %vm5515 = vcmp.eq.s32.totalorder %v5510, 2
    %v5516 = vxor.u32 %v5507, 2147483648
    %v5517 = vsel %vm5515, %v5516, %v5508
    %v5518 = vsel %vm5511, %v5514, %v5517
    %v5519 = vsel %vm5509, nan, %v5518
    %v5520 = vand.u32 2147483647, %v292
    %vm5521 = vcmp.le.f32.partialorder %v5520, 0.7853982
    %vm5522 = vcmp.lt.s32.totalorder %v292, 0
    %v5523 = vand.u32 %v292, 2139095040
    %v5524 = vshrl.u32 %v5523, 23
    %v5525 = vsub.s32 %v5524, 127
    %v5526 = vand.u32 2147483647, %v292
    %v5527 = vand.u32 %v5526, 8388607
    %v5528 = vor.u32 %v5527, 8388608
    %v5529 = vsub.s32 0, %v5528
    %v5530 = vadd.s32 %v5525, 1
    %vm5531 = vcmp.gt.s32.totalorder %v5530, 0
    %v5532 = vsel %vm5531, %v5530, 0
    %v5533 = vshrl.u32 %v5532, 5
    %v5534 = vand.u32 %v5532, 31
    %v5535 = vsub.s32 32, %v5534
    %v5536 = vshrl.u32 683565275, %v5535
    %v5537 = vshll.u32 683565275, %v5534
    %v5538 = vshrl.u32 2475754826, %v5535
    %v5539 = vor.u32 %v5537, %v5538
    %v5540 = vshll.u32 2475754826, %v5534
    %v5541 = vshrl.u32 2131351028, %v5535
    %v5542 = vor.u32 %v5540, %v5541
    %v5543 = vshll.u32 2131351028, %v5534
    %v5544 = vshrl.u32 2102212464, %v5535
    %v5545 = vor.u32 %v5543, %v5544
    %v5546 = vshll.u32 2102212464, %v5534
    %v5547 = vshrl.u32 920167782, %v5535
    %v5548 = vor.u32 %v5546, %v5547
    %v5549 = vshll.u32 920167782, %v5534
    %v5550 = vshrl.u32 1326507024, %v5535
    %v5551 = vor.u32 %v5549, %v5550
    %vm5552 = vcmp.lt.s32.totalorder %v5533, 1
    %vm5553 = vcmp.lt.s32.totalorder %v5533, 2
    %vm5554 = vcmp.lt.s32.totalorder %v5533, 3
    %vm5555 = vcmp.lt.s32.totalorder %v5533, 4
    %v5556 = vsel %vm5552, %v5536, %v5539
    %v5557 = vsel %vm5555, %v5545, 2102212464
    %v5558 = vsel %vm5554, %v5542, %v5557
    %v5559 = vsel %vm5553, %v5556, %v5558
    %v5560 = vsel %vm5552, %v5539, %v5542
    %v5561 = vsel %vm5555, %v5548, 920167782
    %v5562 = vsel %vm5554, %v5545, %v5561
    %v5563 = vsel %vm5553, %v5560, %v5562
    %v5564 = vsel %vm5552, %v5542, %v5545
    %v5565 = vsel %vm5555, %v5551, 1326507024
    %v5566 = vsel %vm5554, %v5548, %v5565
    %v5567 = vsel %vm5553, %v5564, %v5566
    %v5568 = vshll.u32 %v5528, 8
    %v5569 = vmul.u32.u64.compose %v5568, %v5567
    %v5570 = vextract.low.u32 %v5569
    %v5571 = vextract.high.u32 %v5569
    %v5572 = vmul.u32.u64.compose %v5568, %v5563
    %v5573 = vextract.low.u32 %v5572
    %v5574 = vextract.high.u32 %v5572
    %v5575 = vmul.u32 %v5568, %v5559
    %v5576 = vadd.s32 %v5571, %v5573
    %vm5577 = vc.u32 %v5571, %v5573
    %v5578 = vadd.s32 %v5574, 1
    %v5579 = vsel %vm5577, %v5578, %v5574
    %v5580 = vadd.s32 %v5575, %v5579
    %v5581 = vadd.s32 %v5580, 536870912
    %v5582 = vshrl.u32 %v5581, 30
    %v5583 = vshll.u32 %v5582, 30
    %v5584 = vsub.s32 %v5580, %v5583
    %vm5585 = vcmp.lt.s32.totalorder %v5584, 0
    %v5586 = vsub.s32 0, %v5584
    %v5587 = vsel %vm5585, %v5586, %v5584
    %v5588 = vclz %v5587
    %v5589 = vsub.s32 %v5588, 2
    %vm5590 = vcmp.gt.s32.totalorder 0, %v5589
    %v5591 = vsel %vm5590, 0, %v5589
    %v5592 = vsub.s32 32, %v5591
    %v5593 = vshll.u32 %v5584, %v5591
    %v5594 = vshrl.u32 %v5576, %v5592
    %v5595 = vor.u32 %v5593, %v5594
    %v5596 = vsub.s32 4294967266, %v5591
    %v5597 = vadd.s32 %v5596, 127
    %v5598 = vshll.u32 %v5597, 23
    %v5599 = vor.u32 4788187, %v5598
    %v5600 = vand.u32 2147483647, %v5599
    %v5602 = vcvt.s32.f32 %v5595
    %v5603 = vmul.f32 %v5602, %v5600
    %v5604 = vxor.u32 %v5603, 2147483648
    %v5605 = vsel %vm5522, %v5604, %v5603
    %v5606 = vsub.s32 4, %v5582
    %v5607 = vsel %vm5522, %v5606, %v5582
    %v5608 = vsel %vm5521, %v292, %v5605
    %v5609 = vsel %vm5521, 0, %v5607
    %v5610 = vcosq.f32.pop %v5608
    %v5611 = vsinq.f32.pop %v5608
    %vm5612 = vweird.f32 %v292
    %v5613 = vand.u32 %v5609, 3
    %vm5614 = vcmp.lt.s32.totalorder %v5613, 2
    %vm5615 = vcmp.eq.s32.totalorder %v5613, 0
    %v5616 = vxor.u32 %v5611, 2147483648
    %v5617 = vsel %vm5615, %v5610, %v5616
    %vm5618 = vcmp.eq.s32.totalorder %v5613, 2
    %v5619 = vxor.u32 %v5610, 2147483648
    %v5620 = vsel %vm5618, %v5619, %v5611
    %v5621 = vsel %vm5614, %v5617, %v5620
    %v5622 = vsel %vm5612, nan, %v5621
    %v5623 = vand.u32 2147483647, %v293
    %vm5624 = vcmp.le.f32.partialorder %v5623, 0.7853982
    %vm5625 = vcmp.lt.s32.totalorder %v293, 0
    %v5626 = vand.u32 %v293, 2139095040
    %v5627 = vshrl.u32 %v5626, 23
    %v5628 = vsub.s32 %v5627, 127
    %v5629 = vand.u32 2147483647, %v293
    %v5630 = vand.u32 %v5629, 8388607
    %v5631 = vor.u32 %v5630, 8388608
    %v5632 = vsub.s32 0, %v5631
    %v5633 = vadd.s32 %v5628, 1
    %vm5634 = vcmp.gt.s32.totalorder %v5633, 0
    %v5635 = vsel %vm5634, %v5633, 0
    %v5636 = vshrl.u32 %v5635, 5
    %v5637 = vand.u32 %v5635, 31
    %v5638 = vsub.s32 32, %v5637
    %v5639 = vshrl.u32 683565275, %v5638
    %v5640 = vshll.u32 683565275, %v5637
    %v5641 = vshrl.u32 2475754826, %v5638
    %v5642 = vor.u32 %v5640, %v5641
    %v5643 = vshll.u32 2475754826, %v5637
    %v5644 = vshrl.u32 2131351028, %v5638
    %v5645 = vor.u32 %v5643, %v5644
    %v5646 = vshll.u32 2131351028, %v5637
    %v5647 = vshrl.u32 2102212464, %v5638
    %v5648 = vor.u32 %v5646, %v5647
    %v5649 = vshll.u32 2102212464, %v5637
    %v5650 = vshrl.u32 920167782, %v5638
    %v5651 = vor.u32 %v5649, %v5650
    %v5652 = vshll.u32 920167782, %v5637
    %v5653 = vshrl.u32 1326507024, %v5638
    %v5654 = vor.u32 %v5652, %v5653
    %vm5655 = vcmp.lt.s32.totalorder %v5636, 1
    %vm5656 = vcmp.lt.s32.totalorder %v5636, 2
    %vm5657 = vcmp.lt.s32.totalorder %v5636, 3
    %vm5658 = vcmp.lt.s32.totalorder %v5636, 4
    %v5659 = vsel %vm5655, %v5639, %v5642
    %v5660 = vsel %vm5658, %v5648, 2102212464
    %v5661 = vsel %vm5657, %v5645, %v5660
    %v5662 = vsel %vm5656, %v5659, %v5661
    %v5663 = vsel %vm5655, %v5642, %v5645
    %v5664 = vsel %vm5658, %v5651, 920167782
    %v5665 = vsel %vm5657, %v5648, %v5664
    %v5666 = vsel %vm5656, %v5663, %v5665
    %v5667 = vsel %vm5655, %v5645, %v5648
    %v5668 = vsel %vm5658, %v5654, 1326507024
    %v5669 = vsel %vm5657, %v5651, %v5668
    %v5670 = vsel %vm5656, %v5667, %v5669
    %v5671 = vshll.u32 %v5631, 8
    %v5672 = vmul.u32.u64.compose %v5671, %v5670
    %v5673 = vextract.low.u32 %v5672
    %v5674 = vextract.high.u32 %v5672
    %v5675 = vmul.u32.u64.compose %v5671, %v5666
    %v5676 = vextract.low.u32 %v5675
    %v5677 = vextract.high.u32 %v5675
    %v5678 = vmul.u32 %v5671, %v5662
    %v5679 = vadd.s32 %v5674, %v5676
    %vm5680 = vc.u32 %v5674, %v5676
    %v5681 = vadd.s32 %v5677, 1
    %v5682 = vsel %vm5680, %v5681, %v5677
    %v5683 = vadd.s32 %v5678, %v5682
    %v5684 = vadd.s32 %v5683, 536870912
    %v5685 = vshrl.u32 %v5684, 30
    %v5686 = vshll.u32 %v5685, 30
    %v5687 = vsub.s32 %v5683, %v5686
    %vm5688 = vcmp.lt.s32.totalorder %v5687, 0
    %v5689 = vsub.s32 0, %v5687
    %v5690 = vsel %vm5688, %v5689, %v5687
    %v5691 = vclz %v5690
    %v5692 = vsub.s32 %v5691, 2
    %vm5693 = vcmp.gt.s32.totalorder 0, %v5692
    %v5694 = vsel %vm5693, 0, %v5692
    %v5695 = vsub.s32 32, %v5694
    %v5696 = vshll.u32 %v5687, %v5694
    %v5697 = vshrl.u32 %v5679, %v5695
    %v5698 = vor.u32 %v5696, %v5697
    %v5699 = vsub.s32 4294967266, %v5694
    %v5700 = vadd.s32 %v5699, 127
    %v5701 = vshll.u32 %v5700, 23
    %v5702 = vor.u32 4788187, %v5701
    %v5703 = vand.u32 2147483647, %v5702
    %v5705 = vcvt.s32.f32 %v5698
    %v5706 = vmul.f32 %v5705, %v5703
    %v5707 = vxor.u32 %v5706, 2147483648
    %v5708 = vsel %vm5625, %v5707, %v5706
    %v5709 = vsub.s32 4, %v5685
    %v5710 = vsel %vm5625, %v5709, %v5685
    %v5711 = vsel %vm5624, %v293, %v5708
    %v5712 = vsel %vm5624, 0, %v5710
    %v5713 = vcosq.f32.pop %v5711
    %v5714 = vsinq.f32.pop %v5711
    %vm5715 = vweird.f32 %v293
    %v5716 = vand.u32 %v5712, 3
    %vm5717 = vcmp.lt.s32.totalorder %v5716, 2
    %vm5718 = vcmp.eq.s32.totalorder %v5716, 0
    %v5719 = vxor.u32 %v5714, 2147483648
    %v5720 = vsel %vm5718, %v5713, %v5719
    %vm5721 = vcmp.eq.s32.totalorder %v5716, 2
    %v5722 = vxor.u32 %v5713, 2147483648
    %v5723 = vsel %vm5721, %v5722, %v5714
    %v5724 = vsel %vm5717, %v5720, %v5723
    %v5725 = vsel %vm5715, nan, %v5724
    %v5726 = vand.u32 2147483647, %v294
    %vm5727 = vcmp.le.f32.partialorder %v5726, 0.7853982
    %vm5728 = vcmp.lt.s32.totalorder %v294, 0
    %v5729 = vand.u32 %v294, 2139095040
    %v5730 = vshrl.u32 %v5729, 23
    %v5731 = vsub.s32 %v5730, 127
    %v5732 = vand.u32 2147483647, %v294
    %v5733 = vand.u32 %v5732, 8388607
    %v5734 = vor.u32 %v5733, 8388608
    %v5735 = vsub.s32 0, %v5734
    %v5736 = vadd.s32 %v5731, 1
    %vm5737 = vcmp.gt.s32.totalorder %v5736, 0
    %v5738 = vsel %vm5737, %v5736, 0
    %v5739 = vshrl.u32 %v5738, 5
    %v5740 = vand.u32 %v5738, 31
    %v5741 = vsub.s32 32, %v5740
    %v5742 = vshrl.u32 683565275, %v5741
    %v5743 = vshll.u32 683565275, %v5740
    %v5744 = vshrl.u32 2475754826, %v5741
    %v5745 = vor.u32 %v5743, %v5744
    %v5746 = vshll.u32 2475754826, %v5740
    %v5747 = vshrl.u32 2131351028, %v5741
    %v5748 = vor.u32 %v5746, %v5747
    %v5749 = vshll.u32 2131351028, %v5740
    %v5750 = vshrl.u32 2102212464, %v5741
    %v5751 = vor.u32 %v5749, %v5750
    %v5752 = vshll.u32 2102212464, %v5740
    %v5753 = vshrl.u32 920167782, %v5741
    %v5754 = vor.u32 %v5752, %v5753
    %v5755 = vshll.u32 920167782, %v5740
    %v5756 = vshrl.u32 1326507024, %v5741
    %v5757 = vor.u32 %v5755, %v5756
    %vm5758 = vcmp.lt.s32.totalorder %v5739, 1
    %vm5759 = vcmp.lt.s32.totalorder %v5739, 2
    %vm5760 = vcmp.lt.s32.totalorder %v5739, 3
    %vm5761 = vcmp.lt.s32.totalorder %v5739, 4
    %v5762 = vsel %vm5758, %v5742, %v5745
    %v5763 = vsel %vm5761, %v5751, 2102212464
    %v5764 = vsel %vm5760, %v5748, %v5763
    %v5765 = vsel %vm5759, %v5762, %v5764
    %v5766 = vsel %vm5758, %v5745, %v5748
    %v5767 = vsel %vm5761, %v5754, 920167782
    %v5768 = vsel %vm5760, %v5751, %v5767
    %v5769 = vsel %vm5759, %v5766, %v5768
    %v5770 = vsel %vm5758, %v5748, %v5751
    %v5771 = vsel %vm5761, %v5757, 1326507024
    %v5772 = vsel %vm5760, %v5754, %v5771
    %v5773 = vsel %vm5759, %v5770, %v5772
    %v5774 = vshll.u32 %v5734, 8
    %v5775 = vmul.u32.u64.compose %v5774, %v5773
    %v5776 = vextract.low.u32 %v5775
    %v5777 = vextract.high.u32 %v5775
    %v5778 = vmul.u32.u64.compose %v5774, %v5769
    %v5779 = vextract.low.u32 %v5778
    %v5780 = vextract.high.u32 %v5778
    %v5781 = vmul.u32 %v5774, %v5765
    %v5782 = vadd.s32 %v5777, %v5779
    %vm5783 = vc.u32 %v5777, %v5779
    %v5784 = vadd.s32 %v5780, 1
    %v5785 = vsel %vm5783, %v5784, %v5780
    %v5786 = vadd.s32 %v5781, %v5785
    %v5787 = vadd.s32 %v5786, 536870912
    %v5788 = vshrl.u32 %v5787, 30
    %v5789 = vshll.u32 %v5788, 30
    %v5790 = vsub.s32 %v5786, %v5789
    %vm5791 = vcmp.lt.s32.totalorder %v5790, 0
    %v5792 = vsub.s32 0, %v5790
    %v5793 = vsel %vm5791, %v5792, %v5790
    %v5794 = vclz %v5793
    %v5795 = vsub.s32 %v5794, 2
    %vm5796 = vcmp.gt.s32.totalorder 0, %v5795
    %v5797 = vsel %vm5796, 0, %v5795
    %v5798 = vsub.s32 32, %v5797
    %v5799 = vshll.u32 %v5790, %v5797
    %v5800 = vshrl.u32 %v5782, %v5798
    %v5801 = vor.u32 %v5799, %v5800
    %v5802 = vsub.s32 4294967266, %v5797
    %v5803 = vadd.s32 %v5802, 127
    %v5804 = vshll.u32 %v5803, 23
    %v5805 = vor.u32 4788187, %v5804
    %v5806 = vand.u32 2147483647, %v5805
    %v5808 = vcvt.s32.f32 %v5801
    %v5809 = vmul.f32 %v5808, %v5806
    %v5810 = vxor.u32 %v5809, 2147483648
    %v5811 = vsel %vm5728, %v5810, %v5809
    %v5812 = vsub.s32 4, %v5788
    %v5813 = vsel %vm5728, %v5812, %v5788
    %v5814 = vsel %vm5727, %v294, %v5811
    %v5815 = vsel %vm5727, 0, %v5813
    %v5816 = vcosq.f32.pop %v5814
    %v5817 = vsinq.f32.pop %v5814
    %vm5818 = vweird.f32 %v294
    %v5819 = vand.u32 %v5815, 3
    %vm5820 = vcmp.lt.s32.totalorder %v5819, 2
    %vm5821 = vcmp.eq.s32.totalorder %v5819, 0
    %v5822 = vxor.u32 %v5817, 2147483648
    %v5823 = vsel %vm5821, %v5816, %v5822
    %vm5824 = vcmp.eq.s32.totalorder %v5819, 2
    %v5825 = vxor.u32 %v5816, 2147483648
    %v5826 = vsel %vm5824, %v5825, %v5817
    %v5827 = vsel %vm5820, %v5823, %v5826
    %v5828 = vsel %vm5818, nan, %v5827
    %v5829 = vand.u32 2147483647, %v295
    %vm5830 = vcmp.le.f32.partialorder %v5829, 0.7853982
    %vm5831 = vcmp.lt.s32.totalorder %v295, 0
    %v5832 = vand.u32 %v295, 2139095040
    %v5833 = vshrl.u32 %v5832, 23
    %v5834 = vsub.s32 %v5833, 127
    %v5835 = vand.u32 2147483647, %v295
    %v5836 = vand.u32 %v5835, 8388607
    %v5837 = vor.u32 %v5836, 8388608
    %v5838 = vsub.s32 0, %v5837
    %v5839 = vadd.s32 %v5834, 1
    %vm5840 = vcmp.gt.s32.totalorder %v5839, 0
    %v5841 = vsel %vm5840, %v5839, 0
    %v5842 = vshrl.u32 %v5841, 5
    %v5843 = vand.u32 %v5841, 31
    %v5844 = vsub.s32 32, %v5843
    %v5845 = vshrl.u32 683565275, %v5844
    %v5846 = vshll.u32 683565275, %v5843
    %v5847 = vshrl.u32 2475754826, %v5844
    %v5848 = vor.u32 %v5846, %v5847
    %v5849 = vshll.u32 2475754826, %v5843
    %v5850 = vshrl.u32 2131351028, %v5844
    %v5851 = vor.u32 %v5849, %v5850
    %v5852 = vshll.u32 2131351028, %v5843
    %v5853 = vshrl.u32 2102212464, %v5844
    %v5854 = vor.u32 %v5852, %v5853
    %v5855 = vshll.u32 2102212464, %v5843
    %v5856 = vshrl.u32 920167782, %v5844
    %v5857 = vor.u32 %v5855, %v5856
    %v5858 = vshll.u32 920167782, %v5843
    %v5859 = vshrl.u32 1326507024, %v5844
    %v5860 = vor.u32 %v5858, %v5859
    %vm5861 = vcmp.lt.s32.totalorder %v5842, 1
    %vm5862 = vcmp.lt.s32.totalorder %v5842, 2
    %vm5863 = vcmp.lt.s32.totalorder %v5842, 3
    %vm5864 = vcmp.lt.s32.totalorder %v5842, 4
    %v5865 = vsel %vm5861, %v5845, %v5848
    %v5866 = vsel %vm5864, %v5854, 2102212464
    %v5867 = vsel %vm5863, %v5851, %v5866
    %v5868 = vsel %vm5862, %v5865, %v5867
    %v5869 = vsel %vm5861, %v5848, %v5851
    %v5870 = vsel %vm5864, %v5857, 920167782
    %v5871 = vsel %vm5863, %v5854, %v5870
    %v5872 = vsel %vm5862, %v5869, %v5871
    %v5873 = vsel %vm5861, %v5851, %v5854
    %v5874 = vsel %vm5864, %v5860, 1326507024
    %v5875 = vsel %vm5863, %v5857, %v5874
    %v5876 = vsel %vm5862, %v5873, %v5875
    %v5877 = vshll.u32 %v5837, 8
    %v5878 = vmul.u32.u64.compose %v5877, %v5876
    %v5879 = vextract.low.u32 %v5878
    %v5880 = vextract.high.u32 %v5878
    %v5881 = vmul.u32.u64.compose %v5877, %v5872
    %v5882 = vextract.low.u32 %v5881
    %v5883 = vextract.high.u32 %v5881
    %v5884 = vmul.u32 %v5877, %v5868
    %v5885 = vadd.s32 %v5880, %v5882
    %vm5886 = vc.u32 %v5880, %v5882
    %v5887 = vadd.s32 %v5883, 1
    %v5888 = vsel %vm5886, %v5887, %v5883
    %v5889 = vadd.s32 %v5884, %v5888
    %v5890 = vadd.s32 %v5889, 536870912
    %v5891 = vshrl.u32 %v5890, 30
    %v5892 = vshll.u32 %v5891, 30
    %v5893 = vsub.s32 %v5889, %v5892
    %vm5894 = vcmp.lt.s32.totalorder %v5893, 0
    %v5895 = vsub.s32 0, %v5893
    %v5896 = vsel %vm5894, %v5895, %v5893
    %v5897 = vclz %v5896
    %v5898 = vsub.s32 %v5897, 2
    %vm5899 = vcmp.gt.s32.totalorder 0, %v5898
    %v5900 = vsel %vm5899, 0, %v5898
    %v5901 = vsub.s32 32, %v5900
    %v5902 = vshll.u32 %v5893, %v5900
    %v5903 = vshrl.u32 %v5885, %v5901
    %v5904 = vor.u32 %v5902, %v5903
    %v5905 = vsub.s32 4294967266, %v5900
    %v5906 = vadd.s32 %v5905, 127
    %v5907 = vshll.u32 %v5906, 23
    %v5908 = vor.u32 4788187, %v5907
    %v5909 = vand.u32 2147483647, %v5908
    %v5911 = vcvt.s32.f32 %v5904
    %v5912 = vmul.f32 %v5911, %v5909
    %v5913 = vxor.u32 %v5912, 2147483648
    %v5914 = vsel %vm5831, %v5913, %v5912
    %v5915 = vsub.s32 4, %v5891
    %v5916 = vsel %vm5831, %v5915, %v5891
    %v5917 = vsel %vm5830, %v295, %v5914
    %v5918 = vsel %vm5830, 0, %v5916
    %v5919 = vcosq.f32.pop %v5917
    %v5920 = vsinq.f32.pop %v5917
    %vm5921 = vweird.f32 %v295
    %v5922 = vand.u32 %v5918, 3
    %vm5923 = vcmp.lt.s32.totalorder %v5922, 2
    %vm5924 = vcmp.eq.s32.totalorder %v5922, 0
    %v5925 = vxor.u32 %v5920, 2147483648
    %v5926 = vsel %vm5924, %v5919, %v5925
    %vm5927 = vcmp.eq.s32.totalorder %v5922, 2
    %v5928 = vxor.u32 %v5919, 2147483648
    %v5929 = vsel %vm5927, %v5928, %v5920
    %v5930 = vsel %vm5923, %v5926, %v5929
    %v5931 = vsel %vm5921, nan, %v5930
    %v5932 = vand.u32 2147483647, %v296
    %vm5933 = vcmp.le.f32.partialorder %v5932, 0.7853982
    %vm5934 = vcmp.lt.s32.totalorder %v296, 0
    %v5935 = vand.u32 %v296, 2139095040
    %v5936 = vshrl.u32 %v5935, 23
    %v5937 = vsub.s32 %v5936, 127
    %v5938 = vand.u32 2147483647, %v296
    %v5939 = vand.u32 %v5938, 8388607
    %v5940 = vor.u32 %v5939, 8388608
    %v5941 = vsub.s32 0, %v5940
    %v5942 = vadd.s32 %v5937, 1
    %vm5943 = vcmp.gt.s32.totalorder %v5942, 0
    %v5944 = vsel %vm5943, %v5942, 0
    %v5945 = vshrl.u32 %v5944, 5
    %v5946 = vand.u32 %v5944, 31
    %v5947 = vsub.s32 32, %v5946
    %v5948 = vshrl.u32 683565275, %v5947
    %v5949 = vshll.u32 683565275, %v5946
    %v5950 = vshrl.u32 2475754826, %v5947
    %v5951 = vor.u32 %v5949, %v5950
    %v5952 = vshll.u32 2475754826, %v5946
    %v5953 = vshrl.u32 2131351028, %v5947
    %v5954 = vor.u32 %v5952, %v5953
    %v5955 = vshll.u32 2131351028, %v5946
    %v5956 = vshrl.u32 2102212464, %v5947
    %v5957 = vor.u32 %v5955, %v5956
    %v5958 = vshll.u32 2102212464, %v5946
    %v5959 = vshrl.u32 920167782, %v5947
    %v5960 = vor.u32 %v5958, %v5959
    %v5961 = vshll.u32 920167782, %v5946
    %v5962 = vshrl.u32 1326507024, %v5947
    %v5963 = vor.u32 %v5961, %v5962
    %vm5964 = vcmp.lt.s32.totalorder %v5945, 1
    %vm5965 = vcmp.lt.s32.totalorder %v5945, 2
    %vm5966 = vcmp.lt.s32.totalorder %v5945, 3
    %vm5967 = vcmp.lt.s32.totalorder %v5945, 4
    %v5968 = vsel %vm5964, %v5948, %v5951
    %v5969 = vsel %vm5967, %v5957, 2102212464
    %v5970 = vsel %vm5966, %v5954, %v5969
    %v5971 = vsel %vm5965, %v5968, %v5970
    %v5972 = vsel %vm5964, %v5951, %v5954
    %v5973 = vsel %vm5967, %v5960, 920167782
    %v5974 = vsel %vm5966, %v5957, %v5973
    %v5975 = vsel %vm5965, %v5972, %v5974
    %v5976 = vsel %vm5964, %v5954, %v5957
    %v5977 = vsel %vm5967, %v5963, 1326507024
    %v5978 = vsel %vm5966, %v5960, %v5977
    %v5979 = vsel %vm5965, %v5976, %v5978
    %v5980 = vshll.u32 %v5940, 8
    %v5981 = vmul.u32.u64.compose %v5980, %v5979
    %v5982 = vextract.low.u32 %v5981
    %v5983 = vextract.high.u32 %v5981
    %v5984 = vmul.u32.u64.compose %v5980, %v5975
    %v5985 = vextract.low.u32 %v5984
    %v5986 = vextract.high.u32 %v5984
    %v5987 = vmul.u32 %v5980, %v5971
    %v5988 = vadd.s32 %v5983, %v5985
    %vm5989 = vc.u32 %v5983, %v5985
    %v5990 = vadd.s32 %v5986, 1
    %v5991 = vsel %vm5989, %v5990, %v5986
    %v5992 = vadd.s32 %v5987, %v5991
    %v5993 = vadd.s32 %v5992, 536870912
    %v5994 = vshrl.u32 %v5993, 30
    %v5995 = vshll.u32 %v5994, 30
    %v5996 = vsub.s32 %v5992, %v5995
    %vm5997 = vcmp.lt.s32.totalorder %v5996, 0
    %v5998 = vsub.s32 0, %v5996
    %v5999 = vsel %vm5997, %v5998, %v5996
    %v6000 = vclz %v5999
    %v6001 = vsub.s32 %v6000, 2
    %vm6002 = vcmp.gt.s32.totalorder 0, %v6001
    %v6003 = vsel %vm6002, 0, %v6001
    %v6004 = vsub.s32 32, %v6003
    %v6005 = vshll.u32 %v5996, %v6003
    %v6006 = vshrl.u32 %v5988, %v6004
    %v6007 = vor.u32 %v6005, %v6006
    %v6008 = vsub.s32 4294967266, %v6003
    %v6009 = vadd.s32 %v6008, 127
    %v6010 = vshll.u32 %v6009, 23
    %v6011 = vor.u32 4788187, %v6010
    %v6012 = vand.u32 2147483647, %v6011
    %v6014 = vcvt.s32.f32 %v6007
    %v6015 = vmul.f32 %v6014, %v6012
    %v6016 = vxor.u32 %v6015, 2147483648
    %v6017 = vsel %vm5934, %v6016, %v6015
    %v6018 = vsub.s32 4, %v5994
    %v6019 = vsel %vm5934, %v6018, %v5994
    %v6020 = vsel %vm5933, %v296, %v6017
    %v6021 = vsel %vm5933, 0, %v6019
    %v6022 = vcosq.f32.pop %v6020
    %v6023 = vsinq.f32.pop %v6020
    %vm6024 = vweird.f32 %v296
    %v6025 = vand.u32 %v6021, 3
    %vm6026 = vcmp.lt.s32.totalorder %v6025, 2
    %vm6027 = vcmp.eq.s32.totalorder %v6025, 0
    %v6028 = vxor.u32 %v6023, 2147483648
    %v6029 = vsel %vm6027, %v6022, %v6028
    %vm6030 = vcmp.eq.s32.totalorder %v6025, 2
    %v6031 = vxor.u32 %v6022, 2147483648
    %v6032 = vsel %vm6030, %v6031, %v6023
    %v6033 = vsel %vm6026, %v6029, %v6032
    %v6034 = vsel %vm6024, nan, %v6033
    %v6035 = vand.u32 2147483647, %v297
    %vm6036 = vcmp.le.f32.partialorder %v6035, 0.7853982
    %vm6037 = vcmp.lt.s32.totalorder %v297, 0
    %v6038 = vand.u32 %v297, 2139095040
    %v6039 = vshrl.u32 %v6038, 23
    %v6040 = vsub.s32 %v6039, 127
    %v6041 = vand.u32 2147483647, %v297
    %v6042 = vand.u32 %v6041, 8388607
    %v6043 = vor.u32 %v6042, 8388608
    %v6044 = vsub.s32 0, %v6043
    %v6045 = vadd.s32 %v6040, 1
    %vm6046 = vcmp.gt.s32.totalorder %v6045, 0
    %v6047 = vsel %vm6046, %v6045, 0
    %v6048 = vshrl.u32 %v6047, 5
    %v6049 = vand.u32 %v6047, 31
    %v6050 = vsub.s32 32, %v6049
    %v6051 = vshrl.u32 683565275, %v6050
    %v6052 = vshll.u32 683565275, %v6049
    %v6053 = vshrl.u32 2475754826, %v6050
    %v6054 = vor.u32 %v6052, %v6053
    %v6055 = vshll.u32 2475754826, %v6049
    %v6056 = vshrl.u32 2131351028, %v6050
    %v6057 = vor.u32 %v6055, %v6056
    %v6058 = vshll.u32 2131351028, %v6049
    %v6059 = vshrl.u32 2102212464, %v6050
    %v6060 = vor.u32 %v6058, %v6059
    %v6061 = vshll.u32 2102212464, %v6049
    %v6062 = vshrl.u32 920167782, %v6050
    %v6063 = vor.u32 %v6061, %v6062
    %v6064 = vshll.u32 920167782, %v6049
    %v6065 = vshrl.u32 1326507024, %v6050
    %v6066 = vor.u32 %v6064, %v6065
    %vm6067 = vcmp.lt.s32.totalorder %v6048, 1
    %vm6068 = vcmp.lt.s32.totalorder %v6048, 2
    %vm6069 = vcmp.lt.s32.totalorder %v6048, 3
    %vm6070 = vcmp.lt.s32.totalorder %v6048, 4
    %v6071 = vsel %vm6067, %v6051, %v6054
    %v6072 = vsel %vm6070, %v6060, 2102212464
    %v6073 = vsel %vm6069, %v6057, %v6072
    %v6074 = vsel %vm6068, %v6071, %v6073
    %v6075 = vsel %vm6067, %v6054, %v6057
    %v6076 = vsel %vm6070, %v6063, 920167782
    %v6077 = vsel %vm6069, %v6060, %v6076
    %v6078 = vsel %vm6068, %v6075, %v6077
    %v6079 = vsel %vm6067, %v6057, %v6060
    %v6080 = vsel %vm6070, %v6066, 1326507024
    %v6081 = vsel %vm6069, %v6063, %v6080
    %v6082 = vsel %vm6068, %v6079, %v6081
    %v6083 = vshll.u32 %v6043, 8
    %v6084 = vmul.u32.u64.compose %v6083, %v6082
    %v6085 = vextract.low.u32 %v6084
    %v6086 = vextract.high.u32 %v6084
    %v6087 = vmul.u32.u64.compose %v6083, %v6078
    %v6088 = vextract.low.u32 %v6087
    %v6089 = vextract.high.u32 %v6087
    %v6090 = vmul.u32 %v6083, %v6074
    %v6091 = vadd.s32 %v6086, %v6088
    %vm6092 = vc.u32 %v6086, %v6088
    %v6093 = vadd.s32 %v6089, 1
    %v6094 = vsel %vm6092, %v6093, %v6089
    %v6095 = vadd.s32 %v6090, %v6094
    %v6096 = vadd.s32 %v6095, 536870912
    %v6097 = vshrl.u32 %v6096, 30
    %v6098 = vshll.u32 %v6097, 30
    %v6099 = vsub.s32 %v6095, %v6098
    %vm6100 = vcmp.lt.s32.totalorder %v6099, 0
    %v6101 = vsub.s32 0, %v6099
    %v6102 = vsel %vm6100, %v6101, %v6099
    %v6103 = vclz %v6102
    %v6104 = vsub.s32 %v6103, 2
    %vm6105 = vcmp.gt.s32.totalorder 0, %v6104
    %v6106 = vsel %vm6105, 0, %v6104
    %v6107 = vsub.s32 32, %v6106
    %v6108 = vshll.u32 %v6099, %v6106
    %v6109 = vshrl.u32 %v6091, %v6107
    %v6110 = vor.u32 %v6108, %v6109
    %v6111 = vsub.s32 4294967266, %v6106
    %v6112 = vadd.s32 %v6111, 127
    %v6113 = vshll.u32 %v6112, 23
    %v6114 = vor.u32 4788187, %v6113
    %v6115 = vand.u32 2147483647, %v6114
    %v6117 = vcvt.s32.f32 %v6110
    %v6118 = vmul.f32 %v6117, %v6115
    %v6119 = vxor.u32 %v6118, 2147483648
    %v6120 = vsel %vm6037, %v6119, %v6118
    %v6121 = vsub.s32 4, %v6097
    %v6122 = vsel %vm6037, %v6121, %v6097
    %v6123 = vsel %vm6036, %v297, %v6120
    %v6124 = vsel %vm6036, 0, %v6122
    %v6125 = vcosq.f32.pop %v6123
    %v6126 = vsinq.f32.pop %v6123
    %vm6127 = vweird.f32 %v297
    %v6128 = vand.u32 %v6124, 3
    %vm6129 = vcmp.lt.s32.totalorder %v6128, 2
    %vm6130 = vcmp.eq.s32.totalorder %v6128, 0
    %v6131 = vxor.u32 %v6126, 2147483648
    %v6132 = vsel %vm6130, %v6125, %v6131
    %vm6133 = vcmp.eq.s32.totalorder %v6128, 2
    %v6134 = vxor.u32 %v6125, 2147483648
    %v6135 = vsel %vm6133, %v6134, %v6126
    %v6136 = vsel %vm6129, %v6132, %v6135
    %v6137 = vsel %vm6127, nan, %v6136
    %v6138 = vand.u32 2147483647, %v298
    %vm6139 = vcmp.le.f32.partialorder %v6138, 0.7853982
    %vm6140 = vcmp.lt.s32.totalorder %v298, 0
    %v6141 = vand.u32 %v298, 2139095040
    %v6142 = vshrl.u32 %v6141, 23
    %v6143 = vsub.s32 %v6142, 127
    %v6144 = vand.u32 2147483647, %v298
    %v6145 = vand.u32 %v6144, 8388607
    %v6146 = vor.u32 %v6145, 8388608
    %v6147 = vsub.s32 0, %v6146
    %v6148 = vadd.s32 %v6143, 1
    %vm6149 = vcmp.gt.s32.totalorder %v6148, 0
    %v6150 = vsel %vm6149, %v6148, 0
    %v6151 = vshrl.u32 %v6150, 5
    %v6152 = vand.u32 %v6150, 31
    %v6153 = vsub.s32 32, %v6152
    %v6154 = vshrl.u32 683565275, %v6153
    %v6155 = vshll.u32 683565275, %v6152
    %v6156 = vshrl.u32 2475754826, %v6153
    %v6157 = vor.u32 %v6155, %v6156
    %v6158 = vshll.u32 2475754826, %v6152
    %v6159 = vshrl.u32 2131351028, %v6153
    %v6160 = vor.u32 %v6158, %v6159
    %v6161 = vshll.u32 2131351028, %v6152
    %v6162 = vshrl.u32 2102212464, %v6153
    %v6163 = vor.u32 %v6161, %v6162
    %v6164 = vshll.u32 2102212464, %v6152
    %v6165 = vshrl.u32 920167782, %v6153
    %v6166 = vor.u32 %v6164, %v6165
    %v6167 = vshll.u32 920167782, %v6152
    %v6168 = vshrl.u32 1326507024, %v6153
    %v6169 = vor.u32 %v6167, %v6168
    %vm6170 = vcmp.lt.s32.totalorder %v6151, 1
    %vm6171 = vcmp.lt.s32.totalorder %v6151, 2
    %vm6172 = vcmp.lt.s32.totalorder %v6151, 3
    %vm6173 = vcmp.lt.s32.totalorder %v6151, 4
    %v6174 = vsel %vm6170, %v6154, %v6157
    %v6175 = vsel %vm6173, %v6163, 2102212464
    %v6176 = vsel %vm6172, %v6160, %v6175
    %v6177 = vsel %vm6171, %v6174, %v6176
    %v6178 = vsel %vm6170, %v6157, %v6160
    %v6179 = vsel %vm6173, %v6166, 920167782
    %v6180 = vsel %vm6172, %v6163, %v6179
    %v6181 = vsel %vm6171, %v6178, %v6180
    %v6182 = vsel %vm6170, %v6160, %v6163
    %v6183 = vsel %vm6173, %v6169, 1326507024
    %v6184 = vsel %vm6172, %v6166, %v6183
    %v6185 = vsel %vm6171, %v6182, %v6184
    %v6186 = vshll.u32 %v6146, 8
    %v6187 = vmul.u32.u64.compose %v6186, %v6185
    %v6188 = vextract.low.u32 %v6187
    %v6189 = vextract.high.u32 %v6187
    %v6190 = vmul.u32.u64.compose %v6186, %v6181
    %v6191 = vextract.low.u32 %v6190
    %v6192 = vextract.high.u32 %v6190
    %v6193 = vmul.u32 %v6186, %v6177
    %v6194 = vadd.s32 %v6189, %v6191
    %vm6195 = vc.u32 %v6189, %v6191
    %v6196 = vadd.s32 %v6192, 1
    %v6197 = vsel %vm6195, %v6196, %v6192
    %v6198 = vadd.s32 %v6193, %v6197
    %v6199 = vadd.s32 %v6198, 536870912
    %v6200 = vshrl.u32 %v6199, 30
    %v6201 = vshll.u32 %v6200, 30
    %v6202 = vsub.s32 %v6198, %v6201
    %vm6203 = vcmp.lt.s32.totalorder %v6202, 0
    %v6204 = vsub.s32 0, %v6202
    %v6205 = vsel %vm6203, %v6204, %v6202
    %v6206 = vclz %v6205
    %v6207 = vsub.s32 %v6206, 2
    %vm6208 = vcmp.gt.s32.totalorder 0, %v6207
    %v6209 = vsel %vm6208, 0, %v6207
    %v6210 = vsub.s32 32, %v6209
    %v6211 = vshll.u32 %v6202, %v6209
    %v6212 = vshrl.u32 %v6194, %v6210
    %v6213 = vor.u32 %v6211, %v6212
    %v6214 = vsub.s32 4294967266, %v6209
    %v6215 = vadd.s32 %v6214, 127
    %v6216 = vshll.u32 %v6215, 23
    %v6217 = vor.u32 4788187, %v6216
    %v6218 = vand.u32 2147483647, %v6217
    %v6220 = vcvt.s32.f32 %v6213
    %v6221 = vmul.f32 %v6220, %v6218
    %v6222 = vxor.u32 %v6221, 2147483648
    %v6223 = vsel %vm6140, %v6222, %v6221
    %v6224 = vsub.s32 4, %v6200
    %v6225 = vsel %vm6140, %v6224, %v6200
    %v6226 = vsel %vm6139, %v298, %v6223
    %v6227 = vsel %vm6139, 0, %v6225
    %v6228 = vcosq.f32.pop %v6226
    %v6229 = vsinq.f32.pop %v6226
    %vm6230 = vweird.f32 %v298
    %v6231 = vand.u32 %v6227, 3
    %vm6232 = vcmp.lt.s32.totalorder %v6231, 2
    %vm6233 = vcmp.eq.s32.totalorder %v6231, 0
    %v6234 = vxor.u32 %v6229, 2147483648
    %v6235 = vsel %vm6233, %v6228, %v6234
    %vm6236 = vcmp.eq.s32.totalorder %v6231, 2
    %v6237 = vxor.u32 %v6228, 2147483648
    %v6238 = vsel %vm6236, %v6237, %v6229
    %v6239 = vsel %vm6232, %v6235, %v6238
    %v6240 = vsel %vm6230, nan, %v6239
    %v6241 = vand.u32 2147483647, %v299
    %vm6242 = vcmp.le.f32.partialorder %v6241, 0.7853982
    %vm6243 = vcmp.lt.s32.totalorder %v299, 0
    %v6244 = vand.u32 %v299, 2139095040
    %v6245 = vshrl.u32 %v6244, 23
    %v6246 = vsub.s32 %v6245, 127
    %v6247 = vand.u32 2147483647, %v299
    %v6248 = vand.u32 %v6247, 8388607
    %v6249 = vor.u32 %v6248, 8388608
    %v6250 = vsub.s32 0, %v6249
    %v6251 = vadd.s32 %v6246, 1
    %vm6252 = vcmp.gt.s32.totalorder %v6251, 0
    %v6253 = vsel %vm6252, %v6251, 0
    %v6254 = vshrl.u32 %v6253, 5
    %v6255 = vand.u32 %v6253, 31
    %v6256 = vsub.s32 32, %v6255
    %v6257 = vshrl.u32 683565275, %v6256
    %v6258 = vshll.u32 683565275, %v6255
    %v6259 = vshrl.u32 2475754826, %v6256
    %v6260 = vor.u32 %v6258, %v6259
    %v6261 = vshll.u32 2475754826, %v6255
    %v6262 = vshrl.u32 2131351028, %v6256
    %v6263 = vor.u32 %v6261, %v6262
    %v6264 = vshll.u32 2131351028, %v6255
    %v6265 = vshrl.u32 2102212464, %v6256
    %v6266 = vor.u32 %v6264, %v6265
    %v6267 = vshll.u32 2102212464, %v6255
    %v6268 = vshrl.u32 920167782, %v6256
    %v6269 = vor.u32 %v6267, %v6268
    %v6270 = vshll.u32 920167782, %v6255
    %v6271 = vshrl.u32 1326507024, %v6256
    %v6272 = vor.u32 %v6270, %v6271
    %vm6273 = vcmp.lt.s32.totalorder %v6254, 1
    %vm6274 = vcmp.lt.s32.totalorder %v6254, 2
    %vm6275 = vcmp.lt.s32.totalorder %v6254, 3
    %vm6276 = vcmp.lt.s32.totalorder %v6254, 4
    %v6277 = vsel %vm6273, %v6257, %v6260
    %v6278 = vsel %vm6276, %v6266, 2102212464
    %v6279 = vsel %vm6275, %v6263, %v6278
    %v6280 = vsel %vm6274, %v6277, %v6279
    %v6281 = vsel %vm6273, %v6260, %v6263
    %v6282 = vsel %vm6276, %v6269, 920167782
    %v6283 = vsel %vm6275, %v6266, %v6282
    %v6284 = vsel %vm6274, %v6281, %v6283
    %v6285 = vsel %vm6273, %v6263, %v6266
    %v6286 = vsel %vm6276, %v6272, 1326507024
    %v6287 = vsel %vm6275, %v6269, %v6286
    %v6288 = vsel %vm6274, %v6285, %v6287
    %v6289 = vshll.u32 %v6249, 8
    %v6290 = vmul.u32.u64.compose %v6289, %v6288
    %v6291 = vextract.low.u32 %v6290
    %v6292 = vextract.high.u32 %v6290
    %v6293 = vmul.u32.u64.compose %v6289, %v6284
    %v6294 = vextract.low.u32 %v6293
    %v6295 = vextract.high.u32 %v6293
    %v6296 = vmul.u32 %v6289, %v6280
    %v6297 = vadd.s32 %v6292, %v6294
    %vm6298 = vc.u32 %v6292, %v6294
    %v6299 = vadd.s32 %v6295, 1
    %v6300 = vsel %vm6298, %v6299, %v6295
    %v6301 = vadd.s32 %v6296, %v6300
    %v6302 = vadd.s32 %v6301, 536870912
    %v6303 = vshrl.u32 %v6302, 30
    %v6304 = vshll.u32 %v6303, 30
    %v6305 = vsub.s32 %v6301, %v6304
    %vm6306 = vcmp.lt.s32.totalorder %v6305, 0
    %v6307 = vsub.s32 0, %v6305
    %v6308 = vsel %vm6306, %v6307, %v6305
    %v6309 = vclz %v6308
    %v6310 = vsub.s32 %v6309, 2
    %vm6311 = vcmp.gt.s32.totalorder 0, %v6310
    %v6312 = vsel %vm6311, 0, %v6310
    %v6313 = vsub.s32 32, %v6312
    %v6314 = vshll.u32 %v6305, %v6312
    %v6315 = vshrl.u32 %v6297, %v6313
    %v6316 = vor.u32 %v6314, %v6315
    %v6317 = vsub.s32 4294967266, %v6312
    %v6318 = vadd.s32 %v6317, 127
    %v6319 = vshll.u32 %v6318, 23
    %v6320 = vor.u32 4788187, %v6319
    %v6321 = vand.u32 2147483647, %v6320
    %v6323 = vcvt.s32.f32 %v6316
    %v6324 = vmul.f32 %v6323, %v6321
    %v6325 = vxor.u32 %v6324, 2147483648
    %v6326 = vsel %vm6243, %v6325, %v6324
    %v6327 = vsub.s32 4, %v6303
    %v6328 = vsel %vm6243, %v6327, %v6303
    %v6329 = vsel %vm6242, %v299, %v6326
    %v6330 = vsel %vm6242, 0, %v6328
    %v6331 = vcosq.f32.pop %v6329
    %v6332 = vsinq.f32.pop %v6329
    %vm6333 = vweird.f32 %v299
    %v6334 = vand.u32 %v6330, 3
    %vm6335 = vcmp.lt.s32.totalorder %v6334, 2
    %vm6336 = vcmp.eq.s32.totalorder %v6334, 0
    %v6337 = vxor.u32 %v6332, 2147483648
    %v6338 = vsel %vm6336, %v6331, %v6337
    %vm6339 = vcmp.eq.s32.totalorder %v6334, 2
    %v6340 = vxor.u32 %v6331, 2147483648
    %v6341 = vsel %vm6339, %v6340, %v6332
    %v6342 = vsel %vm6335, %v6338, %v6341
    %v6343 = vsel %vm6333, nan, %v6342
    %v6344 = vand.u32 2147483647, %v300
    %vm6345 = vcmp.le.f32.partialorder %v6344, 0.7853982
    %vm6346 = vcmp.lt.s32.totalorder %v300, 0
    %v6347 = vand.u32 %v300, 2139095040
    %v6348 = vshrl.u32 %v6347, 23
    %v6349 = vsub.s32 %v6348, 127
    %v6350 = vand.u32 2147483647, %v300
    %v6351 = vand.u32 %v6350, 8388607
    %v6352 = vor.u32 %v6351, 8388608
    %v6353 = vsub.s32 0, %v6352
    %v6354 = vadd.s32 %v6349, 1
    %vm6355 = vcmp.gt.s32.totalorder %v6354, 0
    %v6356 = vsel %vm6355, %v6354, 0
    %v6357 = vshrl.u32 %v6356, 5
    %v6358 = vand.u32 %v6356, 31
    %v6359 = vsub.s32 32, %v6358
    %v6360 = vshrl.u32 683565275, %v6359
    %v6361 = vshll.u32 683565275, %v6358
    %v6362 = vshrl.u32 2475754826, %v6359
    %v6363 = vor.u32 %v6361, %v6362
    %v6364 = vshll.u32 2475754826, %v6358
    %v6365 = vshrl.u32 2131351028, %v6359
    %v6366 = vor.u32 %v6364, %v6365
    %v6367 = vshll.u32 2131351028, %v6358
    %v6368 = vshrl.u32 2102212464, %v6359
    %v6369 = vor.u32 %v6367, %v6368
    %v6370 = vshll.u32 2102212464, %v6358
    %v6371 = vshrl.u32 920167782, %v6359
    %v6372 = vor.u32 %v6370, %v6371
    %v6373 = vshll.u32 920167782, %v6358
    %v6374 = vshrl.u32 1326507024, %v6359
    %v6375 = vor.u32 %v6373, %v6374
    %vm6376 = vcmp.lt.s32.totalorder %v6357, 1
    %vm6377 = vcmp.lt.s32.totalorder %v6357, 2
    %vm6378 = vcmp.lt.s32.totalorder %v6357, 3
    %vm6379 = vcmp.lt.s32.totalorder %v6357, 4
    %v6380 = vsel %vm6376, %v6360, %v6363
    %v6381 = vsel %vm6379, %v6369, 2102212464
    %v6382 = vsel %vm6378, %v6366, %v6381
    %v6383 = vsel %vm6377, %v6380, %v6382
    %v6384 = vsel %vm6376, %v6363, %v6366
    %v6385 = vsel %vm6379, %v6372, 920167782
    %v6386 = vsel %vm6378, %v6369, %v6385
    %v6387 = vsel %vm6377, %v6384, %v6386
    %v6388 = vsel %vm6376, %v6366, %v6369
    %v6389 = vsel %vm6379, %v6375, 1326507024
    %v6390 = vsel %vm6378, %v6372, %v6389
    %v6391 = vsel %vm6377, %v6388, %v6390
    %v6392 = vshll.u32 %v6352, 8
    %v6393 = vmul.u32.u64.compose %v6392, %v6391
    %v6394 = vextract.low.u32 %v6393
    %v6395 = vextract.high.u32 %v6393
    %v6396 = vmul.u32.u64.compose %v6392, %v6387
    %v6397 = vextract.low.u32 %v6396
    %v6398 = vextract.high.u32 %v6396
    %v6399 = vmul.u32 %v6392, %v6383
    %v6400 = vadd.s32 %v6395, %v6397
    %vm6401 = vc.u32 %v6395, %v6397
    %v6402 = vadd.s32 %v6398, 1
    %v6403 = vsel %vm6401, %v6402, %v6398
    %v6404 = vadd.s32 %v6399, %v6403
    %v6405 = vadd.s32 %v6404, 536870912
    %v6406 = vshrl.u32 %v6405, 30
    %v6407 = vshll.u32 %v6406, 30
    %v6408 = vsub.s32 %v6404, %v6407
    %vm6409 = vcmp.lt.s32.totalorder %v6408, 0
    %v6410 = vsub.s32 0, %v6408
    %v6411 = vsel %vm6409, %v6410, %v6408
    %v6412 = vclz %v6411
    %v6413 = vsub.s32 %v6412, 2
    %vm6414 = vcmp.gt.s32.totalorder 0, %v6413
    %v6415 = vsel %vm6414, 0, %v6413
    %v6416 = vsub.s32 32, %v6415
    %v6417 = vshll.u32 %v6408, %v6415
    %v6418 = vshrl.u32 %v6400, %v6416
    %v6419 = vor.u32 %v6417, %v6418
    %v6420 = vsub.s32 4294967266, %v6415
    %v6421 = vadd.s32 %v6420, 127
    %v6422 = vshll.u32 %v6421, 23
    %v6423 = vor.u32 4788187, %v6422
    %v6424 = vand.u32 2147483647, %v6423
    %v6426 = vcvt.s32.f32 %v6419
    %v6427 = vmul.f32 %v6426, %v6424
    %v6428 = vxor.u32 %v6427, 2147483648
    %v6429 = vsel %vm6346, %v6428, %v6427
    %v6430 = vsub.s32 4, %v6406
    %v6431 = vsel %vm6346, %v6430, %v6406
    %v6432 = vsel %vm6345, %v300, %v6429
    %v6433 = vsel %vm6345, 0, %v6431
    %v6434 = vcosq.f32.pop %v6432
    %v6435 = vsinq.f32.pop %v6432
    %vm6436 = vweird.f32 %v300
    %v6437 = vand.u32 %v6433, 3
    %vm6438 = vcmp.lt.s32.totalorder %v6437, 2
    %vm6439 = vcmp.eq.s32.totalorder %v6437, 0
    %v6440 = vxor.u32 %v6435, 2147483648
    %v6441 = vsel %vm6439, %v6434, %v6440
    %vm6442 = vcmp.eq.s32.totalorder %v6437, 2
    %v6443 = vxor.u32 %v6434, 2147483648
    %v6444 = vsel %vm6442, %v6443, %v6435
    %v6445 = vsel %vm6438, %v6441, %v6444
    %v6446 = vsel %vm6436, nan, %v6445
    %v6447 = vand.u32 2147483647, %v301
    %vm6448 = vcmp.le.f32.partialorder %v6447, 0.7853982
    %vm6449 = vcmp.lt.s32.totalorder %v301, 0
    %v6450 = vand.u32 %v301, 2139095040
    %v6451 = vshrl.u32 %v6450, 23
    %v6452 = vsub.s32 %v6451, 127
    %v6453 = vand.u32 2147483647, %v301
    %v6454 = vand.u32 %v6453, 8388607
    %v6455 = vor.u32 %v6454, 8388608
    %v6456 = vsub.s32 0, %v6455
    %v6457 = vadd.s32 %v6452, 1
    %vm6458 = vcmp.gt.s32.totalorder %v6457, 0
    %v6459 = vsel %vm6458, %v6457, 0
    %v6460 = vshrl.u32 %v6459, 5
    %v6461 = vand.u32 %v6459, 31
    %v6462 = vsub.s32 32, %v6461
    %v6463 = vshrl.u32 683565275, %v6462
    %v6464 = vshll.u32 683565275, %v6461
    %v6465 = vshrl.u32 2475754826, %v6462
    %v6466 = vor.u32 %v6464, %v6465
    %v6467 = vshll.u32 2475754826, %v6461
    %v6468 = vshrl.u32 2131351028, %v6462
    %v6469 = vor.u32 %v6467, %v6468
    %v6470 = vshll.u32 2131351028, %v6461
    %v6471 = vshrl.u32 2102212464, %v6462
    %v6472 = vor.u32 %v6470, %v6471
    %v6473 = vshll.u32 2102212464, %v6461
    %v6474 = vshrl.u32 920167782, %v6462
    %v6475 = vor.u32 %v6473, %v6474
    %v6476 = vshll.u32 920167782, %v6461
    %v6477 = vshrl.u32 1326507024, %v6462
    %v6478 = vor.u32 %v6476, %v6477
    %vm6479 = vcmp.lt.s32.totalorder %v6460, 1
    %vm6480 = vcmp.lt.s32.totalorder %v6460, 2
    %vm6481 = vcmp.lt.s32.totalorder %v6460, 3
    %vm6482 = vcmp.lt.s32.totalorder %v6460, 4
    %v6483 = vsel %vm6479, %v6463, %v6466
    %v6484 = vsel %vm6482, %v6472, 2102212464
    %v6485 = vsel %vm6481, %v6469, %v6484
    %v6486 = vsel %vm6480, %v6483, %v6485
    %v6487 = vsel %vm6479, %v6466, %v6469
    %v6488 = vsel %vm6482, %v6475, 920167782
    %v6489 = vsel %vm6481, %v6472, %v6488
    %v6490 = vsel %vm6480, %v6487, %v6489
    %v6491 = vsel %vm6479, %v6469, %v6472
    %v6492 = vsel %vm6482, %v6478, 1326507024
    %v6493 = vsel %vm6481, %v6475, %v6492
    %v6494 = vsel %vm6480, %v6491, %v6493
    %v6495 = vshll.u32 %v6455, 8
    %v6496 = vmul.u32.u64.compose %v6495, %v6494
    %v6497 = vextract.low.u32 %v6496
    %v6498 = vextract.high.u32 %v6496
    %v6499 = vmul.u32.u64.compose %v6495, %v6490
    %v6500 = vextract.low.u32 %v6499
    %v6501 = vextract.high.u32 %v6499
    %v6502 = vmul.u32 %v6495, %v6486
    %v6503 = vadd.s32 %v6498, %v6500
    %vm6504 = vc.u32 %v6498, %v6500
    %v6505 = vadd.s32 %v6501, 1
    %v6506 = vsel %vm6504, %v6505, %v6501
    %v6507 = vadd.s32 %v6502, %v6506
    %v6508 = vadd.s32 %v6507, 536870912
    %v6509 = vshrl.u32 %v6508, 30
    %v6510 = vshll.u32 %v6509, 30
    %v6511 = vsub.s32 %v6507, %v6510
    %vm6512 = vcmp.lt.s32.totalorder %v6511, 0
    %v6513 = vsub.s32 0, %v6511
    %v6514 = vsel %vm6512, %v6513, %v6511
    %v6515 = vclz %v6514
    %v6516 = vsub.s32 %v6515, 2
    %vm6517 = vcmp.gt.s32.totalorder 0, %v6516
    %v6518 = vsel %vm6517, 0, %v6516
    %v6519 = vsub.s32 32, %v6518
    %v6520 = vshll.u32 %v6511, %v6518
    %v6521 = vshrl.u32 %v6503, %v6519
    %v6522 = vor.u32 %v6520, %v6521
    %v6523 = vsub.s32 4294967266, %v6518
    %v6524 = vadd.s32 %v6523, 127
    %v6525 = vshll.u32 %v6524, 23
    %v6526 = vor.u32 4788187, %v6525
    %v6527 = vand.u32 2147483647, %v6526
    %v6529 = vcvt.s32.f32 %v6522
    %v6530 = vmul.f32 %v6529, %v6527
    %v6531 = vxor.u32 %v6530, 2147483648
    %v6532 = vsel %vm6449, %v6531, %v6530
    %v6533 = vsub.s32 4, %v6509
    %v6534 = vsel %vm6449, %v6533, %v6509
    %v6535 = vsel %vm6448, %v301, %v6532
    %v6536 = vsel %vm6448, 0, %v6534
    %v6537 = vcosq.f32.pop %v6535
    %v6538 = vsinq.f32.pop %v6535
    %vm6539 = vweird.f32 %v301
    %v6540 = vand.u32 %v6536, 3
    %vm6541 = vcmp.lt.s32.totalorder %v6540, 2
    %vm6542 = vcmp.eq.s32.totalorder %v6540, 0
    %v6543 = vxor.u32 %v6538, 2147483648
    %v6544 = vsel %vm6542, %v6537, %v6543
    %vm6545 = vcmp.eq.s32.totalorder %v6540, 2
    %v6546 = vxor.u32 %v6537, 2147483648
    %v6547 = vsel %vm6545, %v6546, %v6538
    %v6548 = vsel %vm6541, %v6544, %v6547
    %v6549 = vsel %vm6539, nan, %v6548
    %v6550 = vand.u32 2147483647, %v302
    %vm6551 = vcmp.le.f32.partialorder %v6550, 0.7853982
    %vm6552 = vcmp.lt.s32.totalorder %v302, 0
    %v6553 = vand.u32 %v302, 2139095040
    %v6554 = vshrl.u32 %v6553, 23
    %v6555 = vsub.s32 %v6554, 127
    %v6556 = vand.u32 2147483647, %v302
    %v6557 = vand.u32 %v6556, 8388607
    %v6558 = vor.u32 %v6557, 8388608
    %v6559 = vsub.s32 0, %v6558
    %v6560 = vadd.s32 %v6555, 1
    %vm6561 = vcmp.gt.s32.totalorder %v6560, 0
    %v6562 = vsel %vm6561, %v6560, 0
    %v6563 = vshrl.u32 %v6562, 5
    %v6564 = vand.u32 %v6562, 31
    %v6565 = vsub.s32 32, %v6564
    %v6566 = vshrl.u32 683565275, %v6565
    %v6567 = vshll.u32 683565275, %v6564
    %v6568 = vshrl.u32 2475754826, %v6565
    %v6569 = vor.u32 %v6567, %v6568
    %v6570 = vshll.u32 2475754826, %v6564
    %v6571 = vshrl.u32 2131351028, %v6565
    %v6572 = vor.u32 %v6570, %v6571
    %v6573 = vshll.u32 2131351028, %v6564
    %v6574 = vshrl.u32 2102212464, %v6565
    %v6575 = vor.u32 %v6573, %v6574
    %v6576 = vshll.u32 2102212464, %v6564
    %v6577 = vshrl.u32 920167782, %v6565
    %v6578 = vor.u32 %v6576, %v6577
    %v6579 = vshll.u32 920167782, %v6564
    %v6580 = vshrl.u32 1326507024, %v6565
    %v6581 = vor.u32 %v6579, %v6580
    %vm6582 = vcmp.lt.s32.totalorder %v6563, 1
    %vm6583 = vcmp.lt.s32.totalorder %v6563, 2
    %vm6584 = vcmp.lt.s32.totalorder %v6563, 3
    %vm6585 = vcmp.lt.s32.totalorder %v6563, 4
    %v6586 = vsel %vm6582, %v6566, %v6569
    %v6587 = vsel %vm6585, %v6575, 2102212464
    %v6588 = vsel %vm6584, %v6572, %v6587
    %v6589 = vsel %vm6583, %v6586, %v6588
    %v6590 = vsel %vm6582, %v6569, %v6572
    %v6591 = vsel %vm6585, %v6578, 920167782
    %v6592 = vsel %vm6584, %v6575, %v6591
    %v6593 = vsel %vm6583, %v6590, %v6592
    %v6594 = vsel %vm6582, %v6572, %v6575
    %v6595 = vsel %vm6585, %v6581, 1326507024
    %v6596 = vsel %vm6584, %v6578, %v6595
    %v6597 = vsel %vm6583, %v6594, %v6596
    %v6598 = vshll.u32 %v6558, 8
    %v6599 = vmul.u32.u64.compose %v6598, %v6597
    %v6600 = vextract.low.u32 %v6599
    %v6601 = vextract.high.u32 %v6599
    %v6602 = vmul.u32.u64.compose %v6598, %v6593
    %v6603 = vextract.low.u32 %v6602
    %v6604 = vextract.high.u32 %v6602
    %v6605 = vmul.u32 %v6598, %v6589
    %v6606 = vadd.s32 %v6601, %v6603
    %vm6607 = vc.u32 %v6601, %v6603
    %v6608 = vadd.s32 %v6604, 1
    %v6609 = vsel %vm6607, %v6608, %v6604
    %v6610 = vadd.s32 %v6605, %v6609
    %v6611 = vadd.s32 %v6610, 536870912
    %v6612 = vshrl.u32 %v6611, 30
    %v6613 = vshll.u32 %v6612, 30
    %v6614 = vsub.s32 %v6610, %v6613
    %vm6615 = vcmp.lt.s32.totalorder %v6614, 0
    %v6616 = vsub.s32 0, %v6614
    %v6617 = vsel %vm6615, %v6616, %v6614
    %v6618 = vclz %v6617
    %v6619 = vsub.s32 %v6618, 2
    %vm6620 = vcmp.gt.s32.totalorder 0, %v6619
    %v6621 = vsel %vm6620, 0, %v6619
    %v6622 = vsub.s32 32, %v6621
    %v6623 = vshll.u32 %v6614, %v6621
    %v6624 = vshrl.u32 %v6606, %v6622
    %v6625 = vor.u32 %v6623, %v6624
    %v6626 = vsub.s32 4294967266, %v6621
    %v6627 = vadd.s32 %v6626, 127
    %v6628 = vshll.u32 %v6627, 23
    %v6629 = vor.u32 4788187, %v6628
    %v6630 = vand.u32 2147483647, %v6629
    %v6632 = vcvt.s32.f32 %v6625
    %v6633 = vmul.f32 %v6632, %v6630
    %v6634 = vxor.u32 %v6633, 2147483648
    %v6635 = vsel %vm6552, %v6634, %v6633
    %v6636 = vsub.s32 4, %v6612
    %v6637 = vsel %vm6552, %v6636, %v6612
    %v6638 = vsel %vm6551, %v302, %v6635
    %v6639 = vsel %vm6551, 0, %v6637
    %v6640 = vcosq.f32.pop %v6638
    %v6641 = vsinq.f32.pop %v6638
    %vm6642 = vweird.f32 %v302
    %v6643 = vand.u32 %v6639, 3
    %vm6644 = vcmp.lt.s32.totalorder %v6643, 2
    %vm6645 = vcmp.eq.s32.totalorder %v6643, 0
    %v6646 = vxor.u32 %v6641, 2147483648
    %v6647 = vsel %vm6645, %v6640, %v6646
    %vm6648 = vcmp.eq.s32.totalorder %v6643, 2
    %v6649 = vxor.u32 %v6640, 2147483648
    %v6650 = vsel %vm6648, %v6649, %v6641
    %v6651 = vsel %vm6644, %v6647, %v6650
    %v6652 = vsel %vm6642, nan, %v6651
    %v6653 = vand.u32 2147483647, %v303
    %vm6654 = vcmp.le.f32.partialorder %v6653, 0.7853982
    %vm6655 = vcmp.lt.s32.totalorder %v303, 0
    %v6656 = vand.u32 %v303, 2139095040
    %v6657 = vshrl.u32 %v6656, 23
    %v6658 = vsub.s32 %v6657, 127
    %v6659 = vand.u32 2147483647, %v303
    %v6660 = vand.u32 %v6659, 8388607
    %v6661 = vor.u32 %v6660, 8388608
    %v6662 = vsub.s32 0, %v6661
    %v6663 = vadd.s32 %v6658, 1
    %vm6664 = vcmp.gt.s32.totalorder %v6663, 0
    %v6665 = vsel %vm6664, %v6663, 0
    %v6666 = vshrl.u32 %v6665, 5
    %v6667 = vand.u32 %v6665, 31
    %v6668 = vsub.s32 32, %v6667
    %v6669 = vshrl.u32 683565275, %v6668
    %v6670 = vshll.u32 683565275, %v6667
    %v6671 = vshrl.u32 2475754826, %v6668
    %v6672 = vor.u32 %v6670, %v6671
    %v6673 = vshll.u32 2475754826, %v6667
    %v6674 = vshrl.u32 2131351028, %v6668
    %v6675 = vor.u32 %v6673, %v6674
    %v6676 = vshll.u32 2131351028, %v6667
    %v6677 = vshrl.u32 2102212464, %v6668
    %v6678 = vor.u32 %v6676, %v6677
    %v6679 = vshll.u32 2102212464, %v6667
    %v6680 = vshrl.u32 920167782, %v6668
    %v6681 = vor.u32 %v6679, %v6680
    %v6682 = vshll.u32 920167782, %v6667
    %v6683 = vshrl.u32 1326507024, %v6668
    %v6684 = vor.u32 %v6682, %v6683
    %vm6685 = vcmp.lt.s32.totalorder %v6666, 1
    %vm6686 = vcmp.lt.s32.totalorder %v6666, 2
    %vm6687 = vcmp.lt.s32.totalorder %v6666, 3
    %vm6688 = vcmp.lt.s32.totalorder %v6666, 4
    %v6689 = vsel %vm6685, %v6669, %v6672
    %v6690 = vsel %vm6688, %v6678, 2102212464
    %v6691 = vsel %vm6687, %v6675, %v6690
    %v6692 = vsel %vm6686, %v6689, %v6691
    %v6693 = vsel %vm6685, %v6672, %v6675
    %v6694 = vsel %vm6688, %v6681, 920167782
    %v6695 = vsel %vm6687, %v6678, %v6694
    %v6696 = vsel %vm6686, %v6693, %v6695
    %v6697 = vsel %vm6685, %v6675, %v6678
    %v6698 = vsel %vm6688, %v6684, 1326507024
    %v6699 = vsel %vm6687, %v6681, %v6698
    %v6700 = vsel %vm6686, %v6697, %v6699
    %v6701 = vshll.u32 %v6661, 8
    %v6702 = vmul.u32.u64.compose %v6701, %v6700
    %v6703 = vextract.low.u32 %v6702
    %v6704 = vextract.high.u32 %v6702
    %v6705 = vmul.u32.u64.compose %v6701, %v6696
    %v6706 = vextract.low.u32 %v6705
    %v6707 = vextract.high.u32 %v6705
    %v6708 = vmul.u32 %v6701, %v6692
    %v6709 = vadd.s32 %v6704, %v6706
    %vm6710 = vc.u32 %v6704, %v6706
    %v6711 = vadd.s32 %v6707, 1
    %v6712 = vsel %vm6710, %v6711, %v6707
    %v6713 = vadd.s32 %v6708, %v6712
    %v6714 = vadd.s32 %v6713, 536870912
    %v6715 = vshrl.u32 %v6714, 30
    %v6716 = vshll.u32 %v6715, 30
    %v6717 = vsub.s32 %v6713, %v6716
    %vm6718 = vcmp.lt.s32.totalorder %v6717, 0
    %v6719 = vsub.s32 0, %v6717
    %v6720 = vsel %vm6718, %v6719, %v6717
    %v6721 = vclz %v6720
    %v6722 = vsub.s32 %v6721, 2
    %vm6723 = vcmp.gt.s32.totalorder 0, %v6722
    %v6724 = vsel %vm6723, 0, %v6722
    %v6725 = vsub.s32 32, %v6724
    %v6726 = vshll.u32 %v6717, %v6724
    %v6727 = vshrl.u32 %v6709, %v6725
    %v6728 = vor.u32 %v6726, %v6727
    %v6729 = vsub.s32 4294967266, %v6724
    %v6730 = vadd.s32 %v6729, 127
    %v6731 = vshll.u32 %v6730, 23
    %v6732 = vor.u32 4788187, %v6731
    %v6733 = vand.u32 2147483647, %v6732
    %v6735 = vcvt.s32.f32 %v6728
    %v6736 = vmul.f32 %v6735, %v6733
    %v6737 = vxor.u32 %v6736, 2147483648
    %v6738 = vsel %vm6655, %v6737, %v6736
    %v6739 = vsub.s32 4, %v6715
    %v6740 = vsel %vm6655, %v6739, %v6715
    %v6741 = vsel %vm6654, %v303, %v6738
    %v6742 = vsel %vm6654, 0, %v6740
    %v6743 = vcosq.f32.pop %v6741
    %v6744 = vsinq.f32.pop %v6741
    %vm6745 = vweird.f32 %v303
    %v6746 = vand.u32 %v6742, 3
    %vm6747 = vcmp.lt.s32.totalorder %v6746, 2
    %vm6748 = vcmp.eq.s32.totalorder %v6746, 0
    %v6749 = vxor.u32 %v6744, 2147483648
    %v6750 = vsel %vm6748, %v6743, %v6749
    %vm6751 = vcmp.eq.s32.totalorder %v6746, 2
    %v6752 = vxor.u32 %v6743, 2147483648
    %v6753 = vsel %vm6751, %v6752, %v6744
    %v6754 = vsel %vm6747, %v6750, %v6753
    %v6755 = vsel %vm6745, nan, %v6754
    %v6756 = vand.u32 2147483647, %v304
    %vm6757 = vcmp.le.f32.partialorder %v6756, 0.7853982
    %vm6758 = vcmp.lt.s32.totalorder %v304, 0
    %v6759 = vand.u32 %v304, 2139095040
    %v6760 = vshrl.u32 %v6759, 23
    %v6761 = vsub.s32 %v6760, 127
    %v6762 = vand.u32 2147483647, %v304
    %v6763 = vand.u32 %v6762, 8388607
    %v6764 = vor.u32 %v6763, 8388608
    %v6765 = vsub.s32 0, %v6764
    %v6766 = vadd.s32 %v6761, 1
    %vm6767 = vcmp.gt.s32.totalorder %v6766, 0
    %v6768 = vsel %vm6767, %v6766, 0
    %v6769 = vshrl.u32 %v6768, 5
    %v6770 = vand.u32 %v6768, 31
    %v6771 = vsub.s32 32, %v6770
    %v6772 = vshrl.u32 683565275, %v6771
    %v6773 = vshll.u32 683565275, %v6770
    %v6774 = vshrl.u32 2475754826, %v6771
    %v6775 = vor.u32 %v6773, %v6774
    %v6776 = vshll.u32 2475754826, %v6770
    %v6777 = vshrl.u32 2131351028, %v6771
    %v6778 = vor.u32 %v6776, %v6777
    %v6779 = vshll.u32 2131351028, %v6770
    %v6780 = vshrl.u32 2102212464, %v6771
    %v6781 = vor.u32 %v6779, %v6780
    %v6782 = vshll.u32 2102212464, %v6770
    %v6783 = vshrl.u32 920167782, %v6771
    %v6784 = vor.u32 %v6782, %v6783
    %v6785 = vshll.u32 920167782, %v6770
    %v6786 = vshrl.u32 1326507024, %v6771
    %v6787 = vor.u32 %v6785, %v6786
    %vm6788 = vcmp.lt.s32.totalorder %v6769, 1
    %vm6789 = vcmp.lt.s32.totalorder %v6769, 2
    %vm6790 = vcmp.lt.s32.totalorder %v6769, 3
    %vm6791 = vcmp.lt.s32.totalorder %v6769, 4
    %v6792 = vsel %vm6788, %v6772, %v6775
    %v6793 = vsel %vm6791, %v6781, 2102212464
    %v6794 = vsel %vm6790, %v6778, %v6793
    %v6795 = vsel %vm6789, %v6792, %v6794
    %v6796 = vsel %vm6788, %v6775, %v6778
    %v6797 = vsel %vm6791, %v6784, 920167782
    %v6798 = vsel %vm6790, %v6781, %v6797
    %v6799 = vsel %vm6789, %v6796, %v6798
    %v6800 = vsel %vm6788, %v6778, %v6781
    %v6801 = vsel %vm6791, %v6787, 1326507024
    %v6802 = vsel %vm6790, %v6784, %v6801
    %v6803 = vsel %vm6789, %v6800, %v6802
    %v6804 = vshll.u32 %v6764, 8
    %v6805 = vmul.u32.u64.compose %v6804, %v6803
    %v6806 = vextract.low.u32 %v6805
    %v6807 = vextract.high.u32 %v6805
    %v6808 = vmul.u32.u64.compose %v6804, %v6799
    %v6809 = vextract.low.u32 %v6808
    %v6810 = vextract.high.u32 %v6808
    %v6811 = vmul.u32 %v6804, %v6795
    %v6812 = vadd.s32 %v6807, %v6809
    %vm6813 = vc.u32 %v6807, %v6809
    %v6814 = vadd.s32 %v6810, 1
    %v6815 = vsel %vm6813, %v6814, %v6810
    %v6816 = vadd.s32 %v6811, %v6815
    %v6817 = vadd.s32 %v6816, 536870912
    %v6818 = vshrl.u32 %v6817, 30
    %v6819 = vshll.u32 %v6818, 30
    %v6820 = vsub.s32 %v6816, %v6819
    %vm6821 = vcmp.lt.s32.totalorder %v6820, 0
    %v6822 = vsub.s32 0, %v6820
    %v6823 = vsel %vm6821, %v6822, %v6820
    %v6824 = vclz %v6823
    %v6825 = vsub.s32 %v6824, 2
    %vm6826 = vcmp.gt.s32.totalorder 0, %v6825
    %v6827 = vsel %vm6826, 0, %v6825
    %v6828 = vsub.s32 32, %v6827
    %v6829 = vshll.u32 %v6820, %v6827
    %v6830 = vshrl.u32 %v6812, %v6828
    %v6831 = vor.u32 %v6829, %v6830
    %v6832 = vsub.s32 4294967266, %v6827
    %v6833 = vadd.s32 %v6832, 127
    %v6834 = vshll.u32 %v6833, 23
    %v6835 = vor.u32 4788187, %v6834
    %v6836 = vand.u32 2147483647, %v6835
    %v6838 = vcvt.s32.f32 %v6831
    %v6839 = vmul.f32 %v6838, %v6836
    %v6840 = vxor.u32 %v6839, 2147483648
    %v6841 = vsel %vm6758, %v6840, %v6839
    %v6842 = vsub.s32 4, %v6818
    %v6843 = vsel %vm6758, %v6842, %v6818
    %v6844 = vsel %vm6757, %v304, %v6841
    %v6845 = vsel %vm6757, 0, %v6843
    %v6846 = vcosq.f32.pop %v6844
    %v6847 = vsinq.f32.pop %v6844
    %vm6848 = vweird.f32 %v304
    %v6849 = vand.u32 %v6845, 3
    %vm6850 = vcmp.lt.s32.totalorder %v6849, 2
    %vm6851 = vcmp.eq.s32.totalorder %v6849, 0
    %v6852 = vxor.u32 %v6847, 2147483648
    %v6853 = vsel %vm6851, %v6846, %v6852
    %vm6854 = vcmp.eq.s32.totalorder %v6849, 2
    %v6855 = vxor.u32 %v6846, 2147483648
    %v6856 = vsel %vm6854, %v6855, %v6847
    %v6857 = vsel %vm6850, %v6853, %v6856
    %v6858 = vsel %vm6848, nan, %v6857
    %v6859 = vand.u32 2147483647, %v305
    %vm6860 = vcmp.le.f32.partialorder %v6859, 0.7853982
    %vm6861 = vcmp.lt.s32.totalorder %v305, 0
    %v6862 = vand.u32 %v305, 2139095040
    %v6863 = vshrl.u32 %v6862, 23
    %v6864 = vsub.s32 %v6863, 127
    %v6865 = vand.u32 2147483647, %v305
    %v6866 = vand.u32 %v6865, 8388607
    %v6867 = vor.u32 %v6866, 8388608
    %v6868 = vsub.s32 0, %v6867
    %v6869 = vadd.s32 %v6864, 1
    %vm6870 = vcmp.gt.s32.totalorder %v6869, 0
    %v6871 = vsel %vm6870, %v6869, 0
    %v6872 = vshrl.u32 %v6871, 5
    %v6873 = vand.u32 %v6871, 31
    %v6874 = vsub.s32 32, %v6873
    %v6875 = vshrl.u32 683565275, %v6874
    %v6876 = vshll.u32 683565275, %v6873
    %v6877 = vshrl.u32 2475754826, %v6874
    %v6878 = vor.u32 %v6876, %v6877
    %v6879 = vshll.u32 2475754826, %v6873
    %v6880 = vshrl.u32 2131351028, %v6874
    %v6881 = vor.u32 %v6879, %v6880
    %v6882 = vshll.u32 2131351028, %v6873
    %v6883 = vshrl.u32 2102212464, %v6874
    %v6884 = vor.u32 %v6882, %v6883
    %v6885 = vshll.u32 2102212464, %v6873
    %v6886 = vshrl.u32 920167782, %v6874
    %v6887 = vor.u32 %v6885, %v6886
    %v6888 = vshll.u32 920167782, %v6873
    %v6889 = vshrl.u32 1326507024, %v6874
    %v6890 = vor.u32 %v6888, %v6889
    %vm6891 = vcmp.lt.s32.totalorder %v6872, 1
    %vm6892 = vcmp.lt.s32.totalorder %v6872, 2
    %vm6893 = vcmp.lt.s32.totalorder %v6872, 3
    %vm6894 = vcmp.lt.s32.totalorder %v6872, 4
    %v6895 = vsel %vm6891, %v6875, %v6878
    %v6896 = vsel %vm6894, %v6884, 2102212464
    %v6897 = vsel %vm6893, %v6881, %v6896
    %v6898 = vsel %vm6892, %v6895, %v6897
    %v6899 = vsel %vm6891, %v6878, %v6881
    %v6900 = vsel %vm6894, %v6887, 920167782
    %v6901 = vsel %vm6893, %v6884, %v6900
    %v6902 = vsel %vm6892, %v6899, %v6901
    %v6903 = vsel %vm6891, %v6881, %v6884
    %v6904 = vsel %vm6894, %v6890, 1326507024
    %v6905 = vsel %vm6893, %v6887, %v6904
    %v6906 = vsel %vm6892, %v6903, %v6905
    %v6907 = vshll.u32 %v6867, 8
    %v6908 = vmul.u32.u64.compose %v6907, %v6906
    %v6909 = vextract.low.u32 %v6908
    %v6910 = vextract.high.u32 %v6908
    %v6911 = vmul.u32.u64.compose %v6907, %v6902
    %v6912 = vextract.low.u32 %v6911
    %v6913 = vextract.high.u32 %v6911
    %v6914 = vmul.u32 %v6907, %v6898
    %v6915 = vadd.s32 %v6910, %v6912
    %vm6916 = vc.u32 %v6910, %v6912
    %v6917 = vadd.s32 %v6913, 1
    %v6918 = vsel %vm6916, %v6917, %v6913
    %v6919 = vadd.s32 %v6914, %v6918
    %v6920 = vadd.s32 %v6919, 536870912
    %v6921 = vshrl.u32 %v6920, 30
    %v6922 = vshll.u32 %v6921, 30
    %v6923 = vsub.s32 %v6919, %v6922
    %vm6924 = vcmp.lt.s32.totalorder %v6923, 0
    %v6925 = vsub.s32 0, %v6923
    %v6926 = vsel %vm6924, %v6925, %v6923
    %v6927 = vclz %v6926
    %v6928 = vsub.s32 %v6927, 2
    %vm6929 = vcmp.gt.s32.totalorder 0, %v6928
    %v6930 = vsel %vm6929, 0, %v6928
    %v6931 = vsub.s32 32, %v6930
    %v6932 = vshll.u32 %v6923, %v6930
    %v6933 = vshrl.u32 %v6915, %v6931
    %v6934 = vor.u32 %v6932, %v6933
    %v6935 = vsub.s32 4294967266, %v6930
    %v6936 = vadd.s32 %v6935, 127
    %v6937 = vshll.u32 %v6936, 23
    %v6938 = vor.u32 4788187, %v6937
    %v6939 = vand.u32 2147483647, %v6938
    %v6941 = vcvt.s32.f32 %v6934
    %v6942 = vmul.f32 %v6941, %v6939
    %v6943 = vxor.u32 %v6942, 2147483648
    %v6944 = vsel %vm6861, %v6943, %v6942
    %v6945 = vsub.s32 4, %v6921
    %v6946 = vsel %vm6861, %v6945, %v6921
    %v6947 = vsel %vm6860, %v305, %v6944
    %v6948 = vsel %vm6860, 0, %v6946
    %v6949 = vcosq.f32.pop %v6947
    %v6950 = vsinq.f32.pop %v6947
    %vm6951 = vweird.f32 %v305
    %v6952 = vand.u32 %v6948, 3
    %vm6953 = vcmp.lt.s32.totalorder %v6952, 2
    %vm6954 = vcmp.eq.s32.totalorder %v6952, 0
    %v6955 = vxor.u32 %v6950, 2147483648
    %v6956 = vsel %vm6954, %v6949, %v6955
    %vm6957 = vcmp.eq.s32.totalorder %v6952, 2
    %v6958 = vxor.u32 %v6949, 2147483648
    %v6959 = vsel %vm6957, %v6958, %v6950
    %v6960 = vsel %vm6953, %v6956, %v6959
    %v6961 = vsel %vm6951, nan, %v6960
    %6962 = vst [vmem:[#allocation2 + $0x10] sm:$0xff] %v3768
    %6963 = vst [vmem:[#allocation2 + $0x18] sm:$0xff] %v3871
    %6964 = vst [vmem:[#allocation2 + $0x30] sm:$0xff] %v3974
    %6965 = vst [vmem:[#allocation2 + $0x38] sm:$0xff] %v4077
    %6966 = vst [vmem:[#allocation2 + $0x50] sm:$0xff] %v4180
    %6967 = vst [vmem:[#allocation2 + $0x58] sm:$0xff] %v4283
    %6968 = vst [vmem:[#allocation2 + $0x70] sm:$0xff] %v4386
    %6969 = vst [vmem:[#allocation2 + $0x78] sm:$0xff] %v4489
    %6970 = vst [vmem:[#allocation2 + $0x90] sm:$0xff] %v4592
    %6971 = vst [vmem:[#allocation2 + $0x98] sm:$0xff] %v4695
    %6972 = vst [vmem:[#allocation2 + $0xb0] sm:$0xff] %v4798
    %6973 = vst [vmem:[#allocation2 + $0xb8] sm:$0xff] %v4901
    %6974 = vst [vmem:[#allocation2 + $0xd0] sm:$0xff] %v5004
    %6975 = vst [vmem:[#allocation2 + $0xd8] sm:$0xff] %v5107
    %6976 = vst [vmem:[#allocation2 + $0xf0] sm:$0xff] %v5210
    %6977 = vst [vmem:[#allocation2 + $0xf8] sm:$0xff] %v5313
    %6978 = vst [vmem:[#allocation2 + $0x110] sm:$0xff] %v5416
    %6979 = vst [vmem:[#allocation2 + $0x118] sm:$0xff] %v5519
    %6980 = vst [vmem:[#allocation2 + $0x130] sm:$0xff] %v5622
    %6981 = vst [vmem:[#allocation2 + $0x138] sm:$0xff] %v5725
    %6982 = vst [vmem:[#allocation2 + $0x150] sm:$0xff] %v5828
    %6983 = vst [vmem:[#allocation2 + $0x158] sm:$0xff] %v5931
    %6984 = vst [vmem:[#allocation2 + $0x170] sm:$0xff] %v6034
    %6985 = vst [vmem:[#allocation2 + $0x178] sm:$0xff] %v6137
    %6986 = vst [vmem:[#allocation2 + $0x190] sm:$0xff] %v6240
    %6987 = vst [vmem:[#allocation2 + $0x198] sm:$0xff] %v6343
    %6988 = vst [vmem:[#allocation2 + $0x1b0] sm:$0xff] %v6446
    %6989 = vst [vmem:[#allocation2 + $0x1b8] sm:$0xff] %v6549
    %6990 = vst [vmem:[#allocation2 + $0x1d0] sm:$0xff] %v6652
    %6991 = vst [vmem:[#allocation2 + $0x1d8] sm:$0xff] %v6755
    %6992 = vst [vmem:[#allocation2 + $0x1f0] sm:$0xff] %v6858
    %6993 = vst [vmem:[#allocation2 + $0x1f8] sm:$0xff] %v6961
    // Predicated region
    $region10: #{tpu_custom_call.1} parent=1 // pred_check
      _
    $region11: #{tpu_custom_call.1} parent=1 // pred_check_branch
      %6995 = sbr.rel (0) target = $region13
    $region12: #{tpu_custom_call.1} parent=1 // pred_region
      %s6997 = ssub.s32 8192, 8192
      %6998 = vsyncadd [#allocation3], %s6997
      %s6999 = sshll.u32 [#allocation2], 4
      %s7000 = int_to_ptr.vmem [resolvable:$true] %s6999
      %7005 = dma.vmem_to_hbm [thread:$0]  %s7000, 8192, %s2, [#allocation3], 512, 512, 32
    $region13: #{tpu_custom_call.1} parent=1 // pred_fallthru
      _
    // Predicated region
    $region14: #{tpu_custom_call.1} parent=1 // pred_check
      _
    $region15: #{tpu_custom_call.1} parent=1 // pred_check_branch
      %7007 = sbr.rel (0) target = $region17
    $region16: #{tpu_custom_call.1} parent=1 // pred_region
      %7008 = dma.done [#allocation3], 8192
    $region17: #{tpu_custom_call.1} parent=1 // pred_fallthru
      _
    %7009 = vsyncpa [#allocation3], 1

</llo_original>
